<compile_context>
chip_gen: v6e
topology: v6e:2x2x1
jax: 0.10.0
libtpu: 0.0.40
codegen_flags: <defaults>
</compile_context>

<pallas_src>
import functools
import math

import jax
import jax.numpy as jnp
import numpy as np
from jax.experimental import pallas as pl
from jax.experimental.pallas import tpu as pltpu

F32 = jnp.float32
BF16 = jnp.bfloat16
VMEM = pl.BlockSpec(memory_space=pltpu.MemorySpace.VMEM)

# ----------------------------- configuration ------------------------------
N_NODES = 8
N_EDGES = 16
NUM_NODE_FEATS = 8
NUM_EDGE_FEATS = 4
NUM_LAYERS = 2          # egnn_blocks after the embedding block
C_HIDDEN = 32
NUM_RBF = 8
BESSEL_CUTOFF = 5.0
# mlp_activation = "SiLU", mlp_output_activation = None, dropout = None,
# modify_coords = True, num_layers_phi = 2


# ------------------------------- fused kernel ------------------------------
def egnn_kernel(
    # graph inputs
    nat_ref, eat_ref, crd_ref, gall_ref, gdiff_ref, scat_ref, freq_ref,
    # embedding MLPs (weights bf16, biases f32)
    enw1_ref, enb1_ref, enw2_ref, enb2_ref,
    eew1_ref, eeb1_ref, eew2_ref, eeb2_ref,
    # per-block weights, stacked on a leading [num_blocks] axis
    whi_ref, whj_ref, wr_ref, wrbf_ref, wef_ref, beb1_ref,
    wmcat_ref, bax1_ref, we2_ref, be2_ref, wb2_ref, bb2_ref,
    wax2_ref, bax2_ref,
    wnh_ref, wnm_ref, bn1_ref, wn2_ref, bn2_ref,
    # outputs
    o_h_ref, o_c_ref, o_ef_ref, o_att_ref,
    *, num_blocks, hdim, n_edges, rbf_scale,
):
    H, E = hdim, n_edges

    def bdot(a, w_bf16):
        # dense MLP matmul: bf16 operands, f32 accumulate (MXU native)
        return jnp.dot(a.astype(BF16), w_bf16, preferred_element_type=F32)

    def xdot(a, b):
        # exact f32 matmul for one-hot gather / scatter-sum (tiny FLOPs)
        return jnp.dot(a, b, preferred_element_type=F32,
                       precision=jax.lax.Precision.HIGHEST)

    # ---- embeddings --------------------------------------------------------
    h = bdot(jax.nn.silu(bdot(nat_ref[...], enw1_ref[...]) + enb1_ref[...]),
             enw2_ref[...]) + enb2_ref[...]                        # [N, H]
    ef = bdot(jax.nn.silu(bdot(eat_ref[...], eew1_ref[...]) + eeb1_ref[...]),
              eew2_ref[...]) + eeb2_ref[...]                       # [E, H]
    coords = crd_ref[...]                                          # [N, 3]

    gall = gall_ref[...]    # [2E, N] rows 0:E = one-hot(sender), E:2E = one-hot(receiver)
    gdiff = gdiff_ref[...]  # [E, N]  one-hot(sender) - one-hot(receiver)
    scat = scat_ref[...]    # [N, E]  one-hot scatter onto edge_index[0]
    freq = freq_ref[...]    # [1, K]  z_0k / cutoff

    att = None
    for b in range(num_blocks):          # unrolled; weights indexed statically
        # ---- gathers (exact, via one-hot matmuls) --------------------------
        hij = xdot(gall, h)                                        # [2E, H]
        h_i = hij[0:E, :]
        h_j = hij[E:2 * E, :]
        rji = xdot(gdiff, coords)                                  # [E, 3]
        # sender != receiver by construction -> absr > 0 (matches reference; no clamp)
        absr = jnp.sqrt(jnp.sum(rji * rji, axis=-1, keepdims=True))   # [E, 1]
        rbf = rbf_scale * jnp.sin(freq * absr) / absr                 # [E, K]

        # ---- fused phi_e L1 + (m-independent) phi_b L1  -> [E, 2H] ---------
        pre = (bdot(h_i, whi_ref[b]) + bdot(h_j, whj_ref[b])
               + absr * wr_ref[b]
               + bdot(rbf, wrbf_ref[b]) + bdot(ef, wef_ref[b])
               + beb1_ref[b])
        m = bdot(jax.nn.silu(pre[:, 0:H]), we2_ref[b]) + be2_ref[b]   # m_ji  [E, H]

        # ---- fused m-projection: [phi_b L1 m-part | att L1 | phi_x L1] -----
        mcat = bdot(m, wmcat_ref[b])                                  # [E, 3H]
        u = jax.nn.silu(pre[:, H:2 * H] + mcat[:, 0:H])
        ef = bdot(u, wb2_ref[b]) + bb2_ref[b]                         # new edge feats

        z = jax.nn.silu(mcat[:, H:3 * H] + bax1_ref[b])               # [E, 2H]
        ax = bdot(z, wax2_ref[b]) + bax2_ref[b]                       # [E, 2]
        att = jax.nn.sigmoid(ax[:, 0:1])                              # attention [E, 1]
        phix = ax[:, 1:2]                                             # phi_x(m)  [E, 1]

        msg = m * att                                                 # [E, H]
        delta = rji / (absr + 1.0) * phix                             # [E, 3]

        # ---- scatter-sum onto nodes (exact) + node / coord update ----------
        m_i = xdot(scat, msg)                                         # [N, H]
        d_i = xdot(scat, delta)                                       # [N, 3]
        t_n = jax.nn.silu(bdot(h, wnh_ref[b]) + bdot(m_i, wnm_ref[b]) + bn1_ref[b])
        h = bdot(t_n, wn2_ref[b]) + bn2_ref[b] + h                    # residual
        coords = coords + d_i

    o_h_ref[...] = h
    o_c_ref[...] = coords
    o_ef_ref[...] = ef
    o_att_ref[...] = att


# --------------------------- parameter init --------------------------------
def init_linear(key, c_in, c_out):
    kw, kb = jax.random.split(key)
    bound = 1.0 / math.sqrt(c_in)
    w = jax.random.uniform(kw, (c_in, c_out), F32, -bound, bound)
    b = jax.random.uniform(kb, (1, c_out), F32, -bound, bound)
    return w, b


def init_mlp2(key, c_in, c_hidden, c_out):
    k1, k2 = jax.random.split(key)
    w1, b1 = init_linear(k1, c_in, c_hidden)
    w2, b2 = init_linear(k2, c_hidden, c_out)
    return (w1, b1, w2, b2)


def init_block(key, hdim, k_rbf):
    keys = jax.random.split(key, 5)
    return {
        "phi_e": init_mlp2(keys[0], 3 * hdim + k_rbf + 1, hdim, hdim),
        "phi_b": init_mlp2(keys[1], 4 * hdim + k_rbf + 1, hdim, hdim),
        "att":   init_mlp2(keys[2], hdim, hdim, 1),
        "phi_n": init_mlp2(keys[3], 2 * hdim, hdim, hdim),
        "phi_x": init_mlp2(keys[4], hdim, hdim, 1),
        "cutoff": jnp.asarray(BESSEL_CUTOFF, F32),
        "z0k": (jnp.pi * jnp.arange(k_rbf)).astype(F32),
    }


def init_egnn(key):
    keys = jax.random.split(key, 3 + NUM_LAYERS)
    return {
        "embed_nodes": init_mlp2(keys[0], NUM_NODE_FEATS, C_HIDDEN, C_HIDDEN),
        "embed_edges": init_mlp2(keys[1], NUM_EDGE_FEATS, C_HIDDEN, C_HIDDEN),
        "blocks": [init_block(keys[2 + i], C_HIDDEN, NUM_RBF) for i in range(1 + NUM_LAYERS)],
    }


# -------------------- one-time weight re-packing (hoisted) ------------------
def _split_block(blk):
    H, K = C_HIDDEN, NUM_RBF
    we1, be1, we2, be2 = blk["phi_e"]
    wb1, bb1, wb2, bb2 = blk["phi_b"]
    wa1, ba1, wa2, ba2 = blk["att"]
    wn1, bn1, wn2, bn2 = blk["phi_n"]
    wx1, bx1, wx2, bx2 = blk["phi_x"]
    # phi_e concat order: [h_i, h_j, |r|, rbf, ef]; phi_b: [h_i, h_j, m, |r|, rbf, ef]
    zeros = jnp.zeros((H, 1), F32)
    return {
        "w_hi":  jnp.concatenate([we1[0:H],                 wb1[0:H]],                 axis=1),
        "w_hj":  jnp.concatenate([we1[H:2 * H],             wb1[H:2 * H]],             axis=1),
        "w_r":   jnp.concatenate([we1[2 * H:2 * H + 1],     wb1[3 * H:3 * H + 1]],     axis=1),
        "w_rbf": jnp.concatenate([we1[2 * H + 1:2 * H + 1 + K],
                                  wb1[3 * H + 1:3 * H + 1 + K]],                       axis=1),
        "w_ef":  jnp.concatenate([we1[2 * H + 1 + K:],      wb1[3 * H + 1 + K:]],      axis=1),
        "b_eb1": jnp.concatenate([be1, bb1], axis=1),
        "w_mcat": jnp.concatenate([wb1[2 * H:3 * H], wa1, wx1], axis=1),   # [H, 3H]
        "b_ax1": jnp.concatenate([ba1, bx1], axis=1),                      # [1, 2H]
        "w_e2": we2, "b_e2": be2,
        "w_b2": wb2, "b_b2": bb2,
        "w_ax2": jnp.concatenate([jnp.concatenate([wa2, zeros], axis=1),
                                  jnp.concatenate([zeros, wx2], axis=1)], axis=0),  # [2H, 2]
        "b_ax2": jnp.concatenate([ba2, bx2], axis=1),                      # [1, 2]
        "w_nh": wn1[0:H], "w_nm": wn1[H:2 * H], "b_n1": bn1, "w_n2": wn2, "b_n2": bn2,
    }


_BF16_KEYS = {"w_hi", "w_hj", "w_rbf", "w_ef", "w_mcat", "w_e2", "w_b2",
              "w_ax2", "w_nh", "w_nm", "w_n2"}


def prepare_params(params):
    """Call once: split/merge/stack weights and cast MXU operands to bf16."""
    en_w1, en_b1, en_w2, en_b2 = params["embed_nodes"]
    ee_w1, ee_b1, ee_w2, ee_b2 = params["embed_edges"]
    splits = [_split_block(blk) for blk in params["blocks"]]
    blocks = {}
    for k in splits[0]:
        arr = jnp.stack([s[k] for s in splits], axis=0)
        blocks[k] = arr.astype(BF16) if k in _BF16_KEYS else arr
    blk0 = params["blocks"][0]
    return {
        "embed": (en_w1.astype(BF16), en_b1, en_w2.astype(BF16), en_b2,
                  ee_w1.astype(BF16), ee_b1, ee_w2.astype(BF16), ee_b2),
        "blocks": blocks,
        "rbf_freq": (blk0["z0k"] / blk0["cutoff"]).reshape(1, NUM_RBF).astype(F32),
    }


# ------------------------------ forward (jitted) ----------------------------
def _egnn_forward_impl(prep, node_attrs, edge_attrs, coords, edge_index):
    n = node_attrs.shape[0]
    e = edge_attrs.shape[0]
    snd, rcv = edge_index[0], edge_index[1]
    ar = jnp.arange(n)
    g_snd = (snd[:, None] == ar[None, :]).astype(F32)          # [E, N]
    g_rcv = (rcv[:, None] == ar[None, :]).astype(F32)          # [E, N]
    gall = jnp.concatenate([g_snd, g_rcv], axis=0)             # [2E, N]
    gdiff = g_snd - g_rcv                                      # [E, N]
    scat = (ar[:, None] == snd[None, :]).astype(F32)           # [N, E] scatter onto edge_index[0]

    b = prep["blocks"]
    args = (node_attrs, edge_attrs, coords, gall, gdiff, scat, prep["rbf_freq"],
            *prep["embed"],
            b["w_hi"], b["w_hj"], b["w_r"], b["w_rbf"], b["w_ef"], b["b_eb1"],
            b["w_mcat"], b["b_ax1"], b["w_e2"], b["b_e2"], b["w_b2"], b["b_b2"],
            b["w_ax2"], b["b_ax2"],
            b["w_nh"], b["w_nm"], b["b_n1"], b["w_n2"], b["b_n2"])

    out_shape = (
        jax.ShapeDtypeStruct((n, C_HIDDEN), F32),   # node feats
        jax.ShapeDtypeStruct((n, 3), F32),          # coordinates
        jax.ShapeDtypeStruct((e, C_HIDDEN), F32),   # edge feats
        jax.ShapeDtypeStruct((e, 1), F32),          # attention
    )
    kern = functools.partial(
        egnn_kernel,
        num_blocks=1 + NUM_LAYERS, hdim=C_HIDDEN, n_edges=e,
        rbf_scale=float(np.sqrt(2.0 / BESSEL_CUTOFF)),
    )
    return pl.pallas_call(
        kern,
        out_shape=out_shape,
        in_specs=[VMEM] * len(args),
        out_specs=(VMEM,) * len(out_shape),
    )(*args)


egnn_forward = jax.jit(_egnn_forward_impl)


# ------------------------- pure-JAX reference ------------------------------
def _dot_hi(a, b):
    return jnp.dot(a, b, precision=jax.lax.Precision.HIGHEST)


def _ref_mlp2(x, p, out_act=None):
    w1, b1, w2, b2 = p
    t = jax.nn.silu(_dot_hi(x, w1) + b1)
    y = _dot_hi(t, w2) + b2
    if out_act == "sigmoid":
        y = jax.nn.sigmoid(y)
    return y


def ref_forward(params, node_attrs, edge_attrs, coords, edge_index):
    n = node_attrs.shape[0]
    h = _ref_mlp2(node_attrs, params["embed_nodes"])
    ef = _ref_mlp2(edge_attrs, params["embed_edges"])
    att = None
    for blk in params["blocks"]:
        snd, rcv = edge_index[0], edge_index[1]
        h_i, h_j = h[snd], h[rcv]
        rji = coords[snd] - coords[rcv]
        absr = jnp.linalg.norm(rji, axis=-1, keepdims=True)
        cutoff, z0k = blk["cutoff"], blk["z0k"]
        rbf = jnp.sqrt(2.0 / cutoff) * jnp.sin(z0k[None, :] * absr / cutoff) / absr
        m = _ref_mlp2(jnp.concatenate([h_i, h_j, absr, rbf, ef], axis=-1), blk["phi_e"])
        ef = _ref_mlp2(jnp.concatenate([h_i, h_j, m, absr, rbf, ef], axis=-1), blk["phi_b"])
        att = _ref_mlp2(m, blk["att"], out_act="sigmoid")
        rcv_n = edge_index[0]
        m_i = jax.ops.segment_sum(m * att, rcv_n, num_segments=n)
        h = _ref_mlp2(jnp.concatenate([h, m_i], axis=-1), blk["phi_n"]) + h
        delta_ji = rji / (absr + 1.0) * _ref_mlp2(m, blk["phi_x"])
        coords = coords + jax.ops.segment_sum(delta_ji, rcv_n, num_segments=n)
    return h, coords, ef, att


# ----------------------------------- main -----------------------------------
if __name__ == "__main__":
    root = jax.random.PRNGKey(0)
    k_par, k_na, k_ea, k_co, k_snd, k_off = jax.random.split(root, 6)

    params = init_egnn(k_par)
    prep = prepare_params(params)          # one-time weight re-packing (hoisted)

    node_attrs = jax.random.normal(k_na, (N_NODES, NUM_NODE_FEATS), F32)
    edge_attrs = jax.random.normal(k_ea, (N_EDGES, NUM_EDGE_FEATS), F32)
    coordinates = jax.random.normal(k_co, (N_NODES, 3), F32)
    senders = jax.random.randint(k_snd, (N_EDGES,), 0, N_NODES, dtype=jnp.int32)
    offsets = jax.random.randint(k_off, (N_EDGES,), 1, N_NODES, dtype=jnp.int32)
    receivers = (senders + offsets) % N_NODES          # guarantees sender != receiver
    edge_index = jnp.stack([senders, receivers], axis=0)

    out = egnn_forward(prep, node_attrs, edge_attrs, coordinates, edge_index)
    out = jax.block_until_ready(out)
    h_out, c_out, ef_out, att_out = out

    # reference check (f32 HIGHEST reference vs bf16-MXU fused kernel)
    h_ref, c_ref, ef_ref, att_ref = ref_forward(params, node_attrs, edge_attrs,
                                                coordinates, edge_index)
    np.testing.assert_allclose(np.asarray(h_out), np.asarray(h_ref), rtol=2e-2, atol=2e-2)
    np.testing.assert_allclose(np.asarray(c_out), np.asarray(c_ref), rtol=2e-2, atol=2e-2)
    np.testing.assert_allclose(np.asarray(ef_out), np.asarray(ef_ref), rtol=2e-2, atol=2e-2)
    np.testing.assert_allclose(np.asarray(att_out), np.asarray(att_ref), rtol=2e-2, atol=2e-2)
    assert np.isfinite(np.asarray(h_out)).all() and np.isfinite(np.asarray(c_out)).all()

    print("KERNEL_OK")
</pallas_src>

<mosaic_0001>
module attributes {stable_mosaic.version = 11 : i64} {
  func.func @egnn_kernel(%arg0: memref<8x8xf32, #tpu.memory_space<vmem>>, %arg1: memref<16x4xf32, #tpu.memory_space<vmem>>, %arg2: memref<8x3xf32, #tpu.memory_space<vmem>>, %arg3: memref<32x8xf32, #tpu.memory_space<vmem>>, %arg4: memref<16x8xf32, #tpu.memory_space<vmem>>, %arg5: memref<8x16xf32, #tpu.memory_space<vmem>>, %arg6: memref<1x8xf32, #tpu.memory_space<vmem>>, %arg7: memref<8x32xbf16, #tpu.memory_space<vmem>>, %arg8: memref<1x32xf32, #tpu.memory_space<vmem>>, %arg9: memref<32x32xbf16, #tpu.memory_space<vmem>>, %arg10: memref<1x32xf32, #tpu.memory_space<vmem>>, %arg11: memref<4x32xbf16, #tpu.memory_space<vmem>>, %arg12: memref<1x32xf32, #tpu.memory_space<vmem>>, %arg13: memref<32x32xbf16, #tpu.memory_space<vmem>>, %arg14: memref<1x32xf32, #tpu.memory_space<vmem>>, %arg15: memref<3x32x64xbf16, #tpu.memory_space<vmem>>, %arg16: memref<3x32x64xbf16, #tpu.memory_space<vmem>>, %arg17: memref<3x1x64xf32, #tpu.memory_space<vmem>>, %arg18: memref<3x8x64xbf16, #tpu.memory_space<vmem>>, %arg19: memref<3x32x64xbf16, #tpu.memory_space<vmem>>, %arg20: memref<3x1x64xf32, #tpu.memory_space<vmem>>, %arg21: memref<3x32x96xbf16, #tpu.memory_space<vmem>>, %arg22: memref<3x1x64xf32, #tpu.memory_space<vmem>>, %arg23: memref<3x32x32xbf16, #tpu.memory_space<vmem>>, %arg24: memref<3x1x32xf32, #tpu.memory_space<vmem>>, %arg25: memref<3x32x32xbf16, #tpu.memory_space<vmem>>, %arg26: memref<3x1x32xf32, #tpu.memory_space<vmem>>, %arg27: memref<3x64x2xbf16, #tpu.memory_space<vmem>>, %arg28: memref<3x1x2xf32, #tpu.memory_space<vmem>>, %arg29: memref<3x32x32xbf16, #tpu.memory_space<vmem>>, %arg30: memref<3x32x32xbf16, #tpu.memory_space<vmem>>, %arg31: memref<3x1x32xf32, #tpu.memory_space<vmem>>, %arg32: memref<3x32x32xbf16, #tpu.memory_space<vmem>>, %arg33: memref<3x1x32xf32, #tpu.memory_space<vmem>>, %arg34: memref<8x32xf32, #tpu.memory_space<vmem>>, %arg35: memref<8x3xf32, #tpu.memory_space<vmem>>, %arg36: memref<16x32xf32, #tpu.memory_space<vmem>>, %arg37: memref<16x1xf32, #tpu.memory_space<vmem>>) attributes {dimension_semantics = [], scalar_prefetch = 0 : i64, scratch_operands = 0 : i64, tpu.core_type = #tpu.core_type<tc>} {
    %c0 = arith.constant 0 : index
    %c0_0 = arith.constant 0 : index
    %0 = vector.load %arg0[%c0, %c0_0] : memref<8x8xf32, #tpu.memory_space<vmem>>, vector<8x8xf32>
    %c0_1 = arith.constant 0 : index
    %c0_2 = arith.constant 0 : index
    %1 = vector.load %arg7[%c0_1, %c0_2] : memref<8x32xbf16, #tpu.memory_space<vmem>>, vector<8x32xbf16>
    %2 = arith.truncf %0 : vector<8x8xf32> to vector<8x8xbf16>
    %cst = arith.constant dense<0.000000e+00> : vector<8x32xf32>
    %3 = tpu.matmul %2, %1, %cst {dimension_numbers = #tpu.dot_dimension_numbers<[1], [0], [0], [1], [0, 0, 1, 1], [], []>} : vector<8x8xbf16>, vector<8x32xbf16>, vector<8x32xf32> -> vector<8x32xf32>
    %c0_3 = arith.constant 0 : index
    %c0_4 = arith.constant 0 : index
    %4 = vector.load %arg8[%c0_3, %c0_4] : memref<1x32xf32, #tpu.memory_space<vmem>>, vector<1x32xf32>
    %5 = vector.broadcast %4 : vector<1x32xf32> to vector<8x32xf32>
    %6 = arith.addf %3, %5 : vector<8x32xf32>
    %7 = arith.negf %6 : vector<8x32xf32>
    %8 = math.exp %7 : vector<8x32xf32>
    %cst_5 = arith.constant 1.000000e+00 : f32
    %9 = vector.broadcast %cst_5 : f32 to vector<8x32xf32>
    %10 = arith.addf %9, %8 : vector<8x32xf32>
    %11 = arith.divf %9, %10 : vector<8x32xf32>
    %12 = arith.mulf %6, %11 : vector<8x32xf32>
    %c0_6 = arith.constant 0 : index
    %c0_7 = arith.constant 0 : index
    %13 = vector.load %arg9[%c0_6, %c0_7] : memref<32x32xbf16, #tpu.memory_space<vmem>>, vector<32x32xbf16>
    %14 = arith.truncf %12 : vector<8x32xf32> to vector<8x32xbf16>
    %cst_8 = arith.constant dense<0.000000e+00> : vector<8x32xf32>
    %15 = tpu.matmul %14, %13, %cst_8 {dimension_numbers = #tpu.dot_dimension_numbers<[1], [0], [0], [1], [0, 0, 1, 1], [], []>} : vector<8x32xbf16>, vector<32x32xbf16>, vector<8x32xf32> -> vector<8x32xf32>
    %c0_9 = arith.constant 0 : index
    %c0_10 = arith.constant 0 : index
    %16 = vector.load %arg10[%c0_9, %c0_10] : memref<1x32xf32, #tpu.memory_space<vmem>>, vector<1x32xf32>
    %17 = vector.broadcast %16 : vector<1x32xf32> to vector<8x32xf32>
    %18 = arith.addf %15, %17 : vector<8x32xf32>
    %c0_11 = arith.constant 0 : index
    %c0_12 = arith.constant 0 : index
    %19 = vector.load %arg1[%c0_11, %c0_12] : memref<16x4xf32, #tpu.memory_space<vmem>>, vector<16x4xf32>
    %c0_13 = arith.constant 0 : index
    %c0_14 = arith.constant 0 : index
    %20 = vector.load %arg11[%c0_13, %c0_14] : memref<4x32xbf16, #tpu.memory_space<vmem>>, vector<4x32xbf16>
    %21 = arith.truncf %19 : vector<16x4xf32> to vector<16x4xbf16>
    %cst_15 = arith.constant dense<0.000000e+00> : vector<16x32xf32>
    %22 = tpu.matmul %21, %20, %cst_15 {dimension_numbers = #tpu.dot_dimension_numbers<[1], [0], [0], [1], [0, 0, 1, 1], [], []>} : vector<16x4xbf16>, vector<4x32xbf16>, vector<16x32xf32> -> vector<16x32xf32>
    %c0_16 = arith.constant 0 : index
    %c0_17 = arith.constant 0 : index
    %23 = vector.load %arg12[%c0_16, %c0_17] : memref<1x32xf32, #tpu.memory_space<vmem>>, vector<1x32xf32>
    %24 = vector.broadcast %23 : vector<1x32xf32> to vector<16x32xf32>
    %25 = arith.addf %22, %24 : vector<16x32xf32>
    %26 = arith.negf %25 : vector<16x32xf32>
    %27 = math.exp %26 : vector<16x32xf32>
    %cst_18 = arith.constant 1.000000e+00 : f32
    %28 = vector.broadcast %cst_18 : f32 to vector<16x32xf32>
    %29 = arith.addf %28, %27 : vector<16x32xf32>
    %30 = arith.divf %28, %29 : vector<16x32xf32>
    %31 = arith.mulf %25, %30 : vector<16x32xf32>
    %c0_19 = arith.constant 0 : index
    %c0_20 = arith.constant 0 : index
    %32 = vector.load %arg13[%c0_19, %c0_20] : memref<32x32xbf16, #tpu.memory_space<vmem>>, vector<32x32xbf16>
    %33 = arith.truncf %31 : vector<16x32xf32> to vector<16x32xbf16>
    %cst_21 = arith.constant dense<0.000000e+00> : vector<16x32xf32>
    %34 = tpu.matmul %33, %32, %cst_21 {dimension_numbers = #tpu.dot_dimension_numbers<[1], [0], [0], [1], [0, 0, 1, 1], [], []>} : vector<16x32xbf16>, vector<32x32xbf16>, vector<16x32xf32> -> vector<16x32xf32>
    %c0_22 = arith.constant 0 : index
    %c0_23 = arith.constant 0 : index
    %35 = vector.load %arg14[%c0_22, %c0_23] : memref<1x32xf32, #tpu.memory_space<vmem>>, vector<1x32xf32>
    %36 = vector.broadcast %35 : vector<1x32xf32> to vector<16x32xf32>
    %37 = arith.addf %34, %36 : vector<16x32xf32>
    %c0_24 = arith.constant 0 : index
    %c0_25 = arith.constant 0 : index
    %38 = vector.load %arg2[%c0_24, %c0_25] : memref<8x3xf32, #tpu.memory_space<vmem>>, vector<8x3xf32>
    %c0_26 = arith.constant 0 : index
    %c0_27 = arith.constant 0 : index
    %39 = vector.load %arg3[%c0_26, %c0_27] : memref<32x8xf32, #tpu.memory_space<vmem>>, vector<32x8xf32>
    %c0_28 = arith.constant 0 : index
    %c0_29 = arith.constant 0 : index
    %40 = vector.load %arg4[%c0_28, %c0_29] : memref<16x8xf32, #tpu.memory_space<vmem>>, vector<16x8xf32>
    %c0_30 = arith.constant 0 : index
    %c0_31 = arith.constant 0 : index
    %41 = vector.load %arg5[%c0_30, %c0_31] : memref<8x16xf32, #tpu.memory_space<vmem>>, vector<8x16xf32>
    %c0_32 = arith.constant 0 : index
    %c0_33 = arith.constant 0 : index
    %42 = vector.load %arg6[%c0_32, %c0_33] : memref<1x8xf32, #tpu.memory_space<vmem>>, vector<1x8xf32>
    %cst_34 = arith.constant dense<0.000000e+00> : vector<32x32xf32>
    %43 = tpu.matmul %39, %18, %cst_34 {dimension_numbers = #tpu.dot_dimension_numbers<[1], [0], [0], [1], [0, 0, 1, 1], [], []>, precision = #tpu.contract_precision<fp32>} : vector<32x8xf32>, vector<8x32xf32>, vector<32x32xf32> -> vector<32x32xf32>
    %44 = vector.extract_strided_slice %43 {offsets = [0, 0], sizes = [16, 32], strides = [1, 1]} : vector<32x32xf32> to vector<16x32xf32>
    %45 = vector.extract_strided_slice %43 {offsets = [16, 0], sizes = [16, 32], strides = [1, 1]} : vector<32x32xf32> to vector<16x32xf32>
    %cst_35 = arith.constant dense<0.000000e+00> : vector<16x3xf32>
    %46 = tpu.matmul %40, %38, %cst_35 {dimension_numbers = #tpu.dot_dimension_numbers<[1], [0], [0], [1], [0, 0, 1, 1], [], []>, precision = #tpu.contract_precision<fp32>} : vector<16x8xf32>, vector<8x3xf32>, vector<16x3xf32> -> vector<16x3xf32>
    %47 = arith.mulf %46, %46 : vector<16x3xf32>
    %cst_36 = arith.constant dense<0.000000e+00> : vector<16xf32>
    %48 = vector.multi_reduction <add>, %47, %cst_36 [1] : vector<16x3xf32> to vector<16xf32>
    %49 = vector.shape_cast %48 : vector<16xf32> to vector<16x1xf32>
    %50 = math.sqrt %49 : vector<16x1xf32>
    %51 = vector.broadcast %42 : vector<1x8xf32> to vector<16x8xf32>
    %52 = vector.broadcast %50 : vector<16x1xf32> to vector<16x8xf32>
    %53 = arith.mulf %51, %52 : vector<16x8xf32>
    %54 = math.sin %53 : vector<16x8xf32>
    %cst_37 = arith.constant 0.632455527 : f32
    %55 = vector.broadcast %cst_37 : f32 to vector<16x8xf32>
    %56 = arith.mulf %55, %54 : vector<16x8xf32>
    %57 = vector.broadcast %50 : vector<16x1xf32> to vector<16x8xf32>
    %58 = arith.divf %56, %57 : vector<16x8xf32>
    %c0_38 = arith.constant 0 : index
    %c0_39 = arith.constant 0 : index
    %c0_40 = arith.constant 0 : index
    %59 = vector.load %arg15[%c0_38, %c0_39, %c0_40] : memref<3x32x64xbf16, #tpu.memory_space<vmem>>, vector<1x32x64xbf16>
    %60 = vector.shape_cast %59 : vector<1x32x64xbf16> to vector<32x64xbf16>
    %61 = arith.truncf %44 : vector<16x32xf32> to vector<16x32xbf16>
    %cst_41 = arith.constant dense<0.000000e+00> : vector<16x64xf32>
    %62 = tpu.matmul %61, %60, %cst_41 {dimension_numbers = #tpu.dot_dimension_numbers<[1], [0], [0], [1], [0, 0, 1, 1], [], []>} : vector<16x32xbf16>, vector<32x64xbf16>, vector<16x64xf32> -> vector<16x64xf32>
    %c0_42 = arith.constant 0 : index
    %c0_43 = arith.constant 0 : index
    %c0_44 = arith.constant 0 : index
    %63 = vector.load %arg16[%c0_42, %c0_43, %c0_44] : memref<3x32x64xbf16, #tpu.memory_space<vmem>>, vector<1x32x64xbf16>
    %64 = vector.shape_cast %63 : vector<1x32x64xbf16> to vector<32x64xbf16>
    %65 = arith.truncf %45 : vector<16x32xf32> to vector<16x32xbf16>
    %cst_45 = arith.constant dense<0.000000e+00> : vector<16x64xf32>
    %66 = tpu.matmul %65, %64, %cst_45 {dimension_numbers = #tpu.dot_dimension_numbers<[1], [0], [0], [1], [0, 0, 1, 1], [], []>} : vector<16x32xbf16>, vector<32x64xbf16>, vector<16x64xf32> -> vector<16x64xf32>
    %67 = arith.addf %62, %66 : vector<16x64xf32>
    %c0_46 = arith.constant 0 : index
    %c0_47 = arith.constant 0 : index
    %c0_48 = arith.constant 0 : index
    %68 = vector.load %arg17[%c0_46, %c0_47, %c0_48] : memref<3x1x64xf32, #tpu.memory_space<vmem>>, vector<1x1x64xf32>
    %69 = vector.shape_cast %68 : vector<1x1x64xf32> to vector<1x64xf32>
    %70 = vector.broadcast %50 : vector<16x1xf32> to vector<16x64xf32>
    %71 = vector.broadcast %69 : vector<1x64xf32> to vector<16x64xf32>
    %72 = arith.mulf %70, %71 : vector<16x64xf32>
    %73 = arith.addf %67, %72 : vector<16x64xf32>
    %c0_49 = arith.constant 0 : index
    %c0_50 = arith.constant 0 : index
    %c0_51 = arith.constant 0 : index
    %74 = vector.load %arg18[%c0_49, %c0_50, %c0_51] : memref<3x8x64xbf16, #tpu.memory_space<vmem>>, vector<1x8x64xbf16>
    %75 = vector.shape_cast %74 : vector<1x8x64xbf16> to vector<8x64xbf16>
    %76 = arith.truncf %58 : vector<16x8xf32> to vector<16x8xbf16>
    %cst_52 = arith.constant dense<0.000000e+00> : vector<16x64xf32>
    %77 = tpu.matmul %76, %75, %cst_52 {dimension_numbers = #tpu.dot_dimension_numbers<[1], [0], [0], [1], [0, 0, 1, 1], [], []>} : vector<16x8xbf16>, vector<8x64xbf16>, vector<16x64xf32> -> vector<16x64xf32>
    %78 = arith.addf %73, %77 : vector<16x64xf32>
    %c0_53 = arith.constant 0 : index
    %c0_54 = arith.constant 0 : index
    %c0_55 = arith.constant 0 : index
    %79 = vector.load %arg19[%c0_53, %c0_54, %c0_55] : memref<3x32x64xbf16, #tpu.memory_space<vmem>>, vector<1x32x64xbf16>
    %80 = vector.shape_cast %79 : vector<1x32x64xbf16> to vector<32x64xbf16>
    %81 = arith.truncf %37 : vector<16x32xf32> to vector<16x32xbf16>
    %cst_56 = arith.constant dense<0.000000e+00> : vector<16x64xf32>
    %82 = tpu.matmul %81, %80, %cst_56 {dimension_numbers = #tpu.dot_dimension_numbers<[1], [0], [0], [1], [0, 0, 1, 1], [], []>} : vector<16x32xbf16>, vector<32x64xbf16>, vector<16x64xf32> -> vector<16x64xf32>
    %83 = arith.addf %78, %82 : vector<16x64xf32>
    %c0_57 = arith.constant 0 : index
    %c0_58 = arith.constant 0 : index
    %c0_59 = arith.constant 0 : index
    %84 = vector.load %arg20[%c0_57, %c0_58, %c0_59] : memref<3x1x64xf32, #tpu.memory_space<vmem>>, vector<1x1x64xf32>
    %85 = vector.shape_cast %84 : vector<1x1x64xf32> to vector<1x64xf32>
    %86 = vector.broadcast %85 : vector<1x64xf32> to vector<16x64xf32>
    %87 = arith.addf %83, %86 : vector<16x64xf32>
    %88 = vector.extract_strided_slice %87 {offsets = [0, 0], sizes = [16, 32], strides = [1, 1]} : vector<16x64xf32> to vector<16x32xf32>
    %89 = arith.negf %88 : vector<16x32xf32>
    %90 = math.exp %89 : vector<16x32xf32>
    %cst_60 = arith.constant 1.000000e+00 : f32
    %91 = vector.broadcast %cst_60 : f32 to vector<16x32xf32>
    %92 = arith.addf %91, %90 : vector<16x32xf32>
    %93 = arith.divf %91, %92 : vector<16x32xf32>
    %94 = arith.mulf %88, %93 : vector<16x32xf32>
    %c0_61 = arith.constant 0 : index
    %c0_62 = arith.constant 0 : index
    %c0_63 = arith.constant 0 : index
    %95 = vector.load %arg23[%c0_61, %c0_62, %c0_63] : memref<3x32x32xbf16, #tpu.memory_space<vmem>>, vector<1x32x32xbf16>
    %96 = vector.shape_cast %95 : vector<1x32x32xbf16> to vector<32x32xbf16>
    %97 = arith.truncf %94 : vector<16x32xf32> to vector<16x32xbf16>
    %cst_64 = arith.constant dense<0.000000e+00> : vector<16x32xf32>
    %98 = tpu.matmul %97, %96, %cst_64 {dimension_numbers = #tpu.dot_dimension_numbers<[1], [0], [0], [1], [0, 0, 1, 1], [], []>} : vector<16x32xbf16>, vector<32x32xbf16>, vector<16x32xf32> -> vector<16x32xf32>
    %c0_65 = arith.constant 0 : index
    %c0_66 = arith.constant 0 : index
    %c0_67 = arith.constant 0 : index
    %99 = vector.load %arg24[%c0_65, %c0_66, %c0_67] : memref<3x1x32xf32, #tpu.memory_space<vmem>>, vector<1x1x32xf32>
    %100 = vector.shape_cast %99 : vector<1x1x32xf32> to vector<1x32xf32>
    %101 = vector.broadcast %100 : vector<1x32xf32> to vector<16x32xf32>
    %102 = arith.addf %98, %101 : vector<16x32xf32>
    %c0_68 = arith.constant 0 : index
    %c0_69 = arith.constant 0 : index
    %c0_70 = arith.constant 0 : index
    %103 = vector.load %arg21[%c0_68, %c0_69, %c0_70] : memref<3x32x96xbf16, #tpu.memory_space<vmem>>, vector<1x32x96xbf16>
    %104 = vector.shape_cast %103 : vector<1x32x96xbf16> to vector<32x96xbf16>
    %105 = arith.truncf %102 : vector<16x32xf32> to vector<16x32xbf16>
    %cst_71 = arith.constant dense<0.000000e+00> : vector<16x96xf32>
    %106 = tpu.matmul %105, %104, %cst_71 {dimension_numbers = #tpu.dot_dimension_numbers<[1], [0], [0], [1], [0, 0, 1, 1], [], []>} : vector<16x32xbf16>, vector<32x96xbf16>, vector<16x96xf32> -> vector<16x96xf32>
    %107 = vector.extract_strided_slice %87 {offsets = [0, 32], sizes = [16, 32], strides = [1, 1]} : vector<16x64xf32> to vector<16x32xf32>
    %108 = vector.extract_strided_slice %106 {offsets = [0, 0], sizes = [16, 32], strides = [1, 1]} : vector<16x96xf32> to vector<16x32xf32>
    %109 = arith.addf %107, %108 : vector<16x32xf32>
    %110 = arith.negf %109 : vector<16x32xf32>
    %111 = math.exp %110 : vector<16x32xf32>
    %cst_72 = arith.constant 1.000000e+00 : f32
    %112 = vector.broadcast %cst_72 : f32 to vector<16x32xf32>
    %113 = arith.addf %112, %111 : vector<16x32xf32>
    %114 = arith.divf %112, %113 : vector<16x32xf32>
    %115 = arith.mulf %109, %114 : vector<16x32xf32>
    %c0_73 = arith.constant 0 : index
    %c0_74 = arith.constant 0 : index
    %c0_75 = arith.constant 0 : index
    %116 = vector.load %arg25[%c0_73, %c0_74, %c0_75] : memref<3x32x32xbf16, #tpu.memory_space<vmem>>, vector<1x32x32xbf16>
    %117 = vector.shape_cast %116 : vector<1x32x32xbf16> to vector<32x32xbf16>
    %118 = arith.truncf %115 : vector<16x32xf32> to vector<16x32xbf16>
    %cst_76 = arith.constant dense<0.000000e+00> : vector<16x32xf32>
    %119 = tpu.matmul %118, %117, %cst_76 {dimension_numbers = #tpu.dot_dimension_numbers<[1], [0], [0], [1], [0, 0, 1, 1], [], []>} : vector<16x32xbf16>, vector<32x32xbf16>, vector<16x32xf32> -> vector<16x32xf32>
    %c0_77 = arith.constant 0 : index
    %c0_78 = arith.constant 0 : index
    %c0_79 = arith.constant 0 : index
    %120 = vector.load %arg26[%c0_77, %c0_78, %c0_79] : memref<3x1x32xf32, #tpu.memory_space<vmem>>, vector<1x1x32xf32>
    %121 = vector.shape_cast %120 : vector<1x1x32xf32> to vector<1x32xf32>
    %122 = vector.broadcast %121 : vector<1x32xf32> to vector<16x32xf32>
    %123 = arith.addf %119, %122 : vector<16x32xf32>
    %124 = vector.extract_strided_slice %106 {offsets = [0, 32], sizes = [16, 64], strides = [1, 1]} : vector<16x96xf32> to vector<16x64xf32>
    %c0_80 = arith.constant 0 : index
    %c0_81 = arith.constant 0 : index
    %c0_82 = arith.constant 0 : index
    %125 = vector.load %arg22[%c0_80, %c0_81, %c0_82] : memref<3x1x64xf32, #tpu.memory_space<vmem>>, vector<1x1x64xf32>
    %126 = vector.shape_cast %125 : vector<1x1x64xf32> to vector<1x64xf32>
    %127 = vector.broadcast %126 : vector<1x64xf32> to vector<16x64xf32>
    %128 = arith.addf %124, %127 : vector<16x64xf32>
    %129 = arith.negf %128 : vector<16x64xf32>
    %130 = math.exp %129 : vector<16x64xf32>
    %cst_83 = arith.constant 1.000000e+00 : f32
    %131 = vector.broadcast %cst_83 : f32 to vector<16x64xf32>
    %132 = arith.addf %131, %130 : vector<16x64xf32>
    %133 = arith.divf %131, %132 : vector<16x64xf32>
    %134 = arith.mulf %128, %133 : vector<16x64xf32>
    %c0_84 = arith.constant 0 : index
    %c0_85 = arith.constant 0 : index
    %c0_86 = arith.constant 0 : index
    %135 = vector.load %arg27[%c0_84, %c0_85, %c0_86] : memref<3x64x2xbf16, #tpu.memory_space<vmem>>, vector<1x64x2xbf16>
    %136 = vector.shape_cast %135 : vector<1x64x2xbf16> to vector<64x2xbf16>
    %137 = arith.truncf %134 : vector<16x64xf32> to vector<16x64xbf16>
    %cst_87 = arith.constant dense<0.000000e+00> : vector<16x2xf32>
    %138 = tpu.matmul %137, %136, %cst_87 {dimension_numbers = #tpu.dot_dimension_numbers<[1], [0], [0], [1], [0, 0, 1, 1], [], []>} : vector<16x64xbf16>, vector<64x2xbf16>, vector<16x2xf32> -> vector<16x2xf32>
    %c0_88 = arith.constant 0 : index
    %c0_89 = arith.constant 0 : index
    %c0_90 = arith.constant 0 : index
    %139 = vector.load %arg28[%c0_88, %c0_89, %c0_90] : memref<3x1x2xf32, #tpu.memory_space<vmem>>, vector<1x1x2xf32>
    %140 = vector.shape_cast %139 : vector<1x1x2xf32> to vector<1x2xf32>
    %141 = vector.broadcast %140 : vector<1x2xf32> to vector<16x2xf32>
    %142 = arith.addf %138, %141 : vector<16x2xf32>
    %143 = vector.extract_strided_slice %142 {offsets = [0, 0], sizes = [16, 1], strides = [1, 1]} : vector<16x2xf32> to vector<16x1xf32>
    %144 = arith.negf %143 : vector<16x1xf32>
    %145 = math.exp %144 : vector<16x1xf32>
    %cst_91 = arith.constant 1.000000e+00 : f32
    %146 = vector.broadcast %cst_91 : f32 to vector<16x1xf32>
    %147 = arith.addf %146, %145 : vector<16x1xf32>
    %148 = arith.divf %146, %147 : vector<16x1xf32>
    %149 = vector.extract_strided_slice %142 {offsets = [0, 1], sizes = [16, 1], strides = [1, 1]} : vector<16x2xf32> to vector<16x1xf32>
    %150 = vector.broadcast %148 : vector<16x1xf32> to vector<16x32xf32>
    %151 = arith.mulf %102, %150 : vector<16x32xf32>
    %cst_92 = arith.constant 1.000000e+00 : f32
    %152 = vector.broadcast %cst_92 : f32 to vector<16x1xf32>
    %153 = arith.addf %50, %152 : vector<16x1xf32>
    %154 = vector.broadcast %153 : vector<16x1xf32> to vector<16x3xf32>
    %155 = arith.divf %46, %154 : vector<16x3xf32>
    %156 = vector.broadcast %149 : vector<16x1xf32> to vector<16x3xf32>
    %157 = arith.mulf %155, %156 : vector<16x3xf32>
    %cst_93 = arith.constant dense<0.000000e+00> : vector<8x32xf32>
    %158 = tpu.matmul %41, %151, %cst_93 {dimension_numbers = #tpu.dot_dimension_numbers<[1], [0], [0], [1], [0, 0, 1, 1], [], []>, precision = #tpu.contract_precision<fp32>} : vector<8x16xf32>, vector<16x32xf32>, vector<8x32xf32> -> vector<8x32xf32>
    %cst_94 = arith.constant dense<0.000000e+00> : vector<8x3xf32>
    %159 = tpu.matmul %41, %157, %cst_94 {dimension_numbers = #tpu.dot_dimension_numbers<[1], [0], [0], [1], [0, 0, 1, 1], [], []>, precision = #tpu.contract_precision<fp32>} : vector<8x16xf32>, vector<16x3xf32>, vector<8x3xf32> -> vector<8x3xf32>
    %c0_95 = arith.constant 0 : index
    %c0_96 = arith.constant 0 : index
    %c0_97 = arith.constant 0 : index
    %160 = vector.load %arg29[%c0_95, %c0_96, %c0_97] : memref<3x32x32xbf16, #tpu.memory_space<vmem>>, vector<1x32x32xbf16>
    %161 = vector.shape_cast %160 : vector<1x32x32xbf16> to vector<32x32xbf16>
    %162 = arith.truncf %18 : vector<8x32xf32> to vector<8x32xbf16>
    %cst_98 = arith.constant dense<0.000000e+00> : vector<8x32xf32>
    %163 = tpu.matmul %162, %161, %cst_98 {dimension_numbers = #tpu.dot_dimension_numbers<[1], [0], [0], [1], [0, 0, 1, 1], [], []>} : vector<8x32xbf16>, vector<32x32xbf16>, vector<8x32xf32> -> vector<8x32xf32>
    %c0_99 = arith.constant 0 : index
    %c0_100 = arith.constant 0 : index
    %c0_101 = arith.constant 0 : index
    %164 = vector.load %arg30[%c0_99, %c0_100, %c0_101] : memref<3x32x32xbf16, #tpu.memory_space<vmem>>, vector<1x32x32xbf16>
    %165 = vector.shape_cast %164 : vector<1x32x32xbf16> to vector<32x32xbf16>
    %166 = arith.truncf %158 : vector<8x32xf32> to vector<8x32xbf16>
    %cst_102 = arith.constant dense<0.000000e+00> : vector<8x32xf32>
    %167 = tpu.matmul %166, %165, %cst_102 {dimension_numbers = #tpu.dot_dimension_numbers<[1], [0], [0], [1], [0, 0, 1, 1], [], []>} : vector<8x32xbf16>, vector<32x32xbf16>, vector<8x32xf32> -> vector<8x32xf32>
    %168 = arith.addf %163, %167 : vector<8x32xf32>
    %c0_103 = arith.constant 0 : index
    %c0_104 = arith.constant 0 : index
    %c0_105 = arith.constant 0 : index
    %169 = vector.load %arg31[%c0_103, %c0_104, %c0_105] : memref<3x1x32xf32, #tpu.memory_space<vmem>>, vector<1x1x32xf32>
    %170 = vector.shape_cast %169 : vector<1x1x32xf32> to vector<1x32xf32>
    %171 = vector.broadcast %170 : vector<1x32xf32> to vector<8x32xf32>
    %172 = arith.addf %168, %171 : vector<8x32xf32>
    %173 = arith.negf %172 : vector<8x32xf32>
    %174 = math.exp %173 : vector<8x32xf32>
    %cst_106 = arith.constant 1.000000e+00 : f32
    %175 = vector.broadcast %cst_106 : f32 to vector<8x32xf32>
    %176 = arith.addf %175, %174 : vector<8x32xf32>
    %177 = arith.divf %175, %176 : vector<8x32xf32>
    %178 = arith.mulf %172, %177 : vector<8x32xf32>
    %c0_107 = arith.constant 0 : index
    %c0_108 = arith.constant 0 : index
    %c0_109 = arith.constant 0 : index
    %179 = vector.load %arg32[%c0_107, %c0_108, %c0_109] : memref<3x32x32xbf16, #tpu.memory_space<vmem>>, vector<1x32x32xbf16>
    %180 = vector.shape_cast %179 : vector<1x32x32xbf16> to vector<32x32xbf16>
    %181 = arith.truncf %178 : vector<8x32xf32> to vector<8x32xbf16>
    %cst_110 = arith.constant dense<0.000000e+00> : vector<8x32xf32>
    %182 = tpu.matmul %181, %180, %cst_110 {dimension_numbers = #tpu.dot_dimension_numbers<[1], [0], [0], [1], [0, 0, 1, 1], [], []>} : vector<8x32xbf16>, vector<32x32xbf16>, vector<8x32xf32> -> vector<8x32xf32>
    %c0_111 = arith.constant 0 : index
    %c0_112 = arith.constant 0 : index
    %c0_113 = arith.constant 0 : index
    %183 = vector.load %arg33[%c0_111, %c0_112, %c0_113] : memref<3x1x32xf32, #tpu.memory_space<vmem>>, vector<1x1x32xf32>
    %184 = vector.shape_cast %183 : vector<1x1x32xf32> to vector<1x32xf32>
    %185 = vector.broadcast %184 : vector<1x32xf32> to vector<8x32xf32>
    %186 = arith.addf %182, %185 : vector<8x32xf32>
    %187 = arith.addf %186, %18 : vector<8x32xf32>
    %188 = arith.addf %38, %159 : vector<8x3xf32>
    %cst_114 = arith.constant dense<0.000000e+00> : vector<32x32xf32>
    %189 = tpu.matmul %39, %187, %cst_114 {dimension_numbers = #tpu.dot_dimension_numbers<[1], [0], [0], [1], [0, 0, 1, 1], [], []>, precision = #tpu.contract_precision<fp32>} : vector<32x8xf32>, vector<8x32xf32>, vector<32x32xf32> -> vector<32x32xf32>
    %190 = vector.extract_strided_slice %189 {offsets = [0, 0], sizes = [16, 32], strides = [1, 1]} : vector<32x32xf32> to vector<16x32xf32>
    %191 = vector.extract_strided_slice %189 {offsets = [16, 0], sizes = [16, 32], strides = [1, 1]} : vector<32x32xf32> to vector<16x32xf32>
    %cst_115 = arith.constant dense<0.000000e+00> : vector<16x3xf32>
    %192 = tpu.matmul %40, %188, %cst_115 {dimension_numbers = #tpu.dot_dimension_numbers<[1], [0], [0], [1], [0, 0, 1, 1], [], []>, precision = #tpu.contract_precision<fp32>} : vector<16x8xf32>, vector<8x3xf32>, vector<16x3xf32> -> vector<16x3xf32>
    %193 = arith.mulf %192, %192 : vector<16x3xf32>
    %cst_116 = arith.constant dense<0.000000e+00> : vector<16xf32>
    %194 = vector.multi_reduction <add>, %193, %cst_116 [1] : vector<16x3xf32> to vector<16xf32>
    %195 = vector.shape_cast %194 : vector<16xf32> to vector<16x1xf32>
    %196 = math.sqrt %195 : vector<16x1xf32>
    %197 = vector.broadcast %42 : vector<1x8xf32> to vector<16x8xf32>
    %198 = vector.broadcast %196 : vector<16x1xf32> to vector<16x8xf32>
    %199 = arith.mulf %197, %198 : vector<16x8xf32>
    %200 = math.sin %199 : vector<16x8xf32>
    %cst_117 = arith.constant 0.632455527 : f32
    %201 = vector.broadcast %cst_117 : f32 to vector<16x8xf32>
    %202 = arith.mulf %201, %200 : vector<16x8xf32>
    %203 = vector.broadcast %196 : vector<16x1xf32> to vector<16x8xf32>
    %204 = arith.divf %202, %203 : vector<16x8xf32>
    %c1 = arith.constant 1 : index
    %c0_118 = arith.constant 0 : index
    %c0_119 = arith.constant 0 : index
    %205 = vector.load %arg15[%c1, %c0_118, %c0_119] : memref<3x32x64xbf16, #tpu.memory_space<vmem>>, vector<1x32x64xbf16>
    %206 = vector.shape_cast %205 : vector<1x32x64xbf16> to vector<32x64xbf16>
    %207 = arith.truncf %190 : vector<16x32xf32> to vector<16x32xbf16>
    %cst_120 = arith.constant dense<0.000000e+00> : vector<16x64xf32>
    %208 = tpu.matmul %207, %206, %cst_120 {dimension_numbers = #tpu.dot_dimension_numbers<[1], [0], [0], [1], [0, 0, 1, 1], [], []>} : vector<16x32xbf16>, vector<32x64xbf16>, vector<16x64xf32> -> vector<16x64xf32>
    %c1_121 = arith.constant 1 : index
    %c0_122 = arith.constant 0 : index
    %c0_123 = arith.constant 0 : index
    %209 = vector.load %arg16[%c1_121, %c0_122, %c0_123] : memref<3x32x64xbf16, #tpu.memory_space<vmem>>, vector<1x32x64xbf16>
    %210 = vector.shape_cast %209 : vector<1x32x64xbf16> to vector<32x64xbf16>
    %211 = arith.truncf %191 : vector<16x32xf32> to vector<16x32xbf16>
    %cst_124 = arith.constant dense<0.000000e+00> : vector<16x64xf32>
    %212 = tpu.matmul %211, %210, %cst_124 {dimension_numbers = #tpu.dot_dimension_numbers<[1], [0], [0], [1], [0, 0, 1, 1], [], []>} : vector<16x32xbf16>, vector<32x64xbf16>, vector<16x64xf32> -> vector<16x64xf32>
    %213 = arith.addf %208, %212 : vector<16x64xf32>
    %c1_125 = arith.constant 1 : index
    %c0_126 = arith.constant 0 : index
    %c0_127 = arith.constant 0 : index
    %214 = vector.load %arg17[%c1_125, %c0_126, %c0_127] : memref<3x1x64xf32, #tpu.memory_space<vmem>>, vector<1x1x64xf32>
    %215 = vector.shape_cast %214 : vector<1x1x64xf32> to vector<1x64xf32>
    %216 = vector.broadcast %196 : vector<16x1xf32> to vector<16x64xf32>
    %217 = vector.broadcast %215 : vector<1x64xf32> to vector<16x64xf32>
    %218 = arith.mulf %216, %217 : vector<16x64xf32>
    %219 = arith.addf %213, %218 : vector<16x64xf32>
    %c1_128 = arith.constant 1 : index
    %c0_129 = arith.constant 0 : index
    %c0_130 = arith.constant 0 : index
    %220 = vector.load %arg18[%c1_128, %c0_129, %c0_130] : memref<3x8x64xbf16, #tpu.memory_space<vmem>>, vector<1x8x64xbf16>
    %221 = vector.shape_cast %220 : vector<1x8x64xbf16> to vector<8x64xbf16>
    %222 = arith.truncf %204 : vector<16x8xf32> to vector<16x8xbf16>
    %cst_131 = arith.constant dense<0.000000e+00> : vector<16x64xf32>
    %223 = tpu.matmul %222, %221, %cst_131 {dimension_numbers = #tpu.dot_dimension_numbers<[1], [0], [0], [1], [0, 0, 1, 1], [], []>} : vector<16x8xbf16>, vector<8x64xbf16>, vector<16x64xf32> -> vector<16x64xf32>
    %224 = arith.addf %219, %223 : vector<16x64xf32>
    %c1_132 = arith.constant 1 : index
    %c0_133 = arith.constant 0 : index
    %c0_134 = arith.constant 0 : index
    %225 = vector.load %arg19[%c1_132, %c0_133, %c0_134] : memref<3x32x64xbf16, #tpu.memory_space<vmem>>, vector<1x32x64xbf16>
    %226 = vector.shape_cast %225 : vector<1x32x64xbf16> to vector<32x64xbf16>
    %227 = arith.truncf %123 : vector<16x32xf32> to vector<16x32xbf16>
    %cst_135 = arith.constant dense<0.000000e+00> : vector<16x64xf32>
    %228 = tpu.matmul %227, %226, %cst_135 {dimension_numbers = #tpu.dot_dimension_numbers<[1], [0], [0], [1], [0, 0, 1, 1], [], []>} : vector<16x32xbf16>, vector<32x64xbf16>, vector<16x64xf32> -> vector<16x64xf32>
    %229 = arith.addf %224, %228 : vector<16x64xf32>
    %c1_136 = arith.constant 1 : index
    %c0_137 = arith.constant 0 : index
    %c0_138 = arith.constant 0 : index
    %230 = vector.load %arg20[%c1_136, %c0_137, %c0_138] : memref<3x1x64xf32, #tpu.memory_space<vmem>>, vector<1x1x64xf32>
    %231 = vector.shape_cast %230 : vector<1x1x64xf32> to vector<1x64xf32>
    %232 = vector.broadcast %231 : vector<1x64xf32> to vector<16x64xf32>
    %233 = arith.addf %229, %232 : vector<16x64xf32>
    %234 = vector.extract_strided_slice %233 {offsets = [0, 0], sizes = [16, 32], strides = [1, 1]} : vector<16x64xf32> to vector<16x32xf32>
    %235 = arith.negf %234 : vector<16x32xf32>
    %236 = math.exp %235 : vector<16x32xf32>
    %cst_139 = arith.constant 1.000000e+00 : f32
    %237 = vector.broadcast %cst_139 : f32 to vector<16x32xf32>
    %238 = arith.addf %237, %236 : vector<16x32xf32>
    %239 = arith.divf %237, %238 : vector<16x32xf32>
    %240 = arith.mulf %234, %239 : vector<16x32xf32>
    %c1_140 = arith.constant 1 : index
    %c0_141 = arith.constant 0 : index
    %c0_142 = arith.constant 0 : index
    %241 = vector.load %arg23[%c1_140, %c0_141, %c0_142] : memref<3x32x32xbf16, #tpu.memory_space<vmem>>, vector<1x32x32xbf16>
    %242 = vector.shape_cast %241 : vector<1x32x32xbf16> to vector<32x32xbf16>
    %243 = arith.truncf %240 : vector<16x32xf32> to vector<16x32xbf16>
    %cst_143 = arith.constant dense<0.000000e+00> : vector<16x32xf32>
    %244 = tpu.matmul %243, %242, %cst_143 {dimension_numbers = #tpu.dot_dimension_numbers<[1], [0], [0], [1], [0, 0, 1, 1], [], []>} : vector<16x32xbf16>, vector<32x32xbf16>, vector<16x32xf32> -> vector<16x32xf32>
    %c1_144 = arith.constant 1 : index
    %c0_145 = arith.constant 0 : index
    %c0_146 = arith.constant 0 : index
    %245 = vector.load %arg24[%c1_144, %c0_145, %c0_146] : memref<3x1x32xf32, #tpu.memory_space<vmem>>, vector<1x1x32xf32>
    %246 = vector.shape_cast %245 : vector<1x1x32xf32> to vector<1x32xf32>
    %247 = vector.broadcast %246 : vector<1x32xf32> to vector<16x32xf32>
    %248 = arith.addf %244, %247 : vector<16x32xf32>
    %c1_147 = arith.constant 1 : index
    %c0_148 = arith.constant 0 : index
    %c0_149 = arith.constant 0 : index
    %249 = vector.load %arg21[%c1_147, %c0_148, %c0_149] : memref<3x32x96xbf16, #tpu.memory_space<vmem>>, vector<1x32x96xbf16>
    %250 = vector.shape_cast %249 : vector<1x32x96xbf16> to vector<32x96xbf16>
    %251 = arith.truncf %248 : vector<16x32xf32> to vector<16x32xbf16>
    %cst_150 = arith.constant dense<0.000000e+00> : vector<16x96xf32>
    %252 = tpu.matmul %251, %250, %cst_150 {dimension_numbers = #tpu.dot_dimension_numbers<[1], [0], [0], [1], [0, 0, 1, 1], [], []>} : vector<16x32xbf16>, vector<32x96xbf16>, vector<16x96xf32> -> vector<16x96xf32>
    %253 = vector.extract_strided_slice %233 {offsets = [0, 32], sizes = [16, 32], strides = [1, 1]} : vector<16x64xf32> to vector<16x32xf32>
    %254 = vector.extract_strided_slice %252 {offsets = [0, 0], sizes = [16, 32], strides = [1, 1]} : vector<16x96xf32> to vector<16x32xf32>
    %255 = arith.addf %253, %254 : vector<16x32xf32>
    %256 = arith.negf %255 : vector<16x32xf32>
    %257 = math.exp %256 : vector<16x32xf32>
    %cst_151 = arith.constant 1.000000e+00 : f32
    %258 = vector.broadcast %cst_151 : f32 to vector<16x32xf32>
    %259 = arith.addf %258, %257 : vector<16x32xf32>
    %260 = arith.divf %258, %259 : vector<16x32xf32>
    %261 = arith.mulf %255, %260 : vector<16x32xf32>
    %c1_152 = arith.constant 1 : index
    %c0_153 = arith.constant 0 : index
    %c0_154 = arith.constant 0 : index
    %262 = vector.load %arg25[%c1_152, %c0_153, %c0_154] : memref<3x32x32xbf16, #tpu.memory_space<vmem>>, vector<1x32x32xbf16>
    %263 = vector.shape_cast %262 : vector<1x32x32xbf16> to vector<32x32xbf16>
    %264 = arith.truncf %261 : vector<16x32xf32> to vector<16x32xbf16>
    %cst_155 = arith.constant dense<0.000000e+00> : vector<16x32xf32>
    %265 = tpu.matmul %264, %263, %cst_155 {dimension_numbers = #tpu.dot_dimension_numbers<[1], [0], [0], [1], [0, 0, 1, 1], [], []>} : vector<16x32xbf16>, vector<32x32xbf16>, vector<16x32xf32> -> vector<16x32xf32>
    %c1_156 = arith.constant 1 : index
    %c0_157 = arith.constant 0 : index
    %c0_158 = arith.constant 0 : index
    %266 = vector.load %arg26[%c1_156, %c0_157, %c0_158] : memref<3x1x32xf32, #tpu.memory_space<vmem>>, vector<1x1x32xf32>
    %267 = vector.shape_cast %266 : vector<1x1x32xf32> to vector<1x32xf32>
    %268 = vector.broadcast %267 : vector<1x32xf32> to vector<16x32xf32>
    %269 = arith.addf %265, %268 : vector<16x32xf32>
    %270 = vector.extract_strided_slice %252 {offsets = [0, 32], sizes = [16, 64], strides = [1, 1]} : vector<16x96xf32> to vector<16x64xf32>
    %c1_159 = arith.constant 1 : index
    %c0_160 = arith.constant 0 : index
    %c0_161 = arith.constant 0 : index
    %271 = vector.load %arg22[%c1_159, %c0_160, %c0_161] : memref<3x1x64xf32, #tpu.memory_space<vmem>>, vector<1x1x64xf32>
    %272 = vector.shape_cast %271 : vector<1x1x64xf32> to vector<1x64xf32>
    %273 = vector.broadcast %272 : vector<1x64xf32> to vector<16x64xf32>
    %274 = arith.addf %270, %273 : vector<16x64xf32>
    %275 = arith.negf %274 : vector<16x64xf32>
    %276 = math.exp %275 : vector<16x64xf32>
    %cst_162 = arith.constant 1.000000e+00 : f32
    %277 = vector.broadcast %cst_162 : f32 to vector<16x64xf32>
    %278 = arith.addf %277, %276 : vector<16x64xf32>
    %279 = arith.divf %277, %278 : vector<16x64xf32>
    %280 = arith.mulf %274, %279 : vector<16x64xf32>
    %c1_163 = arith.constant 1 : index
    %c0_164 = arith.constant 0 : index
    %c0_165 = arith.constant 0 : index
    %281 = vector.load %arg27[%c1_163, %c0_164, %c0_165] : memref<3x64x2xbf16, #tpu.memory_space<vmem>>, vector<1x64x2xbf16>
    %282 = vector.shape_cast %281 : vector<1x64x2xbf16> to vector<64x2xbf16>
    %283 = arith.truncf %280 : vector<16x64xf32> to vector<16x64xbf16>
    %cst_166 = arith.constant dense<0.000000e+00> : vector<16x2xf32>
    %284 = tpu.matmul %283, %282, %cst_166 {dimension_numbers = #tpu.dot_dimension_numbers<[1], [0], [0], [1], [0, 0, 1, 1], [], []>} : vector<16x64xbf16>, vector<64x2xbf16>, vector<16x2xf32> -> vector<16x2xf32>
    %c1_167 = arith.constant 1 : index
    %c0_168 = arith.constant 0 : index
    %c0_169 = arith.constant 0 : index
    %285 = vector.load %arg28[%c1_167, %c0_168, %c0_169] : memref<3x1x2xf32, #tpu.memory_space<vmem>>, vector<1x1x2xf32>
    %286 = vector.shape_cast %285 : vector<1x1x2xf32> to vector<1x2xf32>
    %287 = vector.broadcast %286 : vector<1x2xf32> to vector<16x2xf32>
    %288 = arith.addf %284, %287 : vector<16x2xf32>
    %289 = vector.extract_strided_slice %288 {offsets = [0, 0], sizes = [16, 1], strides = [1, 1]} : vector<16x2xf32> to vector<16x1xf32>
    %290 = arith.negf %289 : vector<16x1xf32>
    %291 = math.exp %290 : vector<16x1xf32>
    %cst_170 = arith.constant 1.000000e+00 : f32
    %292 = vector.broadcast %cst_170 : f32 to vector<16x1xf32>
    %293 = arith.addf %292, %291 : vector<16x1xf32>
    %294 = arith.divf %292, %293 : vector<16x1xf32>
    %295 = vector.extract_strided_slice %288 {offsets = [0, 1], sizes = [16, 1], strides = [1, 1]} : vector<16x2xf32> to vector<16x1xf32>
    %296 = vector.broadcast %294 : vector<16x1xf32> to vector<16x32xf32>
    %297 = arith.mulf %248, %296 : vector<16x32xf32>
    %cst_171 = arith.constant 1.000000e+00 : f32
    %298 = vector.broadcast %cst_171 : f32 to vector<16x1xf32>
    %299 = arith.addf %196, %298 : vector<16x1xf32>
    %300 = vector.broadcast %299 : vector<16x1xf32> to vector<16x3xf32>
    %301 = arith.divf %192, %300 : vector<16x3xf32>
    %302 = vector.broadcast %295 : vector<16x1xf32> to vector<16x3xf32>
    %303 = arith.mulf %301, %302 : vector<16x3xf32>
    %cst_172 = arith.constant dense<0.000000e+00> : vector<8x32xf32>
    %304 = tpu.matmul %41, %297, %cst_172 {dimension_numbers = #tpu.dot_dimension_numbers<[1], [0], [0], [1], [0, 0, 1, 1], [], []>, precision = #tpu.contract_precision<fp32>} : vector<8x16xf32>, vector<16x32xf32>, vector<8x32xf32> -> vector<8x32xf32>
    %cst_173 = arith.constant dense<0.000000e+00> : vector<8x3xf32>
    %305 = tpu.matmul %41, %303, %cst_173 {dimension_numbers = #tpu.dot_dimension_numbers<[1], [0], [0], [1], [0, 0, 1, 1], [], []>, precision = #tpu.contract_precision<fp32>} : vector<8x16xf32>, vector<16x3xf32>, vector<8x3xf32> -> vector<8x3xf32>
    %c1_174 = arith.constant 1 : index
    %c0_175 = arith.constant 0 : index
    %c0_176 = arith.constant 0 : index
    %306 = vector.load %arg29[%c1_174, %c0_175, %c0_176] : memref<3x32x32xbf16, #tpu.memory_space<vmem>>, vector<1x32x32xbf16>
    %307 = vector.shape_cast %306 : vector<1x32x32xbf16> to vector<32x32xbf16>
    %308 = arith.truncf %187 : vector<8x32xf32> to vector<8x32xbf16>
    %cst_177 = arith.constant dense<0.000000e+00> : vector<8x32xf32>
    %309 = tpu.matmul %308, %307, %cst_177 {dimension_numbers = #tpu.dot_dimension_numbers<[1], [0], [0], [1], [0, 0, 1, 1], [], []>} : vector<8x32xbf16>, vector<32x32xbf16>, vector<8x32xf32> -> vector<8x32xf32>
    %c1_178 = arith.constant 1 : index
    %c0_179 = arith.constant 0 : index
    %c0_180 = arith.constant 0 : index
    %310 = vector.load %arg30[%c1_178, %c0_179, %c0_180] : memref<3x32x32xbf16, #tpu.memory_space<vmem>>, vector<1x32x32xbf16>
    %311 = vector.shape_cast %310 : vector<1x32x32xbf16> to vector<32x32xbf16>
    %312 = arith.truncf %304 : vector<8x32xf32> to vector<8x32xbf16>
    %cst_181 = arith.constant dense<0.000000e+00> : vector<8x32xf32>
    %313 = tpu.matmul %312, %311, %cst_181 {dimension_numbers = #tpu.dot_dimension_numbers<[1], [0], [0], [1], [0, 0, 1, 1], [], []>} : vector<8x32xbf16>, vector<32x32xbf16>, vector<8x32xf32> -> vector<8x32xf32>
    %314 = arith.addf %309, %313 : vector<8x32xf32>
    %c1_182 = arith.constant 1 : index
    %c0_183 = arith.constant 0 : index
    %c0_184 = arith.constant 0 : index
    %315 = vector.load %arg31[%c1_182, %c0_183, %c0_184] : memref<3x1x32xf32, #tpu.memory_space<vmem>>, vector<1x1x32xf32>
    %316 = vector.shape_cast %315 : vector<1x1x32xf32> to vector<1x32xf32>
    %317 = vector.broadcast %316 : vector<1x32xf32> to vector<8x32xf32>
    %318 = arith.addf %314, %317 : vector<8x32xf32>
    %319 = arith.negf %318 : vector<8x32xf32>
    %320 = math.exp %319 : vector<8x32xf32>
    %cst_185 = arith.constant 1.000000e+00 : f32
    %321 = vector.broadcast %cst_185 : f32 to vector<8x32xf32>
    %322 = arith.addf %321, %320 : vector<8x32xf32>
    %323 = arith.divf %321, %322 : vector<8x32xf32>
    %324 = arith.mulf %318, %323 : vector<8x32xf32>
    %c1_186 = arith.constant 1 : index
    %c0_187 = arith.constant 0 : index
    %c0_188 = arith.constant 0 : index
    %325 = vector.load %arg32[%c1_186, %c0_187, %c0_188] : memref<3x32x32xbf16, #tpu.memory_space<vmem>>, vector<1x32x32xbf16>
    %326 = vector.shape_cast %325 : vector<1x32x32xbf16> to vector<32x32xbf16>
    %327 = arith.truncf %324 : vector<8x32xf32> to vector<8x32xbf16>
    %cst_189 = arith.constant dense<0.000000e+00> : vector<8x32xf32>
    %328 = tpu.matmul %327, %326, %cst_189 {dimension_numbers = #tpu.dot_dimension_numbers<[1], [0], [0], [1], [0, 0, 1, 1], [], []>} : vector<8x32xbf16>, vector<32x32xbf16>, vector<8x32xf32> -> vector<8x32xf32>
    %c1_190 = arith.constant 1 : index
    %c0_191 = arith.constant 0 : index
    %c0_192 = arith.constant 0 : index
    %329 = vector.load %arg33[%c1_190, %c0_191, %c0_192] : memref<3x1x32xf32, #tpu.memory_space<vmem>>, vector<1x1x32xf32>
    %330 = vector.shape_cast %329 : vector<1x1x32xf32> to vector<1x32xf32>
    %331 = vector.broadcast %330 : vector<1x32xf32> to vector<8x32xf32>
    %332 = arith.addf %328, %331 : vector<8x32xf32>
    %333 = arith.addf %332, %187 : vector<8x32xf32>
    %334 = arith.addf %188, %305 : vector<8x3xf32>
    %cst_193 = arith.constant dense<0.000000e+00> : vector<32x32xf32>
    %335 = tpu.matmul %39, %333, %cst_193 {dimension_numbers = #tpu.dot_dimension_numbers<[1], [0], [0], [1], [0, 0, 1, 1], [], []>, precision = #tpu.contract_precision<fp32>} : vector<32x8xf32>, vector<8x32xf32>, vector<32x32xf32> -> vector<32x32xf32>
    %336 = vector.extract_strided_slice %335 {offsets = [0, 0], sizes = [16, 32], strides = [1, 1]} : vector<32x32xf32> to vector<16x32xf32>
    %337 = vector.extract_strided_slice %335 {offsets = [16, 0], sizes = [16, 32], strides = [1, 1]} : vector<32x32xf32> to vector<16x32xf32>
    %cst_194 = arith.constant dense<0.000000e+00> : vector<16x3xf32>
    %338 = tpu.matmul %40, %334, %cst_194 {dimension_numbers = #tpu.dot_dimension_numbers<[1], [0], [0], [1], [0, 0, 1, 1], [], []>, precision = #tpu.contract_precision<fp32>} : vector<16x8xf32>, vector<8x3xf32>, vector<16x3xf32> -> vector<16x3xf32>
    %339 = arith.mulf %338, %338 : vector<16x3xf32>
    %cst_195 = arith.constant dense<0.000000e+00> : vector<16xf32>
    %340 = vector.multi_reduction <add>, %339, %cst_195 [1] : vector<16x3xf32> to vector<16xf32>
    %341 = vector.shape_cast %340 : vector<16xf32> to vector<16x1xf32>
    %342 = math.sqrt %341 : vector<16x1xf32>
    %343 = vector.broadcast %42 : vector<1x8xf32> to vector<16x8xf32>
    %344 = vector.broadcast %342 : vector<16x1xf32> to vector<16x8xf32>
    %345 = arith.mulf %343, %344 : vector<16x8xf32>
    %346 = math.sin %345 : vector<16x8xf32>
    %cst_196 = arith.constant 0.632455527 : f32
    %347 = vector.broadcast %cst_196 : f32 to vector<16x8xf32>
    %348 = arith.mulf %347, %346 : vector<16x8xf32>
    %349 = vector.broadcast %342 : vector<16x1xf32> to vector<16x8xf32>
    %350 = arith.divf %348, %349 : vector<16x8xf32>
    %c2 = arith.constant 2 : index
    %c0_197 = arith.constant 0 : index
    %c0_198 = arith.constant 0 : index
    %351 = vector.load %arg15[%c2, %c0_197, %c0_198] : memref<3x32x64xbf16, #tpu.memory_space<vmem>>, vector<1x32x64xbf16>
    %352 = vector.shape_cast %351 : vector<1x32x64xbf16> to vector<32x64xbf16>
    %353 = arith.truncf %336 : vector<16x32xf32> to vector<16x32xbf16>
    %cst_199 = arith.constant dense<0.000000e+00> : vector<16x64xf32>
    %354 = tpu.matmul %353, %352, %cst_199 {dimension_numbers = #tpu.dot_dimension_numbers<[1], [0], [0], [1], [0, 0, 1, 1], [], []>} : vector<16x32xbf16>, vector<32x64xbf16>, vector<16x64xf32> -> vector<16x64xf32>
    %c2_200 = arith.constant 2 : index
    %c0_201 = arith.constant 0 : index
    %c0_202 = arith.constant 0 : index
    %355 = vector.load %arg16[%c2_200, %c0_201, %c0_202] : memref<3x32x64xbf16, #tpu.memory_space<vmem>>, vector<1x32x64xbf16>
    %356 = vector.shape_cast %355 : vector<1x32x64xbf16> to vector<32x64xbf16>
    %357 = arith.truncf %337 : vector<16x32xf32> to vector<16x32xbf16>
    %cst_203 = arith.constant dense<0.000000e+00> : vector<16x64xf32>
    %358 = tpu.matmul %357, %356, %cst_203 {dimension_numbers = #tpu.dot_dimension_numbers<[1], [0], [0], [1], [0, 0, 1, 1], [], []>} : vector<16x32xbf16>, vector<32x64xbf16>, vector<16x64xf32> -> vector<16x64xf32>
    %359 = arith.addf %354, %358 : vector<16x64xf32>
    %c2_204 = arith.constant 2 : index
    %c0_205 = arith.constant 0 : index
    %c0_206 = arith.constant 0 : index
    %360 = vector.load %arg17[%c2_204, %c0_205, %c0_206] : memref<3x1x64xf32, #tpu.memory_space<vmem>>, vector<1x1x64xf32>
    %361 = vector.shape_cast %360 : vector<1x1x64xf32> to vector<1x64xf32>
    %362 = vector.broadcast %342 : vector<16x1xf32> to vector<16x64xf32>
    %363 = vector.broadcast %361 : vector<1x64xf32> to vector<16x64xf32>
    %364 = arith.mulf %362, %363 : vector<16x64xf32>
    %365 = arith.addf %359, %364 : vector<16x64xf32>
    %c2_207 = arith.constant 2 : index
    %c0_208 = arith.constant 0 : index
    %c0_209 = arith.constant 0 : index
    %366 = vector.load %arg18[%c2_207, %c0_208, %c0_209] : memref<3x8x64xbf16, #tpu.memory_space<vmem>>, vector<1x8x64xbf16>
    %367 = vector.shape_cast %366 : vector<1x8x64xbf16> to vector<8x64xbf16>
    %368 = arith.truncf %350 : vector<16x8xf32> to vector<16x8xbf16>
    %cst_210 = arith.constant dense<0.000000e+00> : vector<16x64xf32>
    %369 = tpu.matmul %368, %367, %cst_210 {dimension_numbers = #tpu.dot_dimension_numbers<[1], [0], [0], [1], [0, 0, 1, 1], [], []>} : vector<16x8xbf16>, vector<8x64xbf16>, vector<16x64xf32> -> vector<16x64xf32>
    %370 = arith.addf %365, %369 : vector<16x64xf32>
    %c2_211 = arith.constant 2 : index
    %c0_212 = arith.constant 0 : index
    %c0_213 = arith.constant 0 : index
    %371 = vector.load %arg19[%c2_211, %c0_212, %c0_213] : memref<3x32x64xbf16, #tpu.memory_space<vmem>>, vector<1x32x64xbf16>
    %372 = vector.shape_cast %371 : vector<1x32x64xbf16> to vector<32x64xbf16>
    %373 = arith.truncf %269 : vector<16x32xf32> to vector<16x32xbf16>
    %cst_214 = arith.constant dense<0.000000e+00> : vector<16x64xf32>
    %374 = tpu.matmul %373, %372, %cst_214 {dimension_numbers = #tpu.dot_dimension_numbers<[1], [0], [0], [1], [0, 0, 1, 1], [], []>} : vector<16x32xbf16>, vector<32x64xbf16>, vector<16x64xf32> -> vector<16x64xf32>
    %375 = arith.addf %370, %374 : vector<16x64xf32>
    %c2_215 = arith.constant 2 : index
    %c0_216 = arith.constant 0 : index
    %c0_217 = arith.constant 0 : index
    %376 = vector.load %arg20[%c2_215, %c0_216, %c0_217] : memref<3x1x64xf32, #tpu.memory_space<vmem>>, vector<1x1x64xf32>
    %377 = vector.shape_cast %376 : vector<1x1x64xf32> to vector<1x64xf32>
    %378 = vector.broadcast %377 : vector<1x64xf32> to vector<16x64xf32>
    %379 = arith.addf %375, %378 : vector<16x64xf32>
    %380 = vector.extract_strided_slice %379 {offsets = [0, 0], sizes = [16, 32], strides = [1, 1]} : vector<16x64xf32> to vector<16x32xf32>
    %381 = arith.negf %380 : vector<16x32xf32>
    %382 = math.exp %381 : vector<16x32xf32>
    %cst_218 = arith.constant 1.000000e+00 : f32
    %383 = vector.broadcast %cst_218 : f32 to vector<16x32xf32>
    %384 = arith.addf %383, %382 : vector<16x32xf32>
    %385 = arith.divf %383, %384 : vector<16x32xf32>
    %386 = arith.mulf %380, %385 : vector<16x32xf32>
    %c2_219 = arith.constant 2 : index
    %c0_220 = arith.constant 0 : index
    %c0_221 = arith.constant 0 : index
    %387 = vector.load %arg23[%c2_219, %c0_220, %c0_221] : memref<3x32x32xbf16, #tpu.memory_space<vmem>>, vector<1x32x32xbf16>
    %388 = vector.shape_cast %387 : vector<1x32x32xbf16> to vector<32x32xbf16>
    %389 = arith.truncf %386 : vector<16x32xf32> to vector<16x32xbf16>
    %cst_222 = arith.constant dense<0.000000e+00> : vector<16x32xf32>
    %390 = tpu.matmul %389, %388, %cst_222 {dimension_numbers = #tpu.dot_dimension_numbers<[1], [0], [0], [1], [0, 0, 1, 1], [], []>} : vector<16x32xbf16>, vector<32x32xbf16>, vector<16x32xf32> -> vector<16x32xf32>
    %c2_223 = arith.constant 2 : index
    %c0_224 = arith.constant 0 : index
    %c0_225 = arith.constant 0 : index
    %391 = vector.load %arg24[%c2_223, %c0_224, %c0_225] : memref<3x1x32xf32, #tpu.memory_space<vmem>>, vector<1x1x32xf32>
    %392 = vector.shape_cast %391 : vector<1x1x32xf32> to vector<1x32xf32>
    %393 = vector.broadcast %392 : vector<1x32xf32> to vector<16x32xf32>
    %394 = arith.addf %390, %393 : vector<16x32xf32>
    %c2_226 = arith.constant 2 : index
    %c0_227 = arith.constant 0 : index
    %c0_228 = arith.constant 0 : index
    %395 = vector.load %arg21[%c2_226, %c0_227, %c0_228] : memref<3x32x96xbf16, #tpu.memory_space<vmem>>, vector<1x32x96xbf16>
    %396 = vector.shape_cast %395 : vector<1x32x96xbf16> to vector<32x96xbf16>
    %397 = arith.truncf %394 : vector<16x32xf32> to vector<16x32xbf16>
    %cst_229 = arith.constant dense<0.000000e+00> : vector<16x96xf32>
    %398 = tpu.matmul %397, %396, %cst_229 {dimension_numbers = #tpu.dot_dimension_numbers<[1], [0], [0], [1], [0, 0, 1, 1], [], []>} : vector<16x32xbf16>, vector<32x96xbf16>, vector<16x96xf32> -> vector<16x96xf32>
    %399 = vector.extract_strided_slice %379 {offsets = [0, 32], sizes = [16, 32], strides = [1, 1]} : vector<16x64xf32> to vector<16x32xf32>
    %400 = vector.extract_strided_slice %398 {offsets = [0, 0], sizes = [16, 32], strides = [1, 1]} : vector<16x96xf32> to vector<16x32xf32>
    %401 = arith.addf %399, %400 : vector<16x32xf32>
    %402 = arith.negf %401 : vector<16x32xf32>
    %403 = math.exp %402 : vector<16x32xf32>
    %cst_230 = arith.constant 1.000000e+00 : f32
    %404 = vector.broadcast %cst_230 : f32 to vector<16x32xf32>
    %405 = arith.addf %404, %403 : vector<16x32xf32>
    %406 = arith.divf %404, %405 : vector<16x32xf32>
    %407 = arith.mulf %401, %406 : vector<16x32xf32>
    %c2_231 = arith.constant 2 : index
    %c0_232 = arith.constant 0 : index
    %c0_233 = arith.constant 0 : index
    %408 = vector.load %arg25[%c2_231, %c0_232, %c0_233] : memref<3x32x32xbf16, #tpu.memory_space<vmem>>, vector<1x32x32xbf16>
    %409 = vector.shape_cast %408 : vector<1x32x32xbf16> to vector<32x32xbf16>
    %410 = arith.truncf %407 : vector<16x32xf32> to vector<16x32xbf16>
    %cst_234 = arith.constant dense<0.000000e+00> : vector<16x32xf32>
    %411 = tpu.matmul %410, %409, %cst_234 {dimension_numbers = #tpu.dot_dimension_numbers<[1], [0], [0], [1], [0, 0, 1, 1], [], []>} : vector<16x32xbf16>, vector<32x32xbf16>, vector<16x32xf32> -> vector<16x32xf32>
    %c2_235 = arith.constant 2 : index
    %c0_236 = arith.constant 0 : index
    %c0_237 = arith.constant 0 : index
    %412 = vector.load %arg26[%c2_235, %c0_236, %c0_237] : memref<3x1x32xf32, #tpu.memory_space<vmem>>, vector<1x1x32xf32>
    %413 = vector.shape_cast %412 : vector<1x1x32xf32> to vector<1x32xf32>
    %414 = vector.broadcast %413 : vector<1x32xf32> to vector<16x32xf32>
    %415 = arith.addf %411, %414 : vector<16x32xf32>
    %416 = vector.extract_strided_slice %398 {offsets = [0, 32], sizes = [16, 64], strides = [1, 1]} : vector<16x96xf32> to vector<16x64xf32>
    %c2_238 = arith.constant 2 : index
    %c0_239 = arith.constant 0 : index
    %c0_240 = arith.constant 0 : index
    %417 = vector.load %arg22[%c2_238, %c0_239, %c0_240] : memref<3x1x64xf32, #tpu.memory_space<vmem>>, vector<1x1x64xf32>
    %418 = vector.shape_cast %417 : vector<1x1x64xf32> to vector<1x64xf32>
    %419 = vector.broadcast %418 : vector<1x64xf32> to vector<16x64xf32>
    %420 = arith.addf %416, %419 : vector<16x64xf32>
    %421 = arith.negf %420 : vector<16x64xf32>
    %422 = math.exp %421 : vector<16x64xf32>
    %cst_241 = arith.constant 1.000000e+00 : f32
    %423 = vector.broadcast %cst_241 : f32 to vector<16x64xf32>
    %424 = arith.addf %423, %422 : vector<16x64xf32>
    %425 = arith.divf %423, %424 : vector<16x64xf32>
    %426 = arith.mulf %420, %425 : vector<16x64xf32>
    %c2_242 = arith.constant 2 : index
    %c0_243 = arith.constant 0 : index
    %c0_244 = arith.constant 0 : index
    %427 = vector.load %arg27[%c2_242, %c0_243, %c0_244] : memref<3x64x2xbf16, #tpu.memory_space<vmem>>, vector<1x64x2xbf16>
    %428 = vector.shape_cast %427 : vector<1x64x2xbf16> to vector<64x2xbf16>
    %429 = arith.truncf %426 : vector<16x64xf32> to vector<16x64xbf16>
    %cst_245 = arith.constant dense<0.000000e+00> : vector<16x2xf32>
    %430 = tpu.matmul %429, %428, %cst_245 {dimension_numbers = #tpu.dot_dimension_numbers<[1], [0], [0], [1], [0, 0, 1, 1], [], []>} : vector<16x64xbf16>, vector<64x2xbf16>, vector<16x2xf32> -> vector<16x2xf32>
    %c2_246 = arith.constant 2 : index
    %c0_247 = arith.constant 0 : index
    %c0_248 = arith.constant 0 : index
    %431 = vector.load %arg28[%c2_246, %c0_247, %c0_248] : memref<3x1x2xf32, #tpu.memory_space<vmem>>, vector<1x1x2xf32>
    %432 = vector.shape_cast %431 : vector<1x1x2xf32> to vector<1x2xf32>
    %433 = vector.broadcast %432 : vector<1x2xf32> to vector<16x2xf32>
    %434 = arith.addf %430, %433 : vector<16x2xf32>
    %435 = vector.extract_strided_slice %434 {offsets = [0, 0], sizes = [16, 1], strides = [1, 1]} : vector<16x2xf32> to vector<16x1xf32>
    %436 = arith.negf %435 : vector<16x1xf32>
    %437 = math.exp %436 : vector<16x1xf32>
    %cst_249 = arith.constant 1.000000e+00 : f32
    %438 = vector.broadcast %cst_249 : f32 to vector<16x1xf32>
    %439 = arith.addf %438, %437 : vector<16x1xf32>
    %440 = arith.divf %438, %439 : vector<16x1xf32>
    %441 = vector.extract_strided_slice %434 {offsets = [0, 1], sizes = [16, 1], strides = [1, 1]} : vector<16x2xf32> to vector<16x1xf32>
    %442 = vector.broadcast %440 : vector<16x1xf32> to vector<16x32xf32>
    %443 = arith.mulf %394, %442 : vector<16x32xf32>
    %cst_250 = arith.constant 1.000000e+00 : f32
    %444 = vector.broadcast %cst_250 : f32 to vector<16x1xf32>
    %445 = arith.addf %342, %444 : vector<16x1xf32>
    %446 = vector.broadcast %445 : vector<16x1xf32> to vector<16x3xf32>
    %447 = arith.divf %338, %446 : vector<16x3xf32>
    %448 = vector.broadcast %441 : vector<16x1xf32> to vector<16x3xf32>
    %449 = arith.mulf %447, %448 : vector<16x3xf32>
    %cst_251 = arith.constant dense<0.000000e+00> : vector<8x32xf32>
    %450 = tpu.matmul %41, %443, %cst_251 {dimension_numbers = #tpu.dot_dimension_numbers<[1], [0], [0], [1], [0, 0, 1, 1], [], []>, precision = #tpu.contract_precision<fp32>} : vector<8x16xf32>, vector<16x32xf32>, vector<8x32xf32> -> vector<8x32xf32>
    %cst_252 = arith.constant dense<0.000000e+00> : vector<8x3xf32>
    %451 = tpu.matmul %41, %449, %cst_252 {dimension_numbers = #tpu.dot_dimension_numbers<[1], [0], [0], [1], [0, 0, 1, 1], [], []>, precision = #tpu.contract_precision<fp32>} : vector<8x16xf32>, vector<16x3xf32>, vector<8x3xf32> -> vector<8x3xf32>
    %c2_253 = arith.constant 2 : index
    %c0_254 = arith.constant 0 : index
    %c0_255 = arith.constant 0 : index
    %452 = vector.load %arg29[%c2_253, %c0_254, %c0_255] : memref<3x32x32xbf16, #tpu.memory_space<vmem>>, vector<1x32x32xbf16>
    %453 = vector.shape_cast %452 : vector<1x32x32xbf16> to vector<32x32xbf16>
    %454 = arith.truncf %333 : vector<8x32xf32> to vector<8x32xbf16>
    %cst_256 = arith.constant dense<0.000000e+00> : vector<8x32xf32>
    %455 = tpu.matmul %454, %453, %cst_256 {dimension_numbers = #tpu.dot_dimension_numbers<[1], [0], [0], [1], [0, 0, 1, 1], [], []>} : vector<8x32xbf16>, vector<32x32xbf16>, vector<8x32xf32> -> vector<8x32xf32>
    %c2_257 = arith.constant 2 : index
    %c0_258 = arith.constant 0 : index
    %c0_259 = arith.constant 0 : index
    %456 = vector.load %arg30[%c2_257, %c0_258, %c0_259] : memref<3x32x32xbf16, #tpu.memory_space<vmem>>, vector<1x32x32xbf16>
    %457 = vector.shape_cast %456 : vector<1x32x32xbf16> to vector<32x32xbf16>
    %458 = arith.truncf %450 : vector<8x32xf32> to vector<8x32xbf16>
    %cst_260 = arith.constant dense<0.000000e+00> : vector<8x32xf32>
    %459 = tpu.matmul %458, %457, %cst_260 {dimension_numbers = #tpu.dot_dimension_numbers<[1], [0], [0], [1], [0, 0, 1, 1], [], []>} : vector<8x32xbf16>, vector<32x32xbf16>, vector<8x32xf32> -> vector<8x32xf32>
    %460 = arith.addf %455, %459 : vector<8x32xf32>
    %c2_261 = arith.constant 2 : index
    %c0_262 = arith.constant 0 : index
    %c0_263 = arith.constant 0 : index
    %461 = vector.load %arg31[%c2_261, %c0_262, %c0_263] : memref<3x1x32xf32, #tpu.memory_space<vmem>>, vector<1x1x32xf32>
    %462 = vector.shape_cast %461 : vector<1x1x32xf32> to vector<1x32xf32>
    %463 = vector.broadcast %462 : vector<1x32xf32> to vector<8x32xf32>
    %464 = arith.addf %460, %463 : vector<8x32xf32>
    %465 = arith.negf %464 : vector<8x32xf32>
    %466 = math.exp %465 : vector<8x32xf32>
    %cst_264 = arith.constant 1.000000e+00 : f32
    %467 = vector.broadcast %cst_264 : f32 to vector<8x32xf32>
    %468 = arith.addf %467, %466 : vector<8x32xf32>
    %469 = arith.divf %467, %468 : vector<8x32xf32>
    %470 = arith.mulf %464, %469 : vector<8x32xf32>
    %c2_265 = arith.constant 2 : index
    %c0_266 = arith.constant 0 : index
    %c0_267 = arith.constant 0 : index
    %471 = vector.load %arg32[%c2_265, %c0_266, %c0_267] : memref<3x32x32xbf16, #tpu.memory_space<vmem>>, vector<1x32x32xbf16>
    %472 = vector.shape_cast %471 : vector<1x32x32xbf16> to vector<32x32xbf16>
    %473 = arith.truncf %470 : vector<8x32xf32> to vector<8x32xbf16>
    %cst_268 = arith.constant dense<0.000000e+00> : vector<8x32xf32>
    %474 = tpu.matmul %473, %472, %cst_268 {dimension_numbers = #tpu.dot_dimension_numbers<[1], [0], [0], [1], [0, 0, 1, 1], [], []>} : vector<8x32xbf16>, vector<32x32xbf16>, vector<8x32xf32> -> vector<8x32xf32>
    %c2_269 = arith.constant 2 : index
    %c0_270 = arith.constant 0 : index
    %c0_271 = arith.constant 0 : index
    %475 = vector.load %arg33[%c2_269, %c0_270, %c0_271] : memref<3x1x32xf32, #tpu.memory_space<vmem>>, vector<1x1x32xf32>
    %476 = vector.shape_cast %475 : vector<1x1x32xf32> to vector<1x32xf32>
    %477 = vector.broadcast %476 : vector<1x32xf32> to vector<8x32xf32>
    %478 = arith.addf %474, %477 : vector<8x32xf32>
    %479 = arith.addf %478, %333 : vector<8x32xf32>
    %480 = arith.addf %334, %451 : vector<8x3xf32>
    %c0_272 = arith.constant 0 : index
    %c0_273 = arith.constant 0 : index
    %481 = vector.load %arg34[%c0_272, %c0_273] : memref<8x32xf32, #tpu.memory_space<vmem>>, vector<8x32xf32>
    tpu.vector_store %arg34[%c0_272, %c0_273], %479 {strides = array<i32>} : memref<8x32xf32, #tpu.memory_space<vmem>>, vector<8x32xf32>,
    %c0_274 = arith.constant 0 : index
    %c0_275 = arith.constant 0 : index
    %482 = vector.load %arg35[%c0_274, %c0_275] : memref<8x3xf32, #tpu.memory_space<vmem>>, vector<8x3xf32>
    tpu.vector_store %arg35[%c0_274, %c0_275], %480 {strides = array<i32>} : memref<8x3xf32, #tpu.memory_space<vmem>>, vector<8x3xf32>,
    %c0_276 = arith.constant 0 : index
    %c0_277 = arith.constant 0 : index
    %483 = vector.load %arg36[%c0_276, %c0_277] : memref<16x32xf32, #tpu.memory_space<vmem>>, vector<16x32xf32>
    tpu.vector_store %arg36[%c0_276, %c0_277], %415 {strides = array<i32>} : memref<16x32xf32, #tpu.memory_space<vmem>>, vector<16x32xf32>,
    %c0_278 = arith.constant 0 : index
    %c0_279 = arith.constant 0 : index
    %484 = vector.load %arg37[%c0_278, %c0_279] : memref<16x1xf32, #tpu.memory_space<vmem>>, vector<16x1xf32>
    tpu.vector_store %arg37[%c0_278, %c0_279], %440 {strides = array<i32>} : memref<16x1xf32, #tpu.memory_space<vmem>>, vector<16x1xf32>,
    return
  }
}

</mosaic_0001>

<llo_original>
// kernel: _egnn_forward_impl.1
$region0: #{_egnn_forward_impl.1}
  #allocation0 [shape = 'u32[]', space=smem, size = 0x4, offset = 0x4, fixed_abs, tag = 'smem constant byte address 0x4 - core index']
  #allocation1 [shape = 'u32[144,128]{1,0:T(1,128)}', space=vmem, size = 0x12000, scoped, tag = 'internal scratch']
  %s0 = inlined_call_operand.smem [shape: u32[38], index: -1, kind: input, shape index: {}]
  %s1 = sld [smem:[%s0]]
  %s2 = scalar_lea.smem %s0, 1
  %s3 = sld [smem:[%s2]]
  %s4 = scalar_lea.smem %s0, 2
  %s5 = sld [smem:[%s4]]
  %s6 = scalar_lea.smem %s0, 3
  %s7 = sld [smem:[%s6]]
  %s8 = scalar_lea.smem %s0, 4
  %s9 = sld [smem:[%s8]]
  %s10 = scalar_lea.smem %s0, 5
  %s11 = sld [smem:[%s10]]
  %s12 = scalar_lea.smem %s0, 6
  %s13 = sld [smem:[%s12]]
  %s14 = scalar_lea.smem %s0, 7
  %s15 = sld [smem:[%s14]]
  %s16 = scalar_lea.smem %s0, 8
  %s17 = sld [smem:[%s16]]
  %s18 = scalar_lea.smem %s0, 9
  %s19 = sld [smem:[%s18]]
  %s20 = scalar_lea.smem %s0, 10
  %s21 = sld [smem:[%s20]]
  %s22 = scalar_lea.smem %s0, 11
  %s23 = sld [smem:[%s22]]
  %s24 = scalar_lea.smem %s0, 12
  %s25 = sld [smem:[%s24]]
  %s26 = scalar_lea.smem %s0, 13
  %s27 = sld [smem:[%s26]]
  %s28 = scalar_lea.smem %s0, 14
  %s29 = sld [smem:[%s28]]
  %s30 = scalar_lea.smem %s0, 15
  %s31 = sld [smem:[%s30]]
  %s32 = scalar_lea.smem %s0, 16
  %s33 = sld [smem:[%s32]]
  %s34 = scalar_lea.smem %s0, 17
  %s35 = sld [smem:[%s34]]
  %s36 = scalar_lea.smem %s0, 18
  %s37 = sld [smem:[%s36]]
  %s38 = scalar_lea.smem %s0, 19
  %s39 = sld [smem:[%s38]]
  %s40 = scalar_lea.smem %s0, 20
  %s41 = sld [smem:[%s40]]
  %s42 = scalar_lea.smem %s0, 21
  %s43 = sld [smem:[%s42]]
  %s44 = scalar_lea.smem %s0, 22
  %s45 = sld [smem:[%s44]]
  %s46 = scalar_lea.smem %s0, 23
  %s47 = sld [smem:[%s46]]
  %s48 = scalar_lea.smem %s0, 24
  %s49 = sld [smem:[%s48]]
  %s50 = scalar_lea.smem %s0, 25
  %s51 = sld [smem:[%s50]]
  %s52 = scalar_lea.smem %s0, 26
  %s53 = sld [smem:[%s52]]
  %s54 = scalar_lea.smem %s0, 27
  %s55 = sld [smem:[%s54]]
  %s56 = scalar_lea.smem %s0, 28
  %s57 = sld [smem:[%s56]]
  %s58 = scalar_lea.smem %s0, 29
  %s59 = sld [smem:[%s58]]
  %s60 = scalar_lea.smem %s0, 30
  %s61 = sld [smem:[%s60]]
  %s62 = scalar_lea.smem %s0, 31
  %s63 = sld [smem:[%s62]]
  %s64 = scalar_lea.smem %s0, 32
  %s65 = sld [smem:[%s64]]
  %s66 = scalar_lea.smem %s0, 33
  %s67 = sld [smem:[%s66]]
  %s68 = scalar_lea.smem %s0, 34
  %s69 = sld [smem:[%s68]]
  %s70 = scalar_lea.smem %s0, 35
  %s71 = sld [smem:[%s70]]
  %s72 = scalar_lea.smem %s0, 36
  %s73 = sld [smem:[%s72]]
  %s74 = scalar_lea.smem %s0, 37
  %s75 = sld [smem:[%s74]]
  %76 = xla_tuple %s69, %s71, %s73, %s75
  %s77 = sld [smem:[#allocation0]]
  $region242: #{_egnn_forward_impl.1} parent=0
    _
  %s79 = ssub.s32 1, %s77
  %s80 = scalar_select 0, %s79, %s77
  $region1: #{_egnn_forward_impl.1} parent=0
    #allocation2 [shape = 'u8[2048]{0}', space=vmem, size = 0x800, scoped, tag = 'input window, operand 7, single buffered']
    #allocation3 [shape = 's32[1]{0}', space=sflag, size = 0x4, scoped, tag = 'scoped memory for _egnn_forward_impl.1']
    #allocation4 [shape = 's32[1]{0}', space=sflag, size = 0x4, scoped, tag = 'scoped memory for _egnn_forward_impl.1']
    #allocation5 [shape = 'u8[512]{0}', space=vmem, size = 0x400, scoped, tag = 'input window, operand 8, single buffered']
    #allocation6 [shape = 's32[1]{0}', space=sflag, size = 0x4, scoped, tag = 'scoped memory for _egnn_forward_impl.1']
    #allocation7 [shape = 'u8[512]{0}', space=vmem, size = 0x400, scoped, tag = 'input window, operand 10, single buffered']
    #allocation8 [shape = 'u8[1024]{0}', space=vmem, size = 0x400, scoped, tag = 'input window, operand 11, single buffered']
    #allocation9 [shape = 's32[1]{0}', space=sflag, size = 0x4, scoped, tag = 'scoped memory for _egnn_forward_impl.1']
    #allocation10 [shape = 'u8[512]{0}', space=vmem, size = 0x400, scoped, tag = 'input window, operand 12, single buffered']
    #allocation11 [shape = 'u8[8192]{0}', space=vmem, size = 0x2000, scoped, tag = 'input window, operand 13, single buffered']
    #allocation12 [shape = 's32[1]{0}', space=sflag, size = 0x4, scoped, tag = 'scoped memory for _egnn_forward_impl.1']
    #allocation13 [shape = 'u8[512]{0}', space=vmem, size = 0x400, scoped, tag = 'input window, operand 14, single buffered']
    #allocation14 [shape = 'u8[1536]{0}', space=vmem, size = 0x800, scoped, tag = 'input window, operand 17, single buffered']
    #allocation15 [shape = 's32[1]{0}', space=sflag, size = 0x4, scoped, tag = 'scoped memory for _egnn_forward_impl.1']
    #allocation16 [shape = 'u8[6144]{0}', space=vmem, size = 0x1800, scoped, tag = 'input window, operand 18, single buffered']
    #allocation17 [shape = 'u8[1536]{0}', space=vmem, size = 0x800, scoped, tag = 'input window, operand 20, single buffered']
    #allocation18 [shape = 's32[1]{0}', space=sflag, size = 0x4, scoped, tag = 'scoped memory for _egnn_forward_impl.1']
    #allocation19 [shape = 'u8[1536]{0}', space=vmem, size = 0x800, scoped, tag = 'input window, operand 22, single buffered']
    #allocation20 [shape = 'u8[1536]{0}', space=vmem, size = 0x800, scoped, tag = 'input window, operand 24, single buffered']
    #allocation21 [shape = 's32[1]{0}', space=sflag, size = 0x4, scoped, tag = 'scoped memory for _egnn_forward_impl.1']
    #allocation22 [shape = 'u8[24576]{0}', space=vmem, size = 0x6000, scoped, tag = 'input window, operand 25, single buffered']
    #allocation23 [shape = 'u8[1536]{0}', space=vmem, size = 0x800, scoped, tag = 'input window, operand 26, single buffered']
    #allocation24 [shape = 's32[1]{0}', space=sflag, size = 0x4, scoped, tag = 'scoped memory for _egnn_forward_impl.1']
    #allocation25 [shape = 'u8[24576]{0}', space=vmem, size = 0x6000, scoped, tag = 'input window, operand 30, single buffered']
    #allocation26 [shape = 'u8[1536]{0}', space=vmem, size = 0x800, scoped, tag = 'input window, operand 31, single buffered']
    #allocation27 [shape = 's32[1]{0}', space=sflag, size = 0x4, scoped, tag = 'scoped memory for _egnn_forward_impl.1']
    #allocation28 [shape = 'u8[24576]{0}', space=vmem, size = 0x6000, scoped, tag = 'input window, operand 32, single buffered']
    #allocation29 [shape = 'u8[1536]{0}', space=vmem, size = 0x800, scoped, tag = 'input window, operand 33, single buffered']
    #allocation30 [shape = 's32[1]{0}', space=sflag, size = 0x4, scoped, tag = 'scoped memory for _egnn_forward_impl.1']
    #allocation31 [shape = 'u8[4096]{0}', space=vmem, size = 0x1000, scoped, tag = 'output window, operand 0, single buffered']
    #allocation32 [shape = 'u8[8192]{0}', space=vmem, size = 0x2000, scoped, tag = 'output window, operand 2, single buffered']
    #allocation33 [shape = 's32[1]{0}', space=sflag, size = 0x4, scoped, tag = 'scoped memory for _egnn_forward_impl.1']
    %81 = vsyncpa [#allocation3], 0
    %82 = vsyncpa [#allocation6], 0
    %83 = vsyncpa [#allocation9], 0
    %84 = vsyncpa [#allocation12], 0
    %85 = vsyncpa [#allocation15], 0
    %86 = vsyncpa [#allocation18], 0
    %87 = vsyncpa [#allocation21], 0
    %88 = vsyncpa [#allocation24], 0
    %89 = vsyncpa [#allocation27], 0
    %90 = vsyncpa [#allocation30], 0
    %91 = vsyncpa [#allocation4], 0
    %92 = vsyncpa [#allocation33], 0
    // Predicated region
    $region2: #{_egnn_forward_impl.1} parent=1 // pred_check
      _
    $region3: #{_egnn_forward_impl.1} parent=1 // pred_check_branch
      %94 = sbr.rel (0) target = $region5
    $region4: #{_egnn_forward_impl.1} parent=1 // pred_region
      _
    $region5: #{_egnn_forward_impl.1} parent=1 // pred_fallthru
      _
    // Predicated region
    $region6: #{_egnn_forward_impl.1} parent=1 // pred_check
      _
    $region7: #{_egnn_forward_impl.1} parent=1 // pred_check_branch
      %96 = sbr.rel (0) target = $region9
    $region8: #{_egnn_forward_impl.1} parent=1 // pred_region
      _
    $region9: #{_egnn_forward_impl.1} parent=1 // pred_fallthru
      _
    // Predicated region
    $region10: #{_egnn_forward_impl.1} parent=1 // pred_check
      _
    $region11: #{_egnn_forward_impl.1} parent=1 // pred_check_branch
      %98 = sbr.rel (0) target = $region13
    $region12: #{_egnn_forward_impl.1} parent=1 // pred_region
      _
    $region13: #{_egnn_forward_impl.1} parent=1 // pred_fallthru
      _
    // Predicated region
    $region14: #{_egnn_forward_impl.1} parent=1 // pred_check
      _
    $region15: #{_egnn_forward_impl.1} parent=1 // pred_check_branch
      %100 = sbr.rel (0) target = $region17
    $region16: #{_egnn_forward_impl.1} parent=1 // pred_region
      _
    $region17: #{_egnn_forward_impl.1} parent=1 // pred_fallthru
      _
    // Predicated region
    $region18: #{_egnn_forward_impl.1} parent=1 // pred_check
      _
    $region19: #{_egnn_forward_impl.1} parent=1 // pred_check_branch
      %102 = sbr.rel (0) target = $region21
    $region20: #{_egnn_forward_impl.1} parent=1 // pred_region
      _
    $region21: #{_egnn_forward_impl.1} parent=1 // pred_fallthru
      _
    // Predicated region
    $region22: #{_egnn_forward_impl.1} parent=1 // pred_check
      _
    $region23: #{_egnn_forward_impl.1} parent=1 // pred_check_branch
      %104 = sbr.rel (0) target = $region25
    $region24: #{_egnn_forward_impl.1} parent=1 // pred_region
      _
    $region25: #{_egnn_forward_impl.1} parent=1 // pred_fallthru
      _
    // Predicated region
    $region26: #{_egnn_forward_impl.1} parent=1 // pred_check
      _
    $region27: #{_egnn_forward_impl.1} parent=1 // pred_check_branch
      %106 = sbr.rel (0) target = $region29
    $region28: #{_egnn_forward_impl.1} parent=1 // pred_region
      _
    $region29: #{_egnn_forward_impl.1} parent=1 // pred_fallthru
      _
    // Predicated region
    $region30: #{_egnn_forward_impl.1} parent=1 // pred_check
      _
    $region31: #{_egnn_forward_impl.1} parent=1 // pred_check_branch
      %108 = sbr.rel (0) target = $region33
    $region32: #{_egnn_forward_impl.1} parent=1 // pred_region
      %s110 = ssub.s32 64, 64
      %111 = vsyncadd [#allocation3], %s110
      %s113 = sshll.u32 [#allocation2], 4
      %s114 = int_to_ptr.vmem [resolvable:$true] %s113
      %116 = dma.hbm_to_vmem [thread:$0]  %s15, 64, %s114, [#allocation3]
    $region33: #{_egnn_forward_impl.1} parent=1 // pred_fallthru
      _
    // Predicated region
    $region34: #{_egnn_forward_impl.1} parent=1 // pred_check
      _
    $region35: #{_egnn_forward_impl.1} parent=1 // pred_check_branch
      %118 = sbr.rel (0) target = $region37
    $region36: #{_egnn_forward_impl.1} parent=1 // pred_region
      %s120 = ssub.s32 16, 16
      %121 = vsyncadd [#allocation6], %s120
      %s123 = sshll.u32 [#allocation5], 4
      %s124 = int_to_ptr.vmem [resolvable:$true] %s123
      %126 = dma.hbm_to_vmem [thread:$0]  %s17, 16, %s124, [#allocation6]
    $region37: #{_egnn_forward_impl.1} parent=1 // pred_fallthru
      _
    // Predicated region
    $region38: #{_egnn_forward_impl.1} parent=1 // pred_check
      _
    $region39: #{_egnn_forward_impl.1} parent=1 // pred_check_branch
      %128 = sbr.rel (0) target = $region41
    $region40: #{_egnn_forward_impl.1} parent=1 // pred_region
      _
    $region41: #{_egnn_forward_impl.1} parent=1 // pred_fallthru
      _
    // Predicated region
    $region42: #{_egnn_forward_impl.1} parent=1 // pred_check
      _
    $region43: #{_egnn_forward_impl.1} parent=1 // pred_check_branch
      %130 = sbr.rel (0) target = $region45
    $region44: #{_egnn_forward_impl.1} parent=1 // pred_region
      %s132 = ssub.s32 16, 16
      %133 = vsyncadd [#allocation6], %s132
      %s135 = sshll.u32 [#allocation7], 4
      %s136 = int_to_ptr.vmem [resolvable:$true] %s135
      %138 = dma.hbm_to_vmem [thread:$0]  %s21, 16, %s136, [#allocation6]
    $region45: #{_egnn_forward_impl.1} parent=1 // pred_fallthru
      _
    // Predicated region
    $region46: #{_egnn_forward_impl.1} parent=1 // pred_check
      _
    $region47: #{_egnn_forward_impl.1} parent=1 // pred_check_branch
      %140 = sbr.rel (0) target = $region49
    $region48: #{_egnn_forward_impl.1} parent=1 // pred_region
      %s142 = ssub.s32 32, 32
      %143 = vsyncadd [#allocation9], %s142
      %s145 = sshll.u32 [#allocation8], 4
      %s146 = int_to_ptr.vmem [resolvable:$true] %s145
      %148 = dma.hbm_to_vmem [thread:$0]  %s23, 32, %s146, [#allocation9]
    $region49: #{_egnn_forward_impl.1} parent=1 // pred_fallthru
      _
    // Predicated region
    $region50: #{_egnn_forward_impl.1} parent=1 // pred_check
      _
    $region51: #{_egnn_forward_impl.1} parent=1 // pred_check_branch
      %150 = sbr.rel (0) target = $region53
    $region52: #{_egnn_forward_impl.1} parent=1 // pred_region
      %s152 = ssub.s32 16, 16
      %153 = vsyncadd [#allocation9], %s152
      %s155 = sshll.u32 [#allocation10], 4
      %s156 = int_to_ptr.vmem [resolvable:$true] %s155
      %158 = dma.hbm_to_vmem [thread:$0]  %s25, 16, %s156, [#allocation9]
    $region53: #{_egnn_forward_impl.1} parent=1 // pred_fallthru
      _
    // Predicated region
    $region54: #{_egnn_forward_impl.1} parent=1 // pred_check
      _
    $region55: #{_egnn_forward_impl.1} parent=1 // pred_check_branch
      %160 = sbr.rel (0) target = $region57
    $region56: #{_egnn_forward_impl.1} parent=1 // pred_region
      %s162 = ssub.s32 256, 256
      %163 = vsyncadd [#allocation12], %s162
      %s164 = sshll.u32 [#allocation11], 4
      %s165 = int_to_ptr.vmem [resolvable:$true] %s164
      %170 = dma.hbm_to_vmem [thread:$0]  %s27, 256, %s165, [#allocation12], 64, 64, 4
    $region57: #{_egnn_forward_impl.1} parent=1 // pred_fallthru
      _
    // Predicated region
    $region58: #{_egnn_forward_impl.1} parent=1 // pred_check
      _
    $region59: #{_egnn_forward_impl.1} parent=1 // pred_check_branch
      %172 = sbr.rel (0) target = $region61
    $region60: #{_egnn_forward_impl.1} parent=1 // pred_region
      %s174 = ssub.s32 16, 16
      %175 = vsyncadd [#allocation12], %s174
      %s177 = sshll.u32 [#allocation13], 4
      %s178 = int_to_ptr.vmem [resolvable:$true] %s177
      %180 = dma.hbm_to_vmem [thread:$0]  %s29, 16, %s178, [#allocation12]
    $region61: #{_egnn_forward_impl.1} parent=1 // pred_fallthru
      _
    // Predicated region
    $region62: #{_egnn_forward_impl.1} parent=1 // pred_check
      _
    $region63: #{_egnn_forward_impl.1} parent=1 // pred_check_branch
      %182 = sbr.rel (0) target = $region65
    $region64: #{_egnn_forward_impl.1} parent=1 // pred_region
      _
    $region65: #{_egnn_forward_impl.1} parent=1 // pred_fallthru
      _
    // Predicated region
    $region66: #{_egnn_forward_impl.1} parent=1 // pred_check
      _
    $region67: #{_egnn_forward_impl.1} parent=1 // pred_check_branch
      %184 = sbr.rel (0) target = $region69
    $region68: #{_egnn_forward_impl.1} parent=1 // pred_region
      _
    $region69: #{_egnn_forward_impl.1} parent=1 // pred_fallthru
      _
    // Predicated region
    $region70: #{_egnn_forward_impl.1} parent=1 // pred_check
      _
    $region71: #{_egnn_forward_impl.1} parent=1 // pred_check_branch
      %186 = sbr.rel (0) target = $region73
    $region72: #{_egnn_forward_impl.1} parent=1 // pred_region
      %s188 = ssub.s32 48, 48
      %189 = vsyncadd [#allocation15], %s188
      %s190 = sshll.u32 [#allocation14], 4
      %s191 = int_to_ptr.vmem [resolvable:$true] %s190
      %196 = dma.hbm_to_vmem [thread:$0]  %s35, 48, %s191, [#allocation15], 16, 16, 1
    $region73: #{_egnn_forward_impl.1} parent=1 // pred_fallthru
      _
    // Predicated region
    $region74: #{_egnn_forward_impl.1} parent=1 // pred_check
      _
    $region75: #{_egnn_forward_impl.1} parent=1 // pred_check_branch
      %198 = sbr.rel (0) target = $region77
    $region76: #{_egnn_forward_impl.1} parent=1 // pred_region
      %s200 = ssub.s32 192, 192
      %201 = vsyncadd [#allocation15], %s200
      %s202 = sshll.u32 [#allocation16], 4
      %s203 = int_to_ptr.vmem [resolvable:$true] %s202
      %208 = dma.hbm_to_vmem [thread:$0]  %s37, 192, %s203, [#allocation15], 64, 64, 4
    $region77: #{_egnn_forward_impl.1} parent=1 // pred_fallthru
      _
    // Predicated region
    $region78: #{_egnn_forward_impl.1} parent=1 // pred_check
      _
    $region79: #{_egnn_forward_impl.1} parent=1 // pred_check_branch
      %210 = sbr.rel (0) target = $region81
    $region80: #{_egnn_forward_impl.1} parent=1 // pred_region
      _
    $region81: #{_egnn_forward_impl.1} parent=1 // pred_fallthru
      _
    // Predicated region
    $region82: #{_egnn_forward_impl.1} parent=1 // pred_check
      _
    $region83: #{_egnn_forward_impl.1} parent=1 // pred_check_branch
      %212 = sbr.rel (0) target = $region85
    $region84: #{_egnn_forward_impl.1} parent=1 // pred_region
      %s214 = ssub.s32 48, 48
      %215 = vsyncadd [#allocation18], %s214
      %s216 = sshll.u32 [#allocation17], 4
      %s217 = int_to_ptr.vmem [resolvable:$true] %s216
      %222 = dma.hbm_to_vmem [thread:$0]  %s41, 48, %s217, [#allocation18], 16, 16, 1
    $region85: #{_egnn_forward_impl.1} parent=1 // pred_fallthru
      _
    // Predicated region
    $region86: #{_egnn_forward_impl.1} parent=1 // pred_check
      _
    $region87: #{_egnn_forward_impl.1} parent=1 // pred_check_branch
      %224 = sbr.rel (0) target = $region89
    $region88: #{_egnn_forward_impl.1} parent=1 // pred_region
      _
    $region89: #{_egnn_forward_impl.1} parent=1 // pred_fallthru
      _
    // Predicated region
    $region90: #{_egnn_forward_impl.1} parent=1 // pred_check
      _
    $region91: #{_egnn_forward_impl.1} parent=1 // pred_check_branch
      %226 = sbr.rel (0) target = $region93
    $region92: #{_egnn_forward_impl.1} parent=1 // pred_region
      %s228 = ssub.s32 48, 48
      %229 = vsyncadd [#allocation18], %s228
      %s230 = sshll.u32 [#allocation19], 4
      %s231 = int_to_ptr.vmem [resolvable:$true] %s230
      %236 = dma.hbm_to_vmem [thread:$0]  %s45, 48, %s231, [#allocation18], 16, 16, 1
    $region93: #{_egnn_forward_impl.1} parent=1 // pred_fallthru
      _
    // Predicated region
    $region94: #{_egnn_forward_impl.1} parent=1 // pred_check
      _
    $region95: #{_egnn_forward_impl.1} parent=1 // pred_check_branch
      %238 = sbr.rel (0) target = $region97
    $region96: #{_egnn_forward_impl.1} parent=1 // pred_region
      _
    $region97: #{_egnn_forward_impl.1} parent=1 // pred_fallthru
      _
    // Predicated region
    $region98: #{_egnn_forward_impl.1} parent=1 // pred_check
      _
    $region99: #{_egnn_forward_impl.1} parent=1 // pred_check_branch
      %240 = sbr.rel (0) target = $region101
    $region100: #{_egnn_forward_impl.1} parent=1 // pred_region
      %s242 = ssub.s32 48, 48
      %243 = vsyncadd [#allocation21], %s242
      %s244 = sshll.u32 [#allocation20], 4
      %s245 = int_to_ptr.vmem [resolvable:$true] %s244
      %250 = dma.hbm_to_vmem [thread:$0]  %s49, 48, %s245, [#allocation21], 16, 16, 1
    $region101: #{_egnn_forward_impl.1} parent=1 // pred_fallthru
      _
    // Predicated region
    $region102: #{_egnn_forward_impl.1} parent=1 // pred_check
      _
    $region103: #{_egnn_forward_impl.1} parent=1 // pred_check_branch
      %252 = sbr.rel (0) target = $region105
    $region104: #{_egnn_forward_impl.1} parent=1 // pred_region
      %s254 = ssub.s32 768, 768
      %255 = vsyncadd [#allocation21], %s254
      %s256 = sshll.u32 [#allocation22], 4
      %s257 = int_to_ptr.vmem [resolvable:$true] %s256
      %262 = dma.hbm_to_vmem [thread:$0]  %s51, 768, %s257, [#allocation21], 64, 64, 4
    $region105: #{_egnn_forward_impl.1} parent=1 // pred_fallthru
      _
    // Predicated region
    $region106: #{_egnn_forward_impl.1} parent=1 // pred_check
      _
    $region107: #{_egnn_forward_impl.1} parent=1 // pred_check_branch
      %264 = sbr.rel (0) target = $region109
    $region108: #{_egnn_forward_impl.1} parent=1 // pred_region
      %s266 = ssub.s32 48, 48
      %267 = vsyncadd [#allocation24], %s266
      %s268 = sshll.u32 [#allocation23], 4
      %s269 = int_to_ptr.vmem [resolvable:$true] %s268
      %274 = dma.hbm_to_vmem [thread:$0]  %s53, 48, %s269, [#allocation24], 16, 16, 1
    $region109: #{_egnn_forward_impl.1} parent=1 // pred_fallthru
      _
    // Predicated region
    $region110: #{_egnn_forward_impl.1} parent=1 // pred_check
      _
    $region111: #{_egnn_forward_impl.1} parent=1 // pred_check_branch
      %276 = sbr.rel (0) target = $region113
    $region112: #{_egnn_forward_impl.1} parent=1 // pred_region
      _
    $region113: #{_egnn_forward_impl.1} parent=1 // pred_fallthru
      _
    // Predicated region
    $region114: #{_egnn_forward_impl.1} parent=1 // pred_check
      _
    $region115: #{_egnn_forward_impl.1} parent=1 // pred_check_branch
      %278 = sbr.rel (0) target = $region117
    $region116: #{_egnn_forward_impl.1} parent=1 // pred_region
      _
    $region117: #{_egnn_forward_impl.1} parent=1 // pred_fallthru
      _
    // Predicated region
    $region118: #{_egnn_forward_impl.1} parent=1 // pred_check
      _
    $region119: #{_egnn_forward_impl.1} parent=1 // pred_check_branch
      %280 = sbr.rel (0) target = $region121
    $region120: #{_egnn_forward_impl.1} parent=1 // pred_region
      _
    $region121: #{_egnn_forward_impl.1} parent=1 // pred_fallthru
      _
    // Predicated region
    $region122: #{_egnn_forward_impl.1} parent=1 // pred_check
      _
    $region123: #{_egnn_forward_impl.1} parent=1 // pred_check_branch
      %282 = sbr.rel (0) target = $region125
    $region124: #{_egnn_forward_impl.1} parent=1 // pred_region
      %s284 = ssub.s32 768, 768
      %285 = vsyncadd [#allocation24], %s284
      %s286 = sshll.u32 [#allocation25], 4
      %s287 = int_to_ptr.vmem [resolvable:$true] %s286
      %292 = dma.hbm_to_vmem [thread:$0]  %s61, 768, %s287, [#allocation24], 64, 64, 4
    $region125: #{_egnn_forward_impl.1} parent=1 // pred_fallthru
      _
    // Predicated region
    $region126: #{_egnn_forward_impl.1} parent=1 // pred_check
      _
    $region127: #{_egnn_forward_impl.1} parent=1 // pred_check_branch
      %294 = sbr.rel (0) target = $region129
    $region128: #{_egnn_forward_impl.1} parent=1 // pred_region
      %s296 = ssub.s32 48, 48
      %297 = vsyncadd [#allocation27], %s296
      %s298 = sshll.u32 [#allocation26], 4
      %s299 = int_to_ptr.vmem [resolvable:$true] %s298
      %304 = dma.hbm_to_vmem [thread:$0]  %s63, 48, %s299, [#allocation27], 16, 16, 1
    $region129: #{_egnn_forward_impl.1} parent=1 // pred_fallthru
      _
    // Predicated region
    $region130: #{_egnn_forward_impl.1} parent=1 // pred_check
      _
    $region131: #{_egnn_forward_impl.1} parent=1 // pred_check_branch
      %306 = sbr.rel (0) target = $region133
    $region132: #{_egnn_forward_impl.1} parent=1 // pred_region
      %s308 = ssub.s32 768, 768
      %309 = vsyncadd [#allocation27], %s308
      %s310 = sshll.u32 [#allocation28], 4
      %s311 = int_to_ptr.vmem [resolvable:$true] %s310
      %316 = dma.hbm_to_vmem [thread:$0]  %s65, 768, %s311, [#allocation27], 64, 64, 4
    $region133: #{_egnn_forward_impl.1} parent=1 // pred_fallthru
      _
    // Predicated region
    $region134: #{_egnn_forward_impl.1} parent=1 // pred_check
      _
    $region135: #{_egnn_forward_impl.1} parent=1 // pred_check_branch
      %318 = sbr.rel (0) target = $region137
    $region136: #{_egnn_forward_impl.1} parent=1 // pred_region
      %s320 = ssub.s32 48, 48
      %321 = vsyncadd [#allocation30], %s320
      %s322 = sshll.u32 [#allocation29], 4
      %s323 = int_to_ptr.vmem [resolvable:$true] %s322
      %328 = dma.hbm_to_vmem [thread:$0]  %s67, 48, %s323, [#allocation30], 16, 16, 1
    $region137: #{_egnn_forward_impl.1} parent=1 // pred_fallthru
      _
    // Predicated region
    $region138: #{_egnn_forward_impl.1} parent=1 // pred_check
      _
    $region139: #{_egnn_forward_impl.1} parent=1 // pred_check_branch
      %330 = sbr.rel (0) target = $region141
    $region140: #{_egnn_forward_impl.1} parent=1 // pred_region
      %331 = dma.done [#allocation3], 64
    $region141: #{_egnn_forward_impl.1} parent=1 // pred_fallthru
      _
    // Predicated region
    $region142: #{_egnn_forward_impl.1} parent=1 // pred_check
      _
    $region143: #{_egnn_forward_impl.1} parent=1 // pred_check_branch
      %333 = sbr.rel (0) target = $region145
    $region144: #{_egnn_forward_impl.1} parent=1 // pred_region
      %334 = dma.done [#allocation6], 16
    $region145: #{_egnn_forward_impl.1} parent=1 // pred_fallthru
      _
    // Predicated region
    $region146: #{_egnn_forward_impl.1} parent=1 // pred_check
      _
    $region147: #{_egnn_forward_impl.1} parent=1 // pred_check_branch
      %336 = sbr.rel (0) target = $region149
    $region148: #{_egnn_forward_impl.1} parent=1 // pred_region
      %337 = dma.done [#allocation6], 16
    $region149: #{_egnn_forward_impl.1} parent=1 // pred_fallthru
      _
    // Predicated region
    $region150: #{_egnn_forward_impl.1} parent=1 // pred_check
      _
    $region151: #{_egnn_forward_impl.1} parent=1 // pred_check_branch
      %339 = sbr.rel (0) target = $region153
    $region152: #{_egnn_forward_impl.1} parent=1 // pred_region
      %340 = dma.done [#allocation9], 32
    $region153: #{_egnn_forward_impl.1} parent=1 // pred_fallthru
      _
    // Predicated region
    $region154: #{_egnn_forward_impl.1} parent=1 // pred_check
      _
    $region155: #{_egnn_forward_impl.1} parent=1 // pred_check_branch
      %342 = sbr.rel (0) target = $region157
    $region156: #{_egnn_forward_impl.1} parent=1 // pred_region
      %343 = dma.done [#allocation9], 16
    $region157: #{_egnn_forward_impl.1} parent=1 // pred_fallthru
      _
    // Predicated region
    $region158: #{_egnn_forward_impl.1} parent=1 // pred_check
      _
    $region159: #{_egnn_forward_impl.1} parent=1 // pred_check_branch
      %345 = sbr.rel (0) target = $region161
    $region160: #{_egnn_forward_impl.1} parent=1 // pred_region
      %346 = dma.done [#allocation12], 256
    $region161: #{_egnn_forward_impl.1} parent=1 // pred_fallthru
      _
    // Predicated region
    $region162: #{_egnn_forward_impl.1} parent=1 // pred_check
      _
    $region163: #{_egnn_forward_impl.1} parent=1 // pred_check_branch
      %348 = sbr.rel (0) target = $region165
    $region164: #{_egnn_forward_impl.1} parent=1 // pred_region
      %349 = dma.done [#allocation12], 16
    $region165: #{_egnn_forward_impl.1} parent=1 // pred_fallthru
      _
    // Predicated region
    $region166: #{_egnn_forward_impl.1} parent=1 // pred_check
      _
    $region167: #{_egnn_forward_impl.1} parent=1 // pred_check_branch
      %351 = sbr.rel (0) target = $region169
    $region168: #{_egnn_forward_impl.1} parent=1 // pred_region
      %352 = dma.done [#allocation15], 48
    $region169: #{_egnn_forward_impl.1} parent=1 // pred_fallthru
      _
    // Predicated region
    $region170: #{_egnn_forward_impl.1} parent=1 // pred_check
      _
    $region171: #{_egnn_forward_impl.1} parent=1 // pred_check_branch
      %354 = sbr.rel (0) target = $region173
    $region172: #{_egnn_forward_impl.1} parent=1 // pred_region
      %355 = dma.done [#allocation15], 192
    $region173: #{_egnn_forward_impl.1} parent=1 // pred_fallthru
      _
    // Predicated region
    $region174: #{_egnn_forward_impl.1} parent=1 // pred_check
      _
    $region175: #{_egnn_forward_impl.1} parent=1 // pred_check_branch
      %357 = sbr.rel (0) target = $region177
    $region176: #{_egnn_forward_impl.1} parent=1 // pred_region
      %358 = dma.done [#allocation18], 48
    $region177: #{_egnn_forward_impl.1} parent=1 // pred_fallthru
      _
    // Predicated region
    $region178: #{_egnn_forward_impl.1} parent=1 // pred_check
      _
    $region179: #{_egnn_forward_impl.1} parent=1 // pred_check_branch
      %360 = sbr.rel (0) target = $region181
    $region180: #{_egnn_forward_impl.1} parent=1 // pred_region
      %361 = dma.done [#allocation18], 48
    $region181: #{_egnn_forward_impl.1} parent=1 // pred_fallthru
      _
    // Predicated region
    $region182: #{_egnn_forward_impl.1} parent=1 // pred_check
      _
    $region183: #{_egnn_forward_impl.1} parent=1 // pred_check_branch
      %363 = sbr.rel (0) target = $region185
    $region184: #{_egnn_forward_impl.1} parent=1 // pred_region
      %364 = dma.done [#allocation21], 48
    $region185: #{_egnn_forward_impl.1} parent=1 // pred_fallthru
      _
    // Predicated region
    $region186: #{_egnn_forward_impl.1} parent=1 // pred_check
      _
    $region187: #{_egnn_forward_impl.1} parent=1 // pred_check_branch
      %366 = sbr.rel (0) target = $region189
    $region188: #{_egnn_forward_impl.1} parent=1 // pred_region
      %367 = dma.done [#allocation21], 768
    $region189: #{_egnn_forward_impl.1} parent=1 // pred_fallthru
      _
    // Predicated region
    $region190: #{_egnn_forward_impl.1} parent=1 // pred_check
      _
    $region191: #{_egnn_forward_impl.1} parent=1 // pred_check_branch
      %369 = sbr.rel (0) target = $region193
    $region192: #{_egnn_forward_impl.1} parent=1 // pred_region
      %370 = dma.done [#allocation24], 48
    $region193: #{_egnn_forward_impl.1} parent=1 // pred_fallthru
      _
    // Predicated region
    $region194: #{_egnn_forward_impl.1} parent=1 // pred_check
      _
    $region195: #{_egnn_forward_impl.1} parent=1 // pred_check_branch
      %372 = sbr.rel (0) target = $region197
    $region196: #{_egnn_forward_impl.1} parent=1 // pred_region
      %373 = dma.done [#allocation24], 768
    $region197: #{_egnn_forward_impl.1} parent=1 // pred_fallthru
      _
    // Predicated region
    $region198: #{_egnn_forward_impl.1} parent=1 // pred_check
      _
    $region199: #{_egnn_forward_impl.1} parent=1 // pred_check_branch
      %375 = sbr.rel (0) target = $region201
    $region200: #{_egnn_forward_impl.1} parent=1 // pred_region
      %376 = dma.done [#allocation27], 48
    $region201: #{_egnn_forward_impl.1} parent=1 // pred_fallthru
      _
    // Predicated region
    $region202: #{_egnn_forward_impl.1} parent=1 // pred_check
      _
    $region203: #{_egnn_forward_impl.1} parent=1 // pred_check_branch
      %378 = sbr.rel (0) target = $region205
    $region204: #{_egnn_forward_impl.1} parent=1 // pred_region
      %379 = dma.done [#allocation27], 768
    $region205: #{_egnn_forward_impl.1} parent=1 // pred_fallthru
      _
    // Predicated region
    $region206: #{_egnn_forward_impl.1} parent=1 // pred_check
      _
    $region207: #{_egnn_forward_impl.1} parent=1 // pred_check_branch
      %381 = sbr.rel (0) target = $region209
    $region208: #{_egnn_forward_impl.1} parent=1 // pred_region
      %382 = dma.done [#allocation30], 48
    $region209: #{_egnn_forward_impl.1} parent=1 // pred_fallthru
      _
    %v384 = vld [vmem:[%s1] sm:$0xff]
    %v385 = vld [vmem:[#allocation2] sm:$0xf]
    %v386 = vpack.c.bf16 %v384, %v384
    %v387 = vld [vmem:[#allocation5] sm:$0x1]
    %v389 = vlaneseq
    %v390 = vshrl.u32 %v389, 7
    %v391 = vsub.s32 0, %v390
    %v392 = vrot.slane %v387, %v391
    %vm394 = vcmask 64512
    %v396 = vsel %vm394, %v386, 0
    %vm398 = vcmask 1043456
    %v400 = vsel %vm398, %v385, 0
    %402 = vmatprep.subr.bf16.mxu0 0
    %403 = vmatpush1.bf16.msra.mxu0 0
    %404 = vmatprep.subr.bf16.mxu0 0
    %405 = vmatpush1.bf16.msra.mxu0 0
    %406 = vmatprep.subr.bf16.mxu0 0
    %407 = vmatpush1.bf16.msra.mxu0 0
    %408 = vmatprep.subr.bf16.mxu0 0
    %409 = vmatpush1.bf16.msra.mxu0 0
    %410 = vmatprep.subr.bf16.mxu0 0
    %411 = vmatpush1.bf16.msra.mxu0 0
    %412 = vmatprep.subr.bf16.mxu0 0
    %413 = vmatpush1.bf16.msra.mxu0 0
    %414 = vmatprep.subr.bf16.mxu0 0
    %415 = vmatpush1.bf16.msra.mxu0 0
    %416 = vmatprep.subr.bf16.mxu0 0
    %417 = vmatpush1.bf16.msra.mxu0 %v400
    %418 = vmatprep.subr.bf16.mxu0 0
    %419 = vmatpush2.bf16.msra.mxu0 0
    %420 = vmatprep.subr.bf16.mxu0 0
    %421 = vmatpush2.bf16.msra.mxu0 0
    %422 = vmatprep.subr.bf16.mxu0 0
    %423 = vmatpush2.bf16.msra.mxu0 0
    %424 = vmatprep.subr.bf16.mxu0 0
    %425 = vmatpush2.bf16.msra.mxu0 0
    %426 = vmatprep.subr.bf16.mxu0 0
    %427 = vmatpush2.bf16.msra.mxu0 0
    %428 = vmatprep.subr.bf16.mxu0 0
    %429 = vmatpush2.bf16.msra.mxu0 0
    %430 = vmatprep.subr.bf16.mxu0 0
    %431 = vmatpush2.bf16.msra.mxu0 0
    %432 = vmatprep.subr.bf16.mxu0 0
    %433 = vmatpush2.bf16.msra.mxu0 0
    %434 = vmatprep.mubr.bf16.mxu0 0
    %435 = vmatmul.mubr.bf16.gmra.mxu0 %v396
    %v436 = vpop.f32.mrf.mxu0
    %v437 = vadd.f32 %v392, %v436
    %v438 = vpop.f32.mrf.mxu0
    %v439 = vpop.f32.mrf.mxu0
    %v440 = vpop.f32.mrf.mxu0
    %441 = vdwg.mxu0
    %v442 = vxor.u32 %v437, 2147483648
    %v443 = vmul.f32 %v442, 1.442695
    %v444 = vpow.pop %v443
    %v445 = vadd.f32 %v444, 1.0
    %v446 = vrcp.pop %v445
    %v447 = vmul.f32 1.0, %v446
    %v448 = vmul.f32 %v437, %v447
    %v449 = vld [vmem:[%s19] sm:$0xf]
    %v450 = vld [vmem:[%s19 + $0x4] sm:$0xf]
    %v451 = vld [vmem:[%s19 + $0x8] sm:$0xf]
    %v452 = vld [vmem:[%s19 + $0xc] sm:$0xf]
    %v453 = vpack.c.bf16 %v448, %v448
    %v454 = vld [vmem:[#allocation7] sm:$0x1]
    %v456 = vlaneseq
    %v457 = vshrl.u32 %v456, 7
    %v458 = vsub.s32 0, %v457
    %v459 = vrot.slane %v454, %v458
    %v465 = vunpack.c.l.b16 %v449
    %v466 = vunpack.c.l.b16 %v450
    %v467 = vunpack.c.l.b16 %v451
    %v468 = vunpack.c.l.b16 %v452
    %v469 = vpack.c.b16 %v466, %v465
    %v470 = vpack.c.b16 %v468, %v467
    %vm473 = vcmask 261120
    %v475 = vsel %vm473, %v453, 0
    %477 = vmatprep.subr.bf16.mxu0 0
    %478 = vmatpush1.bf16.msra.mxu0 0
    %479 = vmatprep.subr.bf16.mxu0 0
    %480 = vmatpush1.bf16.msra.mxu0 0
    %481 = vmatprep.subr.bf16.mxu0 0
    %482 = vmatpush1.bf16.msra.mxu0 0
    %483 = vmatprep.subr.bf16.mxu0 0
    %484 = vmatpush1.bf16.msra.mxu0 0
    %485 = vmatprep.subr.bf16.mxu0 0
    %486 = vmatpush1.bf16.msra.mxu0 0
    %487 = vmatprep.subr.bf16.mxu0 0
    %488 = vmatpush1.bf16.msra.mxu0 0
    %489 = vmatprep.subr.bf16.mxu0 0
    %490 = vmatpush1.bf16.msra.mxu0 %v470
    %491 = vmatprep.subr.bf16.mxu0 0
    %492 = vmatpush1.bf16.msra.mxu0 %v469
    %493 = vmatprep.subr.bf16.mxu0 0
    %494 = vmatpush2.bf16.msra.mxu0 0
    %495 = vmatprep.subr.bf16.mxu0 0
    %496 = vmatpush2.bf16.msra.mxu0 0
    %497 = vmatprep.subr.bf16.mxu0 0
    %498 = vmatpush2.bf16.msra.mxu0 0
    %499 = vmatprep.subr.bf16.mxu0 0
    %500 = vmatpush2.bf16.msra.mxu0 0
    %501 = vmatprep.subr.bf16.mxu0 0
    %502 = vmatpush2.bf16.msra.mxu0 0
    %503 = vmatprep.subr.bf16.mxu0 0
    %504 = vmatpush2.bf16.msra.mxu0 0
    %505 = vmatprep.subr.bf16.mxu0 0
    %506 = vmatpush2.bf16.msra.mxu0 0
    %507 = vmatprep.subr.bf16.mxu0 0
    %508 = vmatpush2.bf16.msra.mxu0 0
    %509 = vmatprep.mubr.bf16.mxu0 0
    %510 = vmatmul.mubr.bf16.gmra.mxu0 %v475
    %v511 = vpop.f32.mrf.mxu0
    %v512 = vadd.f32 %v459, %v511
    %v513 = vpop.f32.mrf.mxu0
    %v514 = vpop.f32.mrf.mxu0
    %v515 = vpop.f32.mrf.mxu0
    %516 = vdwg.mxu0
    %v517 = vld [vmem:[%s3] sm:$0xff]
    %v518 = vld [vmem:[%s3 + $0x8] sm:$0xff]
    %v519 = vld [vmem:[#allocation8] sm:$0x3]
    %v520 = vpack.c.bf16 %v518, %v517
    %v521 = vld [vmem:[#allocation10] sm:$0x1]
    %v523 = vlaneseq
    %v524 = vshrl.u32 %v523, 7
    %v525 = vsub.s32 0, %v524
    %v526 = vrot.slane %v521, %v525
    %vm528 = vcmask 31744
    %v530 = vsel %vm528, %v520, 0
    %vm532 = vcmask 1041408
    %v534 = vsel %vm532, %v519, 0
    %536 = vmatprep.subr.bf16.mxu0 0
    %537 = vmatpush1.bf16.msra.mxu0 0
    %538 = vmatprep.subr.bf16.mxu0 0
    %539 = vmatpush1.bf16.msra.mxu0 0
    %540 = vmatprep.subr.bf16.mxu0 0
    %541 = vmatpush1.bf16.msra.mxu0 0
    %542 = vmatprep.subr.bf16.mxu0 0
    %543 = vmatpush1.bf16.msra.mxu0 0
    %544 = vmatprep.subr.bf16.mxu0 0
    %545 = vmatpush1.bf16.msra.mxu0 0
    %546 = vmatprep.subr.bf16.mxu0 0
    %547 = vmatpush1.bf16.msra.mxu0 0
    %548 = vmatprep.subr.bf16.mxu0 0
    %549 = vmatpush1.bf16.msra.mxu0 0
    %550 = vmatprep.subr.bf16.mxu0 0
    %551 = vmatpush1.bf16.msra.mxu0 %v534
    %552 = vmatprep.subr.bf16.mxu0 0
    %553 = vmatpush2.bf16.msra.mxu0 0
    %554 = vmatprep.subr.bf16.mxu0 0
    %555 = vmatpush2.bf16.msra.mxu0 0
    %556 = vmatprep.subr.bf16.mxu0 0
    %557 = vmatpush2.bf16.msra.mxu0 0
    %558 = vmatprep.subr.bf16.mxu0 0
    %559 = vmatpush2.bf16.msra.mxu0 0
    %560 = vmatprep.subr.bf16.mxu0 0
    %561 = vmatpush2.bf16.msra.mxu0 0
    %562 = vmatprep.subr.bf16.mxu0 0
    %563 = vmatpush2.bf16.msra.mxu0 0
    %564 = vmatprep.subr.bf16.mxu0 0
    %565 = vmatpush2.bf16.msra.mxu0 0
    %566 = vmatprep.subr.bf16.mxu0 0
    %567 = vmatpush2.bf16.msra.mxu0 0
    %568 = vmatprep.mubr.bf16.mxu0 0
    %569 = vmatmul.mubr.bf16.gmra.mxu0 %v530
    %v570 = vpop.f32.mrf.mxu0
    %v571 = vadd.f32 %v526, %v570
    %v572 = vpop.f32.mrf.mxu0
    %v573 = vpop.f32.mrf.mxu0
    %v574 = vadd.f32 %v526, %v573
    %v575 = vpop.f32.mrf.mxu0
    %576 = vdwg.mxu0
    %v577 = vxor.u32 %v571, 2147483648
    %v578 = vxor.u32 %v574, 2147483648
    %v579 = vmul.f32 %v577, 1.442695
    %v580 = vpow.pop %v579
    %v581 = vmul.f32 %v578, 1.442695
    %v582 = vpow.pop %v581
    %v583 = vadd.f32 %v580, 1.0
    %v584 = vadd.f32 %v582, 1.0
    %v585 = vrcp.pop %v583
    %v586 = vmul.f32 1.0, %v585
    %v587 = vrcp.pop %v584
    %v588 = vmul.f32 1.0, %v587
    %v589 = vmul.f32 %v571, %v586
    %v590 = vmul.f32 %v574, %v588
    %v591 = vld [vmem:[#allocation11] sm:$0xf]
    %v592 = vld [vmem:[#allocation11 + $0x4] sm:$0xf]
    %v593 = vld [vmem:[#allocation11 + $0x8] sm:$0xf]
    %v594 = vld [vmem:[#allocation11 + $0xc] sm:$0xf]
    %v595 = vpack.c.bf16 %v590, %v589
    %v596 = vld [vmem:[#allocation13] sm:$0x1]
    %v598 = vlaneseq
    %v599 = vshrl.u32 %v598, 7
    %v600 = vsub.s32 0, %v599
    %v601 = vrot.slane %v596, %v600
    %v607 = vunpack.c.l.b16 %v591
    %v608 = vunpack.c.l.b16 %v592
    %v609 = vunpack.c.l.b16 %v593
    %v610 = vunpack.c.l.b16 %v594
    %v611 = vpack.c.b16 %v608, %v607
    %v612 = vpack.c.b16 %v610, %v609
    %v616 = vsel %vm473, %v595, 0
    %618 = vmatprep.subr.bf16.mxu0 0
    %619 = vmatpush1.bf16.msra.mxu0 0
    %620 = vmatprep.subr.bf16.mxu0 0
    %621 = vmatpush1.bf16.msra.mxu0 0
    %622 = vmatprep.subr.bf16.mxu0 0
    %623 = vmatpush1.bf16.msra.mxu0 0
    %624 = vmatprep.subr.bf16.mxu0 0
    %625 = vmatpush1.bf16.msra.mxu0 0
    %626 = vmatprep.subr.bf16.mxu0 0
    %627 = vmatpush1.bf16.msra.mxu0 0
    %628 = vmatprep.subr.bf16.mxu0 0
    %629 = vmatpush1.bf16.msra.mxu0 0
    %630 = vmatprep.subr.bf16.mxu0 0
    %631 = vmatpush1.bf16.msra.mxu0 %v612
    %632 = vmatprep.subr.bf16.mxu0 0
    %633 = vmatpush1.bf16.msra.mxu0 %v611
    %634 = vmatprep.subr.bf16.mxu0 0
    %635 = vmatpush2.bf16.msra.mxu0 0
    %636 = vmatprep.subr.bf16.mxu0 0
    %637 = vmatpush2.bf16.msra.mxu0 0
    %638 = vmatprep.subr.bf16.mxu0 0
    %639 = vmatpush2.bf16.msra.mxu0 0
    %640 = vmatprep.subr.bf16.mxu0 0
    %641 = vmatpush2.bf16.msra.mxu0 0
    %642 = vmatprep.subr.bf16.mxu0 0
    %643 = vmatpush2.bf16.msra.mxu0 0
    %644 = vmatprep.subr.bf16.mxu0 0
    %645 = vmatpush2.bf16.msra.mxu0 0
    %646 = vmatprep.subr.bf16.mxu0 0
    %647 = vmatpush2.bf16.msra.mxu0 0
    %648 = vmatprep.subr.bf16.mxu0 0
    %649 = vmatpush2.bf16.msra.mxu0 0
    %650 = vmatprep.mubr.bf16.mxu0 0
    %651 = vmatmul.mubr.bf16.gmra.mxu0 %v616
    %v652 = vpop.f32.mrf.mxu0
    %v653 = vadd.f32 %v601, %v652
    %v654 = vpop.f32.mrf.mxu0
    %v655 = vpop.f32.mrf.mxu0
    %v656 = vadd.f32 %v601, %v655
    %v657 = vpop.f32.mrf.mxu0
    %658 = vdwg.mxu0
    %v659 = vld [vmem:[%s5] sm:$0xff]
    %v660 = vld [vmem:[%s7] sm:$0xff]
    %v661 = vld [vmem:[%s7 + $0x8] sm:$0xff]
    %v662 = vld [vmem:[%s7 + $0x10] sm:$0xff]
    %v663 = vld [vmem:[%s7 + $0x18] sm:$0xff]
    %v664 = vld [vmem:[%s9] sm:$0xff]
    %v665 = vld [vmem:[%s9 + $0x8] sm:$0xff]
    %v666 = vld [vmem:[%s11] sm:$0xff]
    %v667 = vld [vmem:[%s13] sm:$0x1]
    %v669 = vsel %vm394, %v660, 0
    %v672 = vsel %vm394, %v661, 0
    %v675 = vsel %vm394, %v662, 0
    %v678 = vsel %vm394, %v663, 0
    %680 = vmatprep.subr.mxu0 0.0
    %681 = vmatpush1.msra.mxu0 0.0
    %682 = vmatprep.subr.mxu0 0.0
    %683 = vmatpush1.msra.mxu0 0.0
    %684 = vmatprep.subr.mxu0 0.0
    %685 = vmatpush1.msra.mxu0 0.0
    %686 = vmatprep.subr.mxu0 0.0
    %687 = vmatpush1.msra.mxu0 0.0
    %688 = vmatprep.subr.mxu0 0.0
    %689 = vmatpush1.msra.mxu0 0.0
    %690 = vmatprep.subr.mxu0 0.0
    %691 = vmatpush1.msra.mxu0 0.0
    %692 = vmatprep.subr.mxu0 0.0
    %693 = vmatpush1.msra.mxu0 0.0
    %694 = vmatprep.subr.mxu0 0.0
    %695 = vmatpush1.msra.mxu0 0.0
    %696 = vmatprep.subr.mxu0 0.0
    %697 = vmatpush1.msra.mxu0 0.0
    %698 = vmatprep.subr.mxu0 0.0
    %699 = vmatpush1.msra.mxu0 0.0
    %700 = vmatprep.subr.mxu0 0.0
    %701 = vmatpush1.msra.mxu0 0.0
    %702 = vmatprep.subr.mxu0 0.0
    %703 = vmatpush1.msra.mxu0 0.0
    %704 = vmatprep.subr.mxu0 0.0
    %705 = vmatpush1.msra.mxu0 0.0
    %706 = vmatprep.subr.mxu0 0.0
    %707 = vmatpush1.msra.mxu0 0.0
    %708 = vmatprep.subr.mxu0 0.0
    %709 = vmatpush1.msra.mxu0 0.0
    %710 = vmatprep.subr.mxu0 0.0
    %v711 = vand.u32 %v512, 4294901760
    %712 = vmatpush1.msra.mxu0 %v711
    %713 = vmatprep.subr.mxu0 0.0
    %714 = vmatpush2.msra.mxu0 0.0
    %715 = vmatprep.subr.mxu0 0.0
    %716 = vmatpush2.msra.mxu0 0.0
    %717 = vmatprep.subr.mxu0 0.0
    %718 = vmatpush2.msra.mxu0 0.0
    %719 = vmatprep.subr.mxu0 0.0
    %720 = vmatpush2.msra.mxu0 0.0
    %721 = vmatprep.subr.mxu0 0.0
    %722 = vmatpush2.msra.mxu0 0.0
    %723 = vmatprep.subr.mxu0 0.0
    %724 = vmatpush2.msra.mxu0 0.0
    %725 = vmatprep.subr.mxu0 0.0
    %726 = vmatpush2.msra.mxu0 0.0
    %727 = vmatprep.subr.mxu0 0.0
    %728 = vmatpush2.msra.mxu0 0.0
    %729 = vmatprep.subr.mxu0 0.0
    %730 = vmatpush2.msra.mxu0 0.0
    %731 = vmatprep.subr.mxu0 0.0
    %732 = vmatpush2.msra.mxu0 0.0
    %733 = vmatprep.subr.mxu0 0.0
    %734 = vmatpush2.msra.mxu0 0.0
    %735 = vmatprep.subr.mxu0 0.0
    %736 = vmatpush2.msra.mxu0 0.0
    %737 = vmatprep.subr.mxu0 0.0
    %738 = vmatpush2.msra.mxu0 0.0
    %739 = vmatprep.subr.mxu0 0.0
    %740 = vmatpush2.msra.mxu0 0.0
    %741 = vmatprep.subr.mxu0 0.0
    %742 = vmatpush2.msra.mxu0 0.0
    %743 = vmatprep.subr.mxu0 0.0
    %744 = vmatpush2.msra.mxu0 0.0
    %745 = vmatprep.mubr.f32.mxu0 0.0
    %v746 = vand.u32 %v669, 4294901760
    %v747 = vsub.f32 %v669, %v746
    %v748 = vand.u32 %v747, 4294901760
    %v749 = vsub.f32 %v747, %v748
    %v750 = vand.u32 %v749, 4294901760
    %751 = vmatmul.mubr.f32.gmra.mxu0 %v750
    %v752 = vpop.f32.mrf.mxu0
    %v753 = vadd.f32 0.0, %v752
    %v754 = vpop.f32.mrf.mxu0
    %755 = vmatprep.mubr.f32.mxu0 0.0
    %v756 = vand.u32 %v672, 4294901760
    %v757 = vsub.f32 %v672, %v756
    %v758 = vand.u32 %v757, 4294901760
    %v759 = vsub.f32 %v757, %v758
    %v760 = vand.u32 %v759, 4294901760
    %761 = vmatmul.mubr.f32.gmra.mxu0 %v760
    %v762 = vpop.f32.mrf.mxu0
    %v763 = vadd.f32 0.0, %v762
    %v764 = vpop.f32.mrf.mxu0
    %765 = vmatprep.mubr.f32.mxu0 0.0
    %v766 = vand.u32 %v675, 4294901760
    %v767 = vsub.f32 %v675, %v766
    %v768 = vand.u32 %v767, 4294901760
    %v769 = vsub.f32 %v767, %v768
    %v770 = vand.u32 %v769, 4294901760
    %771 = vmatmul.mubr.f32.gmra.mxu0 %v770
    %v772 = vpop.f32.mrf.mxu0
    %v773 = vadd.f32 0.0, %v772
    %v774 = vpop.f32.mrf.mxu0
    %775 = vmatprep.mubr.f32.mxu0 0.0
    %v776 = vand.u32 %v678, 4294901760
    %v777 = vsub.f32 %v678, %v776
    %v778 = vand.u32 %v777, 4294901760
    %v779 = vsub.f32 %v777, %v778
    %v780 = vand.u32 %v779, 4294901760
    %781 = vmatmul.mubr.f32.gmra.mxu0 %v780
    %v782 = vpop.f32.mrf.mxu0
    %v783 = vadd.f32 0.0, %v782
    %v784 = vpop.f32.mrf.mxu0
    %785 = vdwg.mxu0
    %786 = vmatprep.subr.mxu0 0.0
    %787 = vmatpush1.msra.mxu0 0.0
    %788 = vmatprep.subr.mxu0 0.0
    %789 = vmatpush1.msra.mxu0 0.0
    %790 = vmatprep.subr.mxu0 0.0
    %791 = vmatpush1.msra.mxu0 0.0
    %792 = vmatprep.subr.mxu0 0.0
    %793 = vmatpush1.msra.mxu0 0.0
    %794 = vmatprep.subr.mxu0 0.0
    %795 = vmatpush1.msra.mxu0 0.0
    %796 = vmatprep.subr.mxu0 0.0
    %797 = vmatpush1.msra.mxu0 0.0
    %798 = vmatprep.subr.mxu0 0.0
    %799 = vmatpush1.msra.mxu0 0.0
    %800 = vmatprep.subr.mxu0 0.0
    %801 = vmatpush1.msra.mxu0 0.0
    %802 = vmatprep.subr.mxu0 0.0
    %803 = vmatpush1.msra.mxu0 0.0
    %804 = vmatprep.subr.mxu0 0.0
    %805 = vmatpush1.msra.mxu0 0.0
    %806 = vmatprep.subr.mxu0 0.0
    %807 = vmatpush1.msra.mxu0 0.0
    %808 = vmatprep.subr.mxu0 0.0
    %809 = vmatpush1.msra.mxu0 0.0
    %810 = vmatprep.subr.mxu0 0.0
    %811 = vmatpush1.msra.mxu0 0.0
    %812 = vmatprep.subr.mxu0 0.0
    %813 = vmatpush1.msra.mxu0 0.0
    %814 = vmatprep.subr.mxu0 0.0
    %815 = vmatpush1.msra.mxu0 0.0
    %816 = vmatprep.subr.mxu0 0.0
    %v817 = vand.u32 %v512, 4294901760
    %v818 = vsub.f32 %v512, %v817
    %v819 = vand.u32 %v818, 4294901760
    %v820 = vsub.f32 %v818, %v819
    %v821 = vand.u32 %v820, 4294901760
    %822 = vmatpush1.msra.mxu0 %v821
    %823 = vmatprep.subr.mxu0 0.0
    %824 = vmatpush2.msra.mxu0 0.0
    %825 = vmatprep.subr.mxu0 0.0
    %826 = vmatpush2.msra.mxu0 0.0
    %827 = vmatprep.subr.mxu0 0.0
    %828 = vmatpush2.msra.mxu0 0.0
    %829 = vmatprep.subr.mxu0 0.0
    %830 = vmatpush2.msra.mxu0 0.0
    %831 = vmatprep.subr.mxu0 0.0
    %832 = vmatpush2.msra.mxu0 0.0
    %833 = vmatprep.subr.mxu0 0.0
    %834 = vmatpush2.msra.mxu0 0.0
    %835 = vmatprep.subr.mxu0 0.0
    %836 = vmatpush2.msra.mxu0 0.0
    %837 = vmatprep.subr.mxu0 0.0
    %838 = vmatpush2.msra.mxu0 0.0
    %839 = vmatprep.subr.mxu0 0.0
    %840 = vmatpush2.msra.mxu0 0.0
    %841 = vmatprep.subr.mxu0 0.0
    %842 = vmatpush2.msra.mxu0 0.0
    %843 = vmatprep.subr.mxu0 0.0
    %844 = vmatpush2.msra.mxu0 0.0
    %845 = vmatprep.subr.mxu0 0.0
    %846 = vmatpush2.msra.mxu0 0.0
    %847 = vmatprep.subr.mxu0 0.0
    %848 = vmatpush2.msra.mxu0 0.0
    %849 = vmatprep.subr.mxu0 0.0
    %850 = vmatpush2.msra.mxu0 0.0
    %851 = vmatprep.subr.mxu0 0.0
    %852 = vmatpush2.msra.mxu0 0.0
    %853 = vmatprep.subr.mxu0 0.0
    %854 = vmatpush2.msra.mxu0 0.0
    %855 = vmatprep.mubr.f32.mxu0 0.0
    %v856 = vand.u32 %v669, 4294901760
    %857 = vmatmul.mubr.f32.gmra.mxu0 %v856
    %v858 = vpop.f32.mrf.mxu0
    %v859 = vadd.f32 %v753, %v858
    %v860 = vpop.f32.mrf.mxu0
    %861 = vmatprep.mubr.f32.mxu0 0.0
    %v862 = vand.u32 %v672, 4294901760
    %863 = vmatmul.mubr.f32.gmra.mxu0 %v862
    %v864 = vpop.f32.mrf.mxu0
    %v865 = vadd.f32 %v763, %v864
    %v866 = vpop.f32.mrf.mxu0
    %867 = vmatprep.mubr.f32.mxu0 0.0
    %v868 = vand.u32 %v675, 4294901760
    %869 = vmatmul.mubr.f32.gmra.mxu0 %v868
    %v870 = vpop.f32.mrf.mxu0
    %v871 = vadd.f32 %v773, %v870
    %v872 = vpop.f32.mrf.mxu0
    %873 = vmatprep.mubr.f32.mxu0 0.0
    %v874 = vand.u32 %v678, 4294901760
    %875 = vmatmul.mubr.f32.gmra.mxu0 %v874
    %v876 = vpop.f32.mrf.mxu0
    %v877 = vadd.f32 %v783, %v876
    %v878 = vpop.f32.mrf.mxu0
    %879 = vdwg.mxu0
    %880 = vmatprep.subr.mxu0 0.0
    %881 = vmatpush1.msra.mxu0 0.0
    %882 = vmatprep.subr.mxu0 0.0
    %883 = vmatpush1.msra.mxu0 0.0
    %884 = vmatprep.subr.mxu0 0.0
    %885 = vmatpush1.msra.mxu0 0.0
    %886 = vmatprep.subr.mxu0 0.0
    %887 = vmatpush1.msra.mxu0 0.0
    %888 = vmatprep.subr.mxu0 0.0
    %889 = vmatpush1.msra.mxu0 0.0
    %890 = vmatprep.subr.mxu0 0.0
    %891 = vmatpush1.msra.mxu0 0.0
    %892 = vmatprep.subr.mxu0 0.0
    %893 = vmatpush1.msra.mxu0 0.0
    %894 = vmatprep.subr.mxu0 0.0
    %895 = vmatpush1.msra.mxu0 0.0
    %896 = vmatprep.subr.mxu0 0.0
    %897 = vmatpush1.msra.mxu0 0.0
    %898 = vmatprep.subr.mxu0 0.0
    %899 = vmatpush1.msra.mxu0 0.0
    %900 = vmatprep.subr.mxu0 0.0
    %901 = vmatpush1.msra.mxu0 0.0
    %902 = vmatprep.subr.mxu0 0.0
    %903 = vmatpush1.msra.mxu0 0.0
    %904 = vmatprep.subr.mxu0 0.0
    %905 = vmatpush1.msra.mxu0 0.0
    %906 = vmatprep.subr.mxu0 0.0
    %907 = vmatpush1.msra.mxu0 0.0
    %908 = vmatprep.subr.mxu0 0.0
    %909 = vmatpush1.msra.mxu0 0.0
    %910 = vmatprep.subr.mxu0 0.0
    %v911 = vand.u32 %v512, 4294901760
    %v912 = vsub.f32 %v512, %v911
    %913 = vmatpush1.msra.mxu0 %v912
    %914 = vmatprep.subr.mxu0 0.0
    %915 = vmatpush2.msra.mxu0 0.0
    %916 = vmatprep.subr.mxu0 0.0
    %917 = vmatpush2.msra.mxu0 0.0
    %918 = vmatprep.subr.mxu0 0.0
    %919 = vmatpush2.msra.mxu0 0.0
    %920 = vmatprep.subr.mxu0 0.0
    %921 = vmatpush2.msra.mxu0 0.0
    %922 = vmatprep.subr.mxu0 0.0
    %923 = vmatpush2.msra.mxu0 0.0
    %924 = vmatprep.subr.mxu0 0.0
    %925 = vmatpush2.msra.mxu0 0.0
    %926 = vmatprep.subr.mxu0 0.0
    %927 = vmatpush2.msra.mxu0 0.0
    %928 = vmatprep.subr.mxu0 0.0
    %929 = vmatpush2.msra.mxu0 0.0
    %930 = vmatprep.subr.mxu0 0.0
    %931 = vmatpush2.msra.mxu0 0.0
    %932 = vmatprep.subr.mxu0 0.0
    %933 = vmatpush2.msra.mxu0 0.0
    %934 = vmatprep.subr.mxu0 0.0
    %935 = vmatpush2.msra.mxu0 0.0
    %936 = vmatprep.subr.mxu0 0.0
    %937 = vmatpush2.msra.mxu0 0.0
    %938 = vmatprep.subr.mxu0 0.0
    %939 = vmatpush2.msra.mxu0 0.0
    %940 = vmatprep.subr.mxu0 0.0
    %941 = vmatpush2.msra.mxu0 0.0
    %942 = vmatprep.subr.mxu0 0.0
    %943 = vmatpush2.msra.mxu0 0.0
    %944 = vmatprep.subr.mxu0 0.0
    %945 = vmatpush2.msra.mxu0 0.0
    %946 = vmatprep.mubr.f32.mxu0 0.0
    %v947 = vand.u32 %v669, 4294901760
    %v948 = vsub.f32 %v669, %v947
    %949 = vmatmul.mubr.f32.gmra.mxu0 %v948
    %v950 = vpop.f32.mrf.mxu0
    %v951 = vadd.f32 %v859, %v950
    %v952 = vpop.f32.mrf.mxu0
    %953 = vmatprep.mubr.f32.mxu0 0.0
    %v954 = vand.u32 %v672, 4294901760
    %v955 = vsub.f32 %v672, %v954
    %956 = vmatmul.mubr.f32.gmra.mxu0 %v955
    %v957 = vpop.f32.mrf.mxu0
    %v958 = vadd.f32 %v865, %v957
    %v959 = vpop.f32.mrf.mxu0
    %960 = vmatprep.mubr.f32.mxu0 0.0
    %v961 = vand.u32 %v675, 4294901760
    %v962 = vsub.f32 %v675, %v961
    %963 = vmatmul.mubr.f32.gmra.mxu0 %v962
    %v964 = vpop.f32.mrf.mxu0
    %v965 = vadd.f32 %v871, %v964
    %v966 = vpop.f32.mrf.mxu0
    %967 = vmatprep.mubr.f32.mxu0 0.0
    %v968 = vand.u32 %v678, 4294901760
    %v969 = vsub.f32 %v678, %v968
    %970 = vmatmul.mubr.f32.gmra.mxu0 %v969
    %v971 = vpop.f32.mrf.mxu0
    %v972 = vadd.f32 %v877, %v971
    %v973 = vpop.f32.mrf.mxu0
    %974 = vdwg.mxu0
    %975 = vmatprep.subr.mxu0 0.0
    %976 = vmatpush1.msra.mxu0 0.0
    %977 = vmatprep.subr.mxu0 0.0
    %978 = vmatpush1.msra.mxu0 0.0
    %979 = vmatprep.subr.mxu0 0.0
    %980 = vmatpush1.msra.mxu0 0.0
    %981 = vmatprep.subr.mxu0 0.0
    %982 = vmatpush1.msra.mxu0 0.0
    %983 = vmatprep.subr.mxu0 0.0
    %984 = vmatpush1.msra.mxu0 0.0
    %985 = vmatprep.subr.mxu0 0.0
    %986 = vmatpush1.msra.mxu0 0.0
    %987 = vmatprep.subr.mxu0 0.0
    %988 = vmatpush1.msra.mxu0 0.0
    %989 = vmatprep.subr.mxu0 0.0
    %990 = vmatpush1.msra.mxu0 0.0
    %991 = vmatprep.subr.mxu0 0.0
    %992 = vmatpush1.msra.mxu0 0.0
    %993 = vmatprep.subr.mxu0 0.0
    %994 = vmatpush1.msra.mxu0 0.0
    %995 = vmatprep.subr.mxu0 0.0
    %996 = vmatpush1.msra.mxu0 0.0
    %997 = vmatprep.subr.mxu0 0.0
    %998 = vmatpush1.msra.mxu0 0.0
    %999 = vmatprep.subr.mxu0 0.0
    %1000 = vmatpush1.msra.mxu0 0.0
    %1001 = vmatprep.subr.mxu0 0.0
    %1002 = vmatpush1.msra.mxu0 0.0
    %1003 = vmatprep.subr.mxu0 0.0
    %1004 = vmatpush1.msra.mxu0 0.0
    %1005 = vmatprep.subr.mxu0 0.0
    %v1006 = vand.u32 %v512, 4294901760
    %1007 = vmatpush1.msra.mxu0 %v1006
    %1008 = vmatprep.subr.mxu0 0.0
    %1009 = vmatpush2.msra.mxu0 0.0
    %1010 = vmatprep.subr.mxu0 0.0
    %1011 = vmatpush2.msra.mxu0 0.0
    %1012 = vmatprep.subr.mxu0 0.0
    %1013 = vmatpush2.msra.mxu0 0.0
    %1014 = vmatprep.subr.mxu0 0.0
    %1015 = vmatpush2.msra.mxu0 0.0
    %1016 = vmatprep.subr.mxu0 0.0
    %1017 = vmatpush2.msra.mxu0 0.0
    %1018 = vmatprep.subr.mxu0 0.0
    %1019 = vmatpush2.msra.mxu0 0.0
    %1020 = vmatprep.subr.mxu0 0.0
    %1021 = vmatpush2.msra.mxu0 0.0
    %1022 = vmatprep.subr.mxu0 0.0
    %1023 = vmatpush2.msra.mxu0 0.0
    %1024 = vmatprep.subr.mxu0 0.0
    %1025 = vmatpush2.msra.mxu0 0.0
    %1026 = vmatprep.subr.mxu0 0.0
    %1027 = vmatpush2.msra.mxu0 0.0
    %1028 = vmatprep.subr.mxu0 0.0
    %1029 = vmatpush2.msra.mxu0 0.0
    %1030 = vmatprep.subr.mxu0 0.0
    %1031 = vmatpush2.msra.mxu0 0.0
    %1032 = vmatprep.subr.mxu0 0.0
    %1033 = vmatpush2.msra.mxu0 0.0
    %1034 = vmatprep.subr.mxu0 0.0
    %1035 = vmatpush2.msra.mxu0 0.0
    %1036 = vmatprep.subr.mxu0 0.0
    %1037 = vmatpush2.msra.mxu0 0.0
    %1038 = vmatprep.subr.mxu0 0.0
    %1039 = vmatpush2.msra.mxu0 0.0
    %1040 = vmatprep.mubr.f32.mxu0 0.0
    %v1041 = vand.u32 %v669, 4294901760
    %v1042 = vsub.f32 %v669, %v1041
    %v1043 = vand.u32 %v1042, 4294901760
    %1044 = vmatmul.mubr.f32.gmra.mxu0 %v1043
    %v1045 = vpop.f32.mrf.mxu0
    %v1046 = vadd.f32 %v951, %v1045
    %v1047 = vpop.f32.mrf.mxu0
    %1048 = vmatprep.mubr.f32.mxu0 0.0
    %v1049 = vand.u32 %v672, 4294901760
    %v1050 = vsub.f32 %v672, %v1049
    %v1051 = vand.u32 %v1050, 4294901760
    %1052 = vmatmul.mubr.f32.gmra.mxu0 %v1051
    %v1053 = vpop.f32.mrf.mxu0
    %v1054 = vadd.f32 %v958, %v1053
    %v1055 = vpop.f32.mrf.mxu0
    %1056 = vmatprep.mubr.f32.mxu0 0.0
    %v1057 = vand.u32 %v675, 4294901760
    %v1058 = vsub.f32 %v675, %v1057
    %v1059 = vand.u32 %v1058, 4294901760
    %1060 = vmatmul.mubr.f32.gmra.mxu0 %v1059
    %v1061 = vpop.f32.mrf.mxu0
    %v1062 = vadd.f32 %v965, %v1061
    %v1063 = vpop.f32.mrf.mxu0
    %1064 = vmatprep.mubr.f32.mxu0 0.0
    %v1065 = vand.u32 %v678, 4294901760
    %v1066 = vsub.f32 %v678, %v1065
    %v1067 = vand.u32 %v1066, 4294901760
    %1068 = vmatmul.mubr.f32.gmra.mxu0 %v1067
    %v1069 = vpop.f32.mrf.mxu0
    %v1070 = vadd.f32 %v972, %v1069
    %v1071 = vpop.f32.mrf.mxu0
    %1072 = vdwg.mxu0
    %1073 = vmatprep.subr.mxu0 0.0
    %1074 = vmatpush1.msra.mxu0 0.0
    %1075 = vmatprep.subr.mxu0 0.0
    %1076 = vmatpush1.msra.mxu0 0.0
    %1077 = vmatprep.subr.mxu0 0.0
    %1078 = vmatpush1.msra.mxu0 0.0
    %1079 = vmatprep.subr.mxu0 0.0
    %1080 = vmatpush1.msra.mxu0 0.0
    %1081 = vmatprep.subr.mxu0 0.0
    %1082 = vmatpush1.msra.mxu0 0.0
    %1083 = vmatprep.subr.mxu0 0.0
    %1084 = vmatpush1.msra.mxu0 0.0
    %1085 = vmatprep.subr.mxu0 0.0
    %1086 = vmatpush1.msra.mxu0 0.0
    %1087 = vmatprep.subr.mxu0 0.0
    %1088 = vmatpush1.msra.mxu0 0.0
    %1089 = vmatprep.subr.mxu0 0.0
    %1090 = vmatpush1.msra.mxu0 0.0
    %1091 = vmatprep.subr.mxu0 0.0
    %1092 = vmatpush1.msra.mxu0 0.0
    %1093 = vmatprep.subr.mxu0 0.0
    %1094 = vmatpush1.msra.mxu0 0.0
    %1095 = vmatprep.subr.mxu0 0.0
    %1096 = vmatpush1.msra.mxu0 0.0
    %1097 = vmatprep.subr.mxu0 0.0
    %1098 = vmatpush1.msra.mxu0 0.0
    %1099 = vmatprep.subr.mxu0 0.0
    %1100 = vmatpush1.msra.mxu0 0.0
    %1101 = vmatprep.subr.mxu0 0.0
    %1102 = vmatpush1.msra.mxu0 0.0
    %1103 = vmatprep.subr.mxu0 0.0
    %v1104 = vand.u32 %v512, 4294901760
    %v1105 = vsub.f32 %v512, %v1104
    %v1106 = vand.u32 %v1105, 4294901760
    %1107 = vmatpush1.msra.mxu0 %v1106
    %1108 = vmatprep.subr.mxu0 0.0
    %1109 = vmatpush2.msra.mxu0 0.0
    %1110 = vmatprep.subr.mxu0 0.0
    %1111 = vmatpush2.msra.mxu0 0.0
    %1112 = vmatprep.subr.mxu0 0.0
    %1113 = vmatpush2.msra.mxu0 0.0
    %1114 = vmatprep.subr.mxu0 0.0
    %1115 = vmatpush2.msra.mxu0 0.0
    %1116 = vmatprep.subr.mxu0 0.0
    %1117 = vmatpush2.msra.mxu0 0.0
    %1118 = vmatprep.subr.mxu0 0.0
    %1119 = vmatpush2.msra.mxu0 0.0
    %1120 = vmatprep.subr.mxu0 0.0
    %1121 = vmatpush2.msra.mxu0 0.0
    %1122 = vmatprep.subr.mxu0 0.0
    %1123 = vmatpush2.msra.mxu0 0.0
    %1124 = vmatprep.subr.mxu0 0.0
    %1125 = vmatpush2.msra.mxu0 0.0
    %1126 = vmatprep.subr.mxu0 0.0
    %1127 = vmatpush2.msra.mxu0 0.0
    %1128 = vmatprep.subr.mxu0 0.0
    %1129 = vmatpush2.msra.mxu0 0.0
    %1130 = vmatprep.subr.mxu0 0.0
    %1131 = vmatpush2.msra.mxu0 0.0
    %1132 = vmatprep.subr.mxu0 0.0
    %1133 = vmatpush2.msra.mxu0 0.0
    %1134 = vmatprep.subr.mxu0 0.0
    %1135 = vmatpush2.msra.mxu0 0.0
    %1136 = vmatprep.subr.mxu0 0.0
    %1137 = vmatpush2.msra.mxu0 0.0
    %1138 = vmatprep.subr.mxu0 0.0
    %1139 = vmatpush2.msra.mxu0 0.0
    %1140 = vmatprep.mubr.f32.mxu0 0.0
    %v1141 = vand.u32 %v669, 4294901760
    %1142 = vmatmul.mubr.f32.gmra.mxu0 %v1141
    %v1143 = vpop.f32.mrf.mxu0
    %v1144 = vadd.f32 %v1046, %v1143
    %v1145 = vpop.f32.mrf.mxu0
    %1146 = vmatprep.mubr.f32.mxu0 0.0
    %v1147 = vand.u32 %v672, 4294901760
    %1148 = vmatmul.mubr.f32.gmra.mxu0 %v1147
    %v1149 = vpop.f32.mrf.mxu0
    %v1150 = vadd.f32 %v1054, %v1149
    %v1151 = vpop.f32.mrf.mxu0
    %1152 = vmatprep.mubr.f32.mxu0 0.0
    %v1153 = vand.u32 %v675, 4294901760
    %1154 = vmatmul.mubr.f32.gmra.mxu0 %v1153
    %v1155 = vpop.f32.mrf.mxu0
    %v1156 = vadd.f32 %v1062, %v1155
    %v1157 = vpop.f32.mrf.mxu0
    %1158 = vmatprep.mubr.f32.mxu0 0.0
    %v1159 = vand.u32 %v678, 4294901760
    %1160 = vmatmul.mubr.f32.gmra.mxu0 %v1159
    %v1161 = vpop.f32.mrf.mxu0
    %v1162 = vadd.f32 %v1070, %v1161
    %v1163 = vpop.f32.mrf.mxu0
    %1164 = vdwg.mxu0
    %1165 = vmatprep.subr.mxu0 0.0
    %1166 = vmatpush1.msra.mxu0 0.0
    %1167 = vmatprep.subr.mxu0 0.0
    %1168 = vmatpush1.msra.mxu0 0.0
    %1169 = vmatprep.subr.mxu0 0.0
    %1170 = vmatpush1.msra.mxu0 0.0
    %1171 = vmatprep.subr.mxu0 0.0
    %1172 = vmatpush1.msra.mxu0 0.0
    %1173 = vmatprep.subr.mxu0 0.0
    %1174 = vmatpush1.msra.mxu0 0.0
    %1175 = vmatprep.subr.mxu0 0.0
    %1176 = vmatpush1.msra.mxu0 0.0
    %1177 = vmatprep.subr.mxu0 0.0
    %1178 = vmatpush1.msra.mxu0 0.0
    %1179 = vmatprep.subr.mxu0 0.0
    %1180 = vmatpush1.msra.mxu0 0.0
    %1181 = vmatprep.subr.mxu0 0.0
    %1182 = vmatpush1.msra.mxu0 0.0
    %1183 = vmatprep.subr.mxu0 0.0
    %1184 = vmatpush1.msra.mxu0 0.0
    %1185 = vmatprep.subr.mxu0 0.0
    %1186 = vmatpush1.msra.mxu0 0.0
    %1187 = vmatprep.subr.mxu0 0.0
    %1188 = vmatpush1.msra.mxu0 0.0
    %1189 = vmatprep.subr.mxu0 0.0
    %1190 = vmatpush1.msra.mxu0 0.0
    %1191 = vmatprep.subr.mxu0 0.0
    %1192 = vmatpush1.msra.mxu0 0.0
    %1193 = vmatprep.subr.mxu0 0.0
    %1194 = vmatpush1.msra.mxu0 0.0
    %1195 = vmatprep.subr.mxu0 0.0
    %v1196 = vand.u32 %v512, 4294901760
    %1197 = vmatpush1.msra.mxu0 %v1196
    %1198 = vmatprep.subr.mxu0 0.0
    %1199 = vmatpush2.msra.mxu0 0.0
    %1200 = vmatprep.subr.mxu0 0.0
    %1201 = vmatpush2.msra.mxu0 0.0
    %1202 = vmatprep.subr.mxu0 0.0
    %1203 = vmatpush2.msra.mxu0 0.0
    %1204 = vmatprep.subr.mxu0 0.0
    %1205 = vmatpush2.msra.mxu0 0.0
    %1206 = vmatprep.subr.mxu0 0.0
    %1207 = vmatpush2.msra.mxu0 0.0
    %1208 = vmatprep.subr.mxu0 0.0
    %1209 = vmatpush2.msra.mxu0 0.0
    %1210 = vmatprep.subr.mxu0 0.0
    %1211 = vmatpush2.msra.mxu0 0.0
    %1212 = vmatprep.subr.mxu0 0.0
    %1213 = vmatpush2.msra.mxu0 0.0
    %1214 = vmatprep.subr.mxu0 0.0
    %1215 = vmatpush2.msra.mxu0 0.0
    %1216 = vmatprep.subr.mxu0 0.0
    %1217 = vmatpush2.msra.mxu0 0.0
    %1218 = vmatprep.subr.mxu0 0.0
    %1219 = vmatpush2.msra.mxu0 0.0
    %1220 = vmatprep.subr.mxu0 0.0
    %1221 = vmatpush2.msra.mxu0 0.0
    %1222 = vmatprep.subr.mxu0 0.0
    %1223 = vmatpush2.msra.mxu0 0.0
    %1224 = vmatprep.subr.mxu0 0.0
    %1225 = vmatpush2.msra.mxu0 0.0
    %1226 = vmatprep.subr.mxu0 0.0
    %1227 = vmatpush2.msra.mxu0 0.0
    %1228 = vmatprep.subr.mxu0 0.0
    %1229 = vmatpush2.msra.mxu0 0.0
    %1230 = vmatprep.mubr.f32.mxu0 0.0
    %v1231 = vand.u32 %v669, 4294901760
    %1232 = vmatmul.mubr.f32.gmra.mxu0 %v1231
    %v1233 = vpop.f32.mrf.mxu0
    %v1234 = vadd.f32 %v1144, %v1233
    %v1235 = vpop.f32.mrf.mxu0
    %1236 = vmatprep.mubr.f32.mxu0 0.0
    %v1237 = vand.u32 %v672, 4294901760
    %1238 = vmatmul.mubr.f32.gmra.mxu0 %v1237
    %v1239 = vpop.f32.mrf.mxu0
    %v1240 = vadd.f32 %v1150, %v1239
    %v1241 = vpop.f32.mrf.mxu0
    %1242 = vmatprep.mubr.f32.mxu0 0.0
    %v1243 = vand.u32 %v675, 4294901760
    %1244 = vmatmul.mubr.f32.gmra.mxu0 %v1243
    %v1245 = vpop.f32.mrf.mxu0
    %v1246 = vadd.f32 %v1156, %v1245
    %v1247 = vpop.f32.mrf.mxu0
    %1248 = vmatprep.mubr.f32.mxu0 0.0
    %v1249 = vand.u32 %v678, 4294901760
    %1250 = vmatmul.mubr.f32.gmra.mxu0 %v1249
    %v1251 = vpop.f32.mrf.mxu0
    %v1252 = vadd.f32 %v1162, %v1251
    %v1253 = vpop.f32.mrf.mxu0
    %1254 = vdwg.mxu0
    %v1256 = vsel %vm394, %v664, 0
    %v1259 = vsel %vm394, %v665, 0
    %1261 = vmatprep.subr.mxu0 0.0
    %1262 = vmatpush1.msra.mxu0 0.0
    %1263 = vmatprep.subr.mxu0 0.0
    %1264 = vmatpush1.msra.mxu0 0.0
    %1265 = vmatprep.subr.mxu0 0.0
    %1266 = vmatpush1.msra.mxu0 0.0
    %1267 = vmatprep.subr.mxu0 0.0
    %1268 = vmatpush1.msra.mxu0 0.0
    %1269 = vmatprep.subr.mxu0 0.0
    %1270 = vmatpush1.msra.mxu0 0.0
    %1271 = vmatprep.subr.mxu0 0.0
    %1272 = vmatpush1.msra.mxu0 0.0
    %1273 = vmatprep.subr.mxu0 0.0
    %1274 = vmatpush1.msra.mxu0 0.0
    %1275 = vmatprep.subr.mxu0 0.0
    %1276 = vmatpush1.msra.mxu0 0.0
    %1277 = vmatprep.subr.mxu0 0.0
    %1278 = vmatpush1.msra.mxu0 0.0
    %1279 = vmatprep.subr.mxu0 0.0
    %1280 = vmatpush1.msra.mxu0 0.0
    %1281 = vmatprep.subr.mxu0 0.0
    %1282 = vmatpush1.msra.mxu0 0.0
    %1283 = vmatprep.subr.mxu0 0.0
    %1284 = vmatpush1.msra.mxu0 0.0
    %1285 = vmatprep.subr.mxu0 0.0
    %1286 = vmatpush1.msra.mxu0 0.0
    %1287 = vmatprep.subr.mxu0 0.0
    %1288 = vmatpush1.msra.mxu0 0.0
    %1289 = vmatprep.subr.mxu0 0.0
    %1290 = vmatpush1.msra.mxu0 0.0
    %1291 = vmatprep.subr.mxu0 0.0
    %v1292 = vand.u32 %v659, 4294901760
    %1293 = vmatpush1.msra.mxu0 %v1292
    %1294 = vmatprep.subr.mxu0 0.0
    %1295 = vmatpush2.msra.mxu0 0.0
    %1296 = vmatprep.subr.mxu0 0.0
    %1297 = vmatpush2.msra.mxu0 0.0
    %1298 = vmatprep.subr.mxu0 0.0
    %1299 = vmatpush2.msra.mxu0 0.0
    %1300 = vmatprep.subr.mxu0 0.0
    %1301 = vmatpush2.msra.mxu0 0.0
    %1302 = vmatprep.subr.mxu0 0.0
    %1303 = vmatpush2.msra.mxu0 0.0
    %1304 = vmatprep.subr.mxu0 0.0
    %1305 = vmatpush2.msra.mxu0 0.0
    %1306 = vmatprep.subr.mxu0 0.0
    %1307 = vmatpush2.msra.mxu0 0.0
    %1308 = vmatprep.subr.mxu0 0.0
    %1309 = vmatpush2.msra.mxu0 0.0
    %1310 = vmatprep.subr.mxu0 0.0
    %1311 = vmatpush2.msra.mxu0 0.0
    %1312 = vmatprep.subr.mxu0 0.0
    %1313 = vmatpush2.msra.mxu0 0.0
    %1314 = vmatprep.subr.mxu0 0.0
    %1315 = vmatpush2.msra.mxu0 0.0
    %1316 = vmatprep.subr.mxu0 0.0
    %1317 = vmatpush2.msra.mxu0 0.0
    %1318 = vmatprep.subr.mxu0 0.0
    %1319 = vmatpush2.msra.mxu0 0.0
    %1320 = vmatprep.subr.mxu0 0.0
    %1321 = vmatpush2.msra.mxu0 0.0
    %1322 = vmatprep.subr.mxu0 0.0
    %1323 = vmatpush2.msra.mxu0 0.0
    %1324 = vmatprep.subr.mxu0 0.0
    %1325 = vmatpush2.msra.mxu0 0.0
    %1326 = vmatprep.mubr.f32.mxu0 0.0
    %v1327 = vand.u32 %v1256, 4294901760
    %v1328 = vsub.f32 %v1256, %v1327
    %v1329 = vand.u32 %v1328, 4294901760
    %v1330 = vsub.f32 %v1328, %v1329
    %v1331 = vand.u32 %v1330, 4294901760
    %1332 = vmatmul.mubr.f32.gmra.mxu0 %v1331
    %v1333 = vpop.f32.mrf.mxu0
    %v1334 = vadd.f32 0.0, %v1333
    %v1335 = vpop.f32.mrf.mxu0
    %1336 = vmatprep.mubr.f32.mxu0 0.0
    %v1337 = vand.u32 %v1259, 4294901760
    %v1338 = vsub.f32 %v1259, %v1337
    %v1339 = vand.u32 %v1338, 4294901760
    %v1340 = vsub.f32 %v1338, %v1339
    %v1341 = vand.u32 %v1340, 4294901760
    %1342 = vmatmul.mubr.f32.gmra.mxu0 %v1341
    %v1343 = vpop.f32.mrf.mxu0
    %v1344 = vadd.f32 0.0, %v1343
    %v1345 = vpop.f32.mrf.mxu0
    %1346 = vdwg.mxu0
    %1347 = vmatprep.subr.mxu0 0.0
    %1348 = vmatpush1.msra.mxu0 0.0
    %1349 = vmatprep.subr.mxu0 0.0
    %1350 = vmatpush1.msra.mxu0 0.0
    %1351 = vmatprep.subr.mxu0 0.0
    %1352 = vmatpush1.msra.mxu0 0.0
    %1353 = vmatprep.subr.mxu0 0.0
    %1354 = vmatpush1.msra.mxu0 0.0
    %1355 = vmatprep.subr.mxu0 0.0
    %1356 = vmatpush1.msra.mxu0 0.0
    %1357 = vmatprep.subr.mxu0 0.0
    %1358 = vmatpush1.msra.mxu0 0.0
    %1359 = vmatprep.subr.mxu0 0.0
    %1360 = vmatpush1.msra.mxu0 0.0
    %1361 = vmatprep.subr.mxu0 0.0
    %1362 = vmatpush1.msra.mxu0 0.0
    %1363 = vmatprep.subr.mxu0 0.0
    %1364 = vmatpush1.msra.mxu0 0.0
    %1365 = vmatprep.subr.mxu0 0.0
    %1366 = vmatpush1.msra.mxu0 0.0
    %1367 = vmatprep.subr.mxu0 0.0
    %1368 = vmatpush1.msra.mxu0 0.0
    %1369 = vmatprep.subr.mxu0 0.0
    %1370 = vmatpush1.msra.mxu0 0.0
    %1371 = vmatprep.subr.mxu0 0.0
    %1372 = vmatpush1.msra.mxu0 0.0
    %1373 = vmatprep.subr.mxu0 0.0
    %1374 = vmatpush1.msra.mxu0 0.0
    %1375 = vmatprep.subr.mxu0 0.0
    %1376 = vmatpush1.msra.mxu0 0.0
    %1377 = vmatprep.subr.mxu0 0.0
    %v1378 = vand.u32 %v659, 4294901760
    %v1379 = vsub.f32 %v659, %v1378
    %v1380 = vand.u32 %v1379, 4294901760
    %v1381 = vsub.f32 %v1379, %v1380
    %v1382 = vand.u32 %v1381, 4294901760
    %1383 = vmatpush1.msra.mxu0 %v1382
    %1384 = vmatprep.subr.mxu0 0.0
    %1385 = vmatpush2.msra.mxu0 0.0
    %1386 = vmatprep.subr.mxu0 0.0
    %1387 = vmatpush2.msra.mxu0 0.0
    %1388 = vmatprep.subr.mxu0 0.0
    %1389 = vmatpush2.msra.mxu0 0.0
    %1390 = vmatprep.subr.mxu0 0.0
    %1391 = vmatpush2.msra.mxu0 0.0
    %1392 = vmatprep.subr.mxu0 0.0
    %1393 = vmatpush2.msra.mxu0 0.0
    %1394 = vmatprep.subr.mxu0 0.0
    %1395 = vmatpush2.msra.mxu0 0.0
    %1396 = vmatprep.subr.mxu0 0.0
    %1397 = vmatpush2.msra.mxu0 0.0
    %1398 = vmatprep.subr.mxu0 0.0
    %1399 = vmatpush2.msra.mxu0 0.0
    %1400 = vmatprep.subr.mxu0 0.0
    %1401 = vmatpush2.msra.mxu0 0.0
    %1402 = vmatprep.subr.mxu0 0.0
    %1403 = vmatpush2.msra.mxu0 0.0
    %1404 = vmatprep.subr.mxu0 0.0
    %1405 = vmatpush2.msra.mxu0 0.0
    %1406 = vmatprep.subr.mxu0 0.0
    %1407 = vmatpush2.msra.mxu0 0.0
    %1408 = vmatprep.subr.mxu0 0.0
    %1409 = vmatpush2.msra.mxu0 0.0
    %1410 = vmatprep.subr.mxu0 0.0
    %1411 = vmatpush2.msra.mxu0 0.0
    %1412 = vmatprep.subr.mxu0 0.0
    %1413 = vmatpush2.msra.mxu0 0.0
    %1414 = vmatprep.subr.mxu0 0.0
    %1415 = vmatpush2.msra.mxu0 0.0
    %1416 = vmatprep.mubr.f32.mxu0 0.0
    %v1417 = vand.u32 %v1256, 4294901760
    %1418 = vmatmul.mubr.f32.gmra.mxu0 %v1417
    %v1419 = vpop.f32.mrf.mxu0
    %v1420 = vadd.f32 %v1334, %v1419
    %v1421 = vpop.f32.mrf.mxu0
    %1422 = vmatprep.mubr.f32.mxu0 0.0
    %v1423 = vand.u32 %v1259, 4294901760
    %1424 = vmatmul.mubr.f32.gmra.mxu0 %v1423
    %v1425 = vpop.f32.mrf.mxu0
    %v1426 = vadd.f32 %v1344, %v1425
    %v1427 = vpop.f32.mrf.mxu0
    %1428 = vdwg.mxu0
    %1429 = vmatprep.subr.mxu0 0.0
    %1430 = vmatpush1.msra.mxu0 0.0
    %1431 = vmatprep.subr.mxu0 0.0
    %1432 = vmatpush1.msra.mxu0 0.0
    %1433 = vmatprep.subr.mxu0 0.0
    %1434 = vmatpush1.msra.mxu0 0.0
    %1435 = vmatprep.subr.mxu0 0.0
    %1436 = vmatpush1.msra.mxu0 0.0
    %1437 = vmatprep.subr.mxu0 0.0
    %1438 = vmatpush1.msra.mxu0 0.0
    %1439 = vmatprep.subr.mxu0 0.0
    %1440 = vmatpush1.msra.mxu0 0.0
    %1441 = vmatprep.subr.mxu0 0.0
    %1442 = vmatpush1.msra.mxu0 0.0
    %1443 = vmatprep.subr.mxu0 0.0
    %1444 = vmatpush1.msra.mxu0 0.0
    %1445 = vmatprep.subr.mxu0 0.0
    %1446 = vmatpush1.msra.mxu0 0.0
    %1447 = vmatprep.subr.mxu0 0.0
    %1448 = vmatpush1.msra.mxu0 0.0
    %1449 = vmatprep.subr.mxu0 0.0
    %1450 = vmatpush1.msra.mxu0 0.0
    %1451 = vmatprep.subr.mxu0 0.0
    %1452 = vmatpush1.msra.mxu0 0.0
    %1453 = vmatprep.subr.mxu0 0.0
    %1454 = vmatpush1.msra.mxu0 0.0
    %1455 = vmatprep.subr.mxu0 0.0
    %1456 = vmatpush1.msra.mxu0 0.0
    %1457 = vmatprep.subr.mxu0 0.0
    %1458 = vmatpush1.msra.mxu0 0.0
    %1459 = vmatprep.subr.mxu0 0.0
    %v1460 = vand.u32 %v659, 4294901760
    %v1461 = vsub.f32 %v659, %v1460
    %1462 = vmatpush1.msra.mxu0 %v1461
    %1463 = vmatprep.subr.mxu0 0.0
    %1464 = vmatpush2.msra.mxu0 0.0
    %1465 = vmatprep.subr.mxu0 0.0
    %1466 = vmatpush2.msra.mxu0 0.0
    %1467 = vmatprep.subr.mxu0 0.0
    %1468 = vmatpush2.msra.mxu0 0.0
    %1469 = vmatprep.subr.mxu0 0.0
    %1470 = vmatpush2.msra.mxu0 0.0
    %1471 = vmatprep.subr.mxu0 0.0
    %1472 = vmatpush2.msra.mxu0 0.0
    %1473 = vmatprep.subr.mxu0 0.0
    %1474 = vmatpush2.msra.mxu0 0.0
    %1475 = vmatprep.subr.mxu0 0.0
    %1476 = vmatpush2.msra.mxu0 0.0
    %1477 = vmatprep.subr.mxu0 0.0
    %1478 = vmatpush2.msra.mxu0 0.0
    %1479 = vmatprep.subr.mxu0 0.0
    %1480 = vmatpush2.msra.mxu0 0.0
    %1481 = vmatprep.subr.mxu0 0.0
    %1482 = vmatpush2.msra.mxu0 0.0
    %1483 = vmatprep.subr.mxu0 0.0
    %1484 = vmatpush2.msra.mxu0 0.0
    %1485 = vmatprep.subr.mxu0 0.0
    %1486 = vmatpush2.msra.mxu0 0.0
    %1487 = vmatprep.subr.mxu0 0.0
    %1488 = vmatpush2.msra.mxu0 0.0
    %1489 = vmatprep.subr.mxu0 0.0
    %1490 = vmatpush2.msra.mxu0 0.0
    %1491 = vmatprep.subr.mxu0 0.0
    %1492 = vmatpush2.msra.mxu0 0.0
    %1493 = vmatprep.subr.mxu0 0.0
    %1494 = vmatpush2.msra.mxu0 0.0
    %1495 = vmatprep.mubr.f32.mxu0 0.0
    %v1496 = vand.u32 %v1256, 4294901760
    %v1497 = vsub.f32 %v1256, %v1496
    %1498 = vmatmul.mubr.f32.gmra.mxu0 %v1497
    %v1499 = vpop.f32.mrf.mxu0
    %v1500 = vadd.f32 %v1420, %v1499
    %v1501 = vpop.f32.mrf.mxu0
    %1502 = vmatprep.mubr.f32.mxu0 0.0
    %v1503 = vand.u32 %v1259, 4294901760
    %v1504 = vsub.f32 %v1259, %v1503
    %1505 = vmatmul.mubr.f32.gmra.mxu0 %v1504
    %v1506 = vpop.f32.mrf.mxu0
    %v1507 = vadd.f32 %v1426, %v1506
    %v1508 = vpop.f32.mrf.mxu0
    %1509 = vdwg.mxu0
    %1510 = vmatprep.subr.mxu0 0.0
    %1511 = vmatpush1.msra.mxu0 0.0
    %1512 = vmatprep.subr.mxu0 0.0
    %1513 = vmatpush1.msra.mxu0 0.0
    %1514 = vmatprep.subr.mxu0 0.0
    %1515 = vmatpush1.msra.mxu0 0.0
    %1516 = vmatprep.subr.mxu0 0.0
    %1517 = vmatpush1.msra.mxu0 0.0
    %1518 = vmatprep.subr.mxu0 0.0
    %1519 = vmatpush1.msra.mxu0 0.0
    %1520 = vmatprep.subr.mxu0 0.0
    %1521 = vmatpush1.msra.mxu0 0.0
    %1522 = vmatprep.subr.mxu0 0.0
    %1523 = vmatpush1.msra.mxu0 0.0
    %1524 = vmatprep.subr.mxu0 0.0
    %1525 = vmatpush1.msra.mxu0 0.0
    %1526 = vmatprep.subr.mxu0 0.0
    %1527 = vmatpush1.msra.mxu0 0.0
    %1528 = vmatprep.subr.mxu0 0.0
    %1529 = vmatpush1.msra.mxu0 0.0
    %1530 = vmatprep.subr.mxu0 0.0
    %1531 = vmatpush1.msra.mxu0 0.0
    %1532 = vmatprep.subr.mxu0 0.0
    %1533 = vmatpush1.msra.mxu0 0.0
    %1534 = vmatprep.subr.mxu0 0.0
    %1535 = vmatpush1.msra.mxu0 0.0
    %1536 = vmatprep.subr.mxu0 0.0
    %1537 = vmatpush1.msra.mxu0 0.0
    %1538 = vmatprep.subr.mxu0 0.0
    %1539 = vmatpush1.msra.mxu0 0.0
    %1540 = vmatprep.subr.mxu0 0.0
    %v1541 = vand.u32 %v659, 4294901760
    %1542 = vmatpush1.msra.mxu0 %v1541
    %1543 = vmatprep.subr.mxu0 0.0
    %1544 = vmatpush2.msra.mxu0 0.0
    %1545 = vmatprep.subr.mxu0 0.0
    %1546 = vmatpush2.msra.mxu0 0.0
    %1547 = vmatprep.subr.mxu0 0.0
    %1548 = vmatpush2.msra.mxu0 0.0
    %1549 = vmatprep.subr.mxu0 0.0
    %1550 = vmatpush2.msra.mxu0 0.0
    %1551 = vmatprep.subr.mxu0 0.0
    %1552 = vmatpush2.msra.mxu0 0.0
    %1553 = vmatprep.subr.mxu0 0.0
    %1554 = vmatpush2.msra.mxu0 0.0
    %1555 = vmatprep.subr.mxu0 0.0
    %1556 = vmatpush2.msra.mxu0 0.0
    %1557 = vmatprep.subr.mxu0 0.0
    %1558 = vmatpush2.msra.mxu0 0.0
    %1559 = vmatprep.subr.mxu0 0.0
    %1560 = vmatpush2.msra.mxu0 0.0
    %1561 = vmatprep.subr.mxu0 0.0
    %1562 = vmatpush2.msra.mxu0 0.0
    %1563 = vmatprep.subr.mxu0 0.0
    %1564 = vmatpush2.msra.mxu0 0.0
    %1565 = vmatprep.subr.mxu0 0.0
    %1566 = vmatpush2.msra.mxu0 0.0
    %1567 = vmatprep.subr.mxu0 0.0
    %1568 = vmatpush2.msra.mxu0 0.0
    %1569 = vmatprep.subr.mxu0 0.0
    %1570 = vmatpush2.msra.mxu0 0.0
    %1571 = vmatprep.subr.mxu0 0.0
    %1572 = vmatpush2.msra.mxu0 0.0
    %1573 = vmatprep.subr.mxu0 0.0
    %1574 = vmatpush2.msra.mxu0 0.0
    %1575 = vmatprep.mubr.f32.mxu0 0.0
    %v1576 = vand.u32 %v1256, 4294901760
    %v1577 = vsub.f32 %v1256, %v1576
    %v1578 = vand.u32 %v1577, 4294901760
    %1579 = vmatmul.mubr.f32.gmra.mxu0 %v1578
    %v1580 = vpop.f32.mrf.mxu0
    %v1581 = vadd.f32 %v1500, %v1580
    %v1582 = vpop.f32.mrf.mxu0
    %1583 = vmatprep.mubr.f32.mxu0 0.0
    %v1584 = vand.u32 %v1259, 4294901760
    %v1585 = vsub.f32 %v1259, %v1584
    %v1586 = vand.u32 %v1585, 4294901760
    %1587 = vmatmul.mubr.f32.gmra.mxu0 %v1586
    %v1588 = vpop.f32.mrf.mxu0
    %v1589 = vadd.f32 %v1507, %v1588
    %v1590 = vpop.f32.mrf.mxu0
    %1591 = vdwg.mxu0
    %1592 = vmatprep.subr.mxu0 0.0
    %1593 = vmatpush1.msra.mxu0 0.0
    %1594 = vmatprep.subr.mxu0 0.0
    %1595 = vmatpush1.msra.mxu0 0.0
    %1596 = vmatprep.subr.mxu0 0.0
    %1597 = vmatpush1.msra.mxu0 0.0
    %1598 = vmatprep.subr.mxu0 0.0
    %1599 = vmatpush1.msra.mxu0 0.0
    %1600 = vmatprep.subr.mxu0 0.0
    %1601 = vmatpush1.msra.mxu0 0.0
    %1602 = vmatprep.subr.mxu0 0.0
    %1603 = vmatpush1.msra.mxu0 0.0
    %1604 = vmatprep.subr.mxu0 0.0
    %1605 = vmatpush1.msra.mxu0 0.0
    %1606 = vmatprep.subr.mxu0 0.0
    %1607 = vmatpush1.msra.mxu0 0.0
    %1608 = vmatprep.subr.mxu0 0.0
    %1609 = vmatpush1.msra.mxu0 0.0
    %1610 = vmatprep.subr.mxu0 0.0
    %1611 = vmatpush1.msra.mxu0 0.0
    %1612 = vmatprep.subr.mxu0 0.0
    %1613 = vmatpush1.msra.mxu0 0.0
    %1614 = vmatprep.subr.mxu0 0.0
    %1615 = vmatpush1.msra.mxu0 0.0
    %1616 = vmatprep.subr.mxu0 0.0
    %1617 = vmatpush1.msra.mxu0 0.0
    %1618 = vmatprep.subr.mxu0 0.0
    %1619 = vmatpush1.msra.mxu0 0.0
    %1620 = vmatprep.subr.mxu0 0.0
    %1621 = vmatpush1.msra.mxu0 0.0
    %1622 = vmatprep.subr.mxu0 0.0
    %v1623 = vand.u32 %v659, 4294901760
    %v1624 = vsub.f32 %v659, %v1623
    %v1625 = vand.u32 %v1624, 4294901760
    %1626 = vmatpush1.msra.mxu0 %v1625
    %1627 = vmatprep.subr.mxu0 0.0
    %1628 = vmatpush2.msra.mxu0 0.0
    %1629 = vmatprep.subr.mxu0 0.0
    %1630 = vmatpush2.msra.mxu0 0.0
    %1631 = vmatprep.subr.mxu0 0.0
    %1632 = vmatpush2.msra.mxu0 0.0
    %1633 = vmatprep.subr.mxu0 0.0
    %1634 = vmatpush2.msra.mxu0 0.0
    %1635 = vmatprep.subr.mxu0 0.0
    %1636 = vmatpush2.msra.mxu0 0.0
    %1637 = vmatprep.subr.mxu0 0.0
    %1638 = vmatpush2.msra.mxu0 0.0
    %1639 = vmatprep.subr.mxu0 0.0
    %1640 = vmatpush2.msra.mxu0 0.0
    %1641 = vmatprep.subr.mxu0 0.0
    %1642 = vmatpush2.msra.mxu0 0.0
    %1643 = vmatprep.subr.mxu0 0.0
    %1644 = vmatpush2.msra.mxu0 0.0
    %1645 = vmatprep.subr.mxu0 0.0
    %1646 = vmatpush2.msra.mxu0 0.0
    %1647 = vmatprep.subr.mxu0 0.0
    %1648 = vmatpush2.msra.mxu0 0.0
    %1649 = vmatprep.subr.mxu0 0.0
    %1650 = vmatpush2.msra.mxu0 0.0
    %1651 = vmatprep.subr.mxu0 0.0
    %1652 = vmatpush2.msra.mxu0 0.0
    %1653 = vmatprep.subr.mxu0 0.0
    %1654 = vmatpush2.msra.mxu0 0.0
    %1655 = vmatprep.subr.mxu0 0.0
    %1656 = vmatpush2.msra.mxu0 0.0
    %1657 = vmatprep.subr.mxu0 0.0
    %1658 = vmatpush2.msra.mxu0 0.0
    %1659 = vmatprep.mubr.f32.mxu0 0.0
    %v1660 = vand.u32 %v1256, 4294901760
    %1661 = vmatmul.mubr.f32.gmra.mxu0 %v1660
    %v1662 = vpop.f32.mrf.mxu0
    %v1663 = vadd.f32 %v1581, %v1662
    %v1664 = vpop.f32.mrf.mxu0
    %1665 = vmatprep.mubr.f32.mxu0 0.0
    %v1666 = vand.u32 %v1259, 4294901760
    %1667 = vmatmul.mubr.f32.gmra.mxu0 %v1666
    %v1668 = vpop.f32.mrf.mxu0
    %v1669 = vadd.f32 %v1589, %v1668
    %v1670 = vpop.f32.mrf.mxu0
    %1671 = vdwg.mxu0
    %1672 = vmatprep.subr.mxu0 0.0
    %1673 = vmatpush1.msra.mxu0 0.0
    %1674 = vmatprep.subr.mxu0 0.0
    %1675 = vmatpush1.msra.mxu0 0.0
    %1676 = vmatprep.subr.mxu0 0.0
    %1677 = vmatpush1.msra.mxu0 0.0
    %1678 = vmatprep.subr.mxu0 0.0
    %1679 = vmatpush1.msra.mxu0 0.0
    %1680 = vmatprep.subr.mxu0 0.0
    %1681 = vmatpush1.msra.mxu0 0.0
    %1682 = vmatprep.subr.mxu0 0.0
    %1683 = vmatpush1.msra.mxu0 0.0
    %1684 = vmatprep.subr.mxu0 0.0
    %1685 = vmatpush1.msra.mxu0 0.0
    %1686 = vmatprep.subr.mxu0 0.0
    %1687 = vmatpush1.msra.mxu0 0.0
    %1688 = vmatprep.subr.mxu0 0.0
    %1689 = vmatpush1.msra.mxu0 0.0
    %1690 = vmatprep.subr.mxu0 0.0
    %1691 = vmatpush1.msra.mxu0 0.0
    %1692 = vmatprep.subr.mxu0 0.0
    %1693 = vmatpush1.msra.mxu0 0.0
    %1694 = vmatprep.subr.mxu0 0.0
    %1695 = vmatpush1.msra.mxu0 0.0
    %1696 = vmatprep.subr.mxu0 0.0
    %1697 = vmatpush1.msra.mxu0 0.0
    %1698 = vmatprep.subr.mxu0 0.0
    %1699 = vmatpush1.msra.mxu0 0.0
    %1700 = vmatprep.subr.mxu0 0.0
    %1701 = vmatpush1.msra.mxu0 0.0
    %1702 = vmatprep.subr.mxu0 0.0
    %v1703 = vand.u32 %v659, 4294901760
    %1704 = vmatpush1.msra.mxu0 %v1703
    %1705 = vmatprep.subr.mxu0 0.0
    %1706 = vmatpush2.msra.mxu0 0.0
    %1707 = vmatprep.subr.mxu0 0.0
    %1708 = vmatpush2.msra.mxu0 0.0
    %1709 = vmatprep.subr.mxu0 0.0
    %1710 = vmatpush2.msra.mxu0 0.0
    %1711 = vmatprep.subr.mxu0 0.0
    %1712 = vmatpush2.msra.mxu0 0.0
    %1713 = vmatprep.subr.mxu0 0.0
    %1714 = vmatpush2.msra.mxu0 0.0
    %1715 = vmatprep.subr.mxu0 0.0
    %1716 = vmatpush2.msra.mxu0 0.0
    %1717 = vmatprep.subr.mxu0 0.0
    %1718 = vmatpush2.msra.mxu0 0.0
    %1719 = vmatprep.subr.mxu0 0.0
    %1720 = vmatpush2.msra.mxu0 0.0
    %1721 = vmatprep.subr.mxu0 0.0
    %1722 = vmatpush2.msra.mxu0 0.0
    %1723 = vmatprep.subr.mxu0 0.0
    %1724 = vmatpush2.msra.mxu0 0.0
    %1725 = vmatprep.subr.mxu0 0.0
    %1726 = vmatpush2.msra.mxu0 0.0
    %1727 = vmatprep.subr.mxu0 0.0
    %1728 = vmatpush2.msra.mxu0 0.0
    %1729 = vmatprep.subr.mxu0 0.0
    %1730 = vmatpush2.msra.mxu0 0.0
    %1731 = vmatprep.subr.mxu0 0.0
    %1732 = vmatpush2.msra.mxu0 0.0
    %1733 = vmatprep.subr.mxu0 0.0
    %1734 = vmatpush2.msra.mxu0 0.0
    %1735 = vmatprep.subr.mxu0 0.0
    %1736 = vmatpush2.msra.mxu0 0.0
    %1737 = vmatprep.mubr.f32.mxu0 0.0
    %v1738 = vand.u32 %v1256, 4294901760
    %1739 = vmatmul.mubr.f32.gmra.mxu0 %v1738
    %v1740 = vpop.f32.mrf.mxu0
    %v1741 = vadd.f32 %v1663, %v1740
    %v1742 = vpop.f32.mrf.mxu0
    %1743 = vmatprep.mubr.f32.mxu0 0.0
    %v1744 = vand.u32 %v1259, 4294901760
    %1745 = vmatmul.mubr.f32.gmra.mxu0 %v1744
    %v1746 = vpop.f32.mrf.mxu0
    %v1747 = vadd.f32 %v1669, %v1746
    %v1748 = vpop.f32.mrf.mxu0
    %1749 = vdwg.mxu0
    %v1750 = vmul.f32 %v1741, %v1741
    %v1751 = vmul.f32 %v1747, %v1747
    %vm1752 = vcmask 23552
    %v1753 = vsel %vm1752, %v1750, 0.0
    %1754 = vadd.xlane.f32.xlu0 %v1753
    %v1755 = vpop.xlane.xlu0 %1754
    %v1756 = vsel %vm1752, %v1751, 0.0
    %1757 = vadd.xlane.f32.xlu0 %v1756
    %v1758 = vpop.xlane.xlu0 %1757
    %v1759 = vrsqrt.pop %v1755
    %v1760 = vmul.f32 %v1755, %v1759
    %vm1761 = vcmp.eq.f32.partialorder %v1755, inf
    %v1762 = vsel %vm1761, %v1755, %v1760
    %vm1763 = vcmp.eq.f32.partialorder %v1755, 0.0
    %v1764 = vand.u32 %v1755, 2147483648
    %v1765 = vsel %vm1763, %v1764, %v1762
    %v1766 = vrsqrt.pop %v1758
    %v1767 = vmul.f32 %v1758, %v1766
    %vm1768 = vcmp.eq.f32.partialorder %v1758, inf
    %v1769 = vsel %vm1768, %v1758, %v1767
    %vm1770 = vcmp.eq.f32.partialorder %v1758, 0.0
    %v1771 = vand.u32 %v1758, 2147483648
    %v1772 = vsel %vm1770, %v1771, %v1769
    %v1774 = vlaneseq
    %v1775 = vshrl.u32 %v1774, 7
    %v1776 = vsub.s32 0, %v1775
    %v1777 = vrot.slane %v667, %v1776
    %v1779 = vmul.f32 %v1777, %v1765
    %v1780 = vmul.f32 %v1777, %v1772
    %v1781 = vand.u32 2147483647, %v1779
    %vm1782 = vcmp.le.f32.partialorder %v1781, 0.7853982
    %vm1783 = vcmp.lt.s32.totalorder %v1779, 0
    %v1784 = vand.u32 %v1779, 2139095040
    %v1785 = vshrl.u32 %v1784, 23
    %v1786 = vsub.s32 %v1785, 127
    %v1787 = vand.u32 2147483647, %v1779
    %v1788 = vand.u32 %v1787, 8388607
    %v1789 = vor.u32 %v1788, 8388608
    %v1790 = vsub.s32 0, %v1789
    %v1791 = vadd.s32 %v1786, 1
    %vm1792 = vcmp.gt.s32.totalorder %v1791, 0
    %v1793 = vsel %vm1792, %v1791, 0
    %v1794 = vshrl.u32 %v1793, 5
    %v1795 = vand.u32 %v1793, 31
    %v1796 = vsub.s32 32, %v1795
    %v1797 = vshrl.u32 683565275, %v1796
    %v1798 = vshll.u32 683565275, %v1795
    %v1799 = vshrl.u32 2475754826, %v1796
    %v1800 = vor.u32 %v1798, %v1799
    %v1801 = vshll.u32 2475754826, %v1795
    %v1802 = vshrl.u32 2131351028, %v1796
    %v1803 = vor.u32 %v1801, %v1802
    %v1804 = vshll.u32 2131351028, %v1795
    %v1805 = vshrl.u32 2102212464, %v1796
    %v1806 = vor.u32 %v1804, %v1805
    %v1807 = vshll.u32 2102212464, %v1795
    %v1808 = vshrl.u32 920167782, %v1796
    %v1809 = vor.u32 %v1807, %v1808
    %v1810 = vshll.u32 920167782, %v1795
    %v1811 = vshrl.u32 1326507024, %v1796
    %v1812 = vor.u32 %v1810, %v1811
    %vm1813 = vcmp.lt.s32.totalorder %v1794, 1
    %vm1814 = vcmp.lt.s32.totalorder %v1794, 2
    %vm1815 = vcmp.lt.s32.totalorder %v1794, 3
    %vm1816 = vcmp.lt.s32.totalorder %v1794, 4
    %v1817 = vsel %vm1813, %v1797, %v1800
    %v1818 = vsel %vm1816, %v1806, 2102212464
    %v1819 = vsel %vm1815, %v1803, %v1818
    %v1820 = vsel %vm1814, %v1817, %v1819
    %v1821 = vsel %vm1813, %v1800, %v1803
    %v1822 = vsel %vm1816, %v1809, 920167782
    %v1823 = vsel %vm1815, %v1806, %v1822
    %v1824 = vsel %vm1814, %v1821, %v1823
    %v1825 = vsel %vm1813, %v1803, %v1806
    %v1826 = vsel %vm1816, %v1812, 1326507024
    %v1827 = vsel %vm1815, %v1809, %v1826
    %v1828 = vsel %vm1814, %v1825, %v1827
    %v1829 = vshll.u32 %v1789, 8
    %v1830 = vmul.u32.u64.compose %v1829, %v1828
    %v1831 = vextract.low.u32 %v1830
    %v1832 = vextract.high.u32 %v1830
    %v1833 = vmul.u32.u64.compose %v1829, %v1824
    %v1834 = vextract.low.u32 %v1833
    %v1835 = vextract.high.u32 %v1833
    %v1836 = vmul.u32 %v1829, %v1820
    %v1837 = vadd.s32 %v1832, %v1834
    %vm1838 = vc.u32 %v1832, %v1834
    %v1839 = vadd.s32 %v1835, 1
    %v1840 = vsel %vm1838, %v1839, %v1835
    %v1841 = vadd.s32 %v1836, %v1840
    %v1842 = vadd.s32 %v1841, 536870912
    %v1843 = vshrl.u32 %v1842, 30
    %v1844 = vshll.u32 %v1843, 30
    %v1845 = vsub.s32 %v1841, %v1844
    %vm1846 = vcmp.lt.s32.totalorder %v1845, 0
    %v1847 = vsub.s32 0, %v1845
    %v1848 = vsel %vm1846, %v1847, %v1845
    %v1849 = vclz %v1848
    %v1850 = vsub.s32 %v1849, 2
    %vm1851 = vcmp.gt.s32.totalorder 0, %v1850
    %v1852 = vsel %vm1851, 0, %v1850
    %v1853 = vsub.s32 32, %v1852
    %v1854 = vshll.u32 %v1845, %v1852
    %v1855 = vshrl.u32 %v1837, %v1853
    %v1856 = vor.u32 %v1854, %v1855
    %v1857 = vsub.s32 4294967266, %v1852
    %v1858 = vadd.s32 %v1857, 127
    %v1859 = vshll.u32 %v1858, 23
    %v1860 = vor.u32 4788187, %v1859
    %v1861 = vand.u32 2147483647, %v1860
    %v1863 = vcvt.s32.f32 %v1856
    %v1864 = vmul.f32 %v1863, %v1861
    %v1865 = vxor.u32 %v1864, 2147483648
    %v1866 = vsel %vm1783, %v1865, %v1864
    %v1867 = vsub.s32 4, %v1843
    %v1868 = vsel %vm1783, %v1867, %v1843
    %v1869 = vsel %vm1782, %v1779, %v1866
    %v1870 = vsel %vm1782, 0, %v1868
    %v1871 = vcosq.f32.pop %v1869
    %v1872 = vsinq.f32.pop %v1869
    %vm1873 = vweird.f32 %v1779
    %v1874 = vadd.s32 %v1870, 3
    %v1875 = vand.u32 %v1874, 3
    %vm1876 = vcmp.lt.s32.totalorder %v1875, 2
    %vm1877 = vcmp.eq.s32.totalorder %v1875, 0
    %v1878 = vxor.u32 %v1872, 2147483648
    %v1879 = vsel %vm1877, %v1871, %v1878
    %vm1880 = vcmp.eq.s32.totalorder %v1875, 2
    %v1881 = vxor.u32 %v1871, 2147483648
    %v1882 = vsel %vm1880, %v1881, %v1872
    %v1883 = vsel %vm1876, %v1879, %v1882
    %v1884 = vsel %vm1873, nan, %v1883
    %v1885 = vand.u32 2147483647, %v1780
    %vm1886 = vcmp.le.f32.partialorder %v1885, 0.7853982
    %vm1887 = vcmp.lt.s32.totalorder %v1780, 0
    %v1888 = vand.u32 %v1780, 2139095040
    %v1889 = vshrl.u32 %v1888, 23
    %v1890 = vsub.s32 %v1889, 127
    %v1891 = vand.u32 2147483647, %v1780
    %v1892 = vand.u32 %v1891, 8388607
    %v1893 = vor.u32 %v1892, 8388608
    %v1894 = vsub.s32 0, %v1893
    %v1895 = vadd.s32 %v1890, 1
    %vm1896 = vcmp.gt.s32.totalorder %v1895, 0
    %v1897 = vsel %vm1896, %v1895, 0
    %v1898 = vshrl.u32 %v1897, 5
    %v1899 = vand.u32 %v1897, 31
    %v1900 = vsub.s32 32, %v1899
    %v1901 = vshrl.u32 683565275, %v1900
    %v1902 = vshll.u32 683565275, %v1899
    %v1903 = vshrl.u32 2475754826, %v1900
    %v1904 = vor.u32 %v1902, %v1903
    %v1905 = vshll.u32 2475754826, %v1899
    %v1906 = vshrl.u32 2131351028, %v1900
    %v1907 = vor.u32 %v1905, %v1906
    %v1908 = vshll.u32 2131351028, %v1899
    %v1909 = vshrl.u32 2102212464, %v1900
    %v1910 = vor.u32 %v1908, %v1909
    %v1911 = vshll.u32 2102212464, %v1899
    %v1912 = vshrl.u32 920167782, %v1900
    %v1913 = vor.u32 %v1911, %v1912
    %v1914 = vshll.u32 920167782, %v1899
    %v1915 = vshrl.u32 1326507024, %v1900
    %v1916 = vor.u32 %v1914, %v1915
    %vm1917 = vcmp.lt.s32.totalorder %v1898, 1
    %vm1918 = vcmp.lt.s32.totalorder %v1898, 2
    %vm1919 = vcmp.lt.s32.totalorder %v1898, 3
    %vm1920 = vcmp.lt.s32.totalorder %v1898, 4
    %v1921 = vsel %vm1917, %v1901, %v1904
    %v1922 = vsel %vm1920, %v1910, 2102212464
    %v1923 = vsel %vm1919, %v1907, %v1922
    %v1924 = vsel %vm1918, %v1921, %v1923
    %v1925 = vsel %vm1917, %v1904, %v1907
    %v1926 = vsel %vm1920, %v1913, 920167782
    %v1927 = vsel %vm1919, %v1910, %v1926
    %v1928 = vsel %vm1918, %v1925, %v1927
    %v1929 = vsel %vm1917, %v1907, %v1910
    %v1930 = vsel %vm1920, %v1916, 1326507024
    %v1931 = vsel %vm1919, %v1913, %v1930
    %v1932 = vsel %vm1918, %v1929, %v1931
    %v1933 = vshll.u32 %v1893, 8
    %v1934 = vmul.u32.u64.compose %v1933, %v1932
    %v1935 = vextract.low.u32 %v1934
    %v1936 = vextract.high.u32 %v1934
    %v1937 = vmul.u32.u64.compose %v1933, %v1928
    %v1938 = vextract.low.u32 %v1937
    %v1939 = vextract.high.u32 %v1937
    %v1940 = vmul.u32 %v1933, %v1924
    %v1941 = vadd.s32 %v1936, %v1938
    %vm1942 = vc.u32 %v1936, %v1938
    %v1943 = vadd.s32 %v1939, 1
    %v1944 = vsel %vm1942, %v1943, %v1939
    %v1945 = vadd.s32 %v1940, %v1944
    %v1946 = vadd.s32 %v1945, 536870912
    %v1947 = vshrl.u32 %v1946, 30
    %v1948 = vshll.u32 %v1947, 30
    %v1949 = vsub.s32 %v1945, %v1948
    %vm1950 = vcmp.lt.s32.totalorder %v1949, 0
    %v1951 = vsub.s32 0, %v1949
    %v1952 = vsel %vm1950, %v1951, %v1949
    %v1953 = vclz %v1952
    %v1954 = vsub.s32 %v1953, 2
    %vm1955 = vcmp.gt.s32.totalorder 0, %v1954
    %v1956 = vsel %vm1955, 0, %v1954
    %v1957 = vsub.s32 32, %v1956
    %v1958 = vshll.u32 %v1949, %v1956
    %v1959 = vshrl.u32 %v1941, %v1957
    %v1960 = vor.u32 %v1958, %v1959
    %v1961 = vsub.s32 4294967266, %v1956
    %v1962 = vadd.s32 %v1961, 127
    %v1963 = vshll.u32 %v1962, 23
    %v1964 = vor.u32 4788187, %v1963
    %v1965 = vand.u32 2147483647, %v1964
    %v1967 = vcvt.s32.f32 %v1960
    %v1968 = vmul.f32 %v1967, %v1965
    %v1969 = vxor.u32 %v1968, 2147483648
    %v1970 = vsel %vm1887, %v1969, %v1968
    %v1971 = vsub.s32 4, %v1947
    %v1972 = vsel %vm1887, %v1971, %v1947
    %v1973 = vsel %vm1886, %v1780, %v1970
    %v1974 = vsel %vm1886, 0, %v1972
    %v1975 = vcosq.f32.pop %v1973
    %v1976 = vsinq.f32.pop %v1973
    %vm1977 = vweird.f32 %v1780
    %v1978 = vadd.s32 %v1974, 3
    %v1979 = vand.u32 %v1978, 3
    %vm1980 = vcmp.lt.s32.totalorder %v1979, 2
    %vm1981 = vcmp.eq.s32.totalorder %v1979, 0
    %v1982 = vxor.u32 %v1976, 2147483648
    %v1983 = vsel %vm1981, %v1975, %v1982
    %vm1984 = vcmp.eq.s32.totalorder %v1979, 2
    %v1985 = vxor.u32 %v1975, 2147483648
    %v1986 = vsel %vm1984, %v1985, %v1976
    %v1987 = vsel %vm1980, %v1983, %v1986
    %v1988 = vsel %vm1977, nan, %v1987
    %v1989 = vmul.f32 %v1884, 0.6324555
    %v1990 = vmul.f32 %v1988, 0.6324555
    %v1991 = vrcp.pop %v1765
    %v1992 = vmul.f32 %v1989, %v1991
    %v1993 = vrcp.pop %v1772
    %v1994 = vmul.f32 %v1990, %v1993
    %v1995 = vld [vmem:[%s31] sm:$0xf]
    %v1996 = vld [vmem:[%s31 + $0x4] sm:$0xf]
    %v1997 = vld [vmem:[%s31 + $0x8] sm:$0xf]
    %v1998 = vld [vmem:[%s31 + $0xc] sm:$0xf]
    %v1999 = vpack.c.bf16 %v1240, %v1234
    %v2000 = vld [vmem:[%s33] sm:$0xf]
    %v2001 = vld [vmem:[%s33 + $0x4] sm:$0xf]
    %v2002 = vld [vmem:[%s33 + $0x8] sm:$0xf]
    %v2003 = vld [vmem:[%s33 + $0xc] sm:$0xf]
    %v2004 = vpack.c.bf16 %v1252, %v1246
    %v2009 = vunpack.c.l.b16 %v2000
    %v2010 = vunpack.c.l.b16 %v2001
    %v2011 = vunpack.c.l.b16 %v2002
    %v2012 = vunpack.c.l.b16 %v2003
    %v2013 = vpack.c.b16 %v2010, %v2009
    %v2014 = vpack.c.b16 %v2012, %v2011
    %v2018 = vsel %vm473, %v2004, 0
    %2020 = vmatprep.subr.bf16.mxu0 0
    %2021 = vmatpush1.bf16.msra.mxu0 0
    %2022 = vmatprep.subr.bf16.mxu0 0
    %2023 = vmatpush1.bf16.msra.mxu0 0
    %2024 = vmatprep.subr.bf16.mxu0 0
    %2025 = vmatpush1.bf16.msra.mxu0 0
    %2026 = vmatprep.subr.bf16.mxu0 0
    %2027 = vmatpush1.bf16.msra.mxu0 0
    %2028 = vmatprep.subr.bf16.mxu0 0
    %2029 = vmatpush1.bf16.msra.mxu0 0
    %2030 = vmatprep.subr.bf16.mxu0 0
    %2031 = vmatpush1.bf16.msra.mxu0 0
    %2032 = vmatprep.subr.bf16.mxu0 0
    %2033 = vmatpush1.bf16.msra.mxu0 %v2014
    %2034 = vmatprep.subr.bf16.mxu0 0
    %2035 = vmatpush1.bf16.msra.mxu0 %v2013
    %2036 = vmatprep.subr.bf16.mxu0 0
    %2037 = vmatpush2.bf16.msra.mxu0 0
    %2038 = vmatprep.subr.bf16.mxu0 0
    %2039 = vmatpush2.bf16.msra.mxu0 0
    %2040 = vmatprep.subr.bf16.mxu0 0
    %2041 = vmatpush2.bf16.msra.mxu0 0
    %2042 = vmatprep.subr.bf16.mxu0 0
    %2043 = vmatpush2.bf16.msra.mxu0 0
    %2044 = vmatprep.subr.bf16.mxu0 0
    %2045 = vmatpush2.bf16.msra.mxu0 0
    %2046 = vmatprep.subr.bf16.mxu0 0
    %2047 = vmatpush2.bf16.msra.mxu0 0
    %2048 = vmatprep.subr.bf16.mxu0 0
    %2049 = vmatpush2.bf16.msra.mxu0 0
    %2050 = vmatprep.subr.bf16.mxu0 0
    %2051 = vmatpush2.bf16.msra.mxu0 0
    %2052 = vmatprep.mubr.bf16.mxu0 0
    %2053 = vmatmul.mubr.bf16.gmra.mxu0 %v2018
    %v2054 = vpop.f32.mrf.mxu0
    %v2055 = vadd.f32 0.0, %v2054
    %v2056 = vpop.f32.mrf.mxu0
    %v2057 = vpop.f32.mrf.mxu0
    %v2058 = vadd.f32 0.0, %v2057
    %v2059 = vpop.f32.mrf.mxu0
    %2060 = vdwg.mxu0
    %v2065 = vunpack.c.l.b16 %v1995
    %v2066 = vunpack.c.l.b16 %v1996
    %v2067 = vunpack.c.l.b16 %v1997
    %v2068 = vunpack.c.l.b16 %v1998
    %v2069 = vpack.c.b16 %v2066, %v2065
    %v2070 = vpack.c.b16 %v2068, %v2067
    %v2074 = vsel %vm473, %v1999, 0
    %2076 = vmatprep.subr.bf16.mxu0 0
    %2077 = vmatpush1.bf16.msra.mxu0 0
    %2078 = vmatprep.subr.bf16.mxu0 0
    %2079 = vmatpush1.bf16.msra.mxu0 0
    %2080 = vmatprep.subr.bf16.mxu0 0
    %2081 = vmatpush1.bf16.msra.mxu0 0
    %2082 = vmatprep.subr.bf16.mxu0 0
    %2083 = vmatpush1.bf16.msra.mxu0 0
    %2084 = vmatprep.subr.bf16.mxu0 0
    %2085 = vmatpush1.bf16.msra.mxu0 0
    %2086 = vmatprep.subr.bf16.mxu0 0
    %2087 = vmatpush1.bf16.msra.mxu0 0
    %2088 = vmatprep.subr.bf16.mxu0 0
    %2089 = vmatpush1.bf16.msra.mxu0 %v2070
    %2090 = vmatprep.subr.bf16.mxu0 0
    %2091 = vmatpush1.bf16.msra.mxu0 %v2069
    %2092 = vmatprep.subr.bf16.mxu0 0
    %2093 = vmatpush2.bf16.msra.mxu0 0
    %2094 = vmatprep.subr.bf16.mxu0 0
    %2095 = vmatpush2.bf16.msra.mxu0 0
    %2096 = vmatprep.subr.bf16.mxu0 0
    %2097 = vmatpush2.bf16.msra.mxu0 0
    %2098 = vmatprep.subr.bf16.mxu0 0
    %2099 = vmatpush2.bf16.msra.mxu0 0
    %2100 = vmatprep.subr.bf16.mxu0 0
    %2101 = vmatpush2.bf16.msra.mxu0 0
    %2102 = vmatprep.subr.bf16.mxu0 0
    %2103 = vmatpush2.bf16.msra.mxu0 0
    %2104 = vmatprep.subr.bf16.mxu0 0
    %2105 = vmatpush2.bf16.msra.mxu0 0
    %2106 = vmatprep.subr.bf16.mxu0 0
    %2107 = vmatpush2.bf16.msra.mxu0 0
    %2108 = vmatprep.mubr.bf16.mxu0 0
    %2109 = vmatmul.mubr.bf16.gmra.mxu0 %v2074
    %v2110 = vpop.f32.mrf.mxu0
    %v2111 = vadd.f32 %v2055, %v2110
    %v2112 = vpop.f32.mrf.mxu0
    %v2113 = vpop.f32.mrf.mxu0
    %v2114 = vadd.f32 %v2058, %v2113
    %v2115 = vpop.f32.mrf.mxu0
    %2116 = vdwg.mxu0
    %v2117 = vld [vmem:[#allocation14] sm:$0x1]
    %v2119 = vlaneseq
    %v2120 = vshrl.u32 %v2119, 7
    %v2121 = vsub.s32 0, %v2120
    %v2122 = vrot.slane %v2117, %v2121
    %v2124 = vmul.f32 %v1765, %v2122
    %v2125 = vmul.f32 %v1772, %v2122
    %v2126 = vadd.f32 %v2111, %v2124
    %v2127 = vadd.f32 %v2114, %v2125
    %v2128 = vld [vmem:[#allocation16] sm:$0xf]
    %v2129 = vpack.c.bf16 %v1994, %v1992
    %v2131 = vsel %vm394, %v2129, 0
    %v2134 = vsel %vm398, %v2128, 0
    %2136 = vmatprep.subr.bf16.mxu0 0
    %2137 = vmatpush1.bf16.msra.mxu0 0
    %2138 = vmatprep.subr.bf16.mxu0 0
    %2139 = vmatpush1.bf16.msra.mxu0 0
    %2140 = vmatprep.subr.bf16.mxu0 0
    %2141 = vmatpush1.bf16.msra.mxu0 0
    %2142 = vmatprep.subr.bf16.mxu0 0
    %2143 = vmatpush1.bf16.msra.mxu0 0
    %2144 = vmatprep.subr.bf16.mxu0 0
    %2145 = vmatpush1.bf16.msra.mxu0 0
    %2146 = vmatprep.subr.bf16.mxu0 0
    %2147 = vmatpush1.bf16.msra.mxu0 0
    %2148 = vmatprep.subr.bf16.mxu0 0
    %2149 = vmatpush1.bf16.msra.mxu0 0
    %2150 = vmatprep.subr.bf16.mxu0 0
    %2151 = vmatpush1.bf16.msra.mxu0 %v2134
    %2152 = vmatprep.subr.bf16.mxu0 0
    %2153 = vmatpush2.bf16.msra.mxu0 0
    %2154 = vmatprep.subr.bf16.mxu0 0
    %2155 = vmatpush2.bf16.msra.mxu0 0
    %2156 = vmatprep.subr.bf16.mxu0 0
    %2157 = vmatpush2.bf16.msra.mxu0 0
    %2158 = vmatprep.subr.bf16.mxu0 0
    %2159 = vmatpush2.bf16.msra.mxu0 0
    %2160 = vmatprep.subr.bf16.mxu0 0
    %2161 = vmatpush2.bf16.msra.mxu0 0
    %2162 = vmatprep.subr.bf16.mxu0 0
    %2163 = vmatpush2.bf16.msra.mxu0 0
    %2164 = vmatprep.subr.bf16.mxu0 0
    %2165 = vmatpush2.bf16.msra.mxu0 0
    %2166 = vmatprep.subr.bf16.mxu0 0
    %2167 = vmatpush2.bf16.msra.mxu0 0
    %2168 = vmatprep.mubr.bf16.mxu0 0
    %2169 = vmatmul.mubr.bf16.gmra.mxu0 %v2131
    %v2170 = vpop.f32.mrf.mxu0
    %v2171 = vadd.f32 0.0, %v2170
    %v2172 = vpop.f32.mrf.mxu0
    %v2173 = vpop.f32.mrf.mxu0
    %v2174 = vadd.f32 0.0, %v2173
    %v2175 = vpop.f32.mrf.mxu0
    %2176 = vdwg.mxu0
    %v2177 = vadd.f32 %v2126, %v2171
    %v2178 = vadd.f32 %v2127, %v2174
    %v2179 = vld [vmem:[%s39] sm:$0xf]
    %v2180 = vld [vmem:[%s39 + $0x4] sm:$0xf]
    %v2181 = vld [vmem:[%s39 + $0x8] sm:$0xf]
    %v2182 = vld [vmem:[%s39 + $0xc] sm:$0xf]
    %v2183 = vpack.c.bf16 %v656, %v653
    %v2188 = vunpack.c.l.b16 %v2179
    %v2189 = vunpack.c.l.b16 %v2180
    %v2190 = vunpack.c.l.b16 %v2181
    %v2191 = vunpack.c.l.b16 %v2182
    %v2192 = vpack.c.b16 %v2189, %v2188
    %v2193 = vpack.c.b16 %v2191, %v2190
    %v2197 = vsel %vm473, %v2183, 0
    %2199 = vmatprep.subr.bf16.mxu0 0
    %2200 = vmatpush1.bf16.msra.mxu0 0
    %2201 = vmatprep.subr.bf16.mxu0 0
    %2202 = vmatpush1.bf16.msra.mxu0 0
    %2203 = vmatprep.subr.bf16.mxu0 0
    %2204 = vmatpush1.bf16.msra.mxu0 0
    %2205 = vmatprep.subr.bf16.mxu0 0
    %2206 = vmatpush1.bf16.msra.mxu0 0
    %2207 = vmatprep.subr.bf16.mxu0 0
    %2208 = vmatpush1.bf16.msra.mxu0 0
    %2209 = vmatprep.subr.bf16.mxu0 0
    %2210 = vmatpush1.bf16.msra.mxu0 0
    %2211 = vmatprep.subr.bf16.mxu0 0
    %2212 = vmatpush1.bf16.msra.mxu0 %v2193
    %2213 = vmatprep.subr.bf16.mxu0 0
    %2214 = vmatpush1.bf16.msra.mxu0 %v2192
    %2215 = vmatprep.subr.bf16.mxu0 0
    %2216 = vmatpush2.bf16.msra.mxu0 0
    %2217 = vmatprep.subr.bf16.mxu0 0
    %2218 = vmatpush2.bf16.msra.mxu0 0
    %2219 = vmatprep.subr.bf16.mxu0 0
    %2220 = vmatpush2.bf16.msra.mxu0 0
    %2221 = vmatprep.subr.bf16.mxu0 0
    %2222 = vmatpush2.bf16.msra.mxu0 0
    %2223 = vmatprep.subr.bf16.mxu0 0
    %2224 = vmatpush2.bf16.msra.mxu0 0
    %2225 = vmatprep.subr.bf16.mxu0 0
    %2226 = vmatpush2.bf16.msra.mxu0 0
    %2227 = vmatprep.subr.bf16.mxu0 0
    %2228 = vmatpush2.bf16.msra.mxu0 0
    %2229 = vmatprep.subr.bf16.mxu0 0
    %2230 = vmatpush2.bf16.msra.mxu0 0
    %2231 = vmatprep.mubr.bf16.mxu0 0
    %2232 = vmatmul.mubr.bf16.gmra.mxu0 %v2197
    %v2233 = vpop.f32.mrf.mxu0
    %v2234 = vadd.f32 0.0, %v2233
    %v2235 = vpop.f32.mrf.mxu0
    %v2236 = vpop.f32.mrf.mxu0
    %v2237 = vadd.f32 0.0, %v2236
    %v2238 = vpop.f32.mrf.mxu0
    %2239 = vdwg.mxu0
    %v2240 = vadd.f32 %v2177, %v2234
    %v2241 = vadd.f32 %v2178, %v2237
    %v2242 = vld [vmem:[#allocation17] sm:$0x1]
    %v2244 = vlaneseq
    %v2245 = vshrl.u32 %v2244, 7
    %v2246 = vsub.s32 0, %v2245
    %v2247 = vrot.slane %v2242, %v2246
    %v2249 = vadd.f32 %v2240, %v2247
    %v2250 = vadd.f32 %v2241, %v2247
    %v2251 = vxor.u32 %v2249, 2147483648
    %v2252 = vxor.u32 %v2250, 2147483648
    %v2253 = vmul.f32 %v2251, 1.442695
    %v2254 = vpow.pop %v2253
    %v2255 = vmul.f32 %v2252, 1.442695
    %v2256 = vpow.pop %v2255
    %v2257 = vadd.f32 %v2254, 1.0
    %v2258 = vadd.f32 %v2256, 1.0
    %v2259 = vrcp.pop %v2257
    %v2260 = vmul.f32 1.0, %v2259
    %v2261 = vrcp.pop %v2258
    %v2262 = vmul.f32 1.0, %v2261
    %v2263 = vmul.f32 %v2249, %v2260
    %v2264 = vmul.f32 %v2250, %v2262
    %v2265 = vld [vmem:[%s47] sm:$0xf]
    %v2266 = vld [vmem:[%s47 + $0x4] sm:$0xf]
    %v2267 = vld [vmem:[%s47 + $0x8] sm:$0xf]
    %v2268 = vld [vmem:[%s47 + $0xc] sm:$0xf]
    %v2269 = vpack.c.bf16 %v2264, %v2263
    %v2270 = vld [vmem:[#allocation20] sm:$0x1]
    %v2272 = vlaneseq
    %v2273 = vshrl.u32 %v2272, 7
    %v2274 = vsub.s32 0, %v2273
    %v2275 = vrot.slane %v2270, %v2274
    %v2281 = vunpack.c.l.b16 %v2265
    %v2282 = vunpack.c.l.b16 %v2266
    %v2283 = vunpack.c.l.b16 %v2267
    %v2284 = vunpack.c.l.b16 %v2268
    %v2285 = vpack.c.b16 %v2282, %v2281
    %v2286 = vpack.c.b16 %v2284, %v2283
    %v2290 = vsel %vm473, %v2269, 0
    %2292 = vmatprep.subr.bf16.mxu0 0
    %2293 = vmatpush1.bf16.msra.mxu0 0
    %2294 = vmatprep.subr.bf16.mxu0 0
    %2295 = vmatpush1.bf16.msra.mxu0 0
    %2296 = vmatprep.subr.bf16.mxu0 0
    %2297 = vmatpush1.bf16.msra.mxu0 0
    %2298 = vmatprep.subr.bf16.mxu0 0
    %2299 = vmatpush1.bf16.msra.mxu0 0
    %2300 = vmatprep.subr.bf16.mxu0 0
    %2301 = vmatpush1.bf16.msra.mxu0 0
    %2302 = vmatprep.subr.bf16.mxu0 0
    %2303 = vmatpush1.bf16.msra.mxu0 0
    %2304 = vmatprep.subr.bf16.mxu0 0
    %2305 = vmatpush1.bf16.msra.mxu0 %v2286
    %2306 = vmatprep.subr.bf16.mxu0 0
    %2307 = vmatpush1.bf16.msra.mxu0 %v2285
    %2308 = vmatprep.subr.bf16.mxu0 0
    %2309 = vmatpush2.bf16.msra.mxu0 0
    %2310 = vmatprep.subr.bf16.mxu0 0
    %2311 = vmatpush2.bf16.msra.mxu0 0
    %2312 = vmatprep.subr.bf16.mxu0 0
    %2313 = vmatpush2.bf16.msra.mxu0 0
    %2314 = vmatprep.subr.bf16.mxu0 0
    %2315 = vmatpush2.bf16.msra.mxu0 0
    %2316 = vmatprep.subr.bf16.mxu0 0
    %2317 = vmatpush2.bf16.msra.mxu0 0
    %2318 = vmatprep.subr.bf16.mxu0 0
    %2319 = vmatpush2.bf16.msra.mxu0 0
    %2320 = vmatprep.subr.bf16.mxu0 0
    %2321 = vmatpush2.bf16.msra.mxu0 0
    %2322 = vmatprep.subr.bf16.mxu0 0
    %2323 = vmatpush2.bf16.msra.mxu0 0
    %2324 = vmatprep.mubr.bf16.mxu0 0
    %2325 = vmatmul.mubr.bf16.gmra.mxu0 %v2290
    %v2326 = vpop.f32.mrf.mxu0
    %v2327 = vadd.f32 %v2275, %v2326
    %v2328 = vpop.f32.mrf.mxu0
    %v2329 = vpop.f32.mrf.mxu0
    %v2330 = vadd.f32 %v2275, %v2329
    %v2331 = vpop.f32.mrf.mxu0
    %2332 = vdwg.mxu0
    %v2333 = vld [vmem:[%s43] sm:$0xf]
    %v2334 = vld [vmem:[%s43 + $0x4] sm:$0xf]
    %v2335 = vld [vmem:[%s43 + $0x8] sm:$0xf]
    %v2336 = vld [vmem:[%s43 + $0xc] sm:$0xf]
    %v2337 = vpack.c.bf16 %v2330, %v2327
    %v2342 = vunpack.c.l.b16 %v2333
    %v2343 = vunpack.c.l.b16 %v2334
    %v2344 = vunpack.c.l.b16 %v2335
    %v2345 = vunpack.c.l.b16 %v2336
    %v2346 = vpack.c.b16 %v2343, %v2342
    %v2347 = vpack.c.b16 %v2345, %v2344
    %v2351 = vsel %vm473, %v2337, 0
    %2353 = vmatprep.subr.bf16.mxu0 0
    %2354 = vmatpush1.bf16.msra.mxu0 0
    %2355 = vmatprep.subr.bf16.mxu0 0
    %2356 = vmatpush1.bf16.msra.mxu0 0
    %2357 = vmatprep.subr.bf16.mxu0 0
    %2358 = vmatpush1.bf16.msra.mxu0 0
    %2359 = vmatprep.subr.bf16.mxu0 0
    %2360 = vmatpush1.bf16.msra.mxu0 0
    %2361 = vmatprep.subr.bf16.mxu0 0
    %2362 = vmatpush1.bf16.msra.mxu0 0
    %2363 = vmatprep.subr.bf16.mxu0 0
    %2364 = vmatpush1.bf16.msra.mxu0 0
    %2365 = vmatprep.subr.bf16.mxu0 0
    %2366 = vmatpush1.bf16.msra.mxu0 %v2347
    %2367 = vmatprep.subr.bf16.mxu0 0
    %2368 = vmatpush1.bf16.msra.mxu0 %v2346
    %2369 = vmatprep.subr.bf16.mxu0 0
    %2370 = vmatpush2.bf16.msra.mxu0 0
    %2371 = vmatprep.subr.bf16.mxu0 0
    %2372 = vmatpush2.bf16.msra.mxu0 0
    %2373 = vmatprep.subr.bf16.mxu0 0
    %2374 = vmatpush2.bf16.msra.mxu0 0
    %2375 = vmatprep.subr.bf16.mxu0 0
    %2376 = vmatpush2.bf16.msra.mxu0 0
    %2377 = vmatprep.subr.bf16.mxu0 0
    %2378 = vmatpush2.bf16.msra.mxu0 0
    %2379 = vmatprep.subr.bf16.mxu0 0
    %2380 = vmatpush2.bf16.msra.mxu0 0
    %2381 = vmatprep.subr.bf16.mxu0 0
    %2382 = vmatpush2.bf16.msra.mxu0 0
    %2383 = vmatprep.subr.bf16.mxu0 0
    %2384 = vmatpush2.bf16.msra.mxu0 0
    %2385 = vmatprep.mubr.bf16.mxu0 0
    %2386 = vmatmul.mubr.bf16.gmra.mxu0 %v2351
    %v2387 = vpop.f32.mrf.mxu0
    %v2388 = vadd.f32 0.0, %v2387
    %v2389 = vpop.f32.mrf.mxu0
    %v2390 = vpop.f32.mrf.mxu0
    %v2391 = vadd.f32 0.0, %v2390
    %v2392 = vpop.f32.mrf.mxu0
    %2393 = vdwg.mxu0
    %2396 = vrot.lane.b32.xlu0 %v2388, 32
    %v2397 = vpop.permute.xlu0 %2396
    %2398 = vrot.lane.b32.xlu0 %v2391, 32
    %v2399 = vpop.permute.xlu0 %2398
    %v2402 = vadd.f32 %v2249, %v2397
    %v2403 = vadd.f32 %v2250, %v2399
    %v2404 = vxor.u32 %v2402, 2147483648
    %v2405 = vxor.u32 %v2403, 2147483648
    %v2406 = vmul.f32 %v2404, 1.442695
    %v2407 = vpow.pop %v2406
    %v2408 = vmul.f32 %v2405, 1.442695
    %v2409 = vpow.pop %v2408
    %v2410 = vadd.f32 %v2407, 1.0
    %v2411 = vadd.f32 %v2409, 1.0
    %v2412 = vrcp.pop %v2410
    %v2413 = vmul.f32 1.0, %v2412
    %v2414 = vrcp.pop %v2411
    %v2415 = vmul.f32 1.0, %v2414
    %v2416 = vmul.f32 %v2402, %v2413
    %v2417 = vmul.f32 %v2403, %v2415
    %v2418 = vld [vmem:[#allocation22] sm:$0xf]
    %v2419 = vld [vmem:[#allocation22 + $0x4] sm:$0xf]
    %v2420 = vld [vmem:[#allocation22 + $0x8] sm:$0xf]
    %v2421 = vld [vmem:[#allocation22 + $0xc] sm:$0xf]
    %v2422 = vpack.c.bf16 %v2417, %v2416
    %v2423 = vld [vmem:[#allocation23] sm:$0x1]
    %v2425 = vlaneseq
    %v2426 = vshrl.u32 %v2425, 7
    %v2427 = vsub.s32 0, %v2426
    %v2428 = vrot.slane %v2423, %v2427
    %2431 = vrot.lane.b32.xlu0 %v2422, 96
    %v2432 = vpop.permute.xlu0 %2431
    %v2437 = vunpack.c.l.b16 %v2418
    %v2438 = vunpack.c.l.b16 %v2419
    %v2439 = vunpack.c.l.b16 %v2420
    %v2440 = vunpack.c.l.b16 %v2421
    %v2441 = vpack.c.b16 %v2438, %v2437
    %v2442 = vpack.c.b16 %v2440, %v2439
    %v2446 = vsel %vm473, %v2432, 0
    %2448 = vmatprep.subr.bf16.mxu0 0
    %2449 = vmatpush1.bf16.msra.mxu0 0
    %2450 = vmatprep.subr.bf16.mxu0 0
    %2451 = vmatpush1.bf16.msra.mxu0 0
    %2452 = vmatprep.subr.bf16.mxu0 0
    %2453 = vmatpush1.bf16.msra.mxu0 0
    %2454 = vmatprep.subr.bf16.mxu0 0
    %2455 = vmatpush1.bf16.msra.mxu0 0
    %2456 = vmatprep.subr.bf16.mxu0 0
    %2457 = vmatpush1.bf16.msra.mxu0 0
    %2458 = vmatprep.subr.bf16.mxu0 0
    %2459 = vmatpush1.bf16.msra.mxu0 0
    %2460 = vmatprep.subr.bf16.mxu0 0
    %2461 = vmatpush1.bf16.msra.mxu0 %v2442
    %2462 = vmatprep.subr.bf16.mxu0 0
    %2463 = vmatpush1.bf16.msra.mxu0 %v2441
    %2464 = vmatprep.subr.bf16.mxu0 0
    %2465 = vmatpush2.bf16.msra.mxu0 0
    %2466 = vmatprep.subr.bf16.mxu0 0
    %2467 = vmatpush2.bf16.msra.mxu0 0
    %2468 = vmatprep.subr.bf16.mxu0 0
    %2469 = vmatpush2.bf16.msra.mxu0 0
    %2470 = vmatprep.subr.bf16.mxu0 0
    %2471 = vmatpush2.bf16.msra.mxu0 0
    %2472 = vmatprep.subr.bf16.mxu0 0
    %2473 = vmatpush2.bf16.msra.mxu0 0
    %2474 = vmatprep.subr.bf16.mxu0 0
    %2475 = vmatpush2.bf16.msra.mxu0 0
    %2476 = vmatprep.subr.bf16.mxu0 0
    %2477 = vmatpush2.bf16.msra.mxu0 0
    %2478 = vmatprep.subr.bf16.mxu0 0
    %2479 = vmatpush2.bf16.msra.mxu0 0
    %2480 = vmatprep.mubr.bf16.mxu0 0
    %2481 = vmatmul.mubr.bf16.gmra.mxu0 %v2446
    %v2482 = vpop.f32.mrf.mxu0
    %v2483 = vadd.f32 %v2428, %v2482
    %v2484 = vpop.f32.mrf.mxu0
    %v2485 = vpop.f32.mrf.mxu0
    %v2486 = vadd.f32 %v2428, %v2485
    %v2487 = vpop.f32.mrf.mxu0
    %2488 = vdwg.mxu0
    %v2489 = vld [vmem:[#allocation19] sm:$0x1]
    %v2491 = vlaneseq
    %v2492 = vshrl.u32 %v2491, 7
    %v2493 = vsub.s32 0, %v2492
    %v2494 = vrot.slane %v2489, %v2493
    %2495 = vrot.lane.b32.xlu0 %v2494, 32
    %v2496 = vpop.permute.xlu0 %2495
    %v2498 = vadd.f32 %v2388, %v2496
    %v2499 = vadd.f32 %v2391, %v2496
    %v2500 = vxor.u32 %v2498, 2147483648
    %v2501 = vxor.u32 %v2499, 2147483648
    %v2502 = vmul.f32 %v2500, 1.442695
    %v2503 = vpow.pop %v2502
    %v2504 = vmul.f32 %v2501, 1.442695
    %v2505 = vpow.pop %v2504
    %v2506 = vadd.f32 %v2503, 1.0
    %v2507 = vadd.f32 %v2505, 1.0
    %v2508 = vrcp.pop %v2506
    %v2509 = vmul.f32 1.0, %v2508
    %v2510 = vrcp.pop %v2507
    %v2511 = vmul.f32 1.0, %v2510
    %v2512 = vmul.f32 %v2498, %v2509
    %v2513 = vmul.f32 %v2499, %v2511
    %v2514 = vld [vmem:[%s55] sm:$0xf]
    %v2515 = vld [vmem:[%s55 + $0x4] sm:$0xf]
    %v2516 = vld [vmem:[%s55 + $0x8] sm:$0xf]
    %v2517 = vld [vmem:[%s55 + $0xc] sm:$0xf]
    %v2518 = vld [vmem:[%s55 + $0x10] sm:$0xf]
    %v2519 = vld [vmem:[%s55 + $0x14] sm:$0xf]
    %v2520 = vld [vmem:[%s55 + $0x18] sm:$0xf]
    %v2521 = vld [vmem:[%s55 + $0x1c] sm:$0xf]
    %v2522 = vpack.c.bf16 %v2513, %v2512
    %v2523 = vld [vmem:[%s57] sm:$0x1]
    %v2525 = vlaneseq
    %v2526 = vshrl.u32 %v2525, 7
    %v2527 = vsub.s32 0, %v2526
    %v2528 = vrot.slane %v2523, %v2527
    %2531 = vrot.lane.b32.xlu0 %v2522, 96
    %v2532 = vpop.permute.xlu0 %2531
    %v2541 = vunpack.c.l.b16 %v2514
    %v2542 = vunpack.c.l.b16 %v2515
    %v2543 = vunpack.c.l.b16 %v2516
    %v2544 = vunpack.c.l.b16 %v2517
    %v2545 = vunpack.c.l.b16 %v2518
    %v2546 = vunpack.c.l.b16 %v2519
    %v2547 = vunpack.c.l.b16 %v2520
    %v2548 = vunpack.c.l.b16 %v2521
    %v2549 = vpack.c.b16 %v2542, %v2541
    %v2550 = vpack.c.b16 %v2544, %v2543
    %v2551 = vpack.c.b16 %v2546, %v2545
    %v2552 = vpack.c.b16 %v2548, %v2547
    %vm2557 = vcmask 523264
    %v2559 = vsel %vm2557, %v2532, 0
    %2561 = vmatprep.subr.bf16.mxu0 0
    %2562 = vmatpush1.bf16.msra.mxu0 0
    %2563 = vmatprep.subr.bf16.mxu0 0
    %2564 = vmatpush1.bf16.msra.mxu0 0
    %2565 = vmatprep.subr.bf16.mxu0 0
    %2566 = vmatpush1.bf16.msra.mxu0 0
    %2567 = vmatprep.subr.bf16.mxu0 0
    %2568 = vmatpush1.bf16.msra.mxu0 0
    %2569 = vmatprep.subr.bf16.mxu0 0
    %2570 = vmatpush1.bf16.msra.mxu0 %v2552
    %2571 = vmatprep.subr.bf16.mxu0 0
    %2572 = vmatpush1.bf16.msra.mxu0 %v2551
    %2573 = vmatprep.subr.bf16.mxu0 0
    %2574 = vmatpush1.bf16.msra.mxu0 %v2550
    %2575 = vmatprep.subr.bf16.mxu0 0
    %2576 = vmatpush1.bf16.msra.mxu0 %v2549
    %2577 = vmatprep.subr.bf16.mxu0 0
    %2578 = vmatpush2.bf16.msra.mxu0 0
    %2579 = vmatprep.subr.bf16.mxu0 0
    %2580 = vmatpush2.bf16.msra.mxu0 0
    %2581 = vmatprep.subr.bf16.mxu0 0
    %2582 = vmatpush2.bf16.msra.mxu0 0
    %2583 = vmatprep.subr.bf16.mxu0 0
    %2584 = vmatpush2.bf16.msra.mxu0 0
    %2585 = vmatprep.subr.bf16.mxu0 0
    %2586 = vmatpush2.bf16.msra.mxu0 0
    %2587 = vmatprep.subr.bf16.mxu0 0
    %2588 = vmatpush2.bf16.msra.mxu0 0
    %2589 = vmatprep.subr.bf16.mxu0 0
    %2590 = vmatpush2.bf16.msra.mxu0 0
    %2591 = vmatprep.subr.bf16.mxu0 0
    %2592 = vmatpush2.bf16.msra.mxu0 0
    %2593 = vmatprep.mubr.bf16.mxu0 0
    %2594 = vmatmul.mubr.bf16.gmra.mxu0 %v2559
    %v2595 = vpop.f32.mrf.mxu0
    %v2596 = vadd.f32 %v2528, %v2595
    %v2597 = vpop.f32.mrf.mxu0
    %v2598 = vpop.f32.mrf.mxu0
    %v2599 = vadd.f32 %v2528, %v2598
    %v2600 = vpop.f32.mrf.mxu0
    %2601 = vdwg.mxu0
    %v2602 = vxor.u32 %v2596, 2147483648
    %v2603 = vxor.u32 %v2599, 2147483648
    %v2604 = vmul.f32 %v2602, 1.442695
    %v2605 = vpow.pop %v2604
    %v2606 = vmul.f32 %v2603, 1.442695
    %v2607 = vpow.pop %v2606
    %v2608 = vadd.f32 %v2605, 1.0
    %v2609 = vadd.f32 %v2607, 1.0
    %v2610 = vrcp.pop %v2608
    %v2611 = vmul.f32 1.0, %v2610
    %v2612 = vrcp.pop %v2609
    %v2613 = vmul.f32 1.0, %v2612
    %2615 = vset.pattern.permute.xlu0 0
    %2616 = vperm.xlu0 %2615, %v2611
    %v2617 = vpop.permute.xlu0 %2616
    %2620 = vset.pattern.permute.xlu0 0
    %2621 = vperm.xlu0 %2620, %v2613
    %v2622 = vpop.permute.xlu0 %2621
    %v2624 = vmul.f32 %v2327, %v2617
    %v2625 = vmul.f32 %v2330, %v2622
    %v2626 = vadd.f32 %v1765, 1.0
    %v2627 = vadd.f32 %v1772, 1.0
    %v2628 = vrcp.pop %v2626
    %v2629 = vmul.f32 %v1741, %v2628
    %v2630 = vrcp.pop %v2627
    %v2631 = vmul.f32 %v1747, %v2630
    %2633 = vset.pattern.permute.xlu0 1
    %2634 = vperm.xlu0 %2633, %v2596
    %v2635 = vpop.permute.xlu0 %2634
    %2638 = vset.pattern.permute.xlu0 1
    %2639 = vperm.xlu0 %2638, %v2599
    %v2640 = vpop.permute.xlu0 %2639
    %v2642 = vmul.f32 %v2629, %v2635
    %v2643 = vmul.f32 %v2631, %v2640
    %vm2644 = vcmask 130048
    %v2646 = vsel %vm2644, %v666, 0
    %2648 = vmatprep.subr.mxu0 0.0
    %2649 = vmatpush1.msra.mxu0 0.0
    %2650 = vmatprep.subr.mxu0 0.0
    %2651 = vmatpush1.msra.mxu0 0.0
    %2652 = vmatprep.subr.mxu0 0.0
    %2653 = vmatpush1.msra.mxu0 0.0
    %2654 = vmatprep.subr.mxu0 0.0
    %2655 = vmatpush1.msra.mxu0 0.0
    %2656 = vmatprep.subr.mxu0 0.0
    %2657 = vmatpush1.msra.mxu0 0.0
    %2658 = vmatprep.subr.mxu0 0.0
    %2659 = vmatpush1.msra.mxu0 0.0
    %2660 = vmatprep.subr.mxu0 0.0
    %2661 = vmatpush1.msra.mxu0 0.0
    %2662 = vmatprep.subr.mxu0 0.0
    %2663 = vmatpush1.msra.mxu0 0.0
    %2664 = vmatprep.subr.mxu0 0.0
    %2665 = vmatpush1.msra.mxu0 0.0
    %2666 = vmatprep.subr.mxu0 0.0
    %2667 = vmatpush1.msra.mxu0 0.0
    %2668 = vmatprep.subr.mxu0 0.0
    %2669 = vmatpush1.msra.mxu0 0.0
    %2670 = vmatprep.subr.mxu0 0.0
    %2671 = vmatpush1.msra.mxu0 0.0
    %2672 = vmatprep.subr.mxu0 0.0
    %2673 = vmatpush1.msra.mxu0 0.0
    %2674 = vmatprep.subr.mxu0 0.0
    %2675 = vmatpush1.msra.mxu0 0.0
    %2676 = vmatprep.subr.mxu0 0.0
    %v2677 = vand.u32 %v2625, 4294901760
    %2678 = vmatpush1.msra.mxu0 %v2677
    %2679 = vmatprep.subr.mxu0 0.0
    %v2680 = vand.u32 %v2624, 4294901760
    %2681 = vmatpush1.msra.mxu0 %v2680
    %2682 = vmatprep.subr.mxu0 0.0
    %2683 = vmatpush2.msra.mxu0 0.0
    %2684 = vmatprep.subr.mxu0 0.0
    %2685 = vmatpush2.msra.mxu0 0.0
    %2686 = vmatprep.subr.mxu0 0.0
    %2687 = vmatpush2.msra.mxu0 0.0
    %2688 = vmatprep.subr.mxu0 0.0
    %2689 = vmatpush2.msra.mxu0 0.0
    %2690 = vmatprep.subr.mxu0 0.0
    %2691 = vmatpush2.msra.mxu0 0.0
    %2692 = vmatprep.subr.mxu0 0.0
    %2693 = vmatpush2.msra.mxu0 0.0
    %2694 = vmatprep.subr.mxu0 0.0
    %2695 = vmatpush2.msra.mxu0 0.0
    %2696 = vmatprep.subr.mxu0 0.0
    %2697 = vmatpush2.msra.mxu0 0.0
    %2698 = vmatprep.subr.mxu0 0.0
    %2699 = vmatpush2.msra.mxu0 0.0
    %2700 = vmatprep.subr.mxu0 0.0
    %2701 = vmatpush2.msra.mxu0 0.0
    %2702 = vmatprep.subr.mxu0 0.0
    %2703 = vmatpush2.msra.mxu0 0.0
    %2704 = vmatprep.subr.mxu0 0.0
    %2705 = vmatpush2.msra.mxu0 0.0
    %2706 = vmatprep.subr.mxu0 0.0
    %2707 = vmatpush2.msra.mxu0 0.0
    %2708 = vmatprep.subr.mxu0 0.0
    %2709 = vmatpush2.msra.mxu0 0.0
    %2710 = vmatprep.subr.mxu0 0.0
    %2711 = vmatpush2.msra.mxu0 0.0
    %2712 = vmatprep.subr.mxu0 0.0
    %2713 = vmatpush2.msra.mxu0 0.0
    %2714 = vmatprep.mubr.f32.mxu0 0.0
    %v2715 = vand.u32 %v2646, 4294901760
    %v2716 = vsub.f32 %v2646, %v2715
    %v2717 = vand.u32 %v2716, 4294901760
    %v2718 = vsub.f32 %v2716, %v2717
    %v2719 = vand.u32 %v2718, 4294901760
    %2720 = vmatmul.mubr.f32.gmra.mxu0 %v2719
    %v2721 = vpop.f32.mrf.mxu0
    %v2722 = vadd.f32 0.0, %v2721
    %v2723 = vpop.f32.mrf.mxu0
    %2724 = vdwg.mxu0
    %2725 = vmatprep.subr.mxu0 0.0
    %2726 = vmatpush1.msra.mxu0 0.0
    %2727 = vmatprep.subr.mxu0 0.0
    %2728 = vmatpush1.msra.mxu0 0.0
    %2729 = vmatprep.subr.mxu0 0.0
    %2730 = vmatpush1.msra.mxu0 0.0
    %2731 = vmatprep.subr.mxu0 0.0
    %2732 = vmatpush1.msra.mxu0 0.0
    %2733 = vmatprep.subr.mxu0 0.0
    %2734 = vmatpush1.msra.mxu0 0.0
    %2735 = vmatprep.subr.mxu0 0.0
    %2736 = vmatpush1.msra.mxu0 0.0
    %2737 = vmatprep.subr.mxu0 0.0
    %2738 = vmatpush1.msra.mxu0 0.0
    %2739 = vmatprep.subr.mxu0 0.0
    %2740 = vmatpush1.msra.mxu0 0.0
    %2741 = vmatprep.subr.mxu0 0.0
    %2742 = vmatpush1.msra.mxu0 0.0
    %2743 = vmatprep.subr.mxu0 0.0
    %2744 = vmatpush1.msra.mxu0 0.0
    %2745 = vmatprep.subr.mxu0 0.0
    %2746 = vmatpush1.msra.mxu0 0.0
    %2747 = vmatprep.subr.mxu0 0.0
    %2748 = vmatpush1.msra.mxu0 0.0
    %2749 = vmatprep.subr.mxu0 0.0
    %2750 = vmatpush1.msra.mxu0 0.0
    %2751 = vmatprep.subr.mxu0 0.0
    %2752 = vmatpush1.msra.mxu0 0.0
    %2753 = vmatprep.subr.mxu0 0.0
    %v2754 = vand.u32 %v2625, 4294901760
    %v2755 = vsub.f32 %v2625, %v2754
    %v2756 = vand.u32 %v2755, 4294901760
    %v2757 = vsub.f32 %v2755, %v2756
    %v2758 = vand.u32 %v2757, 4294901760
    %2759 = vmatpush1.msra.mxu0 %v2758
    %2760 = vmatprep.subr.mxu0 0.0
    %v2761 = vand.u32 %v2624, 4294901760
    %v2762 = vsub.f32 %v2624, %v2761
    %v2763 = vand.u32 %v2762, 4294901760
    %v2764 = vsub.f32 %v2762, %v2763
    %v2765 = vand.u32 %v2764, 4294901760
    %2766 = vmatpush1.msra.mxu0 %v2765
    %2767 = vmatprep.subr.mxu0 0.0
    %2768 = vmatpush2.msra.mxu0 0.0
    %2769 = vmatprep.subr.mxu0 0.0
    %2770 = vmatpush2.msra.mxu0 0.0
    %2771 = vmatprep.subr.mxu0 0.0
    %2772 = vmatpush2.msra.mxu0 0.0
    %2773 = vmatprep.subr.mxu0 0.0
    %2774 = vmatpush2.msra.mxu0 0.0
    %2775 = vmatprep.subr.mxu0 0.0
    %2776 = vmatpush2.msra.mxu0 0.0
    %2777 = vmatprep.subr.mxu0 0.0
    %2778 = vmatpush2.msra.mxu0 0.0
    %2779 = vmatprep.subr.mxu0 0.0
    %2780 = vmatpush2.msra.mxu0 0.0
    %2781 = vmatprep.subr.mxu0 0.0
    %2782 = vmatpush2.msra.mxu0 0.0
    %2783 = vmatprep.subr.mxu0 0.0
    %2784 = vmatpush2.msra.mxu0 0.0
    %2785 = vmatprep.subr.mxu0 0.0
    %2786 = vmatpush2.msra.mxu0 0.0
    %2787 = vmatprep.subr.mxu0 0.0
    %2788 = vmatpush2.msra.mxu0 0.0
    %2789 = vmatprep.subr.mxu0 0.0
    %2790 = vmatpush2.msra.mxu0 0.0
    %2791 = vmatprep.subr.mxu0 0.0
    %2792 = vmatpush2.msra.mxu0 0.0
    %2793 = vmatprep.subr.mxu0 0.0
    %2794 = vmatpush2.msra.mxu0 0.0
    %2795 = vmatprep.subr.mxu0 0.0
    %2796 = vmatpush2.msra.mxu0 0.0
    %2797 = vmatprep.subr.mxu0 0.0
    %2798 = vmatpush2.msra.mxu0 0.0
    %2799 = vmatprep.mubr.f32.mxu0 0.0
    %v2800 = vand.u32 %v2646, 4294901760
    %2801 = vmatmul.mubr.f32.gmra.mxu0 %v2800
    %v2802 = vpop.f32.mrf.mxu0
    %v2803 = vadd.f32 %v2722, %v2802
    %v2804 = vpop.f32.mrf.mxu0
    %2805 = vdwg.mxu0
    %2806 = vmatprep.subr.mxu0 0.0
    %2807 = vmatpush1.msra.mxu0 0.0
    %2808 = vmatprep.subr.mxu0 0.0
    %2809 = vmatpush1.msra.mxu0 0.0
    %2810 = vmatprep.subr.mxu0 0.0
    %2811 = vmatpush1.msra.mxu0 0.0
    %2812 = vmatprep.subr.mxu0 0.0
    %2813 = vmatpush1.msra.mxu0 0.0
    %2814 = vmatprep.subr.mxu0 0.0
    %2815 = vmatpush1.msra.mxu0 0.0
    %2816 = vmatprep.subr.mxu0 0.0
    %2817 = vmatpush1.msra.mxu0 0.0
    %2818 = vmatprep.subr.mxu0 0.0
    %2819 = vmatpush1.msra.mxu0 0.0
    %2820 = vmatprep.subr.mxu0 0.0
    %2821 = vmatpush1.msra.mxu0 0.0
    %2822 = vmatprep.subr.mxu0 0.0
    %2823 = vmatpush1.msra.mxu0 0.0
    %2824 = vmatprep.subr.mxu0 0.0
    %2825 = vmatpush1.msra.mxu0 0.0
    %2826 = vmatprep.subr.mxu0 0.0
    %2827 = vmatpush1.msra.mxu0 0.0
    %2828 = vmatprep.subr.mxu0 0.0
    %2829 = vmatpush1.msra.mxu0 0.0
    %2830 = vmatprep.subr.mxu0 0.0
    %2831 = vmatpush1.msra.mxu0 0.0
    %2832 = vmatprep.subr.mxu0 0.0
    %2833 = vmatpush1.msra.mxu0 0.0
    %2834 = vmatprep.subr.mxu0 0.0
    %v2835 = vand.u32 %v2625, 4294901760
    %v2836 = vsub.f32 %v2625, %v2835
    %2837 = vmatpush1.msra.mxu0 %v2836
    %2838 = vmatprep.subr.mxu0 0.0
    %v2839 = vand.u32 %v2624, 4294901760
    %v2840 = vsub.f32 %v2624, %v2839
    %2841 = vmatpush1.msra.mxu0 %v2840
    %2842 = vmatprep.subr.mxu0 0.0
    %2843 = vmatpush2.msra.mxu0 0.0
    %2844 = vmatprep.subr.mxu0 0.0
    %2845 = vmatpush2.msra.mxu0 0.0
    %2846 = vmatprep.subr.mxu0 0.0
    %2847 = vmatpush2.msra.mxu0 0.0
    %2848 = vmatprep.subr.mxu0 0.0
    %2849 = vmatpush2.msra.mxu0 0.0
    %2850 = vmatprep.subr.mxu0 0.0
    %2851 = vmatpush2.msra.mxu0 0.0
    %2852 = vmatprep.subr.mxu0 0.0
    %2853 = vmatpush2.msra.mxu0 0.0
    %2854 = vmatprep.subr.mxu0 0.0
    %2855 = vmatpush2.msra.mxu0 0.0
    %2856 = vmatprep.subr.mxu0 0.0
    %2857 = vmatpush2.msra.mxu0 0.0
    %2858 = vmatprep.subr.mxu0 0.0
    %2859 = vmatpush2.msra.mxu0 0.0
    %2860 = vmatprep.subr.mxu0 0.0
    %2861 = vmatpush2.msra.mxu0 0.0
    %2862 = vmatprep.subr.mxu0 0.0
    %2863 = vmatpush2.msra.mxu0 0.0
    %2864 = vmatprep.subr.mxu0 0.0
    %2865 = vmatpush2.msra.mxu0 0.0
    %2866 = vmatprep.subr.mxu0 0.0
    %2867 = vmatpush2.msra.mxu0 0.0
    %2868 = vmatprep.subr.mxu0 0.0
    %2869 = vmatpush2.msra.mxu0 0.0
    %2870 = vmatprep.subr.mxu0 0.0
    %2871 = vmatpush2.msra.mxu0 0.0
    %2872 = vmatprep.subr.mxu0 0.0
    %2873 = vmatpush2.msra.mxu0 0.0
    %2874 = vmatprep.mubr.f32.mxu0 0.0
    %v2875 = vand.u32 %v2646, 4294901760
    %v2876 = vsub.f32 %v2646, %v2875
    %2877 = vmatmul.mubr.f32.gmra.mxu0 %v2876
    %v2878 = vpop.f32.mrf.mxu0
    %v2879 = vadd.f32 %v2803, %v2878
    %v2880 = vpop.f32.mrf.mxu0
    %2881 = vdwg.mxu0
    %2882 = vmatprep.subr.mxu0 0.0
    %2883 = vmatpush1.msra.mxu0 0.0
    %2884 = vmatprep.subr.mxu0 0.0
    %2885 = vmatpush1.msra.mxu0 0.0
    %2886 = vmatprep.subr.mxu0 0.0
    %2887 = vmatpush1.msra.mxu0 0.0
    %2888 = vmatprep.subr.mxu0 0.0
    %2889 = vmatpush1.msra.mxu0 0.0
    %2890 = vmatprep.subr.mxu0 0.0
    %2891 = vmatpush1.msra.mxu0 0.0
    %2892 = vmatprep.subr.mxu0 0.0
    %2893 = vmatpush1.msra.mxu0 0.0
    %2894 = vmatprep.subr.mxu0 0.0
    %2895 = vmatpush1.msra.mxu0 0.0
    %2896 = vmatprep.subr.mxu0 0.0
    %2897 = vmatpush1.msra.mxu0 0.0
    %2898 = vmatprep.subr.mxu0 0.0
    %2899 = vmatpush1.msra.mxu0 0.0
    %2900 = vmatprep.subr.mxu0 0.0
    %2901 = vmatpush1.msra.mxu0 0.0
    %2902 = vmatprep.subr.mxu0 0.0
    %2903 = vmatpush1.msra.mxu0 0.0
    %2904 = vmatprep.subr.mxu0 0.0
    %2905 = vmatpush1.msra.mxu0 0.0
    %2906 = vmatprep.subr.mxu0 0.0
    %2907 = vmatpush1.msra.mxu0 0.0
    %2908 = vmatprep.subr.mxu0 0.0
    %2909 = vmatpush1.msra.mxu0 0.0
    %2910 = vmatprep.subr.mxu0 0.0
    %v2911 = vand.u32 %v2625, 4294901760
    %2912 = vmatpush1.msra.mxu0 %v2911
    %2913 = vmatprep.subr.mxu0 0.0
    %v2914 = vand.u32 %v2624, 4294901760
    %2915 = vmatpush1.msra.mxu0 %v2914
    %2916 = vmatprep.subr.mxu0 0.0
    %2917 = vmatpush2.msra.mxu0 0.0
    %2918 = vmatprep.subr.mxu0 0.0
    %2919 = vmatpush2.msra.mxu0 0.0
    %2920 = vmatprep.subr.mxu0 0.0
    %2921 = vmatpush2.msra.mxu0 0.0
    %2922 = vmatprep.subr.mxu0 0.0
    %2923 = vmatpush2.msra.mxu0 0.0
    %2924 = vmatprep.subr.mxu0 0.0
    %2925 = vmatpush2.msra.mxu0 0.0
    %2926 = vmatprep.subr.mxu0 0.0
    %2927 = vmatpush2.msra.mxu0 0.0
    %2928 = vmatprep.subr.mxu0 0.0
    %2929 = vmatpush2.msra.mxu0 0.0
    %2930 = vmatprep.subr.mxu0 0.0
    %2931 = vmatpush2.msra.mxu0 0.0
    %2932 = vmatprep.subr.mxu0 0.0
    %2933 = vmatpush2.msra.mxu0 0.0
    %2934 = vmatprep.subr.mxu0 0.0
    %2935 = vmatpush2.msra.mxu0 0.0
    %2936 = vmatprep.subr.mxu0 0.0
    %2937 = vmatpush2.msra.mxu0 0.0
    %2938 = vmatprep.subr.mxu0 0.0
    %2939 = vmatpush2.msra.mxu0 0.0
    %2940 = vmatprep.subr.mxu0 0.0
    %2941 = vmatpush2.msra.mxu0 0.0
    %2942 = vmatprep.subr.mxu0 0.0
    %2943 = vmatpush2.msra.mxu0 0.0
    %2944 = vmatprep.subr.mxu0 0.0
    %2945 = vmatpush2.msra.mxu0 0.0
    %2946 = vmatprep.subr.mxu0 0.0
    %2947 = vmatpush2.msra.mxu0 0.0
    %2948 = vmatprep.mubr.f32.mxu0 0.0
    %v2949 = vand.u32 %v2646, 4294901760
    %v2950 = vsub.f32 %v2646, %v2949
    %v2951 = vand.u32 %v2950, 4294901760
    %2952 = vmatmul.mubr.f32.gmra.mxu0 %v2951
    %v2953 = vpop.f32.mrf.mxu0
    %v2954 = vadd.f32 %v2879, %v2953
    %v2955 = vpop.f32.mrf.mxu0
    %2956 = vdwg.mxu0
    %2957 = vmatprep.subr.mxu0 0.0
    %2958 = vmatpush1.msra.mxu0 0.0
    %2959 = vmatprep.subr.mxu0 0.0
    %2960 = vmatpush1.msra.mxu0 0.0
    %2961 = vmatprep.subr.mxu0 0.0
    %2962 = vmatpush1.msra.mxu0 0.0
    %2963 = vmatprep.subr.mxu0 0.0
    %2964 = vmatpush1.msra.mxu0 0.0
    %2965 = vmatprep.subr.mxu0 0.0
    %2966 = vmatpush1.msra.mxu0 0.0
    %2967 = vmatprep.subr.mxu0 0.0
    %2968 = vmatpush1.msra.mxu0 0.0
    %2969 = vmatprep.subr.mxu0 0.0
    %2970 = vmatpush1.msra.mxu0 0.0
    %2971 = vmatprep.subr.mxu0 0.0
    %2972 = vmatpush1.msra.mxu0 0.0
    %2973 = vmatprep.subr.mxu0 0.0
    %2974 = vmatpush1.msra.mxu0 0.0
    %2975 = vmatprep.subr.mxu0 0.0
    %2976 = vmatpush1.msra.mxu0 0.0
    %2977 = vmatprep.subr.mxu0 0.0
    %2978 = vmatpush1.msra.mxu0 0.0
    %2979 = vmatprep.subr.mxu0 0.0
    %2980 = vmatpush1.msra.mxu0 0.0
    %2981 = vmatprep.subr.mxu0 0.0
    %2982 = vmatpush1.msra.mxu0 0.0
    %2983 = vmatprep.subr.mxu0 0.0
    %2984 = vmatpush1.msra.mxu0 0.0
    %2985 = vmatprep.subr.mxu0 0.0
    %v2986 = vand.u32 %v2625, 4294901760
    %v2987 = vsub.f32 %v2625, %v2986
    %v2988 = vand.u32 %v2987, 4294901760
    %2989 = vmatpush1.msra.mxu0 %v2988
    %2990 = vmatprep.subr.mxu0 0.0
    %v2991 = vand.u32 %v2624, 4294901760
    %v2992 = vsub.f32 %v2624, %v2991
    %v2993 = vand.u32 %v2992, 4294901760
    %2994 = vmatpush1.msra.mxu0 %v2993
    %2995 = vmatprep.subr.mxu0 0.0
    %2996 = vmatpush2.msra.mxu0 0.0
    %2997 = vmatprep.subr.mxu0 0.0
    %2998 = vmatpush2.msra.mxu0 0.0
    %2999 = vmatprep.subr.mxu0 0.0
    %3000 = vmatpush2.msra.mxu0 0.0
    %3001 = vmatprep.subr.mxu0 0.0
    %3002 = vmatpush2.msra.mxu0 0.0
    %3003 = vmatprep.subr.mxu0 0.0
    %3004 = vmatpush2.msra.mxu0 0.0
    %3005 = vmatprep.subr.mxu0 0.0
    %3006 = vmatpush2.msra.mxu0 0.0
    %3007 = vmatprep.subr.mxu0 0.0
    %3008 = vmatpush2.msra.mxu0 0.0
    %3009 = vmatprep.subr.mxu0 0.0
    %3010 = vmatpush2.msra.mxu0 0.0
    %3011 = vmatprep.subr.mxu0 0.0
    %3012 = vmatpush2.msra.mxu0 0.0
    %3013 = vmatprep.subr.mxu0 0.0
    %3014 = vmatpush2.msra.mxu0 0.0
    %3015 = vmatprep.subr.mxu0 0.0
    %3016 = vmatpush2.msra.mxu0 0.0
    %3017 = vmatprep.subr.mxu0 0.0
    %3018 = vmatpush2.msra.mxu0 0.0
    %3019 = vmatprep.subr.mxu0 0.0
    %3020 = vmatpush2.msra.mxu0 0.0
    %3021 = vmatprep.subr.mxu0 0.0
    %3022 = vmatpush2.msra.mxu0 0.0
    %3023 = vmatprep.subr.mxu0 0.0
    %3024 = vmatpush2.msra.mxu0 0.0
    %3025 = vmatprep.subr.mxu0 0.0
    %3026 = vmatpush2.msra.mxu0 0.0
    %3027 = vmatprep.mubr.f32.mxu0 0.0
    %v3028 = vand.u32 %v2646, 4294901760
    %3029 = vmatmul.mubr.f32.gmra.mxu0 %v3028
    %v3030 = vpop.f32.mrf.mxu0
    %v3031 = vadd.f32 %v2954, %v3030
    %v3032 = vpop.f32.mrf.mxu0
    %3033 = vdwg.mxu0
    %3034 = vmatprep.subr.mxu0 0.0
    %3035 = vmatpush1.msra.mxu0 0.0
    %3036 = vmatprep.subr.mxu0 0.0
    %3037 = vmatpush1.msra.mxu0 0.0
    %3038 = vmatprep.subr.mxu0 0.0
    %3039 = vmatpush1.msra.mxu0 0.0
    %3040 = vmatprep.subr.mxu0 0.0
    %3041 = vmatpush1.msra.mxu0 0.0
    %3042 = vmatprep.subr.mxu0 0.0
    %3043 = vmatpush1.msra.mxu0 0.0
    %3044 = vmatprep.subr.mxu0 0.0
    %3045 = vmatpush1.msra.mxu0 0.0
    %3046 = vmatprep.subr.mxu0 0.0
    %3047 = vmatpush1.msra.mxu0 0.0
    %3048 = vmatprep.subr.mxu0 0.0
    %3049 = vmatpush1.msra.mxu0 0.0
    %3050 = vmatprep.subr.mxu0 0.0
    %3051 = vmatpush1.msra.mxu0 0.0
    %3052 = vmatprep.subr.mxu0 0.0
    %3053 = vmatpush1.msra.mxu0 0.0
    %3054 = vmatprep.subr.mxu0 0.0
    %3055 = vmatpush1.msra.mxu0 0.0
    %3056 = vmatprep.subr.mxu0 0.0
    %3057 = vmatpush1.msra.mxu0 0.0
    %3058 = vmatprep.subr.mxu0 0.0
    %3059 = vmatpush1.msra.mxu0 0.0
    %3060 = vmatprep.subr.mxu0 0.0
    %3061 = vmatpush1.msra.mxu0 0.0
    %3062 = vmatprep.subr.mxu0 0.0
    %v3063 = vand.u32 %v2625, 4294901760
    %3064 = vmatpush1.msra.mxu0 %v3063
    %3065 = vmatprep.subr.mxu0 0.0
    %v3066 = vand.u32 %v2624, 4294901760
    %3067 = vmatpush1.msra.mxu0 %v3066
    %3068 = vmatprep.subr.mxu0 0.0
    %3069 = vmatpush2.msra.mxu0 0.0
    %3070 = vmatprep.subr.mxu0 0.0
    %3071 = vmatpush2.msra.mxu0 0.0
    %3072 = vmatprep.subr.mxu0 0.0
    %3073 = vmatpush2.msra.mxu0 0.0
    %3074 = vmatprep.subr.mxu0 0.0
    %3075 = vmatpush2.msra.mxu0 0.0
    %3076 = vmatprep.subr.mxu0 0.0
    %3077 = vmatpush2.msra.mxu0 0.0
    %3078 = vmatprep.subr.mxu0 0.0
    %3079 = vmatpush2.msra.mxu0 0.0
    %3080 = vmatprep.subr.mxu0 0.0
    %3081 = vmatpush2.msra.mxu0 0.0
    %3082 = vmatprep.subr.mxu0 0.0
    %3083 = vmatpush2.msra.mxu0 0.0
    %3084 = vmatprep.subr.mxu0 0.0
    %3085 = vmatpush2.msra.mxu0 0.0
    %3086 = vmatprep.subr.mxu0 0.0
    %3087 = vmatpush2.msra.mxu0 0.0
    %3088 = vmatprep.subr.mxu0 0.0
    %3089 = vmatpush2.msra.mxu0 0.0
    %3090 = vmatprep.subr.mxu0 0.0
    %3091 = vmatpush2.msra.mxu0 0.0
    %3092 = vmatprep.subr.mxu0 0.0
    %3093 = vmatpush2.msra.mxu0 0.0
    %3094 = vmatprep.subr.mxu0 0.0
    %3095 = vmatpush2.msra.mxu0 0.0
    %3096 = vmatprep.subr.mxu0 0.0
    %3097 = vmatpush2.msra.mxu0 0.0
    %3098 = vmatprep.subr.mxu0 0.0
    %3099 = vmatpush2.msra.mxu0 0.0
    %3100 = vmatprep.mubr.f32.mxu0 0.0
    %v3101 = vand.u32 %v2646, 4294901760
    %3102 = vmatmul.mubr.f32.gmra.mxu0 %v3101
    %v3103 = vpop.f32.mrf.mxu0
    %v3104 = vadd.f32 %v3031, %v3103
    %v3105 = vpop.f32.mrf.mxu0
    %3106 = vdwg.mxu0
    %3107 = vmatprep.subr.mxu0 0.0
    %3108 = vmatpush1.msra.mxu0 0.0
    %3109 = vmatprep.subr.mxu0 0.0
    %3110 = vmatpush1.msra.mxu0 0.0
    %3111 = vmatprep.subr.mxu0 0.0
    %3112 = vmatpush1.msra.mxu0 0.0
    %3113 = vmatprep.subr.mxu0 0.0
    %3114 = vmatpush1.msra.mxu0 0.0
    %3115 = vmatprep.subr.mxu0 0.0
    %3116 = vmatpush1.msra.mxu0 0.0
    %3117 = vmatprep.subr.mxu0 0.0
    %3118 = vmatpush1.msra.mxu0 0.0
    %3119 = vmatprep.subr.mxu0 0.0
    %3120 = vmatpush1.msra.mxu0 0.0
    %3121 = vmatprep.subr.mxu0 0.0
    %3122 = vmatpush1.msra.mxu0 0.0
    %3123 = vmatprep.subr.mxu0 0.0
    %3124 = vmatpush1.msra.mxu0 0.0
    %3125 = vmatprep.subr.mxu0 0.0
    %3126 = vmatpush1.msra.mxu0 0.0
    %3127 = vmatprep.subr.mxu0 0.0
    %3128 = vmatpush1.msra.mxu0 0.0
    %3129 = vmatprep.subr.mxu0 0.0
    %3130 = vmatpush1.msra.mxu0 0.0
    %3131 = vmatprep.subr.mxu0 0.0
    %3132 = vmatpush1.msra.mxu0 0.0
    %3133 = vmatprep.subr.mxu0 0.0
    %3134 = vmatpush1.msra.mxu0 0.0
    %3135 = vmatprep.subr.mxu0 0.0
    %v3136 = vand.u32 %v2643, 4294901760
    %3137 = vmatpush1.msra.mxu0 %v3136
    %3138 = vmatprep.subr.mxu0 0.0
    %v3139 = vand.u32 %v2642, 4294901760
    %3140 = vmatpush1.msra.mxu0 %v3139
    %3141 = vmatprep.subr.mxu0 0.0
    %3142 = vmatpush2.msra.mxu0 0.0
    %3143 = vmatprep.subr.mxu0 0.0
    %3144 = vmatpush2.msra.mxu0 0.0
    %3145 = vmatprep.subr.mxu0 0.0
    %3146 = vmatpush2.msra.mxu0 0.0
    %3147 = vmatprep.subr.mxu0 0.0
    %3148 = vmatpush2.msra.mxu0 0.0
    %3149 = vmatprep.subr.mxu0 0.0
    %3150 = vmatpush2.msra.mxu0 0.0
    %3151 = vmatprep.subr.mxu0 0.0
    %3152 = vmatpush2.msra.mxu0 0.0
    %3153 = vmatprep.subr.mxu0 0.0
    %3154 = vmatpush2.msra.mxu0 0.0
    %3155 = vmatprep.subr.mxu0 0.0
    %3156 = vmatpush2.msra.mxu0 0.0
    %3157 = vmatprep.subr.mxu0 0.0
    %3158 = vmatpush2.msra.mxu0 0.0
    %3159 = vmatprep.subr.mxu0 0.0
    %3160 = vmatpush2.msra.mxu0 0.0
    %3161 = vmatprep.subr.mxu0 0.0
    %3162 = vmatpush2.msra.mxu0 0.0
    %3163 = vmatprep.subr.mxu0 0.0
    %3164 = vmatpush2.msra.mxu0 0.0
    %3165 = vmatprep.subr.mxu0 0.0
    %3166 = vmatpush2.msra.mxu0 0.0
    %3167 = vmatprep.subr.mxu0 0.0
    %3168 = vmatpush2.msra.mxu0 0.0
    %3169 = vmatprep.subr.mxu0 0.0
    %3170 = vmatpush2.msra.mxu0 0.0
    %3171 = vmatprep.subr.mxu0 0.0
    %3172 = vmatpush2.msra.mxu0 0.0
    %3173 = vmatprep.mubr.f32.mxu0 0.0
    %v3174 = vand.u32 %v2646, 4294901760
    %v3175 = vsub.f32 %v2646, %v3174
    %v3176 = vand.u32 %v3175, 4294901760
    %v3177 = vsub.f32 %v3175, %v3176
    %v3178 = vand.u32 %v3177, 4294901760
    %3179 = vmatmul.mubr.f32.gmra.mxu0 %v3178
    %v3180 = vpop.f32.mrf.mxu0
    %v3181 = vadd.f32 0.0, %v3180
    %v3182 = vpop.f32.mrf.mxu0
    %3183 = vdwg.mxu0
    %3184 = vmatprep.subr.mxu0 0.0
    %3185 = vmatpush1.msra.mxu0 0.0
    %3186 = vmatprep.subr.mxu0 0.0
    %3187 = vmatpush1.msra.mxu0 0.0
    %3188 = vmatprep.subr.mxu0 0.0
    %3189 = vmatpush1.msra.mxu0 0.0
    %3190 = vmatprep.subr.mxu0 0.0
    %3191 = vmatpush1.msra.mxu0 0.0
    %3192 = vmatprep.subr.mxu0 0.0
    %3193 = vmatpush1.msra.mxu0 0.0
    %3194 = vmatprep.subr.mxu0 0.0
    %3195 = vmatpush1.msra.mxu0 0.0
    %3196 = vmatprep.subr.mxu0 0.0
    %3197 = vmatpush1.msra.mxu0 0.0
    %3198 = vmatprep.subr.mxu0 0.0
    %3199 = vmatpush1.msra.mxu0 0.0
    %3200 = vmatprep.subr.mxu0 0.0
    %3201 = vmatpush1.msra.mxu0 0.0
    %3202 = vmatprep.subr.mxu0 0.0
    %3203 = vmatpush1.msra.mxu0 0.0
    %3204 = vmatprep.subr.mxu0 0.0
    %3205 = vmatpush1.msra.mxu0 0.0
    %3206 = vmatprep.subr.mxu0 0.0
    %3207 = vmatpush1.msra.mxu0 0.0
    %3208 = vmatprep.subr.mxu0 0.0
    %3209 = vmatpush1.msra.mxu0 0.0
    %3210 = vmatprep.subr.mxu0 0.0
    %3211 = vmatpush1.msra.mxu0 0.0
    %3212 = vmatprep.subr.mxu0 0.0
    %v3213 = vand.u32 %v2643, 4294901760
    %v3214 = vsub.f32 %v2643, %v3213
    %v3215 = vand.u32 %v3214, 4294901760
    %v3216 = vsub.f32 %v3214, %v3215
    %v3217 = vand.u32 %v3216, 4294901760
    %3218 = vmatpush1.msra.mxu0 %v3217
    %3219 = vmatprep.subr.mxu0 0.0
    %v3220 = vand.u32 %v2642, 4294901760
    %v3221 = vsub.f32 %v2642, %v3220
    %v3222 = vand.u32 %v3221, 4294901760
    %v3223 = vsub.f32 %v3221, %v3222
    %v3224 = vand.u32 %v3223, 4294901760
    %3225 = vmatpush1.msra.mxu0 %v3224
    %3226 = vmatprep.subr.mxu0 0.0
    %3227 = vmatpush2.msra.mxu0 0.0
    %3228 = vmatprep.subr.mxu0 0.0
    %3229 = vmatpush2.msra.mxu0 0.0
    %3230 = vmatprep.subr.mxu0 0.0
    %3231 = vmatpush2.msra.mxu0 0.0
    %3232 = vmatprep.subr.mxu0 0.0
    %3233 = vmatpush2.msra.mxu0 0.0
    %3234 = vmatprep.subr.mxu0 0.0
    %3235 = vmatpush2.msra.mxu0 0.0
    %3236 = vmatprep.subr.mxu0 0.0
    %3237 = vmatpush2.msra.mxu0 0.0
    %3238 = vmatprep.subr.mxu0 0.0
    %3239 = vmatpush2.msra.mxu0 0.0
    %3240 = vmatprep.subr.mxu0 0.0
    %3241 = vmatpush2.msra.mxu0 0.0
    %3242 = vmatprep.subr.mxu0 0.0
    %3243 = vmatpush2.msra.mxu0 0.0
    %3244 = vmatprep.subr.mxu0 0.0
    %3245 = vmatpush2.msra.mxu0 0.0
    %3246 = vmatprep.subr.mxu0 0.0
    %3247 = vmatpush2.msra.mxu0 0.0
    %3248 = vmatprep.subr.mxu0 0.0
    %3249 = vmatpush2.msra.mxu0 0.0
    %3250 = vmatprep.subr.mxu0 0.0
    %3251 = vmatpush2.msra.mxu0 0.0
    %3252 = vmatprep.subr.mxu0 0.0
    %3253 = vmatpush2.msra.mxu0 0.0
    %3254 = vmatprep.subr.mxu0 0.0
    %3255 = vmatpush2.msra.mxu0 0.0
    %3256 = vmatprep.subr.mxu0 0.0
    %3257 = vmatpush2.msra.mxu0 0.0
    %3258 = vmatprep.mubr.f32.mxu0 0.0
    %v3259 = vand.u32 %v2646, 4294901760
    %3260 = vmatmul.mubr.f32.gmra.mxu0 %v3259
    %v3261 = vpop.f32.mrf.mxu0
    %v3262 = vadd.f32 %v3181, %v3261
    %v3263 = vpop.f32.mrf.mxu0
    %3264 = vdwg.mxu0
    %3265 = vmatprep.subr.mxu0 0.0
    %3266 = vmatpush1.msra.mxu0 0.0
    %3267 = vmatprep.subr.mxu0 0.0
    %3268 = vmatpush1.msra.mxu0 0.0
    %3269 = vmatprep.subr.mxu0 0.0
    %3270 = vmatpush1.msra.mxu0 0.0
    %3271 = vmatprep.subr.mxu0 0.0
    %3272 = vmatpush1.msra.mxu0 0.0
    %3273 = vmatprep.subr.mxu0 0.0
    %3274 = vmatpush1.msra.mxu0 0.0
    %3275 = vmatprep.subr.mxu0 0.0
    %3276 = vmatpush1.msra.mxu0 0.0
    %3277 = vmatprep.subr.mxu0 0.0
    %3278 = vmatpush1.msra.mxu0 0.0
    %3279 = vmatprep.subr.mxu0 0.0
    %3280 = vmatpush1.msra.mxu0 0.0
    %3281 = vmatprep.subr.mxu0 0.0
    %3282 = vmatpush1.msra.mxu0 0.0
    %3283 = vmatprep.subr.mxu0 0.0
    %3284 = vmatpush1.msra.mxu0 0.0
    %3285 = vmatprep.subr.mxu0 0.0
    %3286 = vmatpush1.msra.mxu0 0.0
    %3287 = vmatprep.subr.mxu0 0.0
    %3288 = vmatpush1.msra.mxu0 0.0
    %3289 = vmatprep.subr.mxu0 0.0
    %3290 = vmatpush1.msra.mxu0 0.0
    %3291 = vmatprep.subr.mxu0 0.0
    %3292 = vmatpush1.msra.mxu0 0.0
    %3293 = vmatprep.subr.mxu0 0.0
    %v3294 = vand.u32 %v2643, 4294901760
    %v3295 = vsub.f32 %v2643, %v3294
    %3296 = vmatpush1.msra.mxu0 %v3295
    %3297 = vmatprep.subr.mxu0 0.0
    %v3298 = vand.u32 %v2642, 4294901760
    %v3299 = vsub.f32 %v2642, %v3298
    %3300 = vmatpush1.msra.mxu0 %v3299
    %3301 = vmatprep.subr.mxu0 0.0
    %3302 = vmatpush2.msra.mxu0 0.0
    %3303 = vmatprep.subr.mxu0 0.0
    %3304 = vmatpush2.msra.mxu0 0.0
    %3305 = vmatprep.subr.mxu0 0.0
    %3306 = vmatpush2.msra.mxu0 0.0
    %3307 = vmatprep.subr.mxu0 0.0
    %3308 = vmatpush2.msra.mxu0 0.0
    %3309 = vmatprep.subr.mxu0 0.0
    %3310 = vmatpush2.msra.mxu0 0.0
    %3311 = vmatprep.subr.mxu0 0.0
    %3312 = vmatpush2.msra.mxu0 0.0
    %3313 = vmatprep.subr.mxu0 0.0
    %3314 = vmatpush2.msra.mxu0 0.0
    %3315 = vmatprep.subr.mxu0 0.0
    %3316 = vmatpush2.msra.mxu0 0.0
    %3317 = vmatprep.subr.mxu0 0.0
    %3318 = vmatpush2.msra.mxu0 0.0
    %3319 = vmatprep.subr.mxu0 0.0
    %3320 = vmatpush2.msra.mxu0 0.0
    %3321 = vmatprep.subr.mxu0 0.0
    %3322 = vmatpush2.msra.mxu0 0.0
    %3323 = vmatprep.subr.mxu0 0.0
    %3324 = vmatpush2.msra.mxu0 0.0
    %3325 = vmatprep.subr.mxu0 0.0
    %3326 = vmatpush2.msra.mxu0 0.0
    %3327 = vmatprep.subr.mxu0 0.0
    %3328 = vmatpush2.msra.mxu0 0.0
    %3329 = vmatprep.subr.mxu0 0.0
    %3330 = vmatpush2.msra.mxu0 0.0
    %3331 = vmatprep.subr.mxu0 0.0
    %3332 = vmatpush2.msra.mxu0 0.0
    %3333 = vmatprep.mubr.f32.mxu0 0.0
    %v3334 = vand.u32 %v2646, 4294901760
    %v3335 = vsub.f32 %v2646, %v3334
    %3336 = vmatmul.mubr.f32.gmra.mxu0 %v3335
    %v3337 = vpop.f32.mrf.mxu0
    %v3338 = vadd.f32 %v3262, %v3337
    %v3339 = vpop.f32.mrf.mxu0
    %3340 = vdwg.mxu0
    %3341 = vmatprep.subr.mxu0 0.0
    %3342 = vmatpush1.msra.mxu0 0.0
    %3343 = vmatprep.subr.mxu0 0.0
    %3344 = vmatpush1.msra.mxu0 0.0
    %3345 = vmatprep.subr.mxu0 0.0
    %3346 = vmatpush1.msra.mxu0 0.0
    %3347 = vmatprep.subr.mxu0 0.0
    %3348 = vmatpush1.msra.mxu0 0.0
    %3349 = vmatprep.subr.mxu0 0.0
    %3350 = vmatpush1.msra.mxu0 0.0
    %3351 = vmatprep.subr.mxu0 0.0
    %3352 = vmatpush1.msra.mxu0 0.0
    %3353 = vmatprep.subr.mxu0 0.0
    %3354 = vmatpush1.msra.mxu0 0.0
    %3355 = vmatprep.subr.mxu0 0.0
    %3356 = vmatpush1.msra.mxu0 0.0
    %3357 = vmatprep.subr.mxu0 0.0
    %3358 = vmatpush1.msra.mxu0 0.0
    %3359 = vmatprep.subr.mxu0 0.0
    %3360 = vmatpush1.msra.mxu0 0.0
    %3361 = vmatprep.subr.mxu0 0.0
    %3362 = vmatpush1.msra.mxu0 0.0
    %3363 = vmatprep.subr.mxu0 0.0
    %3364 = vmatpush1.msra.mxu0 0.0
    %3365 = vmatprep.subr.mxu0 0.0
    %3366 = vmatpush1.msra.mxu0 0.0
    %3367 = vmatprep.subr.mxu0 0.0
    %3368 = vmatpush1.msra.mxu0 0.0
    %3369 = vmatprep.subr.mxu0 0.0
    %v3370 = vand.u32 %v2643, 4294901760
    %3371 = vmatpush1.msra.mxu0 %v3370
    %3372 = vmatprep.subr.mxu0 0.0
    %v3373 = vand.u32 %v2642, 4294901760
    %3374 = vmatpush1.msra.mxu0 %v3373
    %3375 = vmatprep.subr.mxu0 0.0
    %3376 = vmatpush2.msra.mxu0 0.0
    %3377 = vmatprep.subr.mxu0 0.0
    %3378 = vmatpush2.msra.mxu0 0.0
    %3379 = vmatprep.subr.mxu0 0.0
    %3380 = vmatpush2.msra.mxu0 0.0
    %3381 = vmatprep.subr.mxu0 0.0
    %3382 = vmatpush2.msra.mxu0 0.0
    %3383 = vmatprep.subr.mxu0 0.0
    %3384 = vmatpush2.msra.mxu0 0.0
    %3385 = vmatprep.subr.mxu0 0.0
    %3386 = vmatpush2.msra.mxu0 0.0
    %3387 = vmatprep.subr.mxu0 0.0
    %3388 = vmatpush2.msra.mxu0 0.0
    %3389 = vmatprep.subr.mxu0 0.0
    %3390 = vmatpush2.msra.mxu0 0.0
    %3391 = vmatprep.subr.mxu0 0.0
    %3392 = vmatpush2.msra.mxu0 0.0
    %3393 = vmatprep.subr.mxu0 0.0
    %3394 = vmatpush2.msra.mxu0 0.0
    %3395 = vmatprep.subr.mxu0 0.0
    %3396 = vmatpush2.msra.mxu0 0.0
    %3397 = vmatprep.subr.mxu0 0.0
    %3398 = vmatpush2.msra.mxu0 0.0
    %3399 = vmatprep.subr.mxu0 0.0
    %3400 = vmatpush2.msra.mxu0 0.0
    %3401 = vmatprep.subr.mxu0 0.0
    %3402 = vmatpush2.msra.mxu0 0.0
    %3403 = vmatprep.subr.mxu0 0.0
    %3404 = vmatpush2.msra.mxu0 0.0
    %3405 = vmatprep.subr.mxu0 0.0
    %3406 = vmatpush2.msra.mxu0 0.0
    %3407 = vmatprep.mubr.f32.mxu0 0.0
    %v3408 = vand.u32 %v2646, 4294901760
    %v3409 = vsub.f32 %v2646, %v3408
    %v3410 = vand.u32 %v3409, 4294901760
    %3411 = vmatmul.mubr.f32.gmra.mxu0 %v3410
    %v3412 = vpop.f32.mrf.mxu0
    %v3413 = vadd.f32 %v3338, %v3412
    %v3414 = vpop.f32.mrf.mxu0
    %3415 = vdwg.mxu0
    %3416 = vmatprep.subr.mxu0 0.0
    %3417 = vmatpush1.msra.mxu0 0.0
    %3418 = vmatprep.subr.mxu0 0.0
    %3419 = vmatpush1.msra.mxu0 0.0
    %3420 = vmatprep.subr.mxu0 0.0
    %3421 = vmatpush1.msra.mxu0 0.0
    %3422 = vmatprep.subr.mxu0 0.0
    %3423 = vmatpush1.msra.mxu0 0.0
    %3424 = vmatprep.subr.mxu0 0.0
    %3425 = vmatpush1.msra.mxu0 0.0
    %3426 = vmatprep.subr.mxu0 0.0
    %3427 = vmatpush1.msra.mxu0 0.0
    %3428 = vmatprep.subr.mxu0 0.0
    %3429 = vmatpush1.msra.mxu0 0.0
    %3430 = vmatprep.subr.mxu0 0.0
    %3431 = vmatpush1.msra.mxu0 0.0
    %3432 = vmatprep.subr.mxu0 0.0
    %3433 = vmatpush1.msra.mxu0 0.0
    %3434 = vmatprep.subr.mxu0 0.0
    %3435 = vmatpush1.msra.mxu0 0.0
    %3436 = vmatprep.subr.mxu0 0.0
    %3437 = vmatpush1.msra.mxu0 0.0
    %3438 = vmatprep.subr.mxu0 0.0
    %3439 = vmatpush1.msra.mxu0 0.0
    %3440 = vmatprep.subr.mxu0 0.0
    %3441 = vmatpush1.msra.mxu0 0.0
    %3442 = vmatprep.subr.mxu0 0.0
    %3443 = vmatpush1.msra.mxu0 0.0
    %3444 = vmatprep.subr.mxu0 0.0
    %v3445 = vand.u32 %v2643, 4294901760
    %v3446 = vsub.f32 %v2643, %v3445
    %v3447 = vand.u32 %v3446, 4294901760
    %3448 = vmatpush1.msra.mxu0 %v3447
    %3449 = vmatprep.subr.mxu0 0.0
    %v3450 = vand.u32 %v2642, 4294901760
    %v3451 = vsub.f32 %v2642, %v3450
    %v3452 = vand.u32 %v3451, 4294901760
    %3453 = vmatpush1.msra.mxu0 %v3452
    %3454 = vmatprep.subr.mxu0 0.0
    %3455 = vmatpush2.msra.mxu0 0.0
    %3456 = vmatprep.subr.mxu0 0.0
    %3457 = vmatpush2.msra.mxu0 0.0
    %3458 = vmatprep.subr.mxu0 0.0
    %3459 = vmatpush2.msra.mxu0 0.0
    %3460 = vmatprep.subr.mxu0 0.0
    %3461 = vmatpush2.msra.mxu0 0.0
    %3462 = vmatprep.subr.mxu0 0.0
    %3463 = vmatpush2.msra.mxu0 0.0
    %3464 = vmatprep.subr.mxu0 0.0
    %3465 = vmatpush2.msra.mxu0 0.0
    %3466 = vmatprep.subr.mxu0 0.0
    %3467 = vmatpush2.msra.mxu0 0.0
    %3468 = vmatprep.subr.mxu0 0.0
    %3469 = vmatpush2.msra.mxu0 0.0
    %3470 = vmatprep.subr.mxu0 0.0
    %3471 = vmatpush2.msra.mxu0 0.0
    %3472 = vmatprep.subr.mxu0 0.0
    %3473 = vmatpush2.msra.mxu0 0.0
    %3474 = vmatprep.subr.mxu0 0.0
    %3475 = vmatpush2.msra.mxu0 0.0
    %3476 = vmatprep.subr.mxu0 0.0
    %3477 = vmatpush2.msra.mxu0 0.0
    %3478 = vmatprep.subr.mxu0 0.0
    %3479 = vmatpush2.msra.mxu0 0.0
    %3480 = vmatprep.subr.mxu0 0.0
    %3481 = vmatpush2.msra.mxu0 0.0
    %3482 = vmatprep.subr.mxu0 0.0
    %3483 = vmatpush2.msra.mxu0 0.0
    %3484 = vmatprep.subr.mxu0 0.0
    %3485 = vmatpush2.msra.mxu0 0.0
    %3486 = vmatprep.mubr.f32.mxu0 0.0
    %v3487 = vand.u32 %v2646, 4294901760
    %3488 = vmatmul.mubr.f32.gmra.mxu0 %v3487
    %v3489 = vpop.f32.mrf.mxu0
    %v3490 = vadd.f32 %v3413, %v3489
    %v3491 = vpop.f32.mrf.mxu0
    %3492 = vdwg.mxu0
    %3493 = vmatprep.subr.mxu0 0.0
    %3494 = vmatpush1.msra.mxu0 0.0
    %3495 = vmatprep.subr.mxu0 0.0
    %3496 = vmatpush1.msra.mxu0 0.0
    %3497 = vmatprep.subr.mxu0 0.0
    %3498 = vmatpush1.msra.mxu0 0.0
    %3499 = vmatprep.subr.mxu0 0.0
    %3500 = vmatpush1.msra.mxu0 0.0
    %3501 = vmatprep.subr.mxu0 0.0
    %3502 = vmatpush1.msra.mxu0 0.0
    %3503 = vmatprep.subr.mxu0 0.0
    %3504 = vmatpush1.msra.mxu0 0.0
    %3505 = vmatprep.subr.mxu0 0.0
    %3506 = vmatpush1.msra.mxu0 0.0
    %3507 = vmatprep.subr.mxu0 0.0
    %3508 = vmatpush1.msra.mxu0 0.0
    %3509 = vmatprep.subr.mxu0 0.0
    %3510 = vmatpush1.msra.mxu0 0.0
    %3511 = vmatprep.subr.mxu0 0.0
    %3512 = vmatpush1.msra.mxu0 0.0
    %3513 = vmatprep.subr.mxu0 0.0
    %3514 = vmatpush1.msra.mxu0 0.0
    %3515 = vmatprep.subr.mxu0 0.0
    %3516 = vmatpush1.msra.mxu0 0.0
    %3517 = vmatprep.subr.mxu0 0.0
    %3518 = vmatpush1.msra.mxu0 0.0
    %3519 = vmatprep.subr.mxu0 0.0
    %3520 = vmatpush1.msra.mxu0 0.0
    %3521 = vmatprep.subr.mxu0 0.0
    %v3522 = vand.u32 %v2643, 4294901760
    %3523 = vmatpush1.msra.mxu0 %v3522
    %3524 = vmatprep.subr.mxu0 0.0
    %v3525 = vand.u32 %v2642, 4294901760
    %3526 = vmatpush1.msra.mxu0 %v3525
    %3527 = vmatprep.subr.mxu0 0.0
    %3528 = vmatpush2.msra.mxu0 0.0
    %3529 = vmatprep.subr.mxu0 0.0
    %3530 = vmatpush2.msra.mxu0 0.0
    %3531 = vmatprep.subr.mxu0 0.0
    %3532 = vmatpush2.msra.mxu0 0.0
    %3533 = vmatprep.subr.mxu0 0.0
    %3534 = vmatpush2.msra.mxu0 0.0
    %3535 = vmatprep.subr.mxu0 0.0
    %3536 = vmatpush2.msra.mxu0 0.0
    %3537 = vmatprep.subr.mxu0 0.0
    %3538 = vmatpush2.msra.mxu0 0.0
    %3539 = vmatprep.subr.mxu0 0.0
    %3540 = vmatpush2.msra.mxu0 0.0
    %3541 = vmatprep.subr.mxu0 0.0
    %3542 = vmatpush2.msra.mxu0 0.0
    %3543 = vmatprep.subr.mxu0 0.0
    %3544 = vmatpush2.msra.mxu0 0.0
    %3545 = vmatprep.subr.mxu0 0.0
    %3546 = vmatpush2.msra.mxu0 0.0
    %3547 = vmatprep.subr.mxu0 0.0
    %3548 = vmatpush2.msra.mxu0 0.0
    %3549 = vmatprep.subr.mxu0 0.0
    %3550 = vmatpush2.msra.mxu0 0.0
    %3551 = vmatprep.subr.mxu0 0.0
    %3552 = vmatpush2.msra.mxu0 0.0
    %3553 = vmatprep.subr.mxu0 0.0
    %3554 = vmatpush2.msra.mxu0 0.0
    %3555 = vmatprep.subr.mxu0 0.0
    %3556 = vmatpush2.msra.mxu0 0.0
    %3557 = vmatprep.subr.mxu0 0.0
    %3558 = vmatpush2.msra.mxu0 0.0
    %3559 = vmatprep.mubr.f32.mxu0 0.0
    %v3560 = vand.u32 %v2646, 4294901760
    %3561 = vmatmul.mubr.f32.gmra.mxu0 %v3560
    %v3562 = vpop.f32.mrf.mxu0
    %v3563 = vadd.f32 %v3490, %v3562
    %v3564 = vpop.f32.mrf.mxu0
    %3565 = vdwg.mxu0
    %v3566 = vld [vmem:[%s59] sm:$0xf]
    %v3567 = vld [vmem:[%s59 + $0x4] sm:$0xf]
    %v3568 = vld [vmem:[%s59 + $0x8] sm:$0xf]
    %v3569 = vld [vmem:[%s59 + $0xc] sm:$0xf]
    %v3570 = vpack.c.bf16 %v512, %v512
    %v3571 = vld [vmem:[#allocation25] sm:$0xf]
    %v3572 = vld [vmem:[#allocation25 + $0x4] sm:$0xf]
    %v3573 = vld [vmem:[#allocation25 + $0x8] sm:$0xf]
    %v3574 = vld [vmem:[#allocation25 + $0xc] sm:$0xf]
    %v3575 = vpack.c.bf16 %v3104, %v3104
    %v3580 = vunpack.c.l.b16 %v3571
    %v3581 = vunpack.c.l.b16 %v3572
    %v3582 = vunpack.c.l.b16 %v3573
    %v3583 = vunpack.c.l.b16 %v3574
    %v3584 = vpack.c.b16 %v3581, %v3580
    %v3585 = vpack.c.b16 %v3583, %v3582
    %v3589 = vsel %vm473, %v3575, 0
    %3591 = vmatprep.subr.bf16.mxu0 0
    %3592 = vmatpush1.bf16.msra.mxu0 0
    %3593 = vmatprep.subr.bf16.mxu0 0
    %3594 = vmatpush1.bf16.msra.mxu0 0
    %3595 = vmatprep.subr.bf16.mxu0 0
    %3596 = vmatpush1.bf16.msra.mxu0 0
    %3597 = vmatprep.subr.bf16.mxu0 0
    %3598 = vmatpush1.bf16.msra.mxu0 0
    %3599 = vmatprep.subr.bf16.mxu0 0
    %3600 = vmatpush1.bf16.msra.mxu0 0
    %3601 = vmatprep.subr.bf16.mxu0 0
    %3602 = vmatpush1.bf16.msra.mxu0 0
    %3603 = vmatprep.subr.bf16.mxu0 0
    %3604 = vmatpush1.bf16.msra.mxu0 %v3585
    %3605 = vmatprep.subr.bf16.mxu0 0
    %3606 = vmatpush1.bf16.msra.mxu0 %v3584
    %3607 = vmatprep.subr.bf16.mxu0 0
    %3608 = vmatpush2.bf16.msra.mxu0 0
    %3609 = vmatprep.subr.bf16.mxu0 0
    %3610 = vmatpush2.bf16.msra.mxu0 0
    %3611 = vmatprep.subr.bf16.mxu0 0
    %3612 = vmatpush2.bf16.msra.mxu0 0
    %3613 = vmatprep.subr.bf16.mxu0 0
    %3614 = vmatpush2.bf16.msra.mxu0 0
    %3615 = vmatprep.subr.bf16.mxu0 0
    %3616 = vmatpush2.bf16.msra.mxu0 0
    %3617 = vmatprep.subr.bf16.mxu0 0
    %3618 = vmatpush2.bf16.msra.mxu0 0
    %3619 = vmatprep.subr.bf16.mxu0 0
    %3620 = vmatpush2.bf16.msra.mxu0 0
    %3621 = vmatprep.subr.bf16.mxu0 0
    %3622 = vmatpush2.bf16.msra.mxu0 0
    %3623 = vmatprep.mubr.bf16.mxu0 0
    %3624 = vmatmul.mubr.bf16.gmra.mxu0 %v3589
    %v3625 = vpop.f32.mrf.mxu0
    %v3626 = vadd.f32 0.0, %v3625
    %v3627 = vpop.f32.mrf.mxu0
    %v3628 = vpop.f32.mrf.mxu0
    %v3629 = vpop.f32.mrf.mxu0
    %3630 = vdwg.mxu0
    %v3635 = vunpack.c.l.b16 %v3566
    %v3636 = vunpack.c.l.b16 %v3567
    %v3637 = vunpack.c.l.b16 %v3568
    %v3638 = vunpack.c.l.b16 %v3569
    %v3639 = vpack.c.b16 %v3636, %v3635
    %v3640 = vpack.c.b16 %v3638, %v3637
    %v3644 = vsel %vm473, %v3570, 0
    %3646 = vmatprep.subr.bf16.mxu0 0
    %3647 = vmatpush1.bf16.msra.mxu0 0
    %3648 = vmatprep.subr.bf16.mxu0 0
    %3649 = vmatpush1.bf16.msra.mxu0 0
    %3650 = vmatprep.subr.bf16.mxu0 0
    %3651 = vmatpush1.bf16.msra.mxu0 0
    %3652 = vmatprep.subr.bf16.mxu0 0
    %3653 = vmatpush1.bf16.msra.mxu0 0
    %3654 = vmatprep.subr.bf16.mxu0 0
    %3655 = vmatpush1.bf16.msra.mxu0 0
    %3656 = vmatprep.subr.bf16.mxu0 0
    %3657 = vmatpush1.bf16.msra.mxu0 0
    %3658 = vmatprep.subr.bf16.mxu0 0
    %3659 = vmatpush1.bf16.msra.mxu0 %v3640
    %3660 = vmatprep.subr.bf16.mxu0 0
    %3661 = vmatpush1.bf16.msra.mxu0 %v3639
    %3662 = vmatprep.subr.bf16.mxu0 0
    %3663 = vmatpush2.bf16.msra.mxu0 0
    %3664 = vmatprep.subr.bf16.mxu0 0
    %3665 = vmatpush2.bf16.msra.mxu0 0
    %3666 = vmatprep.subr.bf16.mxu0 0
    %3667 = vmatpush2.bf16.msra.mxu0 0
    %3668 = vmatprep.subr.bf16.mxu0 0
    %3669 = vmatpush2.bf16.msra.mxu0 0
    %3670 = vmatprep.subr.bf16.mxu0 0
    %3671 = vmatpush2.bf16.msra.mxu0 0
    %3672 = vmatprep.subr.bf16.mxu0 0
    %3673 = vmatpush2.bf16.msra.mxu0 0
    %3674 = vmatprep.subr.bf16.mxu0 0
    %3675 = vmatpush2.bf16.msra.mxu0 0
    %3676 = vmatprep.subr.bf16.mxu0 0
    %3677 = vmatpush2.bf16.msra.mxu0 0
    %3678 = vmatprep.mubr.bf16.mxu0 0
    %3679 = vmatmul.mubr.bf16.gmra.mxu0 %v3644
    %v3680 = vpop.f32.mrf.mxu0
    %v3681 = vadd.f32 %v3626, %v3680
    %v3682 = vpop.f32.mrf.mxu0
    %v3683 = vpop.f32.mrf.mxu0
    %v3684 = vpop.f32.mrf.mxu0
    %3685 = vdwg.mxu0
    %v3686 = vld [vmem:[#allocation26] sm:$0x1]
    %v3688 = vlaneseq
    %v3689 = vshrl.u32 %v3688, 7
    %v3690 = vsub.s32 0, %v3689
    %v3691 = vrot.slane %v3686, %v3690
    %v3693 = vadd.f32 %v3681, %v3691
    %v3694 = vxor.u32 %v3693, 2147483648
    %v3695 = vmul.f32 %v3694, 1.442695
    %v3696 = vpow.pop %v3695
    %v3697 = vadd.f32 %v3696, 1.0
    %v3698 = vrcp.pop %v3697
    %v3699 = vmul.f32 1.0, %v3698
    %v3700 = vmul.f32 %v3693, %v3699
    %v3701 = vld [vmem:[#allocation28] sm:$0xf]
    %v3702 = vld [vmem:[#allocation28 + $0x4] sm:$0xf]
    %v3703 = vld [vmem:[#allocation28 + $0x8] sm:$0xf]
    %v3704 = vld [vmem:[#allocation28 + $0xc] sm:$0xf]
    %v3705 = vpack.c.bf16 %v3700, %v3700
    %v3706 = vld [vmem:[#allocation29] sm:$0x1]
    %v3708 = vlaneseq
    %v3709 = vshrl.u32 %v3708, 7
    %v3710 = vsub.s32 0, %v3709
    %v3711 = vrot.slane %v3706, %v3710
    %v3717 = vunpack.c.l.b16 %v3701
    %v3718 = vunpack.c.l.b16 %v3702
    %v3719 = vunpack.c.l.b16 %v3703
    %v3720 = vunpack.c.l.b16 %v3704
    %v3721 = vpack.c.b16 %v3718, %v3717
    %v3722 = vpack.c.b16 %v3720, %v3719
    %v3726 = vsel %vm473, %v3705, 0
    %3728 = vmatprep.subr.bf16.mxu0 0
    %3729 = vmatpush1.bf16.msra.mxu0 0
    %3730 = vmatprep.subr.bf16.mxu0 0
    %3731 = vmatpush1.bf16.msra.mxu0 0
    %3732 = vmatprep.subr.bf16.mxu0 0
    %3733 = vmatpush1.bf16.msra.mxu0 0
    %3734 = vmatprep.subr.bf16.mxu0 0
    %3735 = vmatpush1.bf16.msra.mxu0 0
    %3736 = vmatprep.subr.bf16.mxu0 0
    %3737 = vmatpush1.bf16.msra.mxu0 0
    %3738 = vmatprep.subr.bf16.mxu0 0
    %3739 = vmatpush1.bf16.msra.mxu0 0
    %3740 = vmatprep.subr.bf16.mxu0 0
    %3741 = vmatpush1.bf16.msra.mxu0 %v3722
    %3742 = vmatprep.subr.bf16.mxu0 0
    %3743 = vmatpush1.bf16.msra.mxu0 %v3721
    %3744 = vmatprep.subr.bf16.mxu0 0
    %3745 = vmatpush2.bf16.msra.mxu0 0
    %3746 = vmatprep.subr.bf16.mxu0 0
    %3747 = vmatpush2.bf16.msra.mxu0 0
    %3748 = vmatprep.subr.bf16.mxu0 0
    %3749 = vmatpush2.bf16.msra.mxu0 0
    %3750 = vmatprep.subr.bf16.mxu0 0
    %3751 = vmatpush2.bf16.msra.mxu0 0
    %3752 = vmatprep.subr.bf16.mxu0 0
    %3753 = vmatpush2.bf16.msra.mxu0 0
    %3754 = vmatprep.subr.bf16.mxu0 0
    %3755 = vmatpush2.bf16.msra.mxu0 0
    %3756 = vmatprep.subr.bf16.mxu0 0
    %3757 = vmatpush2.bf16.msra.mxu0 0
    %3758 = vmatprep.subr.bf16.mxu0 0
    %3759 = vmatpush2.bf16.msra.mxu0 0
    %3760 = vmatprep.mubr.bf16.mxu0 0
    %3761 = vmatmul.mubr.bf16.gmra.mxu0 %v3726
    %v3762 = vpop.f32.mrf.mxu0
    %v3763 = vadd.f32 %v3711, %v3762
    %v3764 = vpop.f32.mrf.mxu0
    %v3765 = vpop.f32.mrf.mxu0
    %v3766 = vpop.f32.mrf.mxu0
    %3767 = vdwg.mxu0
    %v3768 = vadd.f32 %v3763, %v512
    %v3769 = vadd.f32 %v659, %v3563
    %3770 = vmatprep.subr.mxu0 0.0
    %3771 = vmatpush1.msra.mxu0 0.0
    %3772 = vmatprep.subr.mxu0 0.0
    %3773 = vmatpush1.msra.mxu0 0.0
    %3774 = vmatprep.subr.mxu0 0.0
    %3775 = vmatpush1.msra.mxu0 0.0
    %3776 = vmatprep.subr.mxu0 0.0
    %3777 = vmatpush1.msra.mxu0 0.0
    %3778 = vmatprep.subr.mxu0 0.0
    %3779 = vmatpush1.msra.mxu0 0.0
    %3780 = vmatprep.subr.mxu0 0.0
    %3781 = vmatpush1.msra.mxu0 0.0
    %3782 = vmatprep.subr.mxu0 0.0
    %3783 = vmatpush1.msra.mxu0 0.0
    %3784 = vmatprep.subr.mxu0 0.0
    %3785 = vmatpush1.msra.mxu0 0.0
    %3786 = vmatprep.subr.mxu0 0.0
    %3787 = vmatpush1.msra.mxu0 0.0
    %3788 = vmatprep.subr.mxu0 0.0
    %3789 = vmatpush1.msra.mxu0 0.0
    %3790 = vmatprep.subr.mxu0 0.0
    %3791 = vmatpush1.msra.mxu0 0.0
    %3792 = vmatprep.subr.mxu0 0.0
    %3793 = vmatpush1.msra.mxu0 0.0
    %3794 = vmatprep.subr.mxu0 0.0
    %3795 = vmatpush1.msra.mxu0 0.0
    %3796 = vmatprep.subr.mxu0 0.0
    %3797 = vmatpush1.msra.mxu0 0.0
    %3798 = vmatprep.subr.mxu0 0.0
    %3799 = vmatpush1.msra.mxu0 0.0
    %3800 = vmatprep.subr.mxu0 0.0
    %v3801 = vand.u32 %v3768, 4294901760
    %3802 = vmatpush1.msra.mxu0 %v3801
    %3803 = vmatprep.subr.mxu0 0.0
    %3804 = vmatpush2.msra.mxu0 0.0
    %3805 = vmatprep.subr.mxu0 0.0
    %3806 = vmatpush2.msra.mxu0 0.0
    %3807 = vmatprep.subr.mxu0 0.0
    %3808 = vmatpush2.msra.mxu0 0.0
    %3809 = vmatprep.subr.mxu0 0.0
    %3810 = vmatpush2.msra.mxu0 0.0
    %3811 = vmatprep.subr.mxu0 0.0
    %3812 = vmatpush2.msra.mxu0 0.0
    %3813 = vmatprep.subr.mxu0 0.0
    %3814 = vmatpush2.msra.mxu0 0.0
    %3815 = vmatprep.subr.mxu0 0.0
    %3816 = vmatpush2.msra.mxu0 0.0
    %3817 = vmatprep.subr.mxu0 0.0
    %3818 = vmatpush2.msra.mxu0 0.0
    %3819 = vmatprep.subr.mxu0 0.0
    %3820 = vmatpush2.msra.mxu0 0.0
    %3821 = vmatprep.subr.mxu0 0.0
    %3822 = vmatpush2.msra.mxu0 0.0
    %3823 = vmatprep.subr.mxu0 0.0
    %3824 = vmatpush2.msra.mxu0 0.0
    %3825 = vmatprep.subr.mxu0 0.0
    %3826 = vmatpush2.msra.mxu0 0.0
    %3827 = vmatprep.subr.mxu0 0.0
    %3828 = vmatpush2.msra.mxu0 0.0
    %3829 = vmatprep.subr.mxu0 0.0
    %3830 = vmatpush2.msra.mxu0 0.0
    %3831 = vmatprep.subr.mxu0 0.0
    %3832 = vmatpush2.msra.mxu0 0.0
    %3833 = vmatprep.subr.mxu0 0.0
    %3834 = vmatpush2.msra.mxu0 0.0
    %3835 = vmatprep.mubr.f32.mxu0 0.0
    %v3836 = vand.u32 %v669, 4294901760
    %v3837 = vsub.f32 %v669, %v3836
    %v3838 = vand.u32 %v3837, 4294901760
    %v3839 = vsub.f32 %v3837, %v3838
    %v3840 = vand.u32 %v3839, 4294901760
    %3841 = vmatmul.mubr.f32.gmra.mxu0 %v3840
    %v3842 = vpop.f32.mrf.mxu0
    %v3843 = vadd.f32 0.0, %v3842
    %v3844 = vpop.f32.mrf.mxu0
    %3845 = vmatprep.mubr.f32.mxu0 0.0
    %v3846 = vand.u32 %v672, 4294901760
    %v3847 = vsub.f32 %v672, %v3846
    %v3848 = vand.u32 %v3847, 4294901760
    %v3849 = vsub.f32 %v3847, %v3848
    %v3850 = vand.u32 %v3849, 4294901760
    %3851 = vmatmul.mubr.f32.gmra.mxu0 %v3850
    %v3852 = vpop.f32.mrf.mxu0
    %v3853 = vadd.f32 0.0, %v3852
    %v3854 = vpop.f32.mrf.mxu0
    %3855 = vmatprep.mubr.f32.mxu0 0.0
    %v3856 = vand.u32 %v675, 4294901760
    %v3857 = vsub.f32 %v675, %v3856
    %v3858 = vand.u32 %v3857, 4294901760
    %v3859 = vsub.f32 %v3857, %v3858
    %v3860 = vand.u32 %v3859, 4294901760
    %3861 = vmatmul.mubr.f32.gmra.mxu0 %v3860
    %v3862 = vpop.f32.mrf.mxu0
    %v3863 = vadd.f32 0.0, %v3862
    %v3864 = vpop.f32.mrf.mxu0
    %3865 = vmatprep.mubr.f32.mxu0 0.0
    %v3866 = vand.u32 %v678, 4294901760
    %v3867 = vsub.f32 %v678, %v3866
    %v3868 = vand.u32 %v3867, 4294901760
    %v3869 = vsub.f32 %v3867, %v3868
    %v3870 = vand.u32 %v3869, 4294901760
    %3871 = vmatmul.mubr.f32.gmra.mxu0 %v3870
    %v3872 = vpop.f32.mrf.mxu0
    %v3873 = vadd.f32 0.0, %v3872
    %v3874 = vpop.f32.mrf.mxu0
    %3875 = vdwg.mxu0
    %3876 = vmatprep.subr.mxu0 0.0
    %3877 = vmatpush1.msra.mxu0 0.0
    %3878 = vmatprep.subr.mxu0 0.0
    %3879 = vmatpush1.msra.mxu0 0.0
    %3880 = vmatprep.subr.mxu0 0.0
    %3881 = vmatpush1.msra.mxu0 0.0
    %3882 = vmatprep.subr.mxu0 0.0
    %3883 = vmatpush1.msra.mxu0 0.0
    %3884 = vmatprep.subr.mxu0 0.0
    %3885 = vmatpush1.msra.mxu0 0.0
    %3886 = vmatprep.subr.mxu0 0.0
    %3887 = vmatpush1.msra.mxu0 0.0
    %3888 = vmatprep.subr.mxu0 0.0
    %3889 = vmatpush1.msra.mxu0 0.0
    %3890 = vmatprep.subr.mxu0 0.0
    %3891 = vmatpush1.msra.mxu0 0.0
    %3892 = vmatprep.subr.mxu0 0.0
    %3893 = vmatpush1.msra.mxu0 0.0
    %3894 = vmatprep.subr.mxu0 0.0
    %3895 = vmatpush1.msra.mxu0 0.0
    %3896 = vmatprep.subr.mxu0 0.0
    %3897 = vmatpush1.msra.mxu0 0.0
    %3898 = vmatprep.subr.mxu0 0.0
    %3899 = vmatpush1.msra.mxu0 0.0
    %3900 = vmatprep.subr.mxu0 0.0
    %3901 = vmatpush1.msra.mxu0 0.0
    %3902 = vmatprep.subr.mxu0 0.0
    %3903 = vmatpush1.msra.mxu0 0.0
    %3904 = vmatprep.subr.mxu0 0.0
    %3905 = vmatpush1.msra.mxu0 0.0
    %3906 = vmatprep.subr.mxu0 0.0
    %v3907 = vand.u32 %v3768, 4294901760
    %v3908 = vsub.f32 %v3768, %v3907
    %v3909 = vand.u32 %v3908, 4294901760
    %v3910 = vsub.f32 %v3908, %v3909
    %v3911 = vand.u32 %v3910, 4294901760
    %3912 = vmatpush1.msra.mxu0 %v3911
    %3913 = vmatprep.subr.mxu0 0.0
    %3914 = vmatpush2.msra.mxu0 0.0
    %3915 = vmatprep.subr.mxu0 0.0
    %3916 = vmatpush2.msra.mxu0 0.0
    %3917 = vmatprep.subr.mxu0 0.0
    %3918 = vmatpush2.msra.mxu0 0.0
    %3919 = vmatprep.subr.mxu0 0.0
    %3920 = vmatpush2.msra.mxu0 0.0
    %3921 = vmatprep.subr.mxu0 0.0
    %3922 = vmatpush2.msra.mxu0 0.0
    %3923 = vmatprep.subr.mxu0 0.0
    %3924 = vmatpush2.msra.mxu0 0.0
    %3925 = vmatprep.subr.mxu0 0.0
    %3926 = vmatpush2.msra.mxu0 0.0
    %3927 = vmatprep.subr.mxu0 0.0
    %3928 = vmatpush2.msra.mxu0 0.0
    %3929 = vmatprep.subr.mxu0 0.0
    %3930 = vmatpush2.msra.mxu0 0.0
    %3931 = vmatprep.subr.mxu0 0.0
    %3932 = vmatpush2.msra.mxu0 0.0
    %3933 = vmatprep.subr.mxu0 0.0
    %3934 = vmatpush2.msra.mxu0 0.0
    %3935 = vmatprep.subr.mxu0 0.0
    %3936 = vmatpush2.msra.mxu0 0.0
    %3937 = vmatprep.subr.mxu0 0.0
    %3938 = vmatpush2.msra.mxu0 0.0
    %3939 = vmatprep.subr.mxu0 0.0
    %3940 = vmatpush2.msra.mxu0 0.0
    %3941 = vmatprep.subr.mxu0 0.0
    %3942 = vmatpush2.msra.mxu0 0.0
    %3943 = vmatprep.subr.mxu0 0.0
    %3944 = vmatpush2.msra.mxu0 0.0
    %3945 = vmatprep.mubr.f32.mxu0 0.0
    %v3946 = vand.u32 %v669, 4294901760
    %3947 = vmatmul.mubr.f32.gmra.mxu0 %v3946
    %v3948 = vpop.f32.mrf.mxu0
    %v3949 = vadd.f32 %v3843, %v3948
    %v3950 = vpop.f32.mrf.mxu0
    %3951 = vmatprep.mubr.f32.mxu0 0.0
    %v3952 = vand.u32 %v672, 4294901760
    %3953 = vmatmul.mubr.f32.gmra.mxu0 %v3952
    %v3954 = vpop.f32.mrf.mxu0
    %v3955 = vadd.f32 %v3853, %v3954
    %v3956 = vpop.f32.mrf.mxu0
    %3957 = vmatprep.mubr.f32.mxu0 0.0
    %v3958 = vand.u32 %v675, 4294901760
    %3959 = vmatmul.mubr.f32.gmra.mxu0 %v3958
    %v3960 = vpop.f32.mrf.mxu0
    %v3961 = vadd.f32 %v3863, %v3960
    %v3962 = vpop.f32.mrf.mxu0
    %3963 = vmatprep.mubr.f32.mxu0 0.0
    %v3964 = vand.u32 %v678, 4294901760
    %3965 = vmatmul.mubr.f32.gmra.mxu0 %v3964
    %v3966 = vpop.f32.mrf.mxu0
    %v3967 = vadd.f32 %v3873, %v3966
    %v3968 = vpop.f32.mrf.mxu0
    %3969 = vdwg.mxu0
    %3970 = vmatprep.subr.mxu0 0.0
    %3971 = vmatpush1.msra.mxu0 0.0
    %3972 = vmatprep.subr.mxu0 0.0
    %3973 = vmatpush1.msra.mxu0 0.0
    %3974 = vmatprep.subr.mxu0 0.0
    %3975 = vmatpush1.msra.mxu0 0.0
    %3976 = vmatprep.subr.mxu0 0.0
    %3977 = vmatpush1.msra.mxu0 0.0
    %3978 = vmatprep.subr.mxu0 0.0
    %3979 = vmatpush1.msra.mxu0 0.0
    %3980 = vmatprep.subr.mxu0 0.0
    %3981 = vmatpush1.msra.mxu0 0.0
    %3982 = vmatprep.subr.mxu0 0.0
    %3983 = vmatpush1.msra.mxu0 0.0
    %3984 = vmatprep.subr.mxu0 0.0
    %3985 = vmatpush1.msra.mxu0 0.0
    %3986 = vmatprep.subr.mxu0 0.0
    %3987 = vmatpush1.msra.mxu0 0.0
    %3988 = vmatprep.subr.mxu0 0.0
    %3989 = vmatpush1.msra.mxu0 0.0
    %3990 = vmatprep.subr.mxu0 0.0
    %3991 = vmatpush1.msra.mxu0 0.0
    %3992 = vmatprep.subr.mxu0 0.0
    %3993 = vmatpush1.msra.mxu0 0.0
    %3994 = vmatprep.subr.mxu0 0.0
    %3995 = vmatpush1.msra.mxu0 0.0
    %3996 = vmatprep.subr.mxu0 0.0
    %3997 = vmatpush1.msra.mxu0 0.0
    %3998 = vmatprep.subr.mxu0 0.0
    %3999 = vmatpush1.msra.mxu0 0.0
    %4000 = vmatprep.subr.mxu0 0.0
    %v4001 = vand.u32 %v3768, 4294901760
    %v4002 = vsub.f32 %v3768, %v4001
    %4003 = vmatpush1.msra.mxu0 %v4002
    %4004 = vmatprep.subr.mxu0 0.0
    %4005 = vmatpush2.msra.mxu0 0.0
    %4006 = vmatprep.subr.mxu0 0.0
    %4007 = vmatpush2.msra.mxu0 0.0
    %4008 = vmatprep.subr.mxu0 0.0
    %4009 = vmatpush2.msra.mxu0 0.0
    %4010 = vmatprep.subr.mxu0 0.0
    %4011 = vmatpush2.msra.mxu0 0.0
    %4012 = vmatprep.subr.mxu0 0.0
    %4013 = vmatpush2.msra.mxu0 0.0
    %4014 = vmatprep.subr.mxu0 0.0
    %4015 = vmatpush2.msra.mxu0 0.0
    %4016 = vmatprep.subr.mxu0 0.0
    %4017 = vmatpush2.msra.mxu0 0.0
    %4018 = vmatprep.subr.mxu0 0.0
    %4019 = vmatpush2.msra.mxu0 0.0
    %4020 = vmatprep.subr.mxu0 0.0
    %4021 = vmatpush2.msra.mxu0 0.0
    %4022 = vmatprep.subr.mxu0 0.0
    %4023 = vmatpush2.msra.mxu0 0.0
    %4024 = vmatprep.subr.mxu0 0.0
    %4025 = vmatpush2.msra.mxu0 0.0
    %4026 = vmatprep.subr.mxu0 0.0
    %4027 = vmatpush2.msra.mxu0 0.0
    %4028 = vmatprep.subr.mxu0 0.0
    %4029 = vmatpush2.msra.mxu0 0.0
    %4030 = vmatprep.subr.mxu0 0.0
    %4031 = vmatpush2.msra.mxu0 0.0
    %4032 = vmatprep.subr.mxu0 0.0
    %4033 = vmatpush2.msra.mxu0 0.0
    %4034 = vmatprep.subr.mxu0 0.0
    %4035 = vmatpush2.msra.mxu0 0.0
    %4036 = vmatprep.mubr.f32.mxu0 0.0
    %v4037 = vand.u32 %v669, 4294901760
    %v4038 = vsub.f32 %v669, %v4037
    %4039 = vmatmul.mubr.f32.gmra.mxu0 %v4038
    %v4040 = vpop.f32.mrf.mxu0
    %v4041 = vadd.f32 %v3949, %v4040
    %v4042 = vpop.f32.mrf.mxu0
    %4043 = vmatprep.mubr.f32.mxu0 0.0
    %v4044 = vand.u32 %v672, 4294901760
    %v4045 = vsub.f32 %v672, %v4044
    %4046 = vmatmul.mubr.f32.gmra.mxu0 %v4045
    %v4047 = vpop.f32.mrf.mxu0
    %v4048 = vadd.f32 %v3955, %v4047
    %v4049 = vpop.f32.mrf.mxu0
    %4050 = vmatprep.mubr.f32.mxu0 0.0
    %v4051 = vand.u32 %v675, 4294901760
    %v4052 = vsub.f32 %v675, %v4051
    %4053 = vmatmul.mubr.f32.gmra.mxu0 %v4052
    %v4054 = vpop.f32.mrf.mxu0
    %v4055 = vadd.f32 %v3961, %v4054
    %v4056 = vpop.f32.mrf.mxu0
    %4057 = vmatprep.mubr.f32.mxu0 0.0
    %v4058 = vand.u32 %v678, 4294901760
    %v4059 = vsub.f32 %v678, %v4058
    %4060 = vmatmul.mubr.f32.gmra.mxu0 %v4059
    %v4061 = vpop.f32.mrf.mxu0
    %v4062 = vadd.f32 %v3967, %v4061
    %v4063 = vpop.f32.mrf.mxu0
    %4064 = vdwg.mxu0
    %4065 = vmatprep.subr.mxu0 0.0
    %4066 = vmatpush1.msra.mxu0 0.0
    %4067 = vmatprep.subr.mxu0 0.0
    %4068 = vmatpush1.msra.mxu0 0.0
    %4069 = vmatprep.subr.mxu0 0.0
    %4070 = vmatpush1.msra.mxu0 0.0
    %4071 = vmatprep.subr.mxu0 0.0
    %4072 = vmatpush1.msra.mxu0 0.0
    %4073 = vmatprep.subr.mxu0 0.0
    %4074 = vmatpush1.msra.mxu0 0.0
    %4075 = vmatprep.subr.mxu0 0.0
    %4076 = vmatpush1.msra.mxu0 0.0
    %4077 = vmatprep.subr.mxu0 0.0
    %4078 = vmatpush1.msra.mxu0 0.0
    %4079 = vmatprep.subr.mxu0 0.0
    %4080 = vmatpush1.msra.mxu0 0.0
    %4081 = vmatprep.subr.mxu0 0.0
    %4082 = vmatpush1.msra.mxu0 0.0
    %4083 = vmatprep.subr.mxu0 0.0
    %4084 = vmatpush1.msra.mxu0 0.0
    %4085 = vmatprep.subr.mxu0 0.0
    %4086 = vmatpush1.msra.mxu0 0.0
    %4087 = vmatprep.subr.mxu0 0.0
    %4088 = vmatpush1.msra.mxu0 0.0
    %4089 = vmatprep.subr.mxu0 0.0
    %4090 = vmatpush1.msra.mxu0 0.0
    %4091 = vmatprep.subr.mxu0 0.0
    %4092 = vmatpush1.msra.mxu0 0.0
    %4093 = vmatprep.subr.mxu0 0.0
    %4094 = vmatpush1.msra.mxu0 0.0
    %4095 = vmatprep.subr.mxu0 0.0
    %v4096 = vand.u32 %v3768, 4294901760
    %4097 = vmatpush1.msra.mxu0 %v4096
    %4098 = vmatprep.subr.mxu0 0.0
    %4099 = vmatpush2.msra.mxu0 0.0
    %4100 = vmatprep.subr.mxu0 0.0
    %4101 = vmatpush2.msra.mxu0 0.0
    %4102 = vmatprep.subr.mxu0 0.0
    %4103 = vmatpush2.msra.mxu0 0.0
    %4104 = vmatprep.subr.mxu0 0.0
    %4105 = vmatpush2.msra.mxu0 0.0
    %4106 = vmatprep.subr.mxu0 0.0
    %4107 = vmatpush2.msra.mxu0 0.0
    %4108 = vmatprep.subr.mxu0 0.0
    %4109 = vmatpush2.msra.mxu0 0.0
    %4110 = vmatprep.subr.mxu0 0.0
    %4111 = vmatpush2.msra.mxu0 0.0
    %4112 = vmatprep.subr.mxu0 0.0
    %4113 = vmatpush2.msra.mxu0 0.0
    %4114 = vmatprep.subr.mxu0 0.0
    %4115 = vmatpush2.msra.mxu0 0.0
    %4116 = vmatprep.subr.mxu0 0.0
    %4117 = vmatpush2.msra.mxu0 0.0
    %4118 = vmatprep.subr.mxu0 0.0
    %4119 = vmatpush2.msra.mxu0 0.0
    %4120 = vmatprep.subr.mxu0 0.0
    %4121 = vmatpush2.msra.mxu0 0.0
    %4122 = vmatprep.subr.mxu0 0.0
    %4123 = vmatpush2.msra.mxu0 0.0
    %4124 = vmatprep.subr.mxu0 0.0
    %4125 = vmatpush2.msra.mxu0 0.0
    %4126 = vmatprep.subr.mxu0 0.0
    %4127 = vmatpush2.msra.mxu0 0.0
    %4128 = vmatprep.subr.mxu0 0.0
    %4129 = vmatpush2.msra.mxu0 0.0
    %4130 = vmatprep.mubr.f32.mxu0 0.0
    %v4131 = vand.u32 %v669, 4294901760
    %v4132 = vsub.f32 %v669, %v4131
    %v4133 = vand.u32 %v4132, 4294901760
    %4134 = vmatmul.mubr.f32.gmra.mxu0 %v4133
    %v4135 = vpop.f32.mrf.mxu0
    %v4136 = vadd.f32 %v4041, %v4135
    %v4137 = vpop.f32.mrf.mxu0
    %4138 = vmatprep.mubr.f32.mxu0 0.0
    %v4139 = vand.u32 %v672, 4294901760
    %v4140 = vsub.f32 %v672, %v4139
    %v4141 = vand.u32 %v4140, 4294901760
    %4142 = vmatmul.mubr.f32.gmra.mxu0 %v4141
    %v4143 = vpop.f32.mrf.mxu0
    %v4144 = vadd.f32 %v4048, %v4143
    %v4145 = vpop.f32.mrf.mxu0
    %4146 = vmatprep.mubr.f32.mxu0 0.0
    %v4147 = vand.u32 %v675, 4294901760
    %v4148 = vsub.f32 %v675, %v4147
    %v4149 = vand.u32 %v4148, 4294901760
    %4150 = vmatmul.mubr.f32.gmra.mxu0 %v4149
    %v4151 = vpop.f32.mrf.mxu0
    %v4152 = vadd.f32 %v4055, %v4151
    %v4153 = vpop.f32.mrf.mxu0
    %4154 = vmatprep.mubr.f32.mxu0 0.0
    %v4155 = vand.u32 %v678, 4294901760
    %v4156 = vsub.f32 %v678, %v4155
    %v4157 = vand.u32 %v4156, 4294901760
    %4158 = vmatmul.mubr.f32.gmra.mxu0 %v4157
    %v4159 = vpop.f32.mrf.mxu0
    %v4160 = vadd.f32 %v4062, %v4159
    %v4161 = vpop.f32.mrf.mxu0
    %4162 = vdwg.mxu0
    %4163 = vmatprep.subr.mxu0 0.0
    %4164 = vmatpush1.msra.mxu0 0.0
    %4165 = vmatprep.subr.mxu0 0.0
    %4166 = vmatpush1.msra.mxu0 0.0
    %4167 = vmatprep.subr.mxu0 0.0
    %4168 = vmatpush1.msra.mxu0 0.0
    %4169 = vmatprep.subr.mxu0 0.0
    %4170 = vmatpush1.msra.mxu0 0.0
    %4171 = vmatprep.subr.mxu0 0.0
    %4172 = vmatpush1.msra.mxu0 0.0
    %4173 = vmatprep.subr.mxu0 0.0
    %4174 = vmatpush1.msra.mxu0 0.0
    %4175 = vmatprep.subr.mxu0 0.0
    %4176 = vmatpush1.msra.mxu0 0.0
    %4177 = vmatprep.subr.mxu0 0.0
    %4178 = vmatpush1.msra.mxu0 0.0
    %4179 = vmatprep.subr.mxu0 0.0
    %4180 = vmatpush1.msra.mxu0 0.0
    %4181 = vmatprep.subr.mxu0 0.0
    %4182 = vmatpush1.msra.mxu0 0.0
    %4183 = vmatprep.subr.mxu0 0.0
    %4184 = vmatpush1.msra.mxu0 0.0
    %4185 = vmatprep.subr.mxu0 0.0
    %4186 = vmatpush1.msra.mxu0 0.0
    %4187 = vmatprep.subr.mxu0 0.0
    %4188 = vmatpush1.msra.mxu0 0.0
    %4189 = vmatprep.subr.mxu0 0.0
    %4190 = vmatpush1.msra.mxu0 0.0
    %4191 = vmatprep.subr.mxu0 0.0
    %4192 = vmatpush1.msra.mxu0 0.0
    %4193 = vmatprep.subr.mxu0 0.0
    %v4194 = vand.u32 %v3768, 4294901760
    %v4195 = vsub.f32 %v3768, %v4194
    %v4196 = vand.u32 %v4195, 4294901760
    %4197 = vmatpush1.msra.mxu0 %v4196
    %4198 = vmatprep.subr.mxu0 0.0
    %4199 = vmatpush2.msra.mxu0 0.0
    %4200 = vmatprep.subr.mxu0 0.0
    %4201 = vmatpush2.msra.mxu0 0.0
    %4202 = vmatprep.subr.mxu0 0.0
    %4203 = vmatpush2.msra.mxu0 0.0
    %4204 = vmatprep.subr.mxu0 0.0
    %4205 = vmatpush2.msra.mxu0 0.0
    %4206 = vmatprep.subr.mxu0 0.0
    %4207 = vmatpush2.msra.mxu0 0.0
    %4208 = vmatprep.subr.mxu0 0.0
    %4209 = vmatpush2.msra.mxu0 0.0
    %4210 = vmatprep.subr.mxu0 0.0
    %4211 = vmatpush2.msra.mxu0 0.0
    %4212 = vmatprep.subr.mxu0 0.0
    %4213 = vmatpush2.msra.mxu0 0.0
    %4214 = vmatprep.subr.mxu0 0.0
    %4215 = vmatpush2.msra.mxu0 0.0
    %4216 = vmatprep.subr.mxu0 0.0
    %4217 = vmatpush2.msra.mxu0 0.0
    %4218 = vmatprep.subr.mxu0 0.0
    %4219 = vmatpush2.msra.mxu0 0.0
    %4220 = vmatprep.subr.mxu0 0.0
    %4221 = vmatpush2.msra.mxu0 0.0
    %4222 = vmatprep.subr.mxu0 0.0
    %4223 = vmatpush2.msra.mxu0 0.0
    %4224 = vmatprep.subr.mxu0 0.0
    %4225 = vmatpush2.msra.mxu0 0.0
    %4226 = vmatprep.subr.mxu0 0.0
    %4227 = vmatpush2.msra.mxu0 0.0
    %4228 = vmatprep.subr.mxu0 0.0
    %4229 = vmatpush2.msra.mxu0 0.0
    %4230 = vmatprep.mubr.f32.mxu0 0.0
    %v4231 = vand.u32 %v669, 4294901760
    %4232 = vmatmul.mubr.f32.gmra.mxu0 %v4231
    %v4233 = vpop.f32.mrf.mxu0
    %v4234 = vadd.f32 %v4136, %v4233
    %v4235 = vpop.f32.mrf.mxu0
    %4236 = vmatprep.mubr.f32.mxu0 0.0
    %v4237 = vand.u32 %v672, 4294901760
    %4238 = vmatmul.mubr.f32.gmra.mxu0 %v4237
    %v4239 = vpop.f32.mrf.mxu0
    %v4240 = vadd.f32 %v4144, %v4239
    %v4241 = vpop.f32.mrf.mxu0
    %4242 = vmatprep.mubr.f32.mxu0 0.0
    %v4243 = vand.u32 %v675, 4294901760
    %4244 = vmatmul.mubr.f32.gmra.mxu0 %v4243
    %v4245 = vpop.f32.mrf.mxu0
    %v4246 = vadd.f32 %v4152, %v4245
    %v4247 = vpop.f32.mrf.mxu0
    %4248 = vmatprep.mubr.f32.mxu0 0.0
    %v4249 = vand.u32 %v678, 4294901760
    %4250 = vmatmul.mubr.f32.gmra.mxu0 %v4249
    %v4251 = vpop.f32.mrf.mxu0
    %v4252 = vadd.f32 %v4160, %v4251
    %v4253 = vpop.f32.mrf.mxu0
    %4254 = vdwg.mxu0
    %4255 = vmatprep.subr.mxu0 0.0
    %4256 = vmatpush1.msra.mxu0 0.0
    %4257 = vmatprep.subr.mxu0 0.0
    %4258 = vmatpush1.msra.mxu0 0.0
    %4259 = vmatprep.subr.mxu0 0.0
    %4260 = vmatpush1.msra.mxu0 0.0
    %4261 = vmatprep.subr.mxu0 0.0
    %4262 = vmatpush1.msra.mxu0 0.0
    %4263 = vmatprep.subr.mxu0 0.0
    %4264 = vmatpush1.msra.mxu0 0.0
    %4265 = vmatprep.subr.mxu0 0.0
    %4266 = vmatpush1.msra.mxu0 0.0
    %4267 = vmatprep.subr.mxu0 0.0
    %4268 = vmatpush1.msra.mxu0 0.0
    %4269 = vmatprep.subr.mxu0 0.0
    %4270 = vmatpush1.msra.mxu0 0.0
    %4271 = vmatprep.subr.mxu0 0.0
    %4272 = vmatpush1.msra.mxu0 0.0
    %4273 = vmatprep.subr.mxu0 0.0
    %4274 = vmatpush1.msra.mxu0 0.0
    %4275 = vmatprep.subr.mxu0 0.0
    %4276 = vmatpush1.msra.mxu0 0.0
    %4277 = vmatprep.subr.mxu0 0.0
    %4278 = vmatpush1.msra.mxu0 0.0
    %4279 = vmatprep.subr.mxu0 0.0
    %4280 = vmatpush1.msra.mxu0 0.0
    %4281 = vmatprep.subr.mxu0 0.0
    %4282 = vmatpush1.msra.mxu0 0.0
    %4283 = vmatprep.subr.mxu0 0.0
    %4284 = vmatpush1.msra.mxu0 0.0
    %4285 = vmatprep.subr.mxu0 0.0
    %v4286 = vand.u32 %v3768, 4294901760
    %4287 = vmatpush1.msra.mxu0 %v4286
    %4288 = vmatprep.subr.mxu0 0.0
    %4289 = vmatpush2.msra.mxu0 0.0
    %4290 = vmatprep.subr.mxu0 0.0
    %4291 = vmatpush2.msra.mxu0 0.0
    %4292 = vmatprep.subr.mxu0 0.0
    %4293 = vmatpush2.msra.mxu0 0.0
    %4294 = vmatprep.subr.mxu0 0.0
    %4295 = vmatpush2.msra.mxu0 0.0
    %4296 = vmatprep.subr.mxu0 0.0
    %4297 = vmatpush2.msra.mxu0 0.0
    %4298 = vmatprep.subr.mxu0 0.0
    %4299 = vmatpush2.msra.mxu0 0.0
    %4300 = vmatprep.subr.mxu0 0.0
    %4301 = vmatpush2.msra.mxu0 0.0
    %4302 = vmatprep.subr.mxu0 0.0
    %4303 = vmatpush2.msra.mxu0 0.0
    %4304 = vmatprep.subr.mxu0 0.0
    %4305 = vmatpush2.msra.mxu0 0.0
    %4306 = vmatprep.subr.mxu0 0.0
    %4307 = vmatpush2.msra.mxu0 0.0
    %4308 = vmatprep.subr.mxu0 0.0
    %4309 = vmatpush2.msra.mxu0 0.0
    %4310 = vmatprep.subr.mxu0 0.0
    %4311 = vmatpush2.msra.mxu0 0.0
    %4312 = vmatprep.subr.mxu0 0.0
    %4313 = vmatpush2.msra.mxu0 0.0
    %4314 = vmatprep.subr.mxu0 0.0
    %4315 = vmatpush2.msra.mxu0 0.0
    %4316 = vmatprep.subr.mxu0 0.0
    %4317 = vmatpush2.msra.mxu0 0.0
    %4318 = vmatprep.subr.mxu0 0.0
    %4319 = vmatpush2.msra.mxu0 0.0
    %4320 = vmatprep.mubr.f32.mxu0 0.0
    %v4321 = vand.u32 %v669, 4294901760
    %4322 = vmatmul.mubr.f32.gmra.mxu0 %v4321
    %v4323 = vpop.f32.mrf.mxu0
    %v4324 = vadd.f32 %v4234, %v4323
    %v4325 = vpop.f32.mrf.mxu0
    %4326 = vmatprep.mubr.f32.mxu0 0.0
    %v4327 = vand.u32 %v672, 4294901760
    %4328 = vmatmul.mubr.f32.gmra.mxu0 %v4327
    %v4329 = vpop.f32.mrf.mxu0
    %v4330 = vadd.f32 %v4240, %v4329
    %v4331 = vpop.f32.mrf.mxu0
    %4332 = vmatprep.mubr.f32.mxu0 0.0
    %v4333 = vand.u32 %v675, 4294901760
    %4334 = vmatmul.mubr.f32.gmra.mxu0 %v4333
    %v4335 = vpop.f32.mrf.mxu0
    %v4336 = vadd.f32 %v4246, %v4335
    %v4337 = vpop.f32.mrf.mxu0
    %4338 = vmatprep.mubr.f32.mxu0 0.0
    %v4339 = vand.u32 %v678, 4294901760
    %4340 = vmatmul.mubr.f32.gmra.mxu0 %v4339
    %v4341 = vpop.f32.mrf.mxu0
    %v4342 = vadd.f32 %v4252, %v4341
    %v4343 = vpop.f32.mrf.mxu0
    %4344 = vdwg.mxu0
    %4345 = vmatprep.subr.mxu0 0.0
    %4346 = vmatpush1.msra.mxu0 0.0
    %4347 = vmatprep.subr.mxu0 0.0
    %4348 = vmatpush1.msra.mxu0 0.0
    %4349 = vmatprep.subr.mxu0 0.0
    %4350 = vmatpush1.msra.mxu0 0.0
    %4351 = vmatprep.subr.mxu0 0.0
    %4352 = vmatpush1.msra.mxu0 0.0
    %4353 = vmatprep.subr.mxu0 0.0
    %4354 = vmatpush1.msra.mxu0 0.0
    %4355 = vmatprep.subr.mxu0 0.0
    %4356 = vmatpush1.msra.mxu0 0.0
    %4357 = vmatprep.subr.mxu0 0.0
    %4358 = vmatpush1.msra.mxu0 0.0
    %4359 = vmatprep.subr.mxu0 0.0
    %4360 = vmatpush1.msra.mxu0 0.0
    %4361 = vmatprep.subr.mxu0 0.0
    %4362 = vmatpush1.msra.mxu0 0.0
    %4363 = vmatprep.subr.mxu0 0.0
    %4364 = vmatpush1.msra.mxu0 0.0
    %4365 = vmatprep.subr.mxu0 0.0
    %4366 = vmatpush1.msra.mxu0 0.0
    %4367 = vmatprep.subr.mxu0 0.0
    %4368 = vmatpush1.msra.mxu0 0.0
    %4369 = vmatprep.subr.mxu0 0.0
    %4370 = vmatpush1.msra.mxu0 0.0
    %4371 = vmatprep.subr.mxu0 0.0
    %4372 = vmatpush1.msra.mxu0 0.0
    %4373 = vmatprep.subr.mxu0 0.0
    %4374 = vmatpush1.msra.mxu0 0.0
    %4375 = vmatprep.subr.mxu0 0.0
    %v4376 = vand.u32 %v3769, 4294901760
    %4377 = vmatpush1.msra.mxu0 %v4376
    %4378 = vmatprep.subr.mxu0 0.0
    %4379 = vmatpush2.msra.mxu0 0.0
    %4380 = vmatprep.subr.mxu0 0.0
    %4381 = vmatpush2.msra.mxu0 0.0
    %4382 = vmatprep.subr.mxu0 0.0
    %4383 = vmatpush2.msra.mxu0 0.0
    %4384 = vmatprep.subr.mxu0 0.0
    %4385 = vmatpush2.msra.mxu0 0.0
    %4386 = vmatprep.subr.mxu0 0.0
    %4387 = vmatpush2.msra.mxu0 0.0
    %4388 = vmatprep.subr.mxu0 0.0
    %4389 = vmatpush2.msra.mxu0 0.0
    %4390 = vmatprep.subr.mxu0 0.0
    %4391 = vmatpush2.msra.mxu0 0.0
    %4392 = vmatprep.subr.mxu0 0.0
    %4393 = vmatpush2.msra.mxu0 0.0
    %4394 = vmatprep.subr.mxu0 0.0
    %4395 = vmatpush2.msra.mxu0 0.0
    %4396 = vmatprep.subr.mxu0 0.0
    %4397 = vmatpush2.msra.mxu0 0.0
    %4398 = vmatprep.subr.mxu0 0.0
    %4399 = vmatpush2.msra.mxu0 0.0
    %4400 = vmatprep.subr.mxu0 0.0
    %4401 = vmatpush2.msra.mxu0 0.0
    %4402 = vmatprep.subr.mxu0 0.0
    %4403 = vmatpush2.msra.mxu0 0.0
    %4404 = vmatprep.subr.mxu0 0.0
    %4405 = vmatpush2.msra.mxu0 0.0
    %4406 = vmatprep.subr.mxu0 0.0
    %4407 = vmatpush2.msra.mxu0 0.0
    %4408 = vmatprep.subr.mxu0 0.0
    %4409 = vmatpush2.msra.mxu0 0.0
    %4410 = vmatprep.mubr.f32.mxu0 0.0
    %v4411 = vand.u32 %v1256, 4294901760
    %v4412 = vsub.f32 %v1256, %v4411
    %v4413 = vand.u32 %v4412, 4294901760
    %v4414 = vsub.f32 %v4412, %v4413
    %v4415 = vand.u32 %v4414, 4294901760
    %4416 = vmatmul.mubr.f32.gmra.mxu0 %v4415
    %v4417 = vpop.f32.mrf.mxu0
    %v4418 = vadd.f32 0.0, %v4417
    %v4419 = vpop.f32.mrf.mxu0
    %4420 = vmatprep.mubr.f32.mxu0 0.0
    %v4421 = vand.u32 %v1259, 4294901760
    %v4422 = vsub.f32 %v1259, %v4421
    %v4423 = vand.u32 %v4422, 4294901760
    %v4424 = vsub.f32 %v4422, %v4423
    %v4425 = vand.u32 %v4424, 4294901760
    %4426 = vmatmul.mubr.f32.gmra.mxu0 %v4425
    %v4427 = vpop.f32.mrf.mxu0
    %v4428 = vadd.f32 0.0, %v4427
    %v4429 = vpop.f32.mrf.mxu0
    %4430 = vdwg.mxu0
    %4431 = vmatprep.subr.mxu0 0.0
    %4432 = vmatpush1.msra.mxu0 0.0
    %4433 = vmatprep.subr.mxu0 0.0
    %4434 = vmatpush1.msra.mxu0 0.0
    %4435 = vmatprep.subr.mxu0 0.0
    %4436 = vmatpush1.msra.mxu0 0.0
    %4437 = vmatprep.subr.mxu0 0.0
    %4438 = vmatpush1.msra.mxu0 0.0
    %4439 = vmatprep.subr.mxu0 0.0
    %4440 = vmatpush1.msra.mxu0 0.0
    %4441 = vmatprep.subr.mxu0 0.0
    %4442 = vmatpush1.msra.mxu0 0.0
    %4443 = vmatprep.subr.mxu0 0.0
    %4444 = vmatpush1.msra.mxu0 0.0
    %4445 = vmatprep.subr.mxu0 0.0
    %4446 = vmatpush1.msra.mxu0 0.0
    %4447 = vmatprep.subr.mxu0 0.0
    %4448 = vmatpush1.msra.mxu0 0.0
    %4449 = vmatprep.subr.mxu0 0.0
    %4450 = vmatpush1.msra.mxu0 0.0
    %4451 = vmatprep.subr.mxu0 0.0
    %4452 = vmatpush1.msra.mxu0 0.0
    %4453 = vmatprep.subr.mxu0 0.0
    %4454 = vmatpush1.msra.mxu0 0.0
    %4455 = vmatprep.subr.mxu0 0.0
    %4456 = vmatpush1.msra.mxu0 0.0
    %4457 = vmatprep.subr.mxu0 0.0
    %4458 = vmatpush1.msra.mxu0 0.0
    %4459 = vmatprep.subr.mxu0 0.0
    %4460 = vmatpush1.msra.mxu0 0.0
    %4461 = vmatprep.subr.mxu0 0.0
    %v4462 = vand.u32 %v3769, 4294901760
    %v4463 = vsub.f32 %v3769, %v4462
    %v4464 = vand.u32 %v4463, 4294901760
    %v4465 = vsub.f32 %v4463, %v4464
    %v4466 = vand.u32 %v4465, 4294901760
    %4467 = vmatpush1.msra.mxu0 %v4466
    %4468 = vmatprep.subr.mxu0 0.0
    %4469 = vmatpush2.msra.mxu0 0.0
    %4470 = vmatprep.subr.mxu0 0.0
    %4471 = vmatpush2.msra.mxu0 0.0
    %4472 = vmatprep.subr.mxu0 0.0
    %4473 = vmatpush2.msra.mxu0 0.0
    %4474 = vmatprep.subr.mxu0 0.0
    %4475 = vmatpush2.msra.mxu0 0.0
    %4476 = vmatprep.subr.mxu0 0.0
    %4477 = vmatpush2.msra.mxu0 0.0
    %4478 = vmatprep.subr.mxu0 0.0
    %4479 = vmatpush2.msra.mxu0 0.0
    %4480 = vmatprep.subr.mxu0 0.0
    %4481 = vmatpush2.msra.mxu0 0.0
    %4482 = vmatprep.subr.mxu0 0.0
    %4483 = vmatpush2.msra.mxu0 0.0
    %4484 = vmatprep.subr.mxu0 0.0
    %4485 = vmatpush2.msra.mxu0 0.0
    %4486 = vmatprep.subr.mxu0 0.0
    %4487 = vmatpush2.msra.mxu0 0.0
    %4488 = vmatprep.subr.mxu0 0.0
    %4489 = vmatpush2.msra.mxu0 0.0
    %4490 = vmatprep.subr.mxu0 0.0
    %4491 = vmatpush2.msra.mxu0 0.0
    %4492 = vmatprep.subr.mxu0 0.0
    %4493 = vmatpush2.msra.mxu0 0.0
    %4494 = vmatprep.subr.mxu0 0.0
    %4495 = vmatpush2.msra.mxu0 0.0
    %4496 = vmatprep.subr.mxu0 0.0
    %4497 = vmatpush2.msra.mxu0 0.0
    %4498 = vmatprep.subr.mxu0 0.0
    %4499 = vmatpush2.msra.mxu0 0.0
    %4500 = vmatprep.mubr.f32.mxu0 0.0
    %v4501 = vand.u32 %v1256, 4294901760
    %4502 = vmatmul.mubr.f32.gmra.mxu0 %v4501
    %v4503 = vpop.f32.mrf.mxu0
    %v4504 = vadd.f32 %v4418, %v4503
    %v4505 = vpop.f32.mrf.mxu0
    %4506 = vmatprep.mubr.f32.mxu0 0.0
    %v4507 = vand.u32 %v1259, 4294901760
    %4508 = vmatmul.mubr.f32.gmra.mxu0 %v4507
    %v4509 = vpop.f32.mrf.mxu0
    %v4510 = vadd.f32 %v4428, %v4509
    %v4511 = vpop.f32.mrf.mxu0
    %4512 = vdwg.mxu0
    %4513 = vmatprep.subr.mxu0 0.0
    %4514 = vmatpush1.msra.mxu0 0.0
    %4515 = vmatprep.subr.mxu0 0.0
    %4516 = vmatpush1.msra.mxu0 0.0
    %4517 = vmatprep.subr.mxu0 0.0
    %4518 = vmatpush1.msra.mxu0 0.0
    %4519 = vmatprep.subr.mxu0 0.0
    %4520 = vmatpush1.msra.mxu0 0.0
    %4521 = vmatprep.subr.mxu0 0.0
    %4522 = vmatpush1.msra.mxu0 0.0
    %4523 = vmatprep.subr.mxu0 0.0
    %4524 = vmatpush1.msra.mxu0 0.0
    %4525 = vmatprep.subr.mxu0 0.0
    %4526 = vmatpush1.msra.mxu0 0.0
    %4527 = vmatprep.subr.mxu0 0.0
    %4528 = vmatpush1.msra.mxu0 0.0
    %4529 = vmatprep.subr.mxu0 0.0
    %4530 = vmatpush1.msra.mxu0 0.0
    %4531 = vmatprep.subr.mxu0 0.0
    %4532 = vmatpush1.msra.mxu0 0.0
    %4533 = vmatprep.subr.mxu0 0.0
    %4534 = vmatpush1.msra.mxu0 0.0
    %4535 = vmatprep.subr.mxu0 0.0
    %4536 = vmatpush1.msra.mxu0 0.0
    %4537 = vmatprep.subr.mxu0 0.0
    %4538 = vmatpush1.msra.mxu0 0.0
    %4539 = vmatprep.subr.mxu0 0.0
    %4540 = vmatpush1.msra.mxu0 0.0
    %4541 = vmatprep.subr.mxu0 0.0
    %4542 = vmatpush1.msra.mxu0 0.0
    %4543 = vmatprep.subr.mxu0 0.0
    %v4544 = vand.u32 %v3769, 4294901760
    %v4545 = vsub.f32 %v3769, %v4544
    %4546 = vmatpush1.msra.mxu0 %v4545
    %4547 = vmatprep.subr.mxu0 0.0
    %4548 = vmatpush2.msra.mxu0 0.0
    %4549 = vmatprep.subr.mxu0 0.0
    %4550 = vmatpush2.msra.mxu0 0.0
    %4551 = vmatprep.subr.mxu0 0.0
    %4552 = vmatpush2.msra.mxu0 0.0
    %4553 = vmatprep.subr.mxu0 0.0
    %4554 = vmatpush2.msra.mxu0 0.0
    %4555 = vmatprep.subr.mxu0 0.0
    %4556 = vmatpush2.msra.mxu0 0.0
    %4557 = vmatprep.subr.mxu0 0.0
    %4558 = vmatpush2.msra.mxu0 0.0
    %4559 = vmatprep.subr.mxu0 0.0
    %4560 = vmatpush2.msra.mxu0 0.0
    %4561 = vmatprep.subr.mxu0 0.0
    %4562 = vmatpush2.msra.mxu0 0.0
    %4563 = vmatprep.subr.mxu0 0.0
    %4564 = vmatpush2.msra.mxu0 0.0
    %4565 = vmatprep.subr.mxu0 0.0
    %4566 = vmatpush2.msra.mxu0 0.0
    %4567 = vmatprep.subr.mxu0 0.0
    %4568 = vmatpush2.msra.mxu0 0.0
    %4569 = vmatprep.subr.mxu0 0.0
    %4570 = vmatpush2.msra.mxu0 0.0
    %4571 = vmatprep.subr.mxu0 0.0
    %4572 = vmatpush2.msra.mxu0 0.0
    %4573 = vmatprep.subr.mxu0 0.0
    %4574 = vmatpush2.msra.mxu0 0.0
    %4575 = vmatprep.subr.mxu0 0.0
    %4576 = vmatpush2.msra.mxu0 0.0
    %4577 = vmatprep.subr.mxu0 0.0
    %4578 = vmatpush2.msra.mxu0 0.0
    %4579 = vmatprep.mubr.f32.mxu0 0.0
    %v4580 = vand.u32 %v1256, 4294901760
    %v4581 = vsub.f32 %v1256, %v4580
    %4582 = vmatmul.mubr.f32.gmra.mxu0 %v4581
    %v4583 = vpop.f32.mrf.mxu0
    %v4584 = vadd.f32 %v4504, %v4583
    %v4585 = vpop.f32.mrf.mxu0
    %4586 = vmatprep.mubr.f32.mxu0 0.0
    %v4587 = vand.u32 %v1259, 4294901760
    %v4588 = vsub.f32 %v1259, %v4587
    %4589 = vmatmul.mubr.f32.gmra.mxu0 %v4588
    %v4590 = vpop.f32.mrf.mxu0
    %v4591 = vadd.f32 %v4510, %v4590
    %v4592 = vpop.f32.mrf.mxu0
    %4593 = vdwg.mxu0
    %4594 = vmatprep.subr.mxu0 0.0
    %4595 = vmatpush1.msra.mxu0 0.0
    %4596 = vmatprep.subr.mxu0 0.0
    %4597 = vmatpush1.msra.mxu0 0.0
    %4598 = vmatprep.subr.mxu0 0.0
    %4599 = vmatpush1.msra.mxu0 0.0
    %4600 = vmatprep.subr.mxu0 0.0
    %4601 = vmatpush1.msra.mxu0 0.0
    %4602 = vmatprep.subr.mxu0 0.0
    %4603 = vmatpush1.msra.mxu0 0.0
    %4604 = vmatprep.subr.mxu0 0.0
    %4605 = vmatpush1.msra.mxu0 0.0
    %4606 = vmatprep.subr.mxu0 0.0
    %4607 = vmatpush1.msra.mxu0 0.0
    %4608 = vmatprep.subr.mxu0 0.0
    %4609 = vmatpush1.msra.mxu0 0.0
    %4610 = vmatprep.subr.mxu0 0.0
    %4611 = vmatpush1.msra.mxu0 0.0
    %4612 = vmatprep.subr.mxu0 0.0
    %4613 = vmatpush1.msra.mxu0 0.0
    %4614 = vmatprep.subr.mxu0 0.0
    %4615 = vmatpush1.msra.mxu0 0.0
    %4616 = vmatprep.subr.mxu0 0.0
    %4617 = vmatpush1.msra.mxu0 0.0
    %4618 = vmatprep.subr.mxu0 0.0
    %4619 = vmatpush1.msra.mxu0 0.0
    %4620 = vmatprep.subr.mxu0 0.0
    %4621 = vmatpush1.msra.mxu0 0.0
    %4622 = vmatprep.subr.mxu0 0.0
    %4623 = vmatpush1.msra.mxu0 0.0
    %4624 = vmatprep.subr.mxu0 0.0
    %v4625 = vand.u32 %v3769, 4294901760
    %4626 = vmatpush1.msra.mxu0 %v4625
    %4627 = vmatprep.subr.mxu0 0.0
    %4628 = vmatpush2.msra.mxu0 0.0
    %4629 = vmatprep.subr.mxu0 0.0
    %4630 = vmatpush2.msra.mxu0 0.0
    %4631 = vmatprep.subr.mxu0 0.0
    %4632 = vmatpush2.msra.mxu0 0.0
    %4633 = vmatprep.subr.mxu0 0.0
    %4634 = vmatpush2.msra.mxu0 0.0
    %4635 = vmatprep.subr.mxu0 0.0
    %4636 = vmatpush2.msra.mxu0 0.0
    %4637 = vmatprep.subr.mxu0 0.0
    %4638 = vmatpush2.msra.mxu0 0.0
    %4639 = vmatprep.subr.mxu0 0.0
    %4640 = vmatpush2.msra.mxu0 0.0
    %4641 = vmatprep.subr.mxu0 0.0
    %4642 = vmatpush2.msra.mxu0 0.0
    %4643 = vmatprep.subr.mxu0 0.0
    %4644 = vmatpush2.msra.mxu0 0.0
    %4645 = vmatprep.subr.mxu0 0.0
    %4646 = vmatpush2.msra.mxu0 0.0
    %4647 = vmatprep.subr.mxu0 0.0
    %4648 = vmatpush2.msra.mxu0 0.0
    %4649 = vmatprep.subr.mxu0 0.0
    %4650 = vmatpush2.msra.mxu0 0.0
    %4651 = vmatprep.subr.mxu0 0.0
    %4652 = vmatpush2.msra.mxu0 0.0
    %4653 = vmatprep.subr.mxu0 0.0
    %4654 = vmatpush2.msra.mxu0 0.0
    %4655 = vmatprep.subr.mxu0 0.0
    %4656 = vmatpush2.msra.mxu0 0.0
    %4657 = vmatprep.subr.mxu0 0.0
    %4658 = vmatpush2.msra.mxu0 0.0
    %4659 = vmatprep.mubr.f32.mxu0 0.0
    %v4660 = vand.u32 %v1256, 4294901760
    %v4661 = vsub.f32 %v1256, %v4660
    %v4662 = vand.u32 %v4661, 4294901760
    %4663 = vmatmul.mubr.f32.gmra.mxu0 %v4662
    %v4664 = vpop.f32.mrf.mxu0
    %v4665 = vadd.f32 %v4584, %v4664
    %v4666 = vpop.f32.mrf.mxu0
    %4667 = vmatprep.mubr.f32.mxu0 0.0
    %v4668 = vand.u32 %v1259, 4294901760
    %v4669 = vsub.f32 %v1259, %v4668
    %v4670 = vand.u32 %v4669, 4294901760
    %4671 = vmatmul.mubr.f32.gmra.mxu0 %v4670
    %v4672 = vpop.f32.mrf.mxu0
    %v4673 = vadd.f32 %v4591, %v4672
    %v4674 = vpop.f32.mrf.mxu0
    %4675 = vdwg.mxu0
    %4676 = vmatprep.subr.mxu0 0.0
    %4677 = vmatpush1.msra.mxu0 0.0
    %4678 = vmatprep.subr.mxu0 0.0
    %4679 = vmatpush1.msra.mxu0 0.0
    %4680 = vmatprep.subr.mxu0 0.0
    %4681 = vmatpush1.msra.mxu0 0.0
    %4682 = vmatprep.subr.mxu0 0.0
    %4683 = vmatpush1.msra.mxu0 0.0
    %4684 = vmatprep.subr.mxu0 0.0
    %4685 = vmatpush1.msra.mxu0 0.0
    %4686 = vmatprep.subr.mxu0 0.0
    %4687 = vmatpush1.msra.mxu0 0.0
    %4688 = vmatprep.subr.mxu0 0.0
    %4689 = vmatpush1.msra.mxu0 0.0
    %4690 = vmatprep.subr.mxu0 0.0
    %4691 = vmatpush1.msra.mxu0 0.0
    %4692 = vmatprep.subr.mxu0 0.0
    %4693 = vmatpush1.msra.mxu0 0.0
    %4694 = vmatprep.subr.mxu0 0.0
    %4695 = vmatpush1.msra.mxu0 0.0
    %4696 = vmatprep.subr.mxu0 0.0
    %4697 = vmatpush1.msra.mxu0 0.0
    %4698 = vmatprep.subr.mxu0 0.0
    %4699 = vmatpush1.msra.mxu0 0.0
    %4700 = vmatprep.subr.mxu0 0.0
    %4701 = vmatpush1.msra.mxu0 0.0
    %4702 = vmatprep.subr.mxu0 0.0
    %4703 = vmatpush1.msra.mxu0 0.0
    %4704 = vmatprep.subr.mxu0 0.0
    %4705 = vmatpush1.msra.mxu0 0.0
    %4706 = vmatprep.subr.mxu0 0.0
    %v4707 = vand.u32 %v3769, 4294901760
    %v4708 = vsub.f32 %v3769, %v4707
    %v4709 = vand.u32 %v4708, 4294901760
    %4710 = vmatpush1.msra.mxu0 %v4709
    %4711 = vmatprep.subr.mxu0 0.0
    %4712 = vmatpush2.msra.mxu0 0.0
    %4713 = vmatprep.subr.mxu0 0.0
    %4714 = vmatpush2.msra.mxu0 0.0
    %4715 = vmatprep.subr.mxu0 0.0
    %4716 = vmatpush2.msra.mxu0 0.0
    %4717 = vmatprep.subr.mxu0 0.0
    %4718 = vmatpush2.msra.mxu0 0.0
    %4719 = vmatprep.subr.mxu0 0.0
    %4720 = vmatpush2.msra.mxu0 0.0
    %4721 = vmatprep.subr.mxu0 0.0
    %4722 = vmatpush2.msra.mxu0 0.0
    %4723 = vmatprep.subr.mxu0 0.0
    %4724 = vmatpush2.msra.mxu0 0.0
    %4725 = vmatprep.subr.mxu0 0.0
    %4726 = vmatpush2.msra.mxu0 0.0
    %4727 = vmatprep.subr.mxu0 0.0
    %4728 = vmatpush2.msra.mxu0 0.0
    %4729 = vmatprep.subr.mxu0 0.0
    %4730 = vmatpush2.msra.mxu0 0.0
    %4731 = vmatprep.subr.mxu0 0.0
    %4732 = vmatpush2.msra.mxu0 0.0
    %4733 = vmatprep.subr.mxu0 0.0
    %4734 = vmatpush2.msra.mxu0 0.0
    %4735 = vmatprep.subr.mxu0 0.0
    %4736 = vmatpush2.msra.mxu0 0.0
    %4737 = vmatprep.subr.mxu0 0.0
    %4738 = vmatpush2.msra.mxu0 0.0
    %4739 = vmatprep.subr.mxu0 0.0
    %4740 = vmatpush2.msra.mxu0 0.0
    %4741 = vmatprep.subr.mxu0 0.0
    %4742 = vmatpush2.msra.mxu0 0.0
    %4743 = vmatprep.mubr.f32.mxu0 0.0
    %v4744 = vand.u32 %v1256, 4294901760
    %4745 = vmatmul.mubr.f32.gmra.mxu0 %v4744
    %v4746 = vpop.f32.mrf.mxu0
    %v4747 = vadd.f32 %v4665, %v4746
    %v4748 = vpop.f32.mrf.mxu0
    %4749 = vmatprep.mubr.f32.mxu0 0.0
    %v4750 = vand.u32 %v1259, 4294901760
    %4751 = vmatmul.mubr.f32.gmra.mxu0 %v4750
    %v4752 = vpop.f32.mrf.mxu0
    %v4753 = vadd.f32 %v4673, %v4752
    %v4754 = vpop.f32.mrf.mxu0
    %4755 = vdwg.mxu0
    %4756 = vmatprep.subr.mxu0 0.0
    %4757 = vmatpush1.msra.mxu0 0.0
    %4758 = vmatprep.subr.mxu0 0.0
    %4759 = vmatpush1.msra.mxu0 0.0
    %4760 = vmatprep.subr.mxu0 0.0
    %4761 = vmatpush1.msra.mxu0 0.0
    %4762 = vmatprep.subr.mxu0 0.0
    %4763 = vmatpush1.msra.mxu0 0.0
    %4764 = vmatprep.subr.mxu0 0.0
    %4765 = vmatpush1.msra.mxu0 0.0
    %4766 = vmatprep.subr.mxu0 0.0
    %4767 = vmatpush1.msra.mxu0 0.0
    %4768 = vmatprep.subr.mxu0 0.0
    %4769 = vmatpush1.msra.mxu0 0.0
    %4770 = vmatprep.subr.mxu0 0.0
    %4771 = vmatpush1.msra.mxu0 0.0
    %4772 = vmatprep.subr.mxu0 0.0
    %4773 = vmatpush1.msra.mxu0 0.0
    %4774 = vmatprep.subr.mxu0 0.0
    %4775 = vmatpush1.msra.mxu0 0.0
    %4776 = vmatprep.subr.mxu0 0.0
    %4777 = vmatpush1.msra.mxu0 0.0
    %4778 = vmatprep.subr.mxu0 0.0
    %4779 = vmatpush1.msra.mxu0 0.0
    %4780 = vmatprep.subr.mxu0 0.0
    %4781 = vmatpush1.msra.mxu0 0.0
    %4782 = vmatprep.subr.mxu0 0.0
    %4783 = vmatpush1.msra.mxu0 0.0
    %4784 = vmatprep.subr.mxu0 0.0
    %4785 = vmatpush1.msra.mxu0 0.0
    %4786 = vmatprep.subr.mxu0 0.0
    %v4787 = vand.u32 %v3769, 4294901760
    %4788 = vmatpush1.msra.mxu0 %v4787
    %4789 = vmatprep.subr.mxu0 0.0
    %4790 = vmatpush2.msra.mxu0 0.0
    %4791 = vmatprep.subr.mxu0 0.0
    %4792 = vmatpush2.msra.mxu0 0.0
    %4793 = vmatprep.subr.mxu0 0.0
    %4794 = vmatpush2.msra.mxu0 0.0
    %4795 = vmatprep.subr.mxu0 0.0
    %4796 = vmatpush2.msra.mxu0 0.0
    %4797 = vmatprep.subr.mxu0 0.0
    %4798 = vmatpush2.msra.mxu0 0.0
    %4799 = vmatprep.subr.mxu0 0.0
    %4800 = vmatpush2.msra.mxu0 0.0
    %4801 = vmatprep.subr.mxu0 0.0
    %4802 = vmatpush2.msra.mxu0 0.0
    %4803 = vmatprep.subr.mxu0 0.0
    %4804 = vmatpush2.msra.mxu0 0.0
    %4805 = vmatprep.subr.mxu0 0.0
    %4806 = vmatpush2.msra.mxu0 0.0
    %4807 = vmatprep.subr.mxu0 0.0
    %4808 = vmatpush2.msra.mxu0 0.0
    %4809 = vmatprep.subr.mxu0 0.0
    %4810 = vmatpush2.msra.mxu0 0.0
    %4811 = vmatprep.subr.mxu0 0.0
    %4812 = vmatpush2.msra.mxu0 0.0
    %4813 = vmatprep.subr.mxu0 0.0
    %4814 = vmatpush2.msra.mxu0 0.0
    %4815 = vmatprep.subr.mxu0 0.0
    %4816 = vmatpush2.msra.mxu0 0.0
    %4817 = vmatprep.subr.mxu0 0.0
    %4818 = vmatpush2.msra.mxu0 0.0
    %4819 = vmatprep.subr.mxu0 0.0
    %4820 = vmatpush2.msra.mxu0 0.0
    %4821 = vmatprep.mubr.f32.mxu0 0.0
    %v4822 = vand.u32 %v1256, 4294901760
    %4823 = vmatmul.mubr.f32.gmra.mxu0 %v4822
    %v4824 = vpop.f32.mrf.mxu0
    %v4825 = vadd.f32 %v4747, %v4824
    %v4826 = vpop.f32.mrf.mxu0
    %4827 = vmatprep.mubr.f32.mxu0 0.0
    %v4828 = vand.u32 %v1259, 4294901760
    %4829 = vmatmul.mubr.f32.gmra.mxu0 %v4828
    %v4830 = vpop.f32.mrf.mxu0
    %v4831 = vadd.f32 %v4753, %v4830
    %v4832 = vpop.f32.mrf.mxu0
    %4833 = vdwg.mxu0
    %v4834 = vmul.f32 %v4825, %v4825
    %v4835 = vmul.f32 %v4831, %v4831
    %v4836 = vsel %vm1752, %v4834, 0.0
    %4837 = vadd.xlane.f32.xlu0 %v4836
    %v4838 = vpop.xlane.xlu0 %4837
    %v4839 = vsel %vm1752, %v4835, 0.0
    %4840 = vadd.xlane.f32.xlu0 %v4839
    %v4841 = vpop.xlane.xlu0 %4840
    %v4842 = vrsqrt.pop %v4838
    %v4843 = vmul.f32 %v4838, %v4842
    %vm4844 = vcmp.eq.f32.partialorder %v4838, inf
    %v4845 = vsel %vm4844, %v4838, %v4843
    %vm4846 = vcmp.eq.f32.partialorder %v4838, 0.0
    %v4847 = vand.u32 %v4838, 2147483648
    %v4848 = vsel %vm4846, %v4847, %v4845
    %v4849 = vrsqrt.pop %v4841
    %v4850 = vmul.f32 %v4841, %v4849
    %vm4851 = vcmp.eq.f32.partialorder %v4841, inf
    %v4852 = vsel %vm4851, %v4841, %v4850
    %vm4853 = vcmp.eq.f32.partialorder %v4841, 0.0
    %v4854 = vand.u32 %v4841, 2147483648
    %v4855 = vsel %vm4853, %v4854, %v4852
    %v4856 = vmul.f32 %v1777, %v4848
    %v4857 = vmul.f32 %v1777, %v4855
    %v4858 = vand.u32 2147483647, %v4856
    %vm4859 = vcmp.le.f32.partialorder %v4858, 0.7853982
    %vm4860 = vcmp.lt.s32.totalorder %v4856, 0
    %v4861 = vand.u32 %v4856, 2139095040
    %v4862 = vshrl.u32 %v4861, 23
    %v4863 = vsub.s32 %v4862, 127
    %v4864 = vand.u32 2147483647, %v4856
    %v4865 = vand.u32 %v4864, 8388607
    %v4866 = vor.u32 %v4865, 8388608
    %v4867 = vsub.s32 0, %v4866
    %v4868 = vadd.s32 %v4863, 1
    %vm4869 = vcmp.gt.s32.totalorder %v4868, 0
    %v4870 = vsel %vm4869, %v4868, 0
    %v4871 = vshrl.u32 %v4870, 5
    %v4872 = vand.u32 %v4870, 31
    %v4873 = vsub.s32 32, %v4872
    %v4874 = vshrl.u32 683565275, %v4873
    %v4875 = vshll.u32 683565275, %v4872
    %v4876 = vshrl.u32 2475754826, %v4873
    %v4877 = vor.u32 %v4875, %v4876
    %v4878 = vshll.u32 2475754826, %v4872
    %v4879 = vshrl.u32 2131351028, %v4873
    %v4880 = vor.u32 %v4878, %v4879
    %v4881 = vshll.u32 2131351028, %v4872
    %v4882 = vshrl.u32 2102212464, %v4873
    %v4883 = vor.u32 %v4881, %v4882
    %v4884 = vshll.u32 2102212464, %v4872
    %v4885 = vshrl.u32 920167782, %v4873
    %v4886 = vor.u32 %v4884, %v4885
    %v4887 = vshll.u32 920167782, %v4872
    %v4888 = vshrl.u32 1326507024, %v4873
    %v4889 = vor.u32 %v4887, %v4888
    %vm4890 = vcmp.lt.s32.totalorder %v4871, 1
    %vm4891 = vcmp.lt.s32.totalorder %v4871, 2
    %vm4892 = vcmp.lt.s32.totalorder %v4871, 3
    %vm4893 = vcmp.lt.s32.totalorder %v4871, 4
    %v4894 = vsel %vm4890, %v4874, %v4877
    %v4895 = vsel %vm4893, %v4883, 2102212464
    %v4896 = vsel %vm4892, %v4880, %v4895
    %v4897 = vsel %vm4891, %v4894, %v4896
    %v4898 = vsel %vm4890, %v4877, %v4880
    %v4899 = vsel %vm4893, %v4886, 920167782
    %v4900 = vsel %vm4892, %v4883, %v4899
    %v4901 = vsel %vm4891, %v4898, %v4900
    %v4902 = vsel %vm4890, %v4880, %v4883
    %v4903 = vsel %vm4893, %v4889, 1326507024
    %v4904 = vsel %vm4892, %v4886, %v4903
    %v4905 = vsel %vm4891, %v4902, %v4904
    %v4906 = vshll.u32 %v4866, 8
    %v4907 = vmul.u32.u64.compose %v4906, %v4905
    %v4908 = vextract.low.u32 %v4907
    %v4909 = vextract.high.u32 %v4907
    %v4910 = vmul.u32.u64.compose %v4906, %v4901
    %v4911 = vextract.low.u32 %v4910
    %v4912 = vextract.high.u32 %v4910
    %v4913 = vmul.u32 %v4906, %v4897
    %v4914 = vadd.s32 %v4909, %v4911
    %vm4915 = vc.u32 %v4909, %v4911
    %v4916 = vadd.s32 %v4912, 1
    %v4917 = vsel %vm4915, %v4916, %v4912
    %v4918 = vadd.s32 %v4913, %v4917
    %v4919 = vadd.s32 %v4918, 536870912
    %v4920 = vshrl.u32 %v4919, 30
    %v4921 = vshll.u32 %v4920, 30
    %v4922 = vsub.s32 %v4918, %v4921
    %vm4923 = vcmp.lt.s32.totalorder %v4922, 0
    %v4924 = vsub.s32 0, %v4922
    %v4925 = vsel %vm4923, %v4924, %v4922
    %v4926 = vclz %v4925
    %v4927 = vsub.s32 %v4926, 2
    %vm4928 = vcmp.gt.s32.totalorder 0, %v4927
    %v4929 = vsel %vm4928, 0, %v4927
    %v4930 = vsub.s32 32, %v4929
    %v4931 = vshll.u32 %v4922, %v4929
    %v4932 = vshrl.u32 %v4914, %v4930
    %v4933 = vor.u32 %v4931, %v4932
    %v4934 = vsub.s32 4294967266, %v4929
    %v4935 = vadd.s32 %v4934, 127
    %v4936 = vshll.u32 %v4935, 23
    %v4937 = vor.u32 4788187, %v4936
    %v4938 = vand.u32 2147483647, %v4937
    %v4940 = vcvt.s32.f32 %v4933
    %v4941 = vmul.f32 %v4940, %v4938
    %v4942 = vxor.u32 %v4941, 2147483648
    %v4943 = vsel %vm4860, %v4942, %v4941
    %v4944 = vsub.s32 4, %v4920
    %v4945 = vsel %vm4860, %v4944, %v4920
    %v4946 = vsel %vm4859, %v4856, %v4943
    %v4947 = vsel %vm4859, 0, %v4945
    %v4948 = vcosq.f32.pop %v4946
    %v4949 = vsinq.f32.pop %v4946
    %vm4950 = vweird.f32 %v4856
    %v4951 = vadd.s32 %v4947, 3
    %v4952 = vand.u32 %v4951, 3
    %vm4953 = vcmp.lt.s32.totalorder %v4952, 2
    %vm4954 = vcmp.eq.s32.totalorder %v4952, 0
    %v4955 = vxor.u32 %v4949, 2147483648
    %v4956 = vsel %vm4954, %v4948, %v4955
    %vm4957 = vcmp.eq.s32.totalorder %v4952, 2
    %v4958 = vxor.u32 %v4948, 2147483648
    %v4959 = vsel %vm4957, %v4958, %v4949
    %v4960 = vsel %vm4953, %v4956, %v4959
    %v4961 = vsel %vm4950, nan, %v4960
    %v4962 = vand.u32 2147483647, %v4857
    %vm4963 = vcmp.le.f32.partialorder %v4962, 0.7853982
    %vm4964 = vcmp.lt.s32.totalorder %v4857, 0
    %v4965 = vand.u32 %v4857, 2139095040
    %v4966 = vshrl.u32 %v4965, 23
    %v4967 = vsub.s32 %v4966, 127
    %v4968 = vand.u32 2147483647, %v4857
    %v4969 = vand.u32 %v4968, 8388607
    %v4970 = vor.u32 %v4969, 8388608
    %v4971 = vsub.s32 0, %v4970
    %v4972 = vadd.s32 %v4967, 1
    %vm4973 = vcmp.gt.s32.totalorder %v4972, 0
    %v4974 = vsel %vm4973, %v4972, 0
    %v4975 = vshrl.u32 %v4974, 5
    %v4976 = vand.u32 %v4974, 31
    %v4977 = vsub.s32 32, %v4976
    %v4978 = vshrl.u32 683565275, %v4977
    %v4979 = vshll.u32 683565275, %v4976
    %v4980 = vshrl.u32 2475754826, %v4977
    %v4981 = vor.u32 %v4979, %v4980
    %v4982 = vshll.u32 2475754826, %v4976
    %v4983 = vshrl.u32 2131351028, %v4977
    %v4984 = vor.u32 %v4982, %v4983
    %v4985 = vshll.u32 2131351028, %v4976
    %v4986 = vshrl.u32 2102212464, %v4977
    %v4987 = vor.u32 %v4985, %v4986
    %v4988 = vshll.u32 2102212464, %v4976
    %v4989 = vshrl.u32 920167782, %v4977
    %v4990 = vor.u32 %v4988, %v4989
    %v4991 = vshll.u32 920167782, %v4976
    %v4992 = vshrl.u32 1326507024, %v4977
    %v4993 = vor.u32 %v4991, %v4992
    %vm4994 = vcmp.lt.s32.totalorder %v4975, 1
    %vm4995 = vcmp.lt.s32.totalorder %v4975, 2
    %vm4996 = vcmp.lt.s32.totalorder %v4975, 3
    %vm4997 = vcmp.lt.s32.totalorder %v4975, 4
    %v4998 = vsel %vm4994, %v4978, %v4981
    %v4999 = vsel %vm4997, %v4987, 2102212464
    %v5000 = vsel %vm4996, %v4984, %v4999
    %v5001 = vsel %vm4995, %v4998, %v5000
    %v5002 = vsel %vm4994, %v4981, %v4984
    %v5003 = vsel %vm4997, %v4990, 920167782
    %v5004 = vsel %vm4996, %v4987, %v5003
    %v5005 = vsel %vm4995, %v5002, %v5004
    %v5006 = vsel %vm4994, %v4984, %v4987
    %v5007 = vsel %vm4997, %v4993, 1326507024
    %v5008 = vsel %vm4996, %v4990, %v5007
    %v5009 = vsel %vm4995, %v5006, %v5008
    %v5010 = vshll.u32 %v4970, 8
    %v5011 = vmul.u32.u64.compose %v5010, %v5009
    %v5012 = vextract.low.u32 %v5011
    %v5013 = vextract.high.u32 %v5011
    %v5014 = vmul.u32.u64.compose %v5010, %v5005
    %v5015 = vextract.low.u32 %v5014
    %v5016 = vextract.high.u32 %v5014
    %v5017 = vmul.u32 %v5010, %v5001
    %v5018 = vadd.s32 %v5013, %v5015
    %vm5019 = vc.u32 %v5013, %v5015
    %v5020 = vadd.s32 %v5016, 1
    %v5021 = vsel %vm5019, %v5020, %v5016
    %v5022 = vadd.s32 %v5017, %v5021
    %v5023 = vadd.s32 %v5022, 536870912
    %v5024 = vshrl.u32 %v5023, 30
    %v5025 = vshll.u32 %v5024, 30
    %v5026 = vsub.s32 %v5022, %v5025
    %vm5027 = vcmp.lt.s32.totalorder %v5026, 0
    %v5028 = vsub.s32 0, %v5026
    %v5029 = vsel %vm5027, %v5028, %v5026
    %v5030 = vclz %v5029
    %v5031 = vsub.s32 %v5030, 2
    %vm5032 = vcmp.gt.s32.totalorder 0, %v5031
    %v5033 = vsel %vm5032, 0, %v5031
    %v5034 = vsub.s32 32, %v5033
    %v5035 = vshll.u32 %v5026, %v5033
    %v5036 = vshrl.u32 %v5018, %v5034
    %v5037 = vor.u32 %v5035, %v5036
    %v5038 = vsub.s32 4294967266, %v5033
    %v5039 = vadd.s32 %v5038, 127
    %v5040 = vshll.u32 %v5039, 23
    %v5041 = vor.u32 4788187, %v5040
    %v5042 = vand.u32 2147483647, %v5041
    %v5044 = vcvt.s32.f32 %v5037
    %v5045 = vmul.f32 %v5044, %v5042
    %v5046 = vxor.u32 %v5045, 2147483648
    %v5047 = vsel %vm4964, %v5046, %v5045
    %v5048 = vsub.s32 4, %v5024
    %v5049 = vsel %vm4964, %v5048, %v5024
    %v5050 = vsel %vm4963, %v4857, %v5047
    %v5051 = vsel %vm4963, 0, %v5049
    %v5052 = vcosq.f32.pop %v5050
    %v5053 = vsinq.f32.pop %v5050
    %vm5054 = vweird.f32 %v4857
    %v5055 = vadd.s32 %v5051, 3
    %v5056 = vand.u32 %v5055, 3
    %vm5057 = vcmp.lt.s32.totalorder %v5056, 2
    %vm5058 = vcmp.eq.s32.totalorder %v5056, 0
    %v5059 = vxor.u32 %v5053, 2147483648
    %v5060 = vsel %vm5058, %v5052, %v5059
    %vm5061 = vcmp.eq.s32.totalorder %v5056, 2
    %v5062 = vxor.u32 %v5052, 2147483648
    %v5063 = vsel %vm5061, %v5062, %v5053
    %v5064 = vsel %vm5057, %v5060, %v5063
    %v5065 = vsel %vm5054, nan, %v5064
    %v5066 = vmul.f32 %v4961, 0.6324555
    %v5067 = vmul.f32 %v5065, 0.6324555
    %v5068 = vrcp.pop %v4848
    %v5069 = vmul.f32 %v5066, %v5068
    %v5070 = vrcp.pop %v4855
    %v5071 = vmul.f32 %v5067, %v5070
    %s5072 = scalar_lea.vmem %s31, 16
    %v5073 = vld [vmem:[%s5072] sm:$0xf]
    %v5074 = vld [vmem:[%s5072 + $0x4] sm:$0xf]
    %v5075 = vld [vmem:[%s5072 + $0x8] sm:$0xf]
    %v5076 = vld [vmem:[%s5072 + $0xc] sm:$0xf]
    %v5077 = vpack.c.bf16 %v4330, %v4324
    %s5078 = scalar_lea.vmem %s33, 16
    %v5079 = vld [vmem:[%s5078] sm:$0xf]
    %v5080 = vld [vmem:[%s5078 + $0x4] sm:$0xf]
    %v5081 = vld [vmem:[%s5078 + $0x8] sm:$0xf]
    %v5082 = vld [vmem:[%s5078 + $0xc] sm:$0xf]
    %v5083 = vpack.c.bf16 %v4342, %v4336
    %v5088 = vunpack.c.l.b16 %v5079
    %v5089 = vunpack.c.l.b16 %v5080
    %v5090 = vunpack.c.l.b16 %v5081
    %v5091 = vunpack.c.l.b16 %v5082
    %v5092 = vpack.c.b16 %v5089, %v5088
    %v5093 = vpack.c.b16 %v5091, %v5090
    %v5097 = vsel %vm473, %v5083, 0
    %5099 = vmatprep.subr.bf16.mxu0 0
    %5100 = vmatpush1.bf16.msra.mxu0 0
    %5101 = vmatprep.subr.bf16.mxu0 0
    %5102 = vmatpush1.bf16.msra.mxu0 0
    %5103 = vmatprep.subr.bf16.mxu0 0
    %5104 = vmatpush1.bf16.msra.mxu0 0
    %5105 = vmatprep.subr.bf16.mxu0 0
    %5106 = vmatpush1.bf16.msra.mxu0 0
    %5107 = vmatprep.subr.bf16.mxu0 0
    %5108 = vmatpush1.bf16.msra.mxu0 0
    %5109 = vmatprep.subr.bf16.mxu0 0
    %5110 = vmatpush1.bf16.msra.mxu0 0
    %5111 = vmatprep.subr.bf16.mxu0 0
    %5112 = vmatpush1.bf16.msra.mxu0 %v5093
    %5113 = vmatprep.subr.bf16.mxu0 0
    %5114 = vmatpush1.bf16.msra.mxu0 %v5092
    %5115 = vmatprep.subr.bf16.mxu0 0
    %5116 = vmatpush2.bf16.msra.mxu0 0
    %5117 = vmatprep.subr.bf16.mxu0 0
    %5118 = vmatpush2.bf16.msra.mxu0 0
    %5119 = vmatprep.subr.bf16.mxu0 0
    %5120 = vmatpush2.bf16.msra.mxu0 0
    %5121 = vmatprep.subr.bf16.mxu0 0
    %5122 = vmatpush2.bf16.msra.mxu0 0
    %5123 = vmatprep.subr.bf16.mxu0 0
    %5124 = vmatpush2.bf16.msra.mxu0 0
    %5125 = vmatprep.subr.bf16.mxu0 0
    %5126 = vmatpush2.bf16.msra.mxu0 0
    %5127 = vmatprep.subr.bf16.mxu0 0
    %5128 = vmatpush2.bf16.msra.mxu0 0
    %5129 = vmatprep.subr.bf16.mxu0 0
    %5130 = vmatpush2.bf16.msra.mxu0 0
    %5131 = vmatprep.mubr.bf16.mxu0 0
    %5132 = vmatmul.mubr.bf16.gmra.mxu0 %v5097
    %v5133 = vpop.f32.mrf.mxu0
    %v5134 = vadd.f32 0.0, %v5133
    %v5135 = vpop.f32.mrf.mxu0
    %v5136 = vpop.f32.mrf.mxu0
    %v5137 = vadd.f32 0.0, %v5136
    %v5138 = vpop.f32.mrf.mxu0
    %5139 = vdwg.mxu0
    %v5144 = vunpack.c.l.b16 %v5073
    %v5145 = vunpack.c.l.b16 %v5074
    %v5146 = vunpack.c.l.b16 %v5075
    %v5147 = vunpack.c.l.b16 %v5076
    %v5148 = vpack.c.b16 %v5145, %v5144
    %v5149 = vpack.c.b16 %v5147, %v5146
    %v5153 = vsel %vm473, %v5077, 0
    %5155 = vmatprep.subr.bf16.mxu0 0
    %5156 = vmatpush1.bf16.msra.mxu0 0
    %5157 = vmatprep.subr.bf16.mxu0 0
    %5158 = vmatpush1.bf16.msra.mxu0 0
    %5159 = vmatprep.subr.bf16.mxu0 0
    %5160 = vmatpush1.bf16.msra.mxu0 0
    %5161 = vmatprep.subr.bf16.mxu0 0
    %5162 = vmatpush1.bf16.msra.mxu0 0
    %5163 = vmatprep.subr.bf16.mxu0 0
    %5164 = vmatpush1.bf16.msra.mxu0 0
    %5165 = vmatprep.subr.bf16.mxu0 0
    %5166 = vmatpush1.bf16.msra.mxu0 0
    %5167 = vmatprep.subr.bf16.mxu0 0
    %5168 = vmatpush1.bf16.msra.mxu0 %v5149
    %5169 = vmatprep.subr.bf16.mxu0 0
    %5170 = vmatpush1.bf16.msra.mxu0 %v5148
    %5171 = vmatprep.subr.bf16.mxu0 0
    %5172 = vmatpush2.bf16.msra.mxu0 0
    %5173 = vmatprep.subr.bf16.mxu0 0
    %5174 = vmatpush2.bf16.msra.mxu0 0
    %5175 = vmatprep.subr.bf16.mxu0 0
    %5176 = vmatpush2.bf16.msra.mxu0 0
    %5177 = vmatprep.subr.bf16.mxu0 0
    %5178 = vmatpush2.bf16.msra.mxu0 0
    %5179 = vmatprep.subr.bf16.mxu0 0
    %5180 = vmatpush2.bf16.msra.mxu0 0
    %5181 = vmatprep.subr.bf16.mxu0 0
    %5182 = vmatpush2.bf16.msra.mxu0 0
    %5183 = vmatprep.subr.bf16.mxu0 0
    %5184 = vmatpush2.bf16.msra.mxu0 0
    %5185 = vmatprep.subr.bf16.mxu0 0
    %5186 = vmatpush2.bf16.msra.mxu0 0
    %5187 = vmatprep.mubr.bf16.mxu0 0
    %5188 = vmatmul.mubr.bf16.gmra.mxu0 %v5153
    %v5189 = vpop.f32.mrf.mxu0
    %v5190 = vadd.f32 %v5134, %v5189
    %v5191 = vpop.f32.mrf.mxu0
    %v5192 = vpop.f32.mrf.mxu0
    %v5193 = vadd.f32 %v5137, %v5192
    %v5194 = vpop.f32.mrf.mxu0
    %5195 = vdwg.mxu0
    %s5196 = scalar_lea.vmem [#allocation14], 1
    %v5197 = vld [vmem:[%s5196] sm:$0x1]
    %v5199 = vlaneseq
    %v5200 = vshrl.u32 %v5199, 7
    %v5201 = vsub.s32 0, %v5200
    %v5202 = vrot.slane %v5197, %v5201
    %v5204 = vmul.f32 %v4848, %v5202
    %v5205 = vmul.f32 %v4855, %v5202
    %v5206 = vadd.f32 %v5190, %v5204
    %v5207 = vadd.f32 %v5193, %v5205
    %s5208 = scalar_lea.vmem [#allocation16], 4
    %v5209 = vld [vmem:[%s5208] sm:$0xf]
    %v5210 = vpack.c.bf16 %v5071, %v5069
    %v5212 = vsel %vm394, %v5210, 0
    %v5215 = vsel %vm398, %v5209, 0
    %5217 = vmatprep.subr.bf16.mxu0 0
    %5218 = vmatpush1.bf16.msra.mxu0 0
    %5219 = vmatprep.subr.bf16.mxu0 0
    %5220 = vmatpush1.bf16.msra.mxu0 0
    %5221 = vmatprep.subr.bf16.mxu0 0
    %5222 = vmatpush1.bf16.msra.mxu0 0
    %5223 = vmatprep.subr.bf16.mxu0 0
    %5224 = vmatpush1.bf16.msra.mxu0 0
    %5225 = vmatprep.subr.bf16.mxu0 0
    %5226 = vmatpush1.bf16.msra.mxu0 0
    %5227 = vmatprep.subr.bf16.mxu0 0
    %5228 = vmatpush1.bf16.msra.mxu0 0
    %5229 = vmatprep.subr.bf16.mxu0 0
    %5230 = vmatpush1.bf16.msra.mxu0 0
    %5231 = vmatprep.subr.bf16.mxu0 0
    %5232 = vmatpush1.bf16.msra.mxu0 %v5215
    %5233 = vmatprep.subr.bf16.mxu0 0
    %5234 = vmatpush2.bf16.msra.mxu0 0
    %5235 = vmatprep.subr.bf16.mxu0 0
    %5236 = vmatpush2.bf16.msra.mxu0 0
    %5237 = vmatprep.subr.bf16.mxu0 0
    %5238 = vmatpush2.bf16.msra.mxu0 0
    %5239 = vmatprep.subr.bf16.mxu0 0
    %5240 = vmatpush2.bf16.msra.mxu0 0
    %5241 = vmatprep.subr.bf16.mxu0 0
    %5242 = vmatpush2.bf16.msra.mxu0 0
    %5243 = vmatprep.subr.bf16.mxu0 0
    %5244 = vmatpush2.bf16.msra.mxu0 0
    %5245 = vmatprep.subr.bf16.mxu0 0
    %5246 = vmatpush2.bf16.msra.mxu0 0
    %5247 = vmatprep.subr.bf16.mxu0 0
    %5248 = vmatpush2.bf16.msra.mxu0 0
    %5249 = vmatprep.mubr.bf16.mxu0 0
    %5250 = vmatmul.mubr.bf16.gmra.mxu0 %v5212
    %v5251 = vpop.f32.mrf.mxu0
    %v5252 = vadd.f32 0.0, %v5251
    %v5253 = vpop.f32.mrf.mxu0
    %v5254 = vpop.f32.mrf.mxu0
    %v5255 = vadd.f32 0.0, %v5254
    %v5256 = vpop.f32.mrf.mxu0
    %5257 = vdwg.mxu0
    %v5258 = vadd.f32 %v5206, %v5252
    %v5259 = vadd.f32 %v5207, %v5255
    %s5260 = scalar_lea.vmem %s39, 16
    %v5261 = vld [vmem:[%s5260] sm:$0xf]
    %v5262 = vld [vmem:[%s5260 + $0x4] sm:$0xf]
    %v5263 = vld [vmem:[%s5260 + $0x8] sm:$0xf]
    %v5264 = vld [vmem:[%s5260 + $0xc] sm:$0xf]
    %v5265 = vpack.c.bf16 %v2486, %v2483
    %v5270 = vunpack.c.l.b16 %v5261
    %v5271 = vunpack.c.l.b16 %v5262
    %v5272 = vunpack.c.l.b16 %v5263
    %v5273 = vunpack.c.l.b16 %v5264
    %v5274 = vpack.c.b16 %v5271, %v5270
    %v5275 = vpack.c.b16 %v5273, %v5272
    %v5279 = vsel %vm473, %v5265, 0
    %5281 = vmatprep.subr.bf16.mxu0 0
    %5282 = vmatpush1.bf16.msra.mxu0 0
    %5283 = vmatprep.subr.bf16.mxu0 0
    %5284 = vmatpush1.bf16.msra.mxu0 0
    %5285 = vmatprep.subr.bf16.mxu0 0
    %5286 = vmatpush1.bf16.msra.mxu0 0
    %5287 = vmatprep.subr.bf16.mxu0 0
    %5288 = vmatpush1.bf16.msra.mxu0 0
    %5289 = vmatprep.subr.bf16.mxu0 0
    %5290 = vmatpush1.bf16.msra.mxu0 0
    %5291 = vmatprep.subr.bf16.mxu0 0
    %5292 = vmatpush1.bf16.msra.mxu0 0
    %5293 = vmatprep.subr.bf16.mxu0 0
    %5294 = vmatpush1.bf16.msra.mxu0 %v5275
    %5295 = vmatprep.subr.bf16.mxu0 0
    %5296 = vmatpush1.bf16.msra.mxu0 %v5274
    %5297 = vmatprep.subr.bf16.mxu0 0
    %5298 = vmatpush2.bf16.msra.mxu0 0
    %5299 = vmatprep.subr.bf16.mxu0 0
    %5300 = vmatpush2.bf16.msra.mxu0 0
    %5301 = vmatprep.subr.bf16.mxu0 0
    %5302 = vmatpush2.bf16.msra.mxu0 0
    %5303 = vmatprep.subr.bf16.mxu0 0
    %5304 = vmatpush2.bf16.msra.mxu0 0
    %5305 = vmatprep.subr.bf16.mxu0 0
    %5306 = vmatpush2.bf16.msra.mxu0 0
    %5307 = vmatprep.subr.bf16.mxu0 0
    %5308 = vmatpush2.bf16.msra.mxu0 0
    %5309 = vmatprep.subr.bf16.mxu0 0
    %5310 = vmatpush2.bf16.msra.mxu0 0
    %5311 = vmatprep.subr.bf16.mxu0 0
    %5312 = vmatpush2.bf16.msra.mxu0 0
    %5313 = vmatprep.mubr.bf16.mxu0 0
    %5314 = vmatmul.mubr.bf16.gmra.mxu0 %v5279
    %v5315 = vpop.f32.mrf.mxu0
    %v5316 = vadd.f32 0.0, %v5315
    %v5317 = vpop.f32.mrf.mxu0
    %v5318 = vpop.f32.mrf.mxu0
    %v5319 = vadd.f32 0.0, %v5318
    %v5320 = vpop.f32.mrf.mxu0
    %5321 = vdwg.mxu0
    %v5322 = vadd.f32 %v5258, %v5316
    %v5323 = vadd.f32 %v5259, %v5319
    %s5324 = scalar_lea.vmem [#allocation17], 1
    %v5325 = vld [vmem:[%s5324] sm:$0x1]
    %v5327 = vlaneseq
    %v5328 = vshrl.u32 %v5327, 7
    %v5329 = vsub.s32 0, %v5328
    %v5330 = vrot.slane %v5325, %v5329
    %v5332 = vadd.f32 %v5322, %v5330
    %v5333 = vadd.f32 %v5323, %v5330
    %v5334 = vxor.u32 %v5332, 2147483648
    %v5335 = vxor.u32 %v5333, 2147483648
    %v5336 = vmul.f32 %v5334, 1.442695
    %v5337 = vpow.pop %v5336
    %v5338 = vmul.f32 %v5335, 1.442695
    %v5339 = vpow.pop %v5338
    %v5340 = vadd.f32 %v5337, 1.0
    %v5341 = vadd.f32 %v5339, 1.0
    %v5342 = vrcp.pop %v5340
    %v5343 = vmul.f32 1.0, %v5342
    %v5344 = vrcp.pop %v5341
    %v5345 = vmul.f32 1.0, %v5344
    %v5346 = vmul.f32 %v5332, %v5343
    %v5347 = vmul.f32 %v5333, %v5345
    %s5348 = scalar_lea.vmem %s47, 16
    %v5349 = vld [vmem:[%s5348] sm:$0xf]
    %v5350 = vld [vmem:[%s5348 + $0x4] sm:$0xf]
    %v5351 = vld [vmem:[%s5348 + $0x8] sm:$0xf]
    %v5352 = vld [vmem:[%s5348 + $0xc] sm:$0xf]
    %v5353 = vpack.c.bf16 %v5347, %v5346
    %s5354 = scalar_lea.vmem [#allocation20], 1
    %v5355 = vld [vmem:[%s5354] sm:$0x1]
    %v5357 = vlaneseq
    %v5358 = vshrl.u32 %v5357, 7
    %v5359 = vsub.s32 0, %v5358
    %v5360 = vrot.slane %v5355, %v5359
    %v5366 = vunpack.c.l.b16 %v5349
    %v5367 = vunpack.c.l.b16 %v5350
    %v5368 = vunpack.c.l.b16 %v5351
    %v5369 = vunpack.c.l.b16 %v5352
    %v5370 = vpack.c.b16 %v5367, %v5366
    %v5371 = vpack.c.b16 %v5369, %v5368
    %v5375 = vsel %vm473, %v5353, 0
    %5377 = vmatprep.subr.bf16.mxu0 0
    %5378 = vmatpush1.bf16.msra.mxu0 0
    %5379 = vmatprep.subr.bf16.mxu0 0
    %5380 = vmatpush1.bf16.msra.mxu0 0
    %5381 = vmatprep.subr.bf16.mxu0 0
    %5382 = vmatpush1.bf16.msra.mxu0 0
    %5383 = vmatprep.subr.bf16.mxu0 0
    %5384 = vmatpush1.bf16.msra.mxu0 0
    %5385 = vmatprep.subr.bf16.mxu0 0
    %5386 = vmatpush1.bf16.msra.mxu0 0
    %5387 = vmatprep.subr.bf16.mxu0 0
    %5388 = vmatpush1.bf16.msra.mxu0 0
    %5389 = vmatprep.subr.bf16.mxu0 0
    %5390 = vmatpush1.bf16.msra.mxu0 %v5371
    %5391 = vmatprep.subr.bf16.mxu0 0
    %5392 = vmatpush1.bf16.msra.mxu0 %v5370
    %5393 = vmatprep.subr.bf16.mxu0 0
    %5394 = vmatpush2.bf16.msra.mxu0 0
    %5395 = vmatprep.subr.bf16.mxu0 0
    %5396 = vmatpush2.bf16.msra.mxu0 0
    %5397 = vmatprep.subr.bf16.mxu0 0
    %5398 = vmatpush2.bf16.msra.mxu0 0
    %5399 = vmatprep.subr.bf16.mxu0 0
    %5400 = vmatpush2.bf16.msra.mxu0 0
    %5401 = vmatprep.subr.bf16.mxu0 0
    %5402 = vmatpush2.bf16.msra.mxu0 0
    %5403 = vmatprep.subr.bf16.mxu0 0
    %5404 = vmatpush2.bf16.msra.mxu0 0
    %5405 = vmatprep.subr.bf16.mxu0 0
    %5406 = vmatpush2.bf16.msra.mxu0 0
    %5407 = vmatprep.subr.bf16.mxu0 0
    %5408 = vmatpush2.bf16.msra.mxu0 0
    %5409 = vmatprep.mubr.bf16.mxu0 0
    %5410 = vmatmul.mubr.bf16.gmra.mxu0 %v5375
    %v5411 = vpop.f32.mrf.mxu0
    %v5412 = vadd.f32 %v5360, %v5411
    %v5413 = vpop.f32.mrf.mxu0
    %v5414 = vpop.f32.mrf.mxu0
    %v5415 = vadd.f32 %v5360, %v5414
    %v5416 = vpop.f32.mrf.mxu0
    %5417 = vdwg.mxu0
    %s5418 = scalar_lea.vmem %s43, 16
    %v5419 = vld [vmem:[%s5418] sm:$0xf]
    %v5420 = vld [vmem:[%s5418 + $0x4] sm:$0xf]
    %v5421 = vld [vmem:[%s5418 + $0x8] sm:$0xf]
    %v5422 = vld [vmem:[%s5418 + $0xc] sm:$0xf]
    %v5423 = vpack.c.bf16 %v5415, %v5412
    %v5428 = vunpack.c.l.b16 %v5419
    %v5429 = vunpack.c.l.b16 %v5420
    %v5430 = vunpack.c.l.b16 %v5421
    %v5431 = vunpack.c.l.b16 %v5422
    %v5432 = vpack.c.b16 %v5429, %v5428
    %v5433 = vpack.c.b16 %v5431, %v5430
    %v5437 = vsel %vm473, %v5423, 0
    %5439 = vmatprep.subr.bf16.mxu0 0
    %5440 = vmatpush1.bf16.msra.mxu0 0
    %5441 = vmatprep.subr.bf16.mxu0 0
    %5442 = vmatpush1.bf16.msra.mxu0 0
    %5443 = vmatprep.subr.bf16.mxu0 0
    %5444 = vmatpush1.bf16.msra.mxu0 0
    %5445 = vmatprep.subr.bf16.mxu0 0
    %5446 = vmatpush1.bf16.msra.mxu0 0
    %5447 = vmatprep.subr.bf16.mxu0 0
    %5448 = vmatpush1.bf16.msra.mxu0 0
    %5449 = vmatprep.subr.bf16.mxu0 0
    %5450 = vmatpush1.bf16.msra.mxu0 0
    %5451 = vmatprep.subr.bf16.mxu0 0
    %5452 = vmatpush1.bf16.msra.mxu0 %v5433
    %5453 = vmatprep.subr.bf16.mxu0 0
    %5454 = vmatpush1.bf16.msra.mxu0 %v5432
    %5455 = vmatprep.subr.bf16.mxu0 0
    %5456 = vmatpush2.bf16.msra.mxu0 0
    %5457 = vmatprep.subr.bf16.mxu0 0
    %5458 = vmatpush2.bf16.msra.mxu0 0
    %5459 = vmatprep.subr.bf16.mxu0 0
    %5460 = vmatpush2.bf16.msra.mxu0 0
    %5461 = vmatprep.subr.bf16.mxu0 0
    %5462 = vmatpush2.bf16.msra.mxu0 0
    %5463 = vmatprep.subr.bf16.mxu0 0
    %5464 = vmatpush2.bf16.msra.mxu0 0
    %5465 = vmatprep.subr.bf16.mxu0 0
    %5466 = vmatpush2.bf16.msra.mxu0 0
    %5467 = vmatprep.subr.bf16.mxu0 0
    %5468 = vmatpush2.bf16.msra.mxu0 0
    %5469 = vmatprep.subr.bf16.mxu0 0
    %5470 = vmatpush2.bf16.msra.mxu0 0
    %5471 = vmatprep.mubr.bf16.mxu0 0
    %5472 = vmatmul.mubr.bf16.gmra.mxu0 %v5437
    %v5473 = vpop.f32.mrf.mxu0
    %v5474 = vadd.f32 0.0, %v5473
    %v5475 = vpop.f32.mrf.mxu0
    %v5476 = vpop.f32.mrf.mxu0
    %v5477 = vadd.f32 0.0, %v5476
    %v5478 = vpop.f32.mrf.mxu0
    %5479 = vdwg.mxu0
    %5482 = vrot.lane.b32.xlu0 %v5474, 32
    %v5483 = vpop.permute.xlu0 %5482
    %5484 = vrot.lane.b32.xlu0 %v5477, 32
    %v5485 = vpop.permute.xlu0 %5484
    %v5488 = vadd.f32 %v5332, %v5483
    %v5489 = vadd.f32 %v5333, %v5485
    %v5490 = vxor.u32 %v5488, 2147483648
    %v5491 = vxor.u32 %v5489, 2147483648
    %v5492 = vmul.f32 %v5490, 1.442695
    %v5493 = vpow.pop %v5492
    %v5494 = vmul.f32 %v5491, 1.442695
    %v5495 = vpow.pop %v5494
    %v5496 = vadd.f32 %v5493, 1.0
    %v5497 = vadd.f32 %v5495, 1.0
    %v5498 = vrcp.pop %v5496
    %v5499 = vmul.f32 1.0, %v5498
    %v5500 = vrcp.pop %v5497
    %v5501 = vmul.f32 1.0, %v5500
    %v5502 = vmul.f32 %v5488, %v5499
    %v5503 = vmul.f32 %v5489, %v5501
    %s5504 = scalar_lea.vmem [#allocation22], 16
    %v5505 = vld [vmem:[%s5504] sm:$0xf]
    %v5506 = vld [vmem:[%s5504 + $0x4] sm:$0xf]
    %v5507 = vld [vmem:[%s5504 + $0x8] sm:$0xf]
    %v5508 = vld [vmem:[%s5504 + $0xc] sm:$0xf]
    %v5509 = vpack.c.bf16 %v5503, %v5502
    %s5510 = scalar_lea.vmem [#allocation23], 1
    %v5511 = vld [vmem:[%s5510] sm:$0x1]
    %v5513 = vlaneseq
    %v5514 = vshrl.u32 %v5513, 7
    %v5515 = vsub.s32 0, %v5514
    %v5516 = vrot.slane %v5511, %v5515
    %5519 = vrot.lane.b32.xlu0 %v5509, 96
    %v5520 = vpop.permute.xlu0 %5519
    %v5525 = vunpack.c.l.b16 %v5505
    %v5526 = vunpack.c.l.b16 %v5506
    %v5527 = vunpack.c.l.b16 %v5507
    %v5528 = vunpack.c.l.b16 %v5508
    %v5529 = vpack.c.b16 %v5526, %v5525
    %v5530 = vpack.c.b16 %v5528, %v5527
    %v5534 = vsel %vm473, %v5520, 0
    %5536 = vmatprep.subr.bf16.mxu0 0
    %5537 = vmatpush1.bf16.msra.mxu0 0
    %5538 = vmatprep.subr.bf16.mxu0 0
    %5539 = vmatpush1.bf16.msra.mxu0 0
    %5540 = vmatprep.subr.bf16.mxu0 0
    %5541 = vmatpush1.bf16.msra.mxu0 0
    %5542 = vmatprep.subr.bf16.mxu0 0
    %5543 = vmatpush1.bf16.msra.mxu0 0
    %5544 = vmatprep.subr.bf16.mxu0 0
    %5545 = vmatpush1.bf16.msra.mxu0 0
    %5546 = vmatprep.subr.bf16.mxu0 0
    %5547 = vmatpush1.bf16.msra.mxu0 0
    %5548 = vmatprep.subr.bf16.mxu0 0
    %5549 = vmatpush1.bf16.msra.mxu0 %v5530
    %5550 = vmatprep.subr.bf16.mxu0 0
    %5551 = vmatpush1.bf16.msra.mxu0 %v5529
    %5552 = vmatprep.subr.bf16.mxu0 0
    %5553 = vmatpush2.bf16.msra.mxu0 0
    %5554 = vmatprep.subr.bf16.mxu0 0
    %5555 = vmatpush2.bf16.msra.mxu0 0
    %5556 = vmatprep.subr.bf16.mxu0 0
    %5557 = vmatpush2.bf16.msra.mxu0 0
    %5558 = vmatprep.subr.bf16.mxu0 0
    %5559 = vmatpush2.bf16.msra.mxu0 0
    %5560 = vmatprep.subr.bf16.mxu0 0
    %5561 = vmatpush2.bf16.msra.mxu0 0
    %5562 = vmatprep.subr.bf16.mxu0 0
    %5563 = vmatpush2.bf16.msra.mxu0 0
    %5564 = vmatprep.subr.bf16.mxu0 0
    %5565 = vmatpush2.bf16.msra.mxu0 0
    %5566 = vmatprep.subr.bf16.mxu0 0
    %5567 = vmatpush2.bf16.msra.mxu0 0
    %5568 = vmatprep.mubr.bf16.mxu0 0
    %5569 = vmatmul.mubr.bf16.gmra.mxu0 %v5534
    %v5570 = vpop.f32.mrf.mxu0
    %v5571 = vadd.f32 %v5516, %v5570
    %v5572 = vpop.f32.mrf.mxu0
    %v5573 = vpop.f32.mrf.mxu0
    %v5574 = vadd.f32 %v5516, %v5573
    %v5575 = vpop.f32.mrf.mxu0
    %5576 = vdwg.mxu0
    %s5577 = scalar_lea.vmem [#allocation19], 1
    %v5578 = vld [vmem:[%s5577] sm:$0x1]
    %v5580 = vlaneseq
    %v5581 = vshrl.u32 %v5580, 7
    %v5582 = vsub.s32 0, %v5581
    %v5583 = vrot.slane %v5578, %v5582
    %5584 = vrot.lane.b32.xlu0 %v5583, 32
    %v5585 = vpop.permute.xlu0 %5584
    %v5587 = vadd.f32 %v5474, %v5585
    %v5588 = vadd.f32 %v5477, %v5585
    %v5589 = vxor.u32 %v5587, 2147483648
    %v5590 = vxor.u32 %v5588, 2147483648
    %v5591 = vmul.f32 %v5589, 1.442695
    %v5592 = vpow.pop %v5591
    %v5593 = vmul.f32 %v5590, 1.442695
    %v5594 = vpow.pop %v5593
    %v5595 = vadd.f32 %v5592, 1.0
    %v5596 = vadd.f32 %v5594, 1.0
    %v5597 = vrcp.pop %v5595
    %v5598 = vmul.f32 1.0, %v5597
    %v5599 = vrcp.pop %v5596
    %v5600 = vmul.f32 1.0, %v5599
    %v5601 = vmul.f32 %v5587, %v5598
    %v5602 = vmul.f32 %v5588, %v5600
    %s5603 = scalar_lea.vmem %s55, 32
    %v5604 = vld [vmem:[%s5603] sm:$0xf]
    %v5605 = vld [vmem:[%s5603 + $0x4] sm:$0xf]
    %v5606 = vld [vmem:[%s5603 + $0x8] sm:$0xf]
    %v5607 = vld [vmem:[%s5603 + $0xc] sm:$0xf]
    %v5608 = vld [vmem:[%s5603 + $0x10] sm:$0xf]
    %v5609 = vld [vmem:[%s5603 + $0x14] sm:$0xf]
    %v5610 = vld [vmem:[%s5603 + $0x18] sm:$0xf]
    %v5611 = vld [vmem:[%s5603 + $0x1c] sm:$0xf]
    %v5612 = vpack.c.bf16 %v5602, %v5601
    %s5613 = scalar_lea.vmem %s57, 1
    %v5614 = vld [vmem:[%s5613] sm:$0x1]
    %v5616 = vlaneseq
    %v5617 = vshrl.u32 %v5616, 7
    %v5618 = vsub.s32 0, %v5617
    %v5619 = vrot.slane %v5614, %v5618
    %5622 = vrot.lane.b32.xlu0 %v5612, 96
    %v5623 = vpop.permute.xlu0 %5622
    %v5632 = vunpack.c.l.b16 %v5604
    %v5633 = vunpack.c.l.b16 %v5605
    %v5634 = vunpack.c.l.b16 %v5606
    %v5635 = vunpack.c.l.b16 %v5607
    %v5636 = vunpack.c.l.b16 %v5608
    %v5637 = vunpack.c.l.b16 %v5609
    %v5638 = vunpack.c.l.b16 %v5610
    %v5639 = vunpack.c.l.b16 %v5611
    %v5640 = vpack.c.b16 %v5633, %v5632
    %v5641 = vpack.c.b16 %v5635, %v5634
    %v5642 = vpack.c.b16 %v5637, %v5636
    %v5643 = vpack.c.b16 %v5639, %v5638
    %v5649 = vsel %vm2557, %v5623, 0
    %5651 = vmatprep.subr.bf16.mxu0 0
    %5652 = vmatpush1.bf16.msra.mxu0 0
    %5653 = vmatprep.subr.bf16.mxu0 0
    %5654 = vmatpush1.bf16.msra.mxu0 0
    %5655 = vmatprep.subr.bf16.mxu0 0
    %5656 = vmatpush1.bf16.msra.mxu0 0
    %5657 = vmatprep.subr.bf16.mxu0 0
    %5658 = vmatpush1.bf16.msra.mxu0 0
    %5659 = vmatprep.subr.bf16.mxu0 0
    %5660 = vmatpush1.bf16.msra.mxu0 %v5643
    %5661 = vmatprep.subr.bf16.mxu0 0
    %5662 = vmatpush1.bf16.msra.mxu0 %v5642
    %5663 = vmatprep.subr.bf16.mxu0 0
    %5664 = vmatpush1.bf16.msra.mxu0 %v5641
    %5665 = vmatprep.subr.bf16.mxu0 0
    %5666 = vmatpush1.bf16.msra.mxu0 %v5640
    %5667 = vmatprep.subr.bf16.mxu0 0
    %5668 = vmatpush2.bf16.msra.mxu0 0
    %5669 = vmatprep.subr.bf16.mxu0 0
    %5670 = vmatpush2.bf16.msra.mxu0 0
    %5671 = vmatprep.subr.bf16.mxu0 0
    %5672 = vmatpush2.bf16.msra.mxu0 0
    %5673 = vmatprep.subr.bf16.mxu0 0
    %5674 = vmatpush2.bf16.msra.mxu0 0
    %5675 = vmatprep.subr.bf16.mxu0 0
    %5676 = vmatpush2.bf16.msra.mxu0 0
    %5677 = vmatprep.subr.bf16.mxu0 0
    %5678 = vmatpush2.bf16.msra.mxu0 0
    %5679 = vmatprep.subr.bf16.mxu0 0
    %5680 = vmatpush2.bf16.msra.mxu0 0
    %5681 = vmatprep.subr.bf16.mxu0 0
    %5682 = vmatpush2.bf16.msra.mxu0 0
    %5683 = vmatprep.mubr.bf16.mxu0 0
    %5684 = vmatmul.mubr.bf16.gmra.mxu0 %v5649
    %v5685 = vpop.f32.mrf.mxu0
    %v5686 = vadd.f32 %v5619, %v5685
    %v5687 = vpop.f32.mrf.mxu0
    %v5688 = vpop.f32.mrf.mxu0
    %v5689 = vadd.f32 %v5619, %v5688
    %v5690 = vpop.f32.mrf.mxu0
    %5691 = vdwg.mxu0
    %v5692 = vxor.u32 %v5686, 2147483648
    %v5693 = vxor.u32 %v5689, 2147483648
    %v5694 = vmul.f32 %v5692, 1.442695
    %v5695 = vpow.pop %v5694
    %v5696 = vmul.f32 %v5693, 1.442695
    %v5697 = vpow.pop %v5696
    %v5698 = vadd.f32 %v5695, 1.0
    %v5699 = vadd.f32 %v5697, 1.0
    %v5700 = vrcp.pop %v5698
    %v5701 = vmul.f32 1.0, %v5700
    %v5702 = vrcp.pop %v5699
    %v5703 = vmul.f32 1.0, %v5702
    %5705 = vset.pattern.permute.xlu0 0
    %5706 = vperm.xlu0 %5705, %v5701
    %v5707 = vpop.permute.xlu0 %5706
    %5710 = vset.pattern.permute.xlu0 0
    %5711 = vperm.xlu0 %5710, %v5703
    %v5712 = vpop.permute.xlu0 %5711
    %v5714 = vmul.f32 %v5412, %v5707
    %v5715 = vmul.f32 %v5415, %v5712
    %v5716 = vadd.f32 %v4848, 1.0
    %v5717 = vadd.f32 %v4855, 1.0
    %v5718 = vrcp.pop %v5716
    %v5719 = vmul.f32 %v4825, %v5718
    %v5720 = vrcp.pop %v5717
    %v5721 = vmul.f32 %v4831, %v5720
    %5723 = vset.pattern.permute.xlu0 1
    %5724 = vperm.xlu0 %5723, %v5686
    %v5725 = vpop.permute.xlu0 %5724
    %5728 = vset.pattern.permute.xlu0 1
    %5729 = vperm.xlu0 %5728, %v5689
    %v5730 = vpop.permute.xlu0 %5729
    %v5732 = vmul.f32 %v5719, %v5725
    %v5733 = vmul.f32 %v5721, %v5730
    %5734 = vmatprep.subr.mxu0 0.0
    %5735 = vmatpush1.msra.mxu0 0.0
    %5736 = vmatprep.subr.mxu0 0.0
    %5737 = vmatpush1.msra.mxu0 0.0
    %5738 = vmatprep.subr.mxu0 0.0
    %5739 = vmatpush1.msra.mxu0 0.0
    %5740 = vmatprep.subr.mxu0 0.0
    %5741 = vmatpush1.msra.mxu0 0.0
    %5742 = vmatprep.subr.mxu0 0.0
    %5743 = vmatpush1.msra.mxu0 0.0
    %5744 = vmatprep.subr.mxu0 0.0
    %5745 = vmatpush1.msra.mxu0 0.0
    %5746 = vmatprep.subr.mxu0 0.0
    %5747 = vmatpush1.msra.mxu0 0.0
    %5748 = vmatprep.subr.mxu0 0.0
    %5749 = vmatpush1.msra.mxu0 0.0
    %5750 = vmatprep.subr.mxu0 0.0
    %5751 = vmatpush1.msra.mxu0 0.0
    %5752 = vmatprep.subr.mxu0 0.0
    %5753 = vmatpush1.msra.mxu0 0.0
    %5754 = vmatprep.subr.mxu0 0.0
    %5755 = vmatpush1.msra.mxu0 0.0
    %5756 = vmatprep.subr.mxu0 0.0
    %5757 = vmatpush1.msra.mxu0 0.0
    %5758 = vmatprep.subr.mxu0 0.0
    %5759 = vmatpush1.msra.mxu0 0.0
    %5760 = vmatprep.subr.mxu0 0.0
    %5761 = vmatpush1.msra.mxu0 0.0
    %5762 = vmatprep.subr.mxu0 0.0
    %v5763 = vand.u32 %v5715, 4294901760
    %5764 = vmatpush1.msra.mxu0 %v5763
    %5765 = vmatprep.subr.mxu0 0.0
    %v5766 = vand.u32 %v5714, 4294901760
    %5767 = vmatpush1.msra.mxu0 %v5766
    %5768 = vmatprep.subr.mxu0 0.0
    %5769 = vmatpush2.msra.mxu0 0.0
    %5770 = vmatprep.subr.mxu0 0.0
    %5771 = vmatpush2.msra.mxu0 0.0
    %5772 = vmatprep.subr.mxu0 0.0
    %5773 = vmatpush2.msra.mxu0 0.0
    %5774 = vmatprep.subr.mxu0 0.0
    %5775 = vmatpush2.msra.mxu0 0.0
    %5776 = vmatprep.subr.mxu0 0.0
    %5777 = vmatpush2.msra.mxu0 0.0
    %5778 = vmatprep.subr.mxu0 0.0
    %5779 = vmatpush2.msra.mxu0 0.0
    %5780 = vmatprep.subr.mxu0 0.0
    %5781 = vmatpush2.msra.mxu0 0.0
    %5782 = vmatprep.subr.mxu0 0.0
    %5783 = vmatpush2.msra.mxu0 0.0
    %5784 = vmatprep.subr.mxu0 0.0
    %5785 = vmatpush2.msra.mxu0 0.0
    %5786 = vmatprep.subr.mxu0 0.0
    %5787 = vmatpush2.msra.mxu0 0.0
    %5788 = vmatprep.subr.mxu0 0.0
    %5789 = vmatpush2.msra.mxu0 0.0
    %5790 = vmatprep.subr.mxu0 0.0
    %5791 = vmatpush2.msra.mxu0 0.0
    %5792 = vmatprep.subr.mxu0 0.0
    %5793 = vmatpush2.msra.mxu0 0.0
    %5794 = vmatprep.subr.mxu0 0.0
    %5795 = vmatpush2.msra.mxu0 0.0
    %5796 = vmatprep.subr.mxu0 0.0
    %5797 = vmatpush2.msra.mxu0 0.0
    %5798 = vmatprep.subr.mxu0 0.0
    %5799 = vmatpush2.msra.mxu0 0.0
    %5800 = vmatprep.mubr.f32.mxu0 0.0
    %v5801 = vand.u32 %v2646, 4294901760
    %v5802 = vsub.f32 %v2646, %v5801
    %v5803 = vand.u32 %v5802, 4294901760
    %v5804 = vsub.f32 %v5802, %v5803
    %v5805 = vand.u32 %v5804, 4294901760
    %5806 = vmatmul.mubr.f32.gmra.mxu0 %v5805
    %v5807 = vpop.f32.mrf.mxu0
    %v5808 = vadd.f32 0.0, %v5807
    %v5809 = vpop.f32.mrf.mxu0
    %5810 = vdwg.mxu0
    %5811 = vmatprep.subr.mxu0 0.0
    %5812 = vmatpush1.msra.mxu0 0.0
    %5813 = vmatprep.subr.mxu0 0.0
    %5814 = vmatpush1.msra.mxu0 0.0
    %5815 = vmatprep.subr.mxu0 0.0
    %5816 = vmatpush1.msra.mxu0 0.0
    %5817 = vmatprep.subr.mxu0 0.0
    %5818 = vmatpush1.msra.mxu0 0.0
    %5819 = vmatprep.subr.mxu0 0.0
    %5820 = vmatpush1.msra.mxu0 0.0
    %5821 = vmatprep.subr.mxu0 0.0
    %5822 = vmatpush1.msra.mxu0 0.0
    %5823 = vmatprep.subr.mxu0 0.0
    %5824 = vmatpush1.msra.mxu0 0.0
    %5825 = vmatprep.subr.mxu0 0.0
    %5826 = vmatpush1.msra.mxu0 0.0
    %5827 = vmatprep.subr.mxu0 0.0
    %5828 = vmatpush1.msra.mxu0 0.0
    %5829 = vmatprep.subr.mxu0 0.0
    %5830 = vmatpush1.msra.mxu0 0.0
    %5831 = vmatprep.subr.mxu0 0.0
    %5832 = vmatpush1.msra.mxu0 0.0
    %5833 = vmatprep.subr.mxu0 0.0
    %5834 = vmatpush1.msra.mxu0 0.0
    %5835 = vmatprep.subr.mxu0 0.0
    %5836 = vmatpush1.msra.mxu0 0.0
    %5837 = vmatprep.subr.mxu0 0.0
    %5838 = vmatpush1.msra.mxu0 0.0
    %5839 = vmatprep.subr.mxu0 0.0
    %v5840 = vand.u32 %v5715, 4294901760
    %v5841 = vsub.f32 %v5715, %v5840
    %v5842 = vand.u32 %v5841, 4294901760
    %v5843 = vsub.f32 %v5841, %v5842
    %v5844 = vand.u32 %v5843, 4294901760
    %5845 = vmatpush1.msra.mxu0 %v5844
    %5846 = vmatprep.subr.mxu0 0.0
    %v5847 = vand.u32 %v5714, 4294901760
    %v5848 = vsub.f32 %v5714, %v5847
    %v5849 = vand.u32 %v5848, 4294901760
    %v5850 = vsub.f32 %v5848, %v5849
    %v5851 = vand.u32 %v5850, 4294901760
    %5852 = vmatpush1.msra.mxu0 %v5851
    %5853 = vmatprep.subr.mxu0 0.0
    %5854 = vmatpush2.msra.mxu0 0.0
    %5855 = vmatprep.subr.mxu0 0.0
    %5856 = vmatpush2.msra.mxu0 0.0
    %5857 = vmatprep.subr.mxu0 0.0
    %5858 = vmatpush2.msra.mxu0 0.0
    %5859 = vmatprep.subr.mxu0 0.0
    %5860 = vmatpush2.msra.mxu0 0.0
    %5861 = vmatprep.subr.mxu0 0.0
    %5862 = vmatpush2.msra.mxu0 0.0
    %5863 = vmatprep.subr.mxu0 0.0
    %5864 = vmatpush2.msra.mxu0 0.0
    %5865 = vmatprep.subr.mxu0 0.0
    %5866 = vmatpush2.msra.mxu0 0.0
    %5867 = vmatprep.subr.mxu0 0.0
    %5868 = vmatpush2.msra.mxu0 0.0
    %5869 = vmatprep.subr.mxu0 0.0
    %5870 = vmatpush2.msra.mxu0 0.0
    %5871 = vmatprep.subr.mxu0 0.0
    %5872 = vmatpush2.msra.mxu0 0.0
    %5873 = vmatprep.subr.mxu0 0.0
    %5874 = vmatpush2.msra.mxu0 0.0
    %5875 = vmatprep.subr.mxu0 0.0
    %5876 = vmatpush2.msra.mxu0 0.0
    %5877 = vmatprep.subr.mxu0 0.0
    %5878 = vmatpush2.msra.mxu0 0.0
    %5879 = vmatprep.subr.mxu0 0.0
    %5880 = vmatpush2.msra.mxu0 0.0
    %5881 = vmatprep.subr.mxu0 0.0
    %5882 = vmatpush2.msra.mxu0 0.0
    %5883 = vmatprep.subr.mxu0 0.0
    %5884 = vmatpush2.msra.mxu0 0.0
    %5885 = vmatprep.mubr.f32.mxu0 0.0
    %v5886 = vand.u32 %v2646, 4294901760
    %5887 = vmatmul.mubr.f32.gmra.mxu0 %v5886
    %v5888 = vpop.f32.mrf.mxu0
    %v5889 = vadd.f32 %v5808, %v5888
    %v5890 = vpop.f32.mrf.mxu0
    %5891 = vdwg.mxu0
    %5892 = vmatprep.subr.mxu0 0.0
    %5893 = vmatpush1.msra.mxu0 0.0
    %5894 = vmatprep.subr.mxu0 0.0
    %5895 = vmatpush1.msra.mxu0 0.0
    %5896 = vmatprep.subr.mxu0 0.0
    %5897 = vmatpush1.msra.mxu0 0.0
    %5898 = vmatprep.subr.mxu0 0.0
    %5899 = vmatpush1.msra.mxu0 0.0
    %5900 = vmatprep.subr.mxu0 0.0
    %5901 = vmatpush1.msra.mxu0 0.0
    %5902 = vmatprep.subr.mxu0 0.0
    %5903 = vmatpush1.msra.mxu0 0.0
    %5904 = vmatprep.subr.mxu0 0.0
    %5905 = vmatpush1.msra.mxu0 0.0
    %5906 = vmatprep.subr.mxu0 0.0
    %5907 = vmatpush1.msra.mxu0 0.0
    %5908 = vmatprep.subr.mxu0 0.0
    %5909 = vmatpush1.msra.mxu0 0.0
    %5910 = vmatprep.subr.mxu0 0.0
    %5911 = vmatpush1.msra.mxu0 0.0
    %5912 = vmatprep.subr.mxu0 0.0
    %5913 = vmatpush1.msra.mxu0 0.0
    %5914 = vmatprep.subr.mxu0 0.0
    %5915 = vmatpush1.msra.mxu0 0.0
    %5916 = vmatprep.subr.mxu0 0.0
    %5917 = vmatpush1.msra.mxu0 0.0
    %5918 = vmatprep.subr.mxu0 0.0
    %5919 = vmatpush1.msra.mxu0 0.0
    %5920 = vmatprep.subr.mxu0 0.0
    %v5921 = vand.u32 %v5715, 4294901760
    %v5922 = vsub.f32 %v5715, %v5921
    %5923 = vmatpush1.msra.mxu0 %v5922
    %5924 = vmatprep.subr.mxu0 0.0
    %v5925 = vand.u32 %v5714, 4294901760
    %v5926 = vsub.f32 %v5714, %v5925
    %5927 = vmatpush1.msra.mxu0 %v5926
    %5928 = vmatprep.subr.mxu0 0.0
    %5929 = vmatpush2.msra.mxu0 0.0
    %5930 = vmatprep.subr.mxu0 0.0
    %5931 = vmatpush2.msra.mxu0 0.0
    %5932 = vmatprep.subr.mxu0 0.0
    %5933 = vmatpush2.msra.mxu0 0.0
    %5934 = vmatprep.subr.mxu0 0.0
    %5935 = vmatpush2.msra.mxu0 0.0
    %5936 = vmatprep.subr.mxu0 0.0
    %5937 = vmatpush2.msra.mxu0 0.0
    %5938 = vmatprep.subr.mxu0 0.0
    %5939 = vmatpush2.msra.mxu0 0.0
    %5940 = vmatprep.subr.mxu0 0.0
    %5941 = vmatpush2.msra.mxu0 0.0
    %5942 = vmatprep.subr.mxu0 0.0
    %5943 = vmatpush2.msra.mxu0 0.0
    %5944 = vmatprep.subr.mxu0 0.0
    %5945 = vmatpush2.msra.mxu0 0.0
    %5946 = vmatprep.subr.mxu0 0.0
    %5947 = vmatpush2.msra.mxu0 0.0
    %5948 = vmatprep.subr.mxu0 0.0
    %5949 = vmatpush2.msra.mxu0 0.0
    %5950 = vmatprep.subr.mxu0 0.0
    %5951 = vmatpush2.msra.mxu0 0.0
    %5952 = vmatprep.subr.mxu0 0.0
    %5953 = vmatpush2.msra.mxu0 0.0
    %5954 = vmatprep.subr.mxu0 0.0
    %5955 = vmatpush2.msra.mxu0 0.0
    %5956 = vmatprep.subr.mxu0 0.0
    %5957 = vmatpush2.msra.mxu0 0.0
    %5958 = vmatprep.subr.mxu0 0.0
    %5959 = vmatpush2.msra.mxu0 0.0
    %5960 = vmatprep.mubr.f32.mxu0 0.0
    %v5961 = vand.u32 %v2646, 4294901760
    %v5962 = vsub.f32 %v2646, %v5961
    %5963 = vmatmul.mubr.f32.gmra.mxu0 %v5962
    %v5964 = vpop.f32.mrf.mxu0
    %v5965 = vadd.f32 %v5889, %v5964
    %v5966 = vpop.f32.mrf.mxu0
    %5967 = vdwg.mxu0
    %5968 = vmatprep.subr.mxu0 0.0
    %5969 = vmatpush1.msra.mxu0 0.0
    %5970 = vmatprep.subr.mxu0 0.0
    %5971 = vmatpush1.msra.mxu0 0.0
    %5972 = vmatprep.subr.mxu0 0.0
    %5973 = vmatpush1.msra.mxu0 0.0
    %5974 = vmatprep.subr.mxu0 0.0
    %5975 = vmatpush1.msra.mxu0 0.0
    %5976 = vmatprep.subr.mxu0 0.0
    %5977 = vmatpush1.msra.mxu0 0.0
    %5978 = vmatprep.subr.mxu0 0.0
    %5979 = vmatpush1.msra.mxu0 0.0
    %5980 = vmatprep.subr.mxu0 0.0
    %5981 = vmatpush1.msra.mxu0 0.0
    %5982 = vmatprep.subr.mxu0 0.0
    %5983 = vmatpush1.msra.mxu0 0.0
    %5984 = vmatprep.subr.mxu0 0.0
    %5985 = vmatpush1.msra.mxu0 0.0
    %5986 = vmatprep.subr.mxu0 0.0
    %5987 = vmatpush1.msra.mxu0 0.0
    %5988 = vmatprep.subr.mxu0 0.0
    %5989 = vmatpush1.msra.mxu0 0.0
    %5990 = vmatprep.subr.mxu0 0.0
    %5991 = vmatpush1.msra.mxu0 0.0
    %5992 = vmatprep.subr.mxu0 0.0
    %5993 = vmatpush1.msra.mxu0 0.0
    %5994 = vmatprep.subr.mxu0 0.0
    %5995 = vmatpush1.msra.mxu0 0.0
    %5996 = vmatprep.subr.mxu0 0.0
    %v5997 = vand.u32 %v5715, 4294901760
    %5998 = vmatpush1.msra.mxu0 %v5997
    %5999 = vmatprep.subr.mxu0 0.0
    %v6000 = vand.u32 %v5714, 4294901760
    %6001 = vmatpush1.msra.mxu0 %v6000
    %6002 = vmatprep.subr.mxu0 0.0
    %6003 = vmatpush2.msra.mxu0 0.0
    %6004 = vmatprep.subr.mxu0 0.0
    %6005 = vmatpush2.msra.mxu0 0.0
    %6006 = vmatprep.subr.mxu0 0.0
    %6007 = vmatpush2.msra.mxu0 0.0
    %6008 = vmatprep.subr.mxu0 0.0
    %6009 = vmatpush2.msra.mxu0 0.0
    %6010 = vmatprep.subr.mxu0 0.0
    %6011 = vmatpush2.msra.mxu0 0.0
    %6012 = vmatprep.subr.mxu0 0.0
    %6013 = vmatpush2.msra.mxu0 0.0
    %6014 = vmatprep.subr.mxu0 0.0
    %6015 = vmatpush2.msra.mxu0 0.0
    %6016 = vmatprep.subr.mxu0 0.0
    %6017 = vmatpush2.msra.mxu0 0.0
    %6018 = vmatprep.subr.mxu0 0.0
    %6019 = vmatpush2.msra.mxu0 0.0
    %6020 = vmatprep.subr.mxu0 0.0
    %6021 = vmatpush2.msra.mxu0 0.0
    %6022 = vmatprep.subr.mxu0 0.0
    %6023 = vmatpush2.msra.mxu0 0.0
    %6024 = vmatprep.subr.mxu0 0.0
    %6025 = vmatpush2.msra.mxu0 0.0
    %6026 = vmatprep.subr.mxu0 0.0
    %6027 = vmatpush2.msra.mxu0 0.0
    %6028 = vmatprep.subr.mxu0 0.0
    %6029 = vmatpush2.msra.mxu0 0.0
    %6030 = vmatprep.subr.mxu0 0.0
    %6031 = vmatpush2.msra.mxu0 0.0
    %6032 = vmatprep.subr.mxu0 0.0
    %6033 = vmatpush2.msra.mxu0 0.0
    %6034 = vmatprep.mubr.f32.mxu0 0.0
    %v6035 = vand.u32 %v2646, 4294901760
    %v6036 = vsub.f32 %v2646, %v6035
    %v6037 = vand.u32 %v6036, 4294901760
    %6038 = vmatmul.mubr.f32.gmra.mxu0 %v6037
    %v6039 = vpop.f32.mrf.mxu0
    %v6040 = vadd.f32 %v5965, %v6039
    %v6041 = vpop.f32.mrf.mxu0
    %6042 = vdwg.mxu0
    %6043 = vmatprep.subr.mxu0 0.0
    %6044 = vmatpush1.msra.mxu0 0.0
    %6045 = vmatprep.subr.mxu0 0.0
    %6046 = vmatpush1.msra.mxu0 0.0
    %6047 = vmatprep.subr.mxu0 0.0
    %6048 = vmatpush1.msra.mxu0 0.0
    %6049 = vmatprep.subr.mxu0 0.0
    %6050 = vmatpush1.msra.mxu0 0.0
    %6051 = vmatprep.subr.mxu0 0.0
    %6052 = vmatpush1.msra.mxu0 0.0
    %6053 = vmatprep.subr.mxu0 0.0
    %6054 = vmatpush1.msra.mxu0 0.0
    %6055 = vmatprep.subr.mxu0 0.0
    %6056 = vmatpush1.msra.mxu0 0.0
    %6057 = vmatprep.subr.mxu0 0.0
    %6058 = vmatpush1.msra.mxu0 0.0
    %6059 = vmatprep.subr.mxu0 0.0
    %6060 = vmatpush1.msra.mxu0 0.0
    %6061 = vmatprep.subr.mxu0 0.0
    %6062 = vmatpush1.msra.mxu0 0.0
    %6063 = vmatprep.subr.mxu0 0.0
    %6064 = vmatpush1.msra.mxu0 0.0
    %6065 = vmatprep.subr.mxu0 0.0
    %6066 = vmatpush1.msra.mxu0 0.0
    %6067 = vmatprep.subr.mxu0 0.0
    %6068 = vmatpush1.msra.mxu0 0.0
    %6069 = vmatprep.subr.mxu0 0.0
    %6070 = vmatpush1.msra.mxu0 0.0
    %6071 = vmatprep.subr.mxu0 0.0
    %v6072 = vand.u32 %v5715, 4294901760
    %v6073 = vsub.f32 %v5715, %v6072
    %v6074 = vand.u32 %v6073, 4294901760
    %6075 = vmatpush1.msra.mxu0 %v6074
    %6076 = vmatprep.subr.mxu0 0.0
    %v6077 = vand.u32 %v5714, 4294901760
    %v6078 = vsub.f32 %v5714, %v6077
    %v6079 = vand.u32 %v6078, 4294901760
    %6080 = vmatpush1.msra.mxu0 %v6079
    %6081 = vmatprep.subr.mxu0 0.0
    %6082 = vmatpush2.msra.mxu0 0.0
    %6083 = vmatprep.subr.mxu0 0.0
    %6084 = vmatpush2.msra.mxu0 0.0
    %6085 = vmatprep.subr.mxu0 0.0
    %6086 = vmatpush2.msra.mxu0 0.0
    %6087 = vmatprep.subr.mxu0 0.0
    %6088 = vmatpush2.msra.mxu0 0.0
    %6089 = vmatprep.subr.mxu0 0.0
    %6090 = vmatpush2.msra.mxu0 0.0
    %6091 = vmatprep.subr.mxu0 0.0
    %6092 = vmatpush2.msra.mxu0 0.0
    %6093 = vmatprep.subr.mxu0 0.0
    %6094 = vmatpush2.msra.mxu0 0.0
    %6095 = vmatprep.subr.mxu0 0.0
    %6096 = vmatpush2.msra.mxu0 0.0
    %6097 = vmatprep.subr.mxu0 0.0
    %6098 = vmatpush2.msra.mxu0 0.0
    %6099 = vmatprep.subr.mxu0 0.0
    %6100 = vmatpush2.msra.mxu0 0.0
    %6101 = vmatprep.subr.mxu0 0.0
    %6102 = vmatpush2.msra.mxu0 0.0
    %6103 = vmatprep.subr.mxu0 0.0
    %6104 = vmatpush2.msra.mxu0 0.0
    %6105 = vmatprep.subr.mxu0 0.0
    %6106 = vmatpush2.msra.mxu0 0.0
    %6107 = vmatprep.subr.mxu0 0.0
    %6108 = vmatpush2.msra.mxu0 0.0
    %6109 = vmatprep.subr.mxu0 0.0
    %6110 = vmatpush2.msra.mxu0 0.0
    %6111 = vmatprep.subr.mxu0 0.0
    %6112 = vmatpush2.msra.mxu0 0.0
    %6113 = vmatprep.mubr.f32.mxu0 0.0
    %v6114 = vand.u32 %v2646, 4294901760
    %6115 = vmatmul.mubr.f32.gmra.mxu0 %v6114
    %v6116 = vpop.f32.mrf.mxu0
    %v6117 = vadd.f32 %v6040, %v6116
    %v6118 = vpop.f32.mrf.mxu0
    %6119 = vdwg.mxu0
    %6120 = vmatprep.subr.mxu0 0.0
    %6121 = vmatpush1.msra.mxu0 0.0
    %6122 = vmatprep.subr.mxu0 0.0
    %6123 = vmatpush1.msra.mxu0 0.0
    %6124 = vmatprep.subr.mxu0 0.0
    %6125 = vmatpush1.msra.mxu0 0.0
    %6126 = vmatprep.subr.mxu0 0.0
    %6127 = vmatpush1.msra.mxu0 0.0
    %6128 = vmatprep.subr.mxu0 0.0
    %6129 = vmatpush1.msra.mxu0 0.0
    %6130 = vmatprep.subr.mxu0 0.0
    %6131 = vmatpush1.msra.mxu0 0.0
    %6132 = vmatprep.subr.mxu0 0.0
    %6133 = vmatpush1.msra.mxu0 0.0
    %6134 = vmatprep.subr.mxu0 0.0
    %6135 = vmatpush1.msra.mxu0 0.0
    %6136 = vmatprep.subr.mxu0 0.0
    %6137 = vmatpush1.msra.mxu0 0.0
    %6138 = vmatprep.subr.mxu0 0.0
    %6139 = vmatpush1.msra.mxu0 0.0
    %6140 = vmatprep.subr.mxu0 0.0
    %6141 = vmatpush1.msra.mxu0 0.0
    %6142 = vmatprep.subr.mxu0 0.0
    %6143 = vmatpush1.msra.mxu0 0.0
    %6144 = vmatprep.subr.mxu0 0.0
    %6145 = vmatpush1.msra.mxu0 0.0
    %6146 = vmatprep.subr.mxu0 0.0
    %6147 = vmatpush1.msra.mxu0 0.0
    %6148 = vmatprep.subr.mxu0 0.0
    %v6149 = vand.u32 %v5715, 4294901760
    %6150 = vmatpush1.msra.mxu0 %v6149
    %6151 = vmatprep.subr.mxu0 0.0
    %v6152 = vand.u32 %v5714, 4294901760
    %6153 = vmatpush1.msra.mxu0 %v6152
    %6154 = vmatprep.subr.mxu0 0.0
    %6155 = vmatpush2.msra.mxu0 0.0
    %6156 = vmatprep.subr.mxu0 0.0
    %6157 = vmatpush2.msra.mxu0 0.0
    %6158 = vmatprep.subr.mxu0 0.0
    %6159 = vmatpush2.msra.mxu0 0.0
    %6160 = vmatprep.subr.mxu0 0.0
    %6161 = vmatpush2.msra.mxu0 0.0
    %6162 = vmatprep.subr.mxu0 0.0
    %6163 = vmatpush2.msra.mxu0 0.0
    %6164 = vmatprep.subr.mxu0 0.0
    %6165 = vmatpush2.msra.mxu0 0.0
    %6166 = vmatprep.subr.mxu0 0.0
    %6167 = vmatpush2.msra.mxu0 0.0
    %6168 = vmatprep.subr.mxu0 0.0
    %6169 = vmatpush2.msra.mxu0 0.0
    %6170 = vmatprep.subr.mxu0 0.0
    %6171 = vmatpush2.msra.mxu0 0.0
    %6172 = vmatprep.subr.mxu0 0.0
    %6173 = vmatpush2.msra.mxu0 0.0
    %6174 = vmatprep.subr.mxu0 0.0
    %6175 = vmatpush2.msra.mxu0 0.0
    %6176 = vmatprep.subr.mxu0 0.0
    %6177 = vmatpush2.msra.mxu0 0.0
    %6178 = vmatprep.subr.mxu0 0.0
    %6179 = vmatpush2.msra.mxu0 0.0
    %6180 = vmatprep.subr.mxu0 0.0
    %6181 = vmatpush2.msra.mxu0 0.0
    %6182 = vmatprep.subr.mxu0 0.0
    %6183 = vmatpush2.msra.mxu0 0.0
    %6184 = vmatprep.subr.mxu0 0.0
    %6185 = vmatpush2.msra.mxu0 0.0
    %6186 = vmatprep.mubr.f32.mxu0 0.0
    %v6187 = vand.u32 %v2646, 4294901760
    %6188 = vmatmul.mubr.f32.gmra.mxu0 %v6187
    %v6189 = vpop.f32.mrf.mxu0
    %v6190 = vadd.f32 %v6117, %v6189
    %v6191 = vpop.f32.mrf.mxu0
    %6192 = vdwg.mxu0
    %6193 = vmatprep.subr.mxu0 0.0
    %6194 = vmatpush1.msra.mxu0 0.0
    %6195 = vmatprep.subr.mxu0 0.0
    %6196 = vmatpush1.msra.mxu0 0.0
    %6197 = vmatprep.subr.mxu0 0.0
    %6198 = vmatpush1.msra.mxu0 0.0
    %6199 = vmatprep.subr.mxu0 0.0
    %6200 = vmatpush1.msra.mxu0 0.0
    %6201 = vmatprep.subr.mxu0 0.0
    %6202 = vmatpush1.msra.mxu0 0.0
    %6203 = vmatprep.subr.mxu0 0.0
    %6204 = vmatpush1.msra.mxu0 0.0
    %6205 = vmatprep.subr.mxu0 0.0
    %6206 = vmatpush1.msra.mxu0 0.0
    %6207 = vmatprep.subr.mxu0 0.0
    %6208 = vmatpush1.msra.mxu0 0.0
    %6209 = vmatprep.subr.mxu0 0.0
    %6210 = vmatpush1.msra.mxu0 0.0
    %6211 = vmatprep.subr.mxu0 0.0
    %6212 = vmatpush1.msra.mxu0 0.0
    %6213 = vmatprep.subr.mxu0 0.0
    %6214 = vmatpush1.msra.mxu0 0.0
    %6215 = vmatprep.subr.mxu0 0.0
    %6216 = vmatpush1.msra.mxu0 0.0
    %6217 = vmatprep.subr.mxu0 0.0
    %6218 = vmatpush1.msra.mxu0 0.0
    %6219 = vmatprep.subr.mxu0 0.0
    %6220 = vmatpush1.msra.mxu0 0.0
    %6221 = vmatprep.subr.mxu0 0.0
    %v6222 = vand.u32 %v5733, 4294901760
    %6223 = vmatpush1.msra.mxu0 %v6222
    %6224 = vmatprep.subr.mxu0 0.0
    %v6225 = vand.u32 %v5732, 4294901760
    %6226 = vmatpush1.msra.mxu0 %v6225
    %6227 = vmatprep.subr.mxu0 0.0
    %6228 = vmatpush2.msra.mxu0 0.0
    %6229 = vmatprep.subr.mxu0 0.0
    %6230 = vmatpush2.msra.mxu0 0.0
    %6231 = vmatprep.subr.mxu0 0.0
    %6232 = vmatpush2.msra.mxu0 0.0
    %6233 = vmatprep.subr.mxu0 0.0
    %6234 = vmatpush2.msra.mxu0 0.0
    %6235 = vmatprep.subr.mxu0 0.0
    %6236 = vmatpush2.msra.mxu0 0.0
    %6237 = vmatprep.subr.mxu0 0.0
    %6238 = vmatpush2.msra.mxu0 0.0
    %6239 = vmatprep.subr.mxu0 0.0
    %6240 = vmatpush2.msra.mxu0 0.0
    %6241 = vmatprep.subr.mxu0 0.0
    %6242 = vmatpush2.msra.mxu0 0.0
    %6243 = vmatprep.subr.mxu0 0.0
    %6244 = vmatpush2.msra.mxu0 0.0
    %6245 = vmatprep.subr.mxu0 0.0
    %6246 = vmatpush2.msra.mxu0 0.0
    %6247 = vmatprep.subr.mxu0 0.0
    %6248 = vmatpush2.msra.mxu0 0.0
    %6249 = vmatprep.subr.mxu0 0.0
    %6250 = vmatpush2.msra.mxu0 0.0
    %6251 = vmatprep.subr.mxu0 0.0
    %6252 = vmatpush2.msra.mxu0 0.0
    %6253 = vmatprep.subr.mxu0 0.0
    %6254 = vmatpush2.msra.mxu0 0.0
    %6255 = vmatprep.subr.mxu0 0.0
    %6256 = vmatpush2.msra.mxu0 0.0
    %6257 = vmatprep.subr.mxu0 0.0
    %6258 = vmatpush2.msra.mxu0 0.0
    %6259 = vmatprep.mubr.f32.mxu0 0.0
    %v6260 = vand.u32 %v2646, 4294901760
    %v6261 = vsub.f32 %v2646, %v6260
    %v6262 = vand.u32 %v6261, 4294901760
    %v6263 = vsub.f32 %v6261, %v6262
    %v6264 = vand.u32 %v6263, 4294901760
    %6265 = vmatmul.mubr.f32.gmra.mxu0 %v6264
    %v6266 = vpop.f32.mrf.mxu0
    %v6267 = vadd.f32 0.0, %v6266
    %v6268 = vpop.f32.mrf.mxu0
    %6269 = vdwg.mxu0
    %6270 = vmatprep.subr.mxu0 0.0
    %6271 = vmatpush1.msra.mxu0 0.0
    %6272 = vmatprep.subr.mxu0 0.0
    %6273 = vmatpush1.msra.mxu0 0.0
    %6274 = vmatprep.subr.mxu0 0.0
    %6275 = vmatpush1.msra.mxu0 0.0
    %6276 = vmatprep.subr.mxu0 0.0
    %6277 = vmatpush1.msra.mxu0 0.0
    %6278 = vmatprep.subr.mxu0 0.0
    %6279 = vmatpush1.msra.mxu0 0.0
    %6280 = vmatprep.subr.mxu0 0.0
    %6281 = vmatpush1.msra.mxu0 0.0
    %6282 = vmatprep.subr.mxu0 0.0
    %6283 = vmatpush1.msra.mxu0 0.0
    %6284 = vmatprep.subr.mxu0 0.0
    %6285 = vmatpush1.msra.mxu0 0.0
    %6286 = vmatprep.subr.mxu0 0.0
    %6287 = vmatpush1.msra.mxu0 0.0
    %6288 = vmatprep.subr.mxu0 0.0
    %6289 = vmatpush1.msra.mxu0 0.0
    %6290 = vmatprep.subr.mxu0 0.0
    %6291 = vmatpush1.msra.mxu0 0.0
    %6292 = vmatprep.subr.mxu0 0.0
    %6293 = vmatpush1.msra.mxu0 0.0
    %6294 = vmatprep.subr.mxu0 0.0
    %6295 = vmatpush1.msra.mxu0 0.0
    %6296 = vmatprep.subr.mxu0 0.0
    %6297 = vmatpush1.msra.mxu0 0.0
    %6298 = vmatprep.subr.mxu0 0.0
    %v6299 = vand.u32 %v5733, 4294901760
    %v6300 = vsub.f32 %v5733, %v6299
    %v6301 = vand.u32 %v6300, 4294901760
    %v6302 = vsub.f32 %v6300, %v6301
    %v6303 = vand.u32 %v6302, 4294901760
    %6304 = vmatpush1.msra.mxu0 %v6303
    %6305 = vmatprep.subr.mxu0 0.0
    %v6306 = vand.u32 %v5732, 4294901760
    %v6307 = vsub.f32 %v5732, %v6306
    %v6308 = vand.u32 %v6307, 4294901760
    %v6309 = vsub.f32 %v6307, %v6308
    %v6310 = vand.u32 %v6309, 4294901760
    %6311 = vmatpush1.msra.mxu0 %v6310
    %6312 = vmatprep.subr.mxu0 0.0
    %6313 = vmatpush2.msra.mxu0 0.0
    %6314 = vmatprep.subr.mxu0 0.0
    %6315 = vmatpush2.msra.mxu0 0.0
    %6316 = vmatprep.subr.mxu0 0.0
    %6317 = vmatpush2.msra.mxu0 0.0
    %6318 = vmatprep.subr.mxu0 0.0
    %6319 = vmatpush2.msra.mxu0 0.0
    %6320 = vmatprep.subr.mxu0 0.0
    %6321 = vmatpush2.msra.mxu0 0.0
    %6322 = vmatprep.subr.mxu0 0.0
    %6323 = vmatpush2.msra.mxu0 0.0
    %6324 = vmatprep.subr.mxu0 0.0
    %6325 = vmatpush2.msra.mxu0 0.0
    %6326 = vmatprep.subr.mxu0 0.0
    %6327 = vmatpush2.msra.mxu0 0.0
    %6328 = vmatprep.subr.mxu0 0.0
    %6329 = vmatpush2.msra.mxu0 0.0
    %6330 = vmatprep.subr.mxu0 0.0
    %6331 = vmatpush2.msra.mxu0 0.0
    %6332 = vmatprep.subr.mxu0 0.0
    %6333 = vmatpush2.msra.mxu0 0.0
    %6334 = vmatprep.subr.mxu0 0.0
    %6335 = vmatpush2.msra.mxu0 0.0
    %6336 = vmatprep.subr.mxu0 0.0
    %6337 = vmatpush2.msra.mxu0 0.0
    %6338 = vmatprep.subr.mxu0 0.0
    %6339 = vmatpush2.msra.mxu0 0.0
    %6340 = vmatprep.subr.mxu0 0.0
    %6341 = vmatpush2.msra.mxu0 0.0
    %6342 = vmatprep.subr.mxu0 0.0
    %6343 = vmatpush2.msra.mxu0 0.0
    %6344 = vmatprep.mubr.f32.mxu0 0.0
    %v6345 = vand.u32 %v2646, 4294901760
    %6346 = vmatmul.mubr.f32.gmra.mxu0 %v6345
    %v6347 = vpop.f32.mrf.mxu0
    %v6348 = vadd.f32 %v6267, %v6347
    %v6349 = vpop.f32.mrf.mxu0
    %6350 = vdwg.mxu0
    %6351 = vmatprep.subr.mxu0 0.0
    %6352 = vmatpush1.msra.mxu0 0.0
    %6353 = vmatprep.subr.mxu0 0.0
    %6354 = vmatpush1.msra.mxu0 0.0
    %6355 = vmatprep.subr.mxu0 0.0
    %6356 = vmatpush1.msra.mxu0 0.0
    %6357 = vmatprep.subr.mxu0 0.0
    %6358 = vmatpush1.msra.mxu0 0.0
    %6359 = vmatprep.subr.mxu0 0.0
    %6360 = vmatpush1.msra.mxu0 0.0
    %6361 = vmatprep.subr.mxu0 0.0
    %6362 = vmatpush1.msra.mxu0 0.0
    %6363 = vmatprep.subr.mxu0 0.0
    %6364 = vmatpush1.msra.mxu0 0.0
    %6365 = vmatprep.subr.mxu0 0.0
    %6366 = vmatpush1.msra.mxu0 0.0
    %6367 = vmatprep.subr.mxu0 0.0
    %6368 = vmatpush1.msra.mxu0 0.0
    %6369 = vmatprep.subr.mxu0 0.0
    %6370 = vmatpush1.msra.mxu0 0.0
    %6371 = vmatprep.subr.mxu0 0.0
    %6372 = vmatpush1.msra.mxu0 0.0
    %6373 = vmatprep.subr.mxu0 0.0
    %6374 = vmatpush1.msra.mxu0 0.0
    %6375 = vmatprep.subr.mxu0 0.0
    %6376 = vmatpush1.msra.mxu0 0.0
    %6377 = vmatprep.subr.mxu0 0.0
    %6378 = vmatpush1.msra.mxu0 0.0
    %6379 = vmatprep.subr.mxu0 0.0
    %v6380 = vand.u32 %v5733, 4294901760
    %v6381 = vsub.f32 %v5733, %v6380
    %6382 = vmatpush1.msra.mxu0 %v6381
    %6383 = vmatprep.subr.mxu0 0.0
    %v6384 = vand.u32 %v5732, 4294901760
    %v6385 = vsub.f32 %v5732, %v6384
    %6386 = vmatpush1.msra.mxu0 %v6385
    %6387 = vmatprep.subr.mxu0 0.0
    %6388 = vmatpush2.msra.mxu0 0.0
    %6389 = vmatprep.subr.mxu0 0.0
    %6390 = vmatpush2.msra.mxu0 0.0
    %6391 = vmatprep.subr.mxu0 0.0
    %6392 = vmatpush2.msra.mxu0 0.0
    %6393 = vmatprep.subr.mxu0 0.0
    %6394 = vmatpush2.msra.mxu0 0.0
    %6395 = vmatprep.subr.mxu0 0.0
    %6396 = vmatpush2.msra.mxu0 0.0
    %6397 = vmatprep.subr.mxu0 0.0
    %6398 = vmatpush2.msra.mxu0 0.0
    %6399 = vmatprep.subr.mxu0 0.0
    %6400 = vmatpush2.msra.mxu0 0.0
    %6401 = vmatprep.subr.mxu0 0.0
    %6402 = vmatpush2.msra.mxu0 0.0
    %6403 = vmatprep.subr.mxu0 0.0
    %6404 = vmatpush2.msra.mxu0 0.0
    %6405 = vmatprep.subr.mxu0 0.0
    %6406 = vmatpush2.msra.mxu0 0.0
    %6407 = vmatprep.subr.mxu0 0.0
    %6408 = vmatpush2.msra.mxu0 0.0
    %6409 = vmatprep.subr.mxu0 0.0
    %6410 = vmatpush2.msra.mxu0 0.0
    %6411 = vmatprep.subr.mxu0 0.0
    %6412 = vmatpush2.msra.mxu0 0.0
    %6413 = vmatprep.subr.mxu0 0.0
    %6414 = vmatpush2.msra.mxu0 0.0
    %6415 = vmatprep.subr.mxu0 0.0
    %6416 = vmatpush2.msra.mxu0 0.0
    %6417 = vmatprep.subr.mxu0 0.0
    %6418 = vmatpush2.msra.mxu0 0.0
    %6419 = vmatprep.mubr.f32.mxu0 0.0
    %v6420 = vand.u32 %v2646, 4294901760
    %v6421 = vsub.f32 %v2646, %v6420
    %6422 = vmatmul.mubr.f32.gmra.mxu0 %v6421
    %v6423 = vpop.f32.mrf.mxu0
    %v6424 = vadd.f32 %v6348, %v6423
    %v6425 = vpop.f32.mrf.mxu0
    %6426 = vdwg.mxu0
    %6427 = vmatprep.subr.mxu0 0.0
    %6428 = vmatpush1.msra.mxu0 0.0
    %6429 = vmatprep.subr.mxu0 0.0
    %6430 = vmatpush1.msra.mxu0 0.0
    %6431 = vmatprep.subr.mxu0 0.0
    %6432 = vmatpush1.msra.mxu0 0.0
    %6433 = vmatprep.subr.mxu0 0.0
    %6434 = vmatpush1.msra.mxu0 0.0
    %6435 = vmatprep.subr.mxu0 0.0
    %6436 = vmatpush1.msra.mxu0 0.0
    %6437 = vmatprep.subr.mxu0 0.0
    %6438 = vmatpush1.msra.mxu0 0.0
    %6439 = vmatprep.subr.mxu0 0.0
    %6440 = vmatpush1.msra.mxu0 0.0
    %6441 = vmatprep.subr.mxu0 0.0
    %6442 = vmatpush1.msra.mxu0 0.0
    %6443 = vmatprep.subr.mxu0 0.0
    %6444 = vmatpush1.msra.mxu0 0.0
    %6445 = vmatprep.subr.mxu0 0.0
    %6446 = vmatpush1.msra.mxu0 0.0
    %6447 = vmatprep.subr.mxu0 0.0
    %6448 = vmatpush1.msra.mxu0 0.0
    %6449 = vmatprep.subr.mxu0 0.0
    %6450 = vmatpush1.msra.mxu0 0.0
    %6451 = vmatprep.subr.mxu0 0.0
    %6452 = vmatpush1.msra.mxu0 0.0
    %6453 = vmatprep.subr.mxu0 0.0
    %6454 = vmatpush1.msra.mxu0 0.0
    %6455 = vmatprep.subr.mxu0 0.0
    %v6456 = vand.u32 %v5733, 4294901760
    %6457 = vmatpush1.msra.mxu0 %v6456
    %6458 = vmatprep.subr.mxu0 0.0
    %v6459 = vand.u32 %v5732, 4294901760
    %6460 = vmatpush1.msra.mxu0 %v6459
    %6461 = vmatprep.subr.mxu0 0.0
    %6462 = vmatpush2.msra.mxu0 0.0
    %6463 = vmatprep.subr.mxu0 0.0
    %6464 = vmatpush2.msra.mxu0 0.0
    %6465 = vmatprep.subr.mxu0 0.0
    %6466 = vmatpush2.msra.mxu0 0.0
    %6467 = vmatprep.subr.mxu0 0.0
    %6468 = vmatpush2.msra.mxu0 0.0
    %6469 = vmatprep.subr.mxu0 0.0
    %6470 = vmatpush2.msra.mxu0 0.0
    %6471 = vmatprep.subr.mxu0 0.0
    %6472 = vmatpush2.msra.mxu0 0.0
    %6473 = vmatprep.subr.mxu0 0.0
    %6474 = vmatpush2.msra.mxu0 0.0
    %6475 = vmatprep.subr.mxu0 0.0
    %6476 = vmatpush2.msra.mxu0 0.0
    %6477 = vmatprep.subr.mxu0 0.0
    %6478 = vmatpush2.msra.mxu0 0.0
    %6479 = vmatprep.subr.mxu0 0.0
    %6480 = vmatpush2.msra.mxu0 0.0
    %6481 = vmatprep.subr.mxu0 0.0
    %6482 = vmatpush2.msra.mxu0 0.0
    %6483 = vmatprep.subr.mxu0 0.0
    %6484 = vmatpush2.msra.mxu0 0.0
    %6485 = vmatprep.subr.mxu0 0.0
    %6486 = vmatpush2.msra.mxu0 0.0
    %6487 = vmatprep.subr.mxu0 0.0
    %6488 = vmatpush2.msra.mxu0 0.0
    %6489 = vmatprep.subr.mxu0 0.0
    %6490 = vmatpush2.msra.mxu0 0.0
    %6491 = vmatprep.subr.mxu0 0.0
    %6492 = vmatpush2.msra.mxu0 0.0
    %6493 = vmatprep.mubr.f32.mxu0 0.0
    %v6494 = vand.u32 %v2646, 4294901760
    %v6495 = vsub.f32 %v2646, %v6494
    %v6496 = vand.u32 %v6495, 4294901760
    %6497 = vmatmul.mubr.f32.gmra.mxu0 %v6496
    %v6498 = vpop.f32.mrf.mxu0
    %v6499 = vadd.f32 %v6424, %v6498
    %v6500 = vpop.f32.mrf.mxu0
    %6501 = vdwg.mxu0
    %6502 = vmatprep.subr.mxu0 0.0
    %6503 = vmatpush1.msra.mxu0 0.0
    %6504 = vmatprep.subr.mxu0 0.0
    %6505 = vmatpush1.msra.mxu0 0.0
    %6506 = vmatprep.subr.mxu0 0.0
    %6507 = vmatpush1.msra.mxu0 0.0
    %6508 = vmatprep.subr.mxu0 0.0
    %6509 = vmatpush1.msra.mxu0 0.0
    %6510 = vmatprep.subr.mxu0 0.0
    %6511 = vmatpush1.msra.mxu0 0.0
    %6512 = vmatprep.subr.mxu0 0.0
    %6513 = vmatpush1.msra.mxu0 0.0
    %6514 = vmatprep.subr.mxu0 0.0
    %6515 = vmatpush1.msra.mxu0 0.0
    %6516 = vmatprep.subr.mxu0 0.0
    %6517 = vmatpush1.msra.mxu0 0.0
    %6518 = vmatprep.subr.mxu0 0.0
    %6519 = vmatpush1.msra.mxu0 0.0
    %6520 = vmatprep.subr.mxu0 0.0
    %6521 = vmatpush1.msra.mxu0 0.0
    %6522 = vmatprep.subr.mxu0 0.0
    %6523 = vmatpush1.msra.mxu0 0.0
    %6524 = vmatprep.subr.mxu0 0.0
    %6525 = vmatpush1.msra.mxu0 0.0
    %6526 = vmatprep.subr.mxu0 0.0
    %6527 = vmatpush1.msra.mxu0 0.0
    %6528 = vmatprep.subr.mxu0 0.0
    %6529 = vmatpush1.msra.mxu0 0.0
    %6530 = vmatprep.subr.mxu0 0.0
    %v6531 = vand.u32 %v5733, 4294901760
    %v6532 = vsub.f32 %v5733, %v6531
    %v6533 = vand.u32 %v6532, 4294901760
    %6534 = vmatpush1.msra.mxu0 %v6533
    %6535 = vmatprep.subr.mxu0 0.0
    %v6536 = vand.u32 %v5732, 4294901760
    %v6537 = vsub.f32 %v5732, %v6536
    %v6538 = vand.u32 %v6537, 4294901760
    %6539 = vmatpush1.msra.mxu0 %v6538
    %6540 = vmatprep.subr.mxu0 0.0
    %6541 = vmatpush2.msra.mxu0 0.0
    %6542 = vmatprep.subr.mxu0 0.0
    %6543 = vmatpush2.msra.mxu0 0.0
    %6544 = vmatprep.subr.mxu0 0.0
    %6545 = vmatpush2.msra.mxu0 0.0
    %6546 = vmatprep.subr.mxu0 0.0
    %6547 = vmatpush2.msra.mxu0 0.0
    %6548 = vmatprep.subr.mxu0 0.0
    %6549 = vmatpush2.msra.mxu0 0.0
    %6550 = vmatprep.subr.mxu0 0.0
    %6551 = vmatpush2.msra.mxu0 0.0
    %6552 = vmatprep.subr.mxu0 0.0
    %6553 = vmatpush2.msra.mxu0 0.0
    %6554 = vmatprep.subr.mxu0 0.0
    %6555 = vmatpush2.msra.mxu0 0.0
    %6556 = vmatprep.subr.mxu0 0.0
    %6557 = vmatpush2.msra.mxu0 0.0
    %6558 = vmatprep.subr.mxu0 0.0
    %6559 = vmatpush2.msra.mxu0 0.0
    %6560 = vmatprep.subr.mxu0 0.0
    %6561 = vmatpush2.msra.mxu0 0.0
    %6562 = vmatprep.subr.mxu0 0.0
    %6563 = vmatpush2.msra.mxu0 0.0
    %6564 = vmatprep.subr.mxu0 0.0
    %6565 = vmatpush2.msra.mxu0 0.0
    %6566 = vmatprep.subr.mxu0 0.0
    %6567 = vmatpush2.msra.mxu0 0.0
    %6568 = vmatprep.subr.mxu0 0.0
    %6569 = vmatpush2.msra.mxu0 0.0
    %6570 = vmatprep.subr.mxu0 0.0
    %6571 = vmatpush2.msra.mxu0 0.0
    %6572 = vmatprep.mubr.f32.mxu0 0.0
    %v6573 = vand.u32 %v2646, 4294901760
    %6574 = vmatmul.mubr.f32.gmra.mxu0 %v6573
    %v6575 = vpop.f32.mrf.mxu0
    %v6576 = vadd.f32 %v6499, %v6575
    %v6577 = vpop.f32.mrf.mxu0
    %6578 = vdwg.mxu0
    %6579 = vmatprep.subr.mxu0 0.0
    %6580 = vmatpush1.msra.mxu0 0.0
    %6581 = vmatprep.subr.mxu0 0.0
    %6582 = vmatpush1.msra.mxu0 0.0
    %6583 = vmatprep.subr.mxu0 0.0
    %6584 = vmatpush1.msra.mxu0 0.0
    %6585 = vmatprep.subr.mxu0 0.0
    %6586 = vmatpush1.msra.mxu0 0.0
    %6587 = vmatprep.subr.mxu0 0.0
    %6588 = vmatpush1.msra.mxu0 0.0
    %6589 = vmatprep.subr.mxu0 0.0
    %6590 = vmatpush1.msra.mxu0 0.0
    %6591 = vmatprep.subr.mxu0 0.0
    %6592 = vmatpush1.msra.mxu0 0.0
    %6593 = vmatprep.subr.mxu0 0.0
    %6594 = vmatpush1.msra.mxu0 0.0
    %6595 = vmatprep.subr.mxu0 0.0
    %6596 = vmatpush1.msra.mxu0 0.0
    %6597 = vmatprep.subr.mxu0 0.0
    %6598 = vmatpush1.msra.mxu0 0.0
    %6599 = vmatprep.subr.mxu0 0.0
    %6600 = vmatpush1.msra.mxu0 0.0
    %6601 = vmatprep.subr.mxu0 0.0
    %6602 = vmatpush1.msra.mxu0 0.0
    %6603 = vmatprep.subr.mxu0 0.0
    %6604 = vmatpush1.msra.mxu0 0.0
    %6605 = vmatprep.subr.mxu0 0.0
    %6606 = vmatpush1.msra.mxu0 0.0
    %6607 = vmatprep.subr.mxu0 0.0
    %v6608 = vand.u32 %v5733, 4294901760
    %6609 = vmatpush1.msra.mxu0 %v6608
    %6610 = vmatprep.subr.mxu0 0.0
    %v6611 = vand.u32 %v5732, 4294901760
    %6612 = vmatpush1.msra.mxu0 %v6611
    %6613 = vmatprep.subr.mxu0 0.0
    %6614 = vmatpush2.msra.mxu0 0.0
    %6615 = vmatprep.subr.mxu0 0.0
    %6616 = vmatpush2.msra.mxu0 0.0
    %6617 = vmatprep.subr.mxu0 0.0
    %6618 = vmatpush2.msra.mxu0 0.0
    %6619 = vmatprep.subr.mxu0 0.0
    %6620 = vmatpush2.msra.mxu0 0.0
    %6621 = vmatprep.subr.mxu0 0.0
    %6622 = vmatpush2.msra.mxu0 0.0
    %6623 = vmatprep.subr.mxu0 0.0
    %6624 = vmatpush2.msra.mxu0 0.0
    %6625 = vmatprep.subr.mxu0 0.0
    %6626 = vmatpush2.msra.mxu0 0.0
    %6627 = vmatprep.subr.mxu0 0.0
    %6628 = vmatpush2.msra.mxu0 0.0
    %6629 = vmatprep.subr.mxu0 0.0
    %6630 = vmatpush2.msra.mxu0 0.0
    %6631 = vmatprep.subr.mxu0 0.0
    %6632 = vmatpush2.msra.mxu0 0.0
    %6633 = vmatprep.subr.mxu0 0.0
    %6634 = vmatpush2.msra.mxu0 0.0
    %6635 = vmatprep.subr.mxu0 0.0
    %6636 = vmatpush2.msra.mxu0 0.0
    %6637 = vmatprep.subr.mxu0 0.0
    %6638 = vmatpush2.msra.mxu0 0.0
    %6639 = vmatprep.subr.mxu0 0.0
    %6640 = vmatpush2.msra.mxu0 0.0
    %6641 = vmatprep.subr.mxu0 0.0
    %6642 = vmatpush2.msra.mxu0 0.0
    %6643 = vmatprep.subr.mxu0 0.0
    %6644 = vmatpush2.msra.mxu0 0.0
    %6645 = vmatprep.mubr.f32.mxu0 0.0
    %v6646 = vand.u32 %v2646, 4294901760
    %6647 = vmatmul.mubr.f32.gmra.mxu0 %v6646
    %v6648 = vpop.f32.mrf.mxu0
    %v6649 = vadd.f32 %v6576, %v6648
    %v6650 = vpop.f32.mrf.mxu0
    %6651 = vdwg.mxu0
    %s6652 = scalar_lea.vmem %s59, 16
    %v6653 = vld [vmem:[%s6652] sm:$0xf]
    %v6654 = vld [vmem:[%s6652 + $0x4] sm:$0xf]
    %v6655 = vld [vmem:[%s6652 + $0x8] sm:$0xf]
    %v6656 = vld [vmem:[%s6652 + $0xc] sm:$0xf]
    %v6657 = vpack.c.bf16 %v3768, %v3768
    %s6658 = scalar_lea.vmem [#allocation25], 16
    %v6659 = vld [vmem:[%s6658] sm:$0xf]
    %v6660 = vld [vmem:[%s6658 + $0x4] sm:$0xf]
    %v6661 = vld [vmem:[%s6658 + $0x8] sm:$0xf]
    %v6662 = vld [vmem:[%s6658 + $0xc] sm:$0xf]
    %v6663 = vpack.c.bf16 %v6190, %v6190
    %v6668 = vunpack.c.l.b16 %v6659
    %v6669 = vunpack.c.l.b16 %v6660
    %v6670 = vunpack.c.l.b16 %v6661
    %v6671 = vunpack.c.l.b16 %v6662
    %v6672 = vpack.c.b16 %v6669, %v6668
    %v6673 = vpack.c.b16 %v6671, %v6670
    %v6677 = vsel %vm473, %v6663, 0
    %6679 = vmatprep.subr.bf16.mxu0 0
    %6680 = vmatpush1.bf16.msra.mxu0 0
    %6681 = vmatprep.subr.bf16.mxu0 0
    %6682 = vmatpush1.bf16.msra.mxu0 0
    %6683 = vmatprep.subr.bf16.mxu0 0
    %6684 = vmatpush1.bf16.msra.mxu0 0
    %6685 = vmatprep.subr.bf16.mxu0 0
    %6686 = vmatpush1.bf16.msra.mxu0 0
    %6687 = vmatprep.subr.bf16.mxu0 0
    %6688 = vmatpush1.bf16.msra.mxu0 0
    %6689 = vmatprep.subr.bf16.mxu0 0
    %6690 = vmatpush1.bf16.msra.mxu0 0
    %6691 = vmatprep.subr.bf16.mxu0 0
    %6692 = vmatpush1.bf16.msra.mxu0 %v6673
    %6693 = vmatprep.subr.bf16.mxu0 0
    %6694 = vmatpush1.bf16.msra.mxu0 %v6672
    %6695 = vmatprep.subr.bf16.mxu0 0
    %6696 = vmatpush2.bf16.msra.mxu0 0
    %6697 = vmatprep.subr.bf16.mxu0 0
    %6698 = vmatpush2.bf16.msra.mxu0 0
    %6699 = vmatprep.subr.bf16.mxu0 0
    %6700 = vmatpush2.bf16.msra.mxu0 0
    %6701 = vmatprep.subr.bf16.mxu0 0
    %6702 = vmatpush2.bf16.msra.mxu0 0
    %6703 = vmatprep.subr.bf16.mxu0 0
    %6704 = vmatpush2.bf16.msra.mxu0 0
    %6705 = vmatprep.subr.bf16.mxu0 0
    %6706 = vmatpush2.bf16.msra.mxu0 0
    %6707 = vmatprep.subr.bf16.mxu0 0
    %6708 = vmatpush2.bf16.msra.mxu0 0
    %6709 = vmatprep.subr.bf16.mxu0 0
    %6710 = vmatpush2.bf16.msra.mxu0 0
    %6711 = vmatprep.mubr.bf16.mxu0 0
    %6712 = vmatmul.mubr.bf16.gmra.mxu0 %v6677
    %v6713 = vpop.f32.mrf.mxu0
    %v6714 = vadd.f32 0.0, %v6713
    %v6715 = vpop.f32.mrf.mxu0
    %v6716 = vpop.f32.mrf.mxu0
    %v6717 = vpop.f32.mrf.mxu0
    %6718 = vdwg.mxu0
    %v6723 = vunpack.c.l.b16 %v6653
    %v6724 = vunpack.c.l.b16 %v6654
    %v6725 = vunpack.c.l.b16 %v6655
    %v6726 = vunpack.c.l.b16 %v6656
    %v6727 = vpack.c.b16 %v6724, %v6723
    %v6728 = vpack.c.b16 %v6726, %v6725
    %v6732 = vsel %vm473, %v6657, 0
    %6734 = vmatprep.subr.bf16.mxu0 0
    %6735 = vmatpush1.bf16.msra.mxu0 0
    %6736 = vmatprep.subr.bf16.mxu0 0
    %6737 = vmatpush1.bf16.msra.mxu0 0
    %6738 = vmatprep.subr.bf16.mxu0 0
    %6739 = vmatpush1.bf16.msra.mxu0 0
    %6740 = vmatprep.subr.bf16.mxu0 0
    %6741 = vmatpush1.bf16.msra.mxu0 0
    %6742 = vmatprep.subr.bf16.mxu0 0
    %6743 = vmatpush1.bf16.msra.mxu0 0
    %6744 = vmatprep.subr.bf16.mxu0 0
    %6745 = vmatpush1.bf16.msra.mxu0 0
    %6746 = vmatprep.subr.bf16.mxu0 0
    %6747 = vmatpush1.bf16.msra.mxu0 %v6728
    %6748 = vmatprep.subr.bf16.mxu0 0
    %6749 = vmatpush1.bf16.msra.mxu0 %v6727
    %6750 = vmatprep.subr.bf16.mxu0 0
    %6751 = vmatpush2.bf16.msra.mxu0 0
    %6752 = vmatprep.subr.bf16.mxu0 0
    %6753 = vmatpush2.bf16.msra.mxu0 0
    %6754 = vmatprep.subr.bf16.mxu0 0
    %6755 = vmatpush2.bf16.msra.mxu0 0
    %6756 = vmatprep.subr.bf16.mxu0 0
    %6757 = vmatpush2.bf16.msra.mxu0 0
    %6758 = vmatprep.subr.bf16.mxu0 0
    %6759 = vmatpush2.bf16.msra.mxu0 0
    %6760 = vmatprep.subr.bf16.mxu0 0
    %6761 = vmatpush2.bf16.msra.mxu0 0
    %6762 = vmatprep.subr.bf16.mxu0 0
    %6763 = vmatpush2.bf16.msra.mxu0 0
    %6764 = vmatprep.subr.bf16.mxu0 0
    %6765 = vmatpush2.bf16.msra.mxu0 0
    %6766 = vmatprep.mubr.bf16.mxu0 0
    %6767 = vmatmul.mubr.bf16.gmra.mxu0 %v6732
    %v6768 = vpop.f32.mrf.mxu0
    %v6769 = vadd.f32 %v6714, %v6768
    %v6770 = vpop.f32.mrf.mxu0
    %v6771 = vpop.f32.mrf.mxu0
    %v6772 = vpop.f32.mrf.mxu0
    %6773 = vdwg.mxu0
    %s6774 = scalar_lea.vmem [#allocation26], 1
    %v6775 = vld [vmem:[%s6774] sm:$0x1]
    %v6777 = vlaneseq
    %v6778 = vshrl.u32 %v6777, 7
    %v6779 = vsub.s32 0, %v6778
    %v6780 = vrot.slane %v6775, %v6779
    %v6782 = vadd.f32 %v6769, %v6780
    %v6783 = vxor.u32 %v6782, 2147483648
    %v6784 = vmul.f32 %v6783, 1.442695
    %v6785 = vpow.pop %v6784
    %v6786 = vadd.f32 %v6785, 1.0
    %v6787 = vrcp.pop %v6786
    %v6788 = vmul.f32 1.0, %v6787
    %v6789 = vmul.f32 %v6782, %v6788
    %s6790 = scalar_lea.vmem [#allocation28], 16
    %v6791 = vld [vmem:[%s6790] sm:$0xf]
    %v6792 = vld [vmem:[%s6790 + $0x4] sm:$0xf]
    %v6793 = vld [vmem:[%s6790 + $0x8] sm:$0xf]
    %v6794 = vld [vmem:[%s6790 + $0xc] sm:$0xf]
    %v6795 = vpack.c.bf16 %v6789, %v6789
    %s6796 = scalar_lea.vmem [#allocation29], 1
    %v6797 = vld [vmem:[%s6796] sm:$0x1]
    %v6799 = vlaneseq
    %v6800 = vshrl.u32 %v6799, 7
    %v6801 = vsub.s32 0, %v6800
    %v6802 = vrot.slane %v6797, %v6801
    %v6808 = vunpack.c.l.b16 %v6791
    %v6809 = vunpack.c.l.b16 %v6792
    %v6810 = vunpack.c.l.b16 %v6793
    %v6811 = vunpack.c.l.b16 %v6794
    %v6812 = vpack.c.b16 %v6809, %v6808
    %v6813 = vpack.c.b16 %v6811, %v6810
    %v6817 = vsel %vm473, %v6795, 0
    %6819 = vmatprep.subr.bf16.mxu0 0
    %6820 = vmatpush1.bf16.msra.mxu0 0
    %6821 = vmatprep.subr.bf16.mxu0 0
    %6822 = vmatpush1.bf16.msra.mxu0 0
    %6823 = vmatprep.subr.bf16.mxu0 0
    %6824 = vmatpush1.bf16.msra.mxu0 0
    %6825 = vmatprep.subr.bf16.mxu0 0
    %6826 = vmatpush1.bf16.msra.mxu0 0
    %6827 = vmatprep.subr.bf16.mxu0 0
    %6828 = vmatpush1.bf16.msra.mxu0 0
    %6829 = vmatprep.subr.bf16.mxu0 0
    %6830 = vmatpush1.bf16.msra.mxu0 0
    %6831 = vmatprep.subr.bf16.mxu0 0
    %6832 = vmatpush1.bf16.msra.mxu0 %v6813
    %6833 = vmatprep.subr.bf16.mxu0 0
    %6834 = vmatpush1.bf16.msra.mxu0 %v6812
    %6835 = vmatprep.subr.bf16.mxu0 0
    %6836 = vmatpush2.bf16.msra.mxu0 0
    %6837 = vmatprep.subr.bf16.mxu0 0
    %6838 = vmatpush2.bf16.msra.mxu0 0
    %6839 = vmatprep.subr.bf16.mxu0 0
    %6840 = vmatpush2.bf16.msra.mxu0 0
    %6841 = vmatprep.subr.bf16.mxu0 0
    %6842 = vmatpush2.bf16.msra.mxu0 0
    %6843 = vmatprep.subr.bf16.mxu0 0
    %6844 = vmatpush2.bf16.msra.mxu0 0
    %6845 = vmatprep.subr.bf16.mxu0 0
    %6846 = vmatpush2.bf16.msra.mxu0 0
    %6847 = vmatprep.subr.bf16.mxu0 0
    %6848 = vmatpush2.bf16.msra.mxu0 0
    %6849 = vmatprep.subr.bf16.mxu0 0
    %6850 = vmatpush2.bf16.msra.mxu0 0
    %6851 = vmatprep.mubr.bf16.mxu0 0
    %6852 = vmatmul.mubr.bf16.gmra.mxu0 %v6817
    %v6853 = vpop.f32.mrf.mxu0
    %v6854 = vadd.f32 %v6802, %v6853
    %v6855 = vpop.f32.mrf.mxu0
    %v6856 = vpop.f32.mrf.mxu0
    %v6857 = vpop.f32.mrf.mxu0
    %6858 = vdwg.mxu0
    %v6859 = vadd.f32 %v6854, %v3768
    %v6860 = vadd.f32 %v3769, %v6649
    %6861 = vmatprep.subr.mxu0 0.0
    %6862 = vmatpush1.msra.mxu0 0.0
    %6863 = vmatprep.subr.mxu0 0.0
    %6864 = vmatpush1.msra.mxu0 0.0
    %6865 = vmatprep.subr.mxu0 0.0
    %6866 = vmatpush1.msra.mxu0 0.0
    %6867 = vmatprep.subr.mxu0 0.0
    %6868 = vmatpush1.msra.mxu0 0.0
    %6869 = vmatprep.subr.mxu0 0.0
    %6870 = vmatpush1.msra.mxu0 0.0
    %6871 = vmatprep.subr.mxu0 0.0
    %6872 = vmatpush1.msra.mxu0 0.0
    %6873 = vmatprep.subr.mxu0 0.0
    %6874 = vmatpush1.msra.mxu0 0.0
    %6875 = vmatprep.subr.mxu0 0.0
    %6876 = vmatpush1.msra.mxu0 0.0
    %6877 = vmatprep.subr.mxu0 0.0
    %6878 = vmatpush1.msra.mxu0 0.0
    %6879 = vmatprep.subr.mxu0 0.0
    %6880 = vmatpush1.msra.mxu0 0.0
    %6881 = vmatprep.subr.mxu0 0.0
    %6882 = vmatpush1.msra.mxu0 0.0
    %6883 = vmatprep.subr.mxu0 0.0
    %6884 = vmatpush1.msra.mxu0 0.0
    %6885 = vmatprep.subr.mxu0 0.0
    %6886 = vmatpush1.msra.mxu0 0.0
    %6887 = vmatprep.subr.mxu0 0.0
    %6888 = vmatpush1.msra.mxu0 0.0
    %6889 = vmatprep.subr.mxu0 0.0
    %6890 = vmatpush1.msra.mxu0 0.0
    %6891 = vmatprep.subr.mxu0 0.0
    %v6892 = vand.u32 %v6859, 4294901760
    %6893 = vmatpush1.msra.mxu0 %v6892
    %6894 = vmatprep.subr.mxu0 0.0
    %6895 = vmatpush2.msra.mxu0 0.0
    %6896 = vmatprep.subr.mxu0 0.0
    %6897 = vmatpush2.msra.mxu0 0.0
    %6898 = vmatprep.subr.mxu0 0.0
    %6899 = vmatpush2.msra.mxu0 0.0
    %6900 = vmatprep.subr.mxu0 0.0
    %6901 = vmatpush2.msra.mxu0 0.0
    %6902 = vmatprep.subr.mxu0 0.0
    %6903 = vmatpush2.msra.mxu0 0.0
    %6904 = vmatprep.subr.mxu0 0.0
    %6905 = vmatpush2.msra.mxu0 0.0
    %6906 = vmatprep.subr.mxu0 0.0
    %6907 = vmatpush2.msra.mxu0 0.0
    %6908 = vmatprep.subr.mxu0 0.0
    %6909 = vmatpush2.msra.mxu0 0.0
    %6910 = vmatprep.subr.mxu0 0.0
    %6911 = vmatpush2.msra.mxu0 0.0
    %6912 = vmatprep.subr.mxu0 0.0
    %6913 = vmatpush2.msra.mxu0 0.0
    %6914 = vmatprep.subr.mxu0 0.0
    %6915 = vmatpush2.msra.mxu0 0.0
    %6916 = vmatprep.subr.mxu0 0.0
    %6917 = vmatpush2.msra.mxu0 0.0
    %6918 = vmatprep.subr.mxu0 0.0
    %6919 = vmatpush2.msra.mxu0 0.0
    %6920 = vmatprep.subr.mxu0 0.0
    %6921 = vmatpush2.msra.mxu0 0.0
    %6922 = vmatprep.subr.mxu0 0.0
    %6923 = vmatpush2.msra.mxu0 0.0
    %6924 = vmatprep.subr.mxu0 0.0
    %6925 = vmatpush2.msra.mxu0 0.0
    %6926 = vmatprep.mubr.f32.mxu0 0.0
    %v6927 = vand.u32 %v669, 4294901760
    %v6928 = vsub.f32 %v669, %v6927
    %v6929 = vand.u32 %v6928, 4294901760
    %v6930 = vsub.f32 %v6928, %v6929
    %v6931 = vand.u32 %v6930, 4294901760
    %6932 = vmatmul.mubr.f32.gmra.mxu0 %v6931
    %v6933 = vpop.f32.mrf.mxu0
    %v6934 = vadd.f32 0.0, %v6933
    %v6935 = vpop.f32.mrf.mxu0
    %6936 = vmatprep.mubr.f32.mxu0 0.0
    %v6937 = vand.u32 %v672, 4294901760
    %v6938 = vsub.f32 %v672, %v6937
    %v6939 = vand.u32 %v6938, 4294901760
    %v6940 = vsub.f32 %v6938, %v6939
    %v6941 = vand.u32 %v6940, 4294901760
    %6942 = vmatmul.mubr.f32.gmra.mxu0 %v6941
    %v6943 = vpop.f32.mrf.mxu0
    %v6944 = vadd.f32 0.0, %v6943
    %v6945 = vpop.f32.mrf.mxu0
    %6946 = vmatprep.mubr.f32.mxu0 0.0
    %v6947 = vand.u32 %v675, 4294901760
    %v6948 = vsub.f32 %v675, %v6947
    %v6949 = vand.u32 %v6948, 4294901760
    %v6950 = vsub.f32 %v6948, %v6949
    %v6951 = vand.u32 %v6950, 4294901760
    %6952 = vmatmul.mubr.f32.gmra.mxu0 %v6951
    %v6953 = vpop.f32.mrf.mxu0
    %v6954 = vadd.f32 0.0, %v6953
    %v6955 = vpop.f32.mrf.mxu0
    %6956 = vmatprep.mubr.f32.mxu0 0.0
    %v6957 = vand.u32 %v678, 4294901760
    %v6958 = vsub.f32 %v678, %v6957
    %v6959 = vand.u32 %v6958, 4294901760
    %v6960 = vsub.f32 %v6958, %v6959
    %v6961 = vand.u32 %v6960, 4294901760
    %6962 = vmatmul.mubr.f32.gmra.mxu0 %v6961
    %v6963 = vpop.f32.mrf.mxu0
    %v6964 = vadd.f32 0.0, %v6963
    %v6965 = vpop.f32.mrf.mxu0
    %6966 = vdwg.mxu0
    %6967 = vmatprep.subr.mxu0 0.0
    %6968 = vmatpush1.msra.mxu0 0.0
    %6969 = vmatprep.subr.mxu0 0.0
    %6970 = vmatpush1.msra.mxu0 0.0
    %6971 = vmatprep.subr.mxu0 0.0
    %6972 = vmatpush1.msra.mxu0 0.0
    %6973 = vmatprep.subr.mxu0 0.0
    %6974 = vmatpush1.msra.mxu0 0.0
    %6975 = vmatprep.subr.mxu0 0.0
    %6976 = vmatpush1.msra.mxu0 0.0
    %6977 = vmatprep.subr.mxu0 0.0
    %6978 = vmatpush1.msra.mxu0 0.0
    %6979 = vmatprep.subr.mxu0 0.0
    %6980 = vmatpush1.msra.mxu0 0.0
    %6981 = vmatprep.subr.mxu0 0.0
    %6982 = vmatpush1.msra.mxu0 0.0
    %6983 = vmatprep.subr.mxu0 0.0
    %6984 = vmatpush1.msra.mxu0 0.0
    %6985 = vmatprep.subr.mxu0 0.0
    %6986 = vmatpush1.msra.mxu0 0.0
    %6987 = vmatprep.subr.mxu0 0.0
    %6988 = vmatpush1.msra.mxu0 0.0
    %6989 = vmatprep.subr.mxu0 0.0
    %6990 = vmatpush1.msra.mxu0 0.0
    %6991 = vmatprep.subr.mxu0 0.0
    %6992 = vmatpush1.msra.mxu0 0.0
    %6993 = vmatprep.subr.mxu0 0.0
    %6994 = vmatpush1.msra.mxu0 0.0
    %6995 = vmatprep.subr.mxu0 0.0
    %6996 = vmatpush1.msra.mxu0 0.0
    %6997 = vmatprep.subr.mxu0 0.0
    %v6998 = vand.u32 %v6859, 4294901760
    %v6999 = vsub.f32 %v6859, %v6998
    %v7000 = vand.u32 %v6999, 4294901760
    %v7001 = vsub.f32 %v6999, %v7000
    %v7002 = vand.u32 %v7001, 4294901760
    %7003 = vmatpush1.msra.mxu0 %v7002
    %7004 = vmatprep.subr.mxu0 0.0
    %7005 = vmatpush2.msra.mxu0 0.0
    %7006 = vmatprep.subr.mxu0 0.0
    %7007 = vmatpush2.msra.mxu0 0.0
    %7008 = vmatprep.subr.mxu0 0.0
    %7009 = vmatpush2.msra.mxu0 0.0
    %7010 = vmatprep.subr.mxu0 0.0
    %7011 = vmatpush2.msra.mxu0 0.0
    %7012 = vmatprep.subr.mxu0 0.0
    %7013 = vmatpush2.msra.mxu0 0.0
    %7014 = vmatprep.subr.mxu0 0.0
    %7015 = vmatpush2.msra.mxu0 0.0
    %7016 = vmatprep.subr.mxu0 0.0
    %7017 = vmatpush2.msra.mxu0 0.0
    %7018 = vmatprep.subr.mxu0 0.0
    %7019 = vmatpush2.msra.mxu0 0.0
    %7020 = vmatprep.subr.mxu0 0.0
    %7021 = vmatpush2.msra.mxu0 0.0
    %7022 = vmatprep.subr.mxu0 0.0
    %7023 = vmatpush2.msra.mxu0 0.0
    %7024 = vmatprep.subr.mxu0 0.0
    %7025 = vmatpush2.msra.mxu0 0.0
    %7026 = vmatprep.subr.mxu0 0.0
    %7027 = vmatpush2.msra.mxu0 0.0
    %7028 = vmatprep.subr.mxu0 0.0
    %7029 = vmatpush2.msra.mxu0 0.0
    %7030 = vmatprep.subr.mxu0 0.0
    %7031 = vmatpush2.msra.mxu0 0.0
    %7032 = vmatprep.subr.mxu0 0.0
    %7033 = vmatpush2.msra.mxu0 0.0
    %7034 = vmatprep.subr.mxu0 0.0
    %7035 = vmatpush2.msra.mxu0 0.0
    %7036 = vmatprep.mubr.f32.mxu0 0.0
    %v7037 = vand.u32 %v669, 4294901760
    %7038 = vmatmul.mubr.f32.gmra.mxu0 %v7037
    %v7039 = vpop.f32.mrf.mxu0
    %v7040 = vadd.f32 %v6934, %v7039
    %v7041 = vpop.f32.mrf.mxu0
    %7042 = vmatprep.mubr.f32.mxu0 0.0
    %v7043 = vand.u32 %v672, 4294901760
    %7044 = vmatmul.mubr.f32.gmra.mxu0 %v7043
    %v7045 = vpop.f32.mrf.mxu0
    %v7046 = vadd.f32 %v6944, %v7045
    %v7047 = vpop.f32.mrf.mxu0
    %7048 = vmatprep.mubr.f32.mxu0 0.0
    %v7049 = vand.u32 %v675, 4294901760
    %7050 = vmatmul.mubr.f32.gmra.mxu0 %v7049
    %v7051 = vpop.f32.mrf.mxu0
    %v7052 = vadd.f32 %v6954, %v7051
    %v7053 = vpop.f32.mrf.mxu0
    %7054 = vmatprep.mubr.f32.mxu0 0.0
    %v7055 = vand.u32 %v678, 4294901760
    %7056 = vmatmul.mubr.f32.gmra.mxu0 %v7055
    %v7057 = vpop.f32.mrf.mxu0
    %v7058 = vadd.f32 %v6964, %v7057
    %v7059 = vpop.f32.mrf.mxu0
    %7060 = vdwg.mxu0
    %7061 = vmatprep.subr.mxu0 0.0
    %7062 = vmatpush1.msra.mxu0 0.0
    %7063 = vmatprep.subr.mxu0 0.0
    %7064 = vmatpush1.msra.mxu0 0.0
    %7065 = vmatprep.subr.mxu0 0.0
    %7066 = vmatpush1.msra.mxu0 0.0
    %7067 = vmatprep.subr.mxu0 0.0
    %7068 = vmatpush1.msra.mxu0 0.0
    %7069 = vmatprep.subr.mxu0 0.0
    %7070 = vmatpush1.msra.mxu0 0.0
    %7071 = vmatprep.subr.mxu0 0.0
    %7072 = vmatpush1.msra.mxu0 0.0
    %7073 = vmatprep.subr.mxu0 0.0
    %7074 = vmatpush1.msra.mxu0 0.0
    %7075 = vmatprep.subr.mxu0 0.0
    %7076 = vmatpush1.msra.mxu0 0.0
    %7077 = vmatprep.subr.mxu0 0.0
    %7078 = vmatpush1.msra.mxu0 0.0
    %7079 = vmatprep.subr.mxu0 0.0
    %7080 = vmatpush1.msra.mxu0 0.0
    %7081 = vmatprep.subr.mxu0 0.0
    %7082 = vmatpush1.msra.mxu0 0.0
    %7083 = vmatprep.subr.mxu0 0.0
    %7084 = vmatpush1.msra.mxu0 0.0
    %7085 = vmatprep.subr.mxu0 0.0
    %7086 = vmatpush1.msra.mxu0 0.0
    %7087 = vmatprep.subr.mxu0 0.0
    %7088 = vmatpush1.msra.mxu0 0.0
    %7089 = vmatprep.subr.mxu0 0.0
    %7090 = vmatpush1.msra.mxu0 0.0
    %7091 = vmatprep.subr.mxu0 0.0
    %v7092 = vand.u32 %v6859, 4294901760
    %v7093 = vsub.f32 %v6859, %v7092
    %7094 = vmatpush1.msra.mxu0 %v7093
    %7095 = vmatprep.subr.mxu0 0.0
    %7096 = vmatpush2.msra.mxu0 0.0
    %7097 = vmatprep.subr.mxu0 0.0
    %7098 = vmatpush2.msra.mxu0 0.0
    %7099 = vmatprep.subr.mxu0 0.0
    %7100 = vmatpush2.msra.mxu0 0.0
    %7101 = vmatprep.subr.mxu0 0.0
    %7102 = vmatpush2.msra.mxu0 0.0
    %7103 = vmatprep.subr.mxu0 0.0
    %7104 = vmatpush2.msra.mxu0 0.0
    %7105 = vmatprep.subr.mxu0 0.0
    %7106 = vmatpush2.msra.mxu0 0.0
    %7107 = vmatprep.subr.mxu0 0.0
    %7108 = vmatpush2.msra.mxu0 0.0
    %7109 = vmatprep.subr.mxu0 0.0
    %7110 = vmatpush2.msra.mxu0 0.0
    %7111 = vmatprep.subr.mxu0 0.0
    %7112 = vmatpush2.msra.mxu0 0.0
    %7113 = vmatprep.subr.mxu0 0.0
    %7114 = vmatpush2.msra.mxu0 0.0
    %7115 = vmatprep.subr.mxu0 0.0
    %7116 = vmatpush2.msra.mxu0 0.0
    %7117 = vmatprep.subr.mxu0 0.0
    %7118 = vmatpush2.msra.mxu0 0.0
    %7119 = vmatprep.subr.mxu0 0.0
    %7120 = vmatpush2.msra.mxu0 0.0
    %7121 = vmatprep.subr.mxu0 0.0
    %7122 = vmatpush2.msra.mxu0 0.0
    %7123 = vmatprep.subr.mxu0 0.0
    %7124 = vmatpush2.msra.mxu0 0.0
    %7125 = vmatprep.subr.mxu0 0.0
    %7126 = vmatpush2.msra.mxu0 0.0
    %7127 = vmatprep.mubr.f32.mxu0 0.0
    %v7128 = vand.u32 %v669, 4294901760
    %v7129 = vsub.f32 %v669, %v7128
    %7130 = vmatmul.mubr.f32.gmra.mxu0 %v7129
    %v7131 = vpop.f32.mrf.mxu0
    %v7132 = vadd.f32 %v7040, %v7131
    %v7133 = vpop.f32.mrf.mxu0
    %7134 = vmatprep.mubr.f32.mxu0 0.0
    %v7135 = vand.u32 %v672, 4294901760
    %v7136 = vsub.f32 %v672, %v7135
    %7137 = vmatmul.mubr.f32.gmra.mxu0 %v7136
    %v7138 = vpop.f32.mrf.mxu0
    %v7139 = vadd.f32 %v7046, %v7138
    %v7140 = vpop.f32.mrf.mxu0
    %7141 = vmatprep.mubr.f32.mxu0 0.0
    %v7142 = vand.u32 %v675, 4294901760
    %v7143 = vsub.f32 %v675, %v7142
    %7144 = vmatmul.mubr.f32.gmra.mxu0 %v7143
    %v7145 = vpop.f32.mrf.mxu0
    %v7146 = vadd.f32 %v7052, %v7145
    %v7147 = vpop.f32.mrf.mxu0
    %7148 = vmatprep.mubr.f32.mxu0 0.0
    %v7149 = vand.u32 %v678, 4294901760
    %v7150 = vsub.f32 %v678, %v7149
    %7151 = vmatmul.mubr.f32.gmra.mxu0 %v7150
    %v7152 = vpop.f32.mrf.mxu0
    %v7153 = vadd.f32 %v7058, %v7152
    %v7154 = vpop.f32.mrf.mxu0
    %7155 = vdwg.mxu0
    %7156 = vmatprep.subr.mxu0 0.0
    %7157 = vmatpush1.msra.mxu0 0.0
    %7158 = vmatprep.subr.mxu0 0.0
    %7159 = vmatpush1.msra.mxu0 0.0
    %7160 = vmatprep.subr.mxu0 0.0
    %7161 = vmatpush1.msra.mxu0 0.0
    %7162 = vmatprep.subr.mxu0 0.0
    %7163 = vmatpush1.msra.mxu0 0.0
    %7164 = vmatprep.subr.mxu0 0.0
    %7165 = vmatpush1.msra.mxu0 0.0
    %7166 = vmatprep.subr.mxu0 0.0
    %7167 = vmatpush1.msra.mxu0 0.0
    %7168 = vmatprep.subr.mxu0 0.0
    %7169 = vmatpush1.msra.mxu0 0.0
    %7170 = vmatprep.subr.mxu0 0.0
    %7171 = vmatpush1.msra.mxu0 0.0
    %7172 = vmatprep.subr.mxu0 0.0
    %7173 = vmatpush1.msra.mxu0 0.0
    %7174 = vmatprep.subr.mxu0 0.0
    %7175 = vmatpush1.msra.mxu0 0.0
    %7176 = vmatprep.subr.mxu0 0.0
    %7177 = vmatpush1.msra.mxu0 0.0
    %7178 = vmatprep.subr.mxu0 0.0
    %7179 = vmatpush1.msra.mxu0 0.0
    %7180 = vmatprep.subr.mxu0 0.0
    %7181 = vmatpush1.msra.mxu0 0.0
    %7182 = vmatprep.subr.mxu0 0.0
    %7183 = vmatpush1.msra.mxu0 0.0
    %7184 = vmatprep.subr.mxu0 0.0
    %7185 = vmatpush1.msra.mxu0 0.0
    %7186 = vmatprep.subr.mxu0 0.0
    %v7187 = vand.u32 %v6859, 4294901760
    %7188 = vmatpush1.msra.mxu0 %v7187
    %7189 = vmatprep.subr.mxu0 0.0
    %7190 = vmatpush2.msra.mxu0 0.0
    %7191 = vmatprep.subr.mxu0 0.0
    %7192 = vmatpush2.msra.mxu0 0.0
    %7193 = vmatprep.subr.mxu0 0.0
    %7194 = vmatpush2.msra.mxu0 0.0
    %7195 = vmatprep.subr.mxu0 0.0
    %7196 = vmatpush2.msra.mxu0 0.0
    %7197 = vmatprep.subr.mxu0 0.0
    %7198 = vmatpush2.msra.mxu0 0.0
    %7199 = vmatprep.subr.mxu0 0.0
    %7200 = vmatpush2.msra.mxu0 0.0
    %7201 = vmatprep.subr.mxu0 0.0
    %7202 = vmatpush2.msra.mxu0 0.0
    %7203 = vmatprep.subr.mxu0 0.0
    %7204 = vmatpush2.msra.mxu0 0.0
    %7205 = vmatprep.subr.mxu0 0.0
    %7206 = vmatpush2.msra.mxu0 0.0
    %7207 = vmatprep.subr.mxu0 0.0
    %7208 = vmatpush2.msra.mxu0 0.0
    %7209 = vmatprep.subr.mxu0 0.0
    %7210 = vmatpush2.msra.mxu0 0.0
    %7211 = vmatprep.subr.mxu0 0.0
    %7212 = vmatpush2.msra.mxu0 0.0
    %7213 = vmatprep.subr.mxu0 0.0
    %7214 = vmatpush2.msra.mxu0 0.0
    %7215 = vmatprep.subr.mxu0 0.0
    %7216 = vmatpush2.msra.mxu0 0.0
    %7217 = vmatprep.subr.mxu0 0.0
    %7218 = vmatpush2.msra.mxu0 0.0
    %7219 = vmatprep.subr.mxu0 0.0
    %7220 = vmatpush2.msra.mxu0 0.0
    %7221 = vmatprep.mubr.f32.mxu0 0.0
    %v7222 = vand.u32 %v669, 4294901760
    %v7223 = vsub.f32 %v669, %v7222
    %v7224 = vand.u32 %v7223, 4294901760
    %7225 = vmatmul.mubr.f32.gmra.mxu0 %v7224
    %v7226 = vpop.f32.mrf.mxu0
    %v7227 = vadd.f32 %v7132, %v7226
    %v7228 = vpop.f32.mrf.mxu0
    %7229 = vmatprep.mubr.f32.mxu0 0.0
    %v7230 = vand.u32 %v672, 4294901760
    %v7231 = vsub.f32 %v672, %v7230
    %v7232 = vand.u32 %v7231, 4294901760
    %7233 = vmatmul.mubr.f32.gmra.mxu0 %v7232
    %v7234 = vpop.f32.mrf.mxu0
    %v7235 = vadd.f32 %v7139, %v7234
    %v7236 = vpop.f32.mrf.mxu0
    %7237 = vmatprep.mubr.f32.mxu0 0.0
    %v7238 = vand.u32 %v675, 4294901760
    %v7239 = vsub.f32 %v675, %v7238
    %v7240 = vand.u32 %v7239, 4294901760
    %7241 = vmatmul.mubr.f32.gmra.mxu0 %v7240
    %v7242 = vpop.f32.mrf.mxu0
    %v7243 = vadd.f32 %v7146, %v7242
    %v7244 = vpop.f32.mrf.mxu0
    %7245 = vmatprep.mubr.f32.mxu0 0.0
    %v7246 = vand.u32 %v678, 4294901760
    %v7247 = vsub.f32 %v678, %v7246
    %v7248 = vand.u32 %v7247, 4294901760
    %7249 = vmatmul.mubr.f32.gmra.mxu0 %v7248
    %v7250 = vpop.f32.mrf.mxu0
    %v7251 = vadd.f32 %v7153, %v7250
    %v7252 = vpop.f32.mrf.mxu0
    %7253 = vdwg.mxu0
    %7254 = vmatprep.subr.mxu0 0.0
    %7255 = vmatpush1.msra.mxu0 0.0
    %7256 = vmatprep.subr.mxu0 0.0
    %7257 = vmatpush1.msra.mxu0 0.0
    %7258 = vmatprep.subr.mxu0 0.0
    %7259 = vmatpush1.msra.mxu0 0.0
    %7260 = vmatprep.subr.mxu0 0.0
    %7261 = vmatpush1.msra.mxu0 0.0
    %7262 = vmatprep.subr.mxu0 0.0
    %7263 = vmatpush1.msra.mxu0 0.0
    %7264 = vmatprep.subr.mxu0 0.0
    %7265 = vmatpush1.msra.mxu0 0.0
    %7266 = vmatprep.subr.mxu0 0.0
    %7267 = vmatpush1.msra.mxu0 0.0
    %7268 = vmatprep.subr.mxu0 0.0
    %7269 = vmatpush1.msra.mxu0 0.0
    %7270 = vmatprep.subr.mxu0 0.0
    %7271 = vmatpush1.msra.mxu0 0.0
    %7272 = vmatprep.subr.mxu0 0.0
    %7273 = vmatpush1.msra.mxu0 0.0
    %7274 = vmatprep.subr.mxu0 0.0
    %7275 = vmatpush1.msra.mxu0 0.0
    %7276 = vmatprep.subr.mxu0 0.0
    %7277 = vmatpush1.msra.mxu0 0.0
    %7278 = vmatprep.subr.mxu0 0.0
    %7279 = vmatpush1.msra.mxu0 0.0
    %7280 = vmatprep.subr.mxu0 0.0
    %7281 = vmatpush1.msra.mxu0 0.0
    %7282 = vmatprep.subr.mxu0 0.0
    %7283 = vmatpush1.msra.mxu0 0.0
    %7284 = vmatprep.subr.mxu0 0.0
    %v7285 = vand.u32 %v6859, 4294901760
    %v7286 = vsub.f32 %v6859, %v7285
    %v7287 = vand.u32 %v7286, 4294901760
    %7288 = vmatpush1.msra.mxu0 %v7287
    %7289 = vmatprep.subr.mxu0 0.0
    %7290 = vmatpush2.msra.mxu0 0.0
    %7291 = vmatprep.subr.mxu0 0.0
    %7292 = vmatpush2.msra.mxu0 0.0
    %7293 = vmatprep.subr.mxu0 0.0
    %7294 = vmatpush2.msra.mxu0 0.0
    %7295 = vmatprep.subr.mxu0 0.0
    %7296 = vmatpush2.msra.mxu0 0.0
    %7297 = vmatprep.subr.mxu0 0.0
    %7298 = vmatpush2.msra.mxu0 0.0
    %7299 = vmatprep.subr.mxu0 0.0
    %7300 = vmatpush2.msra.mxu0 0.0
    %7301 = vmatprep.subr.mxu0 0.0
    %7302 = vmatpush2.msra.mxu0 0.0
    %7303 = vmatprep.subr.mxu0 0.0
    %7304 = vmatpush2.msra.mxu0 0.0
    %7305 = vmatprep.subr.mxu0 0.0
    %7306 = vmatpush2.msra.mxu0 0.0
    %7307 = vmatprep.subr.mxu0 0.0
    %7308 = vmatpush2.msra.mxu0 0.0
    %7309 = vmatprep.subr.mxu0 0.0
    %7310 = vmatpush2.msra.mxu0 0.0
    %7311 = vmatprep.subr.mxu0 0.0
    %7312 = vmatpush2.msra.mxu0 0.0
    %7313 = vmatprep.subr.mxu0 0.0
    %7314 = vmatpush2.msra.mxu0 0.0
    %7315 = vmatprep.subr.mxu0 0.0
    %7316 = vmatpush2.msra.mxu0 0.0
    %7317 = vmatprep.subr.mxu0 0.0
    %7318 = vmatpush2.msra.mxu0 0.0
    %7319 = vmatprep.subr.mxu0 0.0
    %7320 = vmatpush2.msra.mxu0 0.0
    %7321 = vmatprep.mubr.f32.mxu0 0.0
    %v7322 = vand.u32 %v669, 4294901760
    %7323 = vmatmul.mubr.f32.gmra.mxu0 %v7322
    %v7324 = vpop.f32.mrf.mxu0
    %v7325 = vadd.f32 %v7227, %v7324
    %v7326 = vpop.f32.mrf.mxu0
    %7327 = vmatprep.mubr.f32.mxu0 0.0
    %v7328 = vand.u32 %v672, 4294901760
    %7329 = vmatmul.mubr.f32.gmra.mxu0 %v7328
    %v7330 = vpop.f32.mrf.mxu0
    %v7331 = vadd.f32 %v7235, %v7330
    %v7332 = vpop.f32.mrf.mxu0
    %7333 = vmatprep.mubr.f32.mxu0 0.0
    %v7334 = vand.u32 %v675, 4294901760
    %7335 = vmatmul.mubr.f32.gmra.mxu0 %v7334
    %v7336 = vpop.f32.mrf.mxu0
    %v7337 = vadd.f32 %v7243, %v7336
    %v7338 = vpop.f32.mrf.mxu0
    %7339 = vmatprep.mubr.f32.mxu0 0.0
    %v7340 = vand.u32 %v678, 4294901760
    %7341 = vmatmul.mubr.f32.gmra.mxu0 %v7340
    %v7342 = vpop.f32.mrf.mxu0
    %v7343 = vadd.f32 %v7251, %v7342
    %v7344 = vpop.f32.mrf.mxu0
    %7345 = vdwg.mxu0
    %7346 = vmatprep.subr.mxu0 0.0
    %7347 = vmatpush1.msra.mxu0 0.0
    %7348 = vmatprep.subr.mxu0 0.0
    %7349 = vmatpush1.msra.mxu0 0.0
    %7350 = vmatprep.subr.mxu0 0.0
    %7351 = vmatpush1.msra.mxu0 0.0
    %7352 = vmatprep.subr.mxu0 0.0
    %7353 = vmatpush1.msra.mxu0 0.0
    %7354 = vmatprep.subr.mxu0 0.0
    %7355 = vmatpush1.msra.mxu0 0.0
    %7356 = vmatprep.subr.mxu0 0.0
    %7357 = vmatpush1.msra.mxu0 0.0
    %7358 = vmatprep.subr.mxu0 0.0
    %7359 = vmatpush1.msra.mxu0 0.0
    %7360 = vmatprep.subr.mxu0 0.0
    %7361 = vmatpush1.msra.mxu0 0.0
    %7362 = vmatprep.subr.mxu0 0.0
    %7363 = vmatpush1.msra.mxu0 0.0
    %7364 = vmatprep.subr.mxu0 0.0
    %7365 = vmatpush1.msra.mxu0 0.0
    %7366 = vmatprep.subr.mxu0 0.0
    %7367 = vmatpush1.msra.mxu0 0.0
    %7368 = vmatprep.subr.mxu0 0.0
    %7369 = vmatpush1.msra.mxu0 0.0
    %7370 = vmatprep.subr.mxu0 0.0
    %7371 = vmatpush1.msra.mxu0 0.0
    %7372 = vmatprep.subr.mxu0 0.0
    %7373 = vmatpush1.msra.mxu0 0.0
    %7374 = vmatprep.subr.mxu0 0.0
    %7375 = vmatpush1.msra.mxu0 0.0
    %7376 = vmatprep.subr.mxu0 0.0
    %v7377 = vand.u32 %v6859, 4294901760
    %7378 = vmatpush1.msra.mxu0 %v7377
    %7379 = vmatprep.subr.mxu0 0.0
    %7380 = vmatpush2.msra.mxu0 0.0
    %7381 = vmatprep.subr.mxu0 0.0
    %7382 = vmatpush2.msra.mxu0 0.0
    %7383 = vmatprep.subr.mxu0 0.0
    %7384 = vmatpush2.msra.mxu0 0.0
    %7385 = vmatprep.subr.mxu0 0.0
    %7386 = vmatpush2.msra.mxu0 0.0
    %7387 = vmatprep.subr.mxu0 0.0
    %7388 = vmatpush2.msra.mxu0 0.0
    %7389 = vmatprep.subr.mxu0 0.0
    %7390 = vmatpush2.msra.mxu0 0.0
    %7391 = vmatprep.subr.mxu0 0.0
    %7392 = vmatpush2.msra.mxu0 0.0
    %7393 = vmatprep.subr.mxu0 0.0
    %7394 = vmatpush2.msra.mxu0 0.0
    %7395 = vmatprep.subr.mxu0 0.0
    %7396 = vmatpush2.msra.mxu0 0.0
    %7397 = vmatprep.subr.mxu0 0.0
    %7398 = vmatpush2.msra.mxu0 0.0
    %7399 = vmatprep.subr.mxu0 0.0
    %7400 = vmatpush2.msra.mxu0 0.0
    %7401 = vmatprep.subr.mxu0 0.0
    %7402 = vmatpush2.msra.mxu0 0.0
    %7403 = vmatprep.subr.mxu0 0.0
    %7404 = vmatpush2.msra.mxu0 0.0
    %7405 = vmatprep.subr.mxu0 0.0
    %7406 = vmatpush2.msra.mxu0 0.0
    %7407 = vmatprep.subr.mxu0 0.0
    %7408 = vmatpush2.msra.mxu0 0.0
    %7409 = vmatprep.subr.mxu0 0.0
    %7410 = vmatpush2.msra.mxu0 0.0
    %7411 = vmatprep.mubr.f32.mxu0 0.0
    %v7412 = vand.u32 %v669, 4294901760
    %7413 = vmatmul.mubr.f32.gmra.mxu0 %v7412
    %v7414 = vpop.f32.mrf.mxu0
    %v7415 = vadd.f32 %v7325, %v7414
    %v7416 = vpop.f32.mrf.mxu0
    %7417 = vmatprep.mubr.f32.mxu0 0.0
    %v7418 = vand.u32 %v672, 4294901760
    %7419 = vmatmul.mubr.f32.gmra.mxu0 %v7418
    %v7420 = vpop.f32.mrf.mxu0
    %v7421 = vadd.f32 %v7331, %v7420
    %v7422 = vpop.f32.mrf.mxu0
    %7423 = vmatprep.mubr.f32.mxu0 0.0
    %v7424 = vand.u32 %v675, 4294901760
    %7425 = vmatmul.mubr.f32.gmra.mxu0 %v7424
    %v7426 = vpop.f32.mrf.mxu0
    %v7427 = vadd.f32 %v7337, %v7426
    %v7428 = vpop.f32.mrf.mxu0
    %7429 = vmatprep.mubr.f32.mxu0 0.0
    %v7430 = vand.u32 %v678, 4294901760
    %7431 = vmatmul.mubr.f32.gmra.mxu0 %v7430
    %v7432 = vpop.f32.mrf.mxu0
    %v7433 = vadd.f32 %v7343, %v7432
    %v7434 = vpop.f32.mrf.mxu0
    %7435 = vdwg.mxu0
    %7436 = vmatprep.subr.mxu0 0.0
    %7437 = vmatpush1.msra.mxu0 0.0
    %7438 = vmatprep.subr.mxu0 0.0
    %7439 = vmatpush1.msra.mxu0 0.0
    %7440 = vmatprep.subr.mxu0 0.0
    %7441 = vmatpush1.msra.mxu0 0.0
    %7442 = vmatprep.subr.mxu0 0.0
    %7443 = vmatpush1.msra.mxu0 0.0
    %7444 = vmatprep.subr.mxu0 0.0
    %7445 = vmatpush1.msra.mxu0 0.0
    %7446 = vmatprep.subr.mxu0 0.0
    %7447 = vmatpush1.msra.mxu0 0.0
    %7448 = vmatprep.subr.mxu0 0.0
    %7449 = vmatpush1.msra.mxu0 0.0
    %7450 = vmatprep.subr.mxu0 0.0
    %7451 = vmatpush1.msra.mxu0 0.0
    %7452 = vmatprep.subr.mxu0 0.0
    %7453 = vmatpush1.msra.mxu0 0.0
    %7454 = vmatprep.subr.mxu0 0.0
    %7455 = vmatpush1.msra.mxu0 0.0
    %7456 = vmatprep.subr.mxu0 0.0
    %7457 = vmatpush1.msra.mxu0 0.0
    %7458 = vmatprep.subr.mxu0 0.0
    %7459 = vmatpush1.msra.mxu0 0.0
    %7460 = vmatprep.subr.mxu0 0.0
    %7461 = vmatpush1.msra.mxu0 0.0
    %7462 = vmatprep.subr.mxu0 0.0
    %7463 = vmatpush1.msra.mxu0 0.0
    %7464 = vmatprep.subr.mxu0 0.0
    %7465 = vmatpush1.msra.mxu0 0.0
    %7466 = vmatprep.subr.mxu0 0.0
    %v7467 = vand.u32 %v6860, 4294901760
    %7468 = vmatpush1.msra.mxu0 %v7467
    %7469 = vmatprep.subr.mxu0 0.0
    %7470 = vmatpush2.msra.mxu0 0.0
    %7471 = vmatprep.subr.mxu0 0.0
    %7472 = vmatpush2.msra.mxu0 0.0
    %7473 = vmatprep.subr.mxu0 0.0
    %7474 = vmatpush2.msra.mxu0 0.0
    %7475 = vmatprep.subr.mxu0 0.0
    %7476 = vmatpush2.msra.mxu0 0.0
    %7477 = vmatprep.subr.mxu0 0.0
    %7478 = vmatpush2.msra.mxu0 0.0
    %7479 = vmatprep.subr.mxu0 0.0
    %7480 = vmatpush2.msra.mxu0 0.0
    %7481 = vmatprep.subr.mxu0 0.0
    %7482 = vmatpush2.msra.mxu0 0.0
    %7483 = vmatprep.subr.mxu0 0.0
    %7484 = vmatpush2.msra.mxu0 0.0
    %7485 = vmatprep.subr.mxu0 0.0
    %7486 = vmatpush2.msra.mxu0 0.0
    %7487 = vmatprep.subr.mxu0 0.0
    %7488 = vmatpush2.msra.mxu0 0.0
    %7489 = vmatprep.subr.mxu0 0.0
    %7490 = vmatpush2.msra.mxu0 0.0
    %7491 = vmatprep.subr.mxu0 0.0
    %7492 = vmatpush2.msra.mxu0 0.0
    %7493 = vmatprep.subr.mxu0 0.0
    %7494 = vmatpush2.msra.mxu0 0.0
    %7495 = vmatprep.subr.mxu0 0.0
    %7496 = vmatpush2.msra.mxu0 0.0
    %7497 = vmatprep.subr.mxu0 0.0
    %7498 = vmatpush2.msra.mxu0 0.0
    %7499 = vmatprep.subr.mxu0 0.0
    %7500 = vmatpush2.msra.mxu0 0.0
    %7501 = vmatprep.mubr.f32.mxu0 0.0
    %v7502 = vand.u32 %v1256, 4294901760
    %v7503 = vsub.f32 %v1256, %v7502
    %v7504 = vand.u32 %v7503, 4294901760
    %v7505 = vsub.f32 %v7503, %v7504
    %v7506 = vand.u32 %v7505, 4294901760
    %7507 = vmatmul.mubr.f32.gmra.mxu0 %v7506
    %v7508 = vpop.f32.mrf.mxu0
    %v7509 = vadd.f32 0.0, %v7508
    %v7510 = vpop.f32.mrf.mxu0
    %7511 = vmatprep.mubr.f32.mxu0 0.0
    %v7512 = vand.u32 %v1259, 4294901760
    %v7513 = vsub.f32 %v1259, %v7512
    %v7514 = vand.u32 %v7513, 4294901760
    %v7515 = vsub.f32 %v7513, %v7514
    %v7516 = vand.u32 %v7515, 4294901760
    %7517 = vmatmul.mubr.f32.gmra.mxu0 %v7516
    %v7518 = vpop.f32.mrf.mxu0
    %v7519 = vadd.f32 0.0, %v7518
    %v7520 = vpop.f32.mrf.mxu0
    %7521 = vdwg.mxu0
    %7522 = vmatprep.subr.mxu0 0.0
    %7523 = vmatpush1.msra.mxu0 0.0
    %7524 = vmatprep.subr.mxu0 0.0
    %7525 = vmatpush1.msra.mxu0 0.0
    %7526 = vmatprep.subr.mxu0 0.0
    %7527 = vmatpush1.msra.mxu0 0.0
    %7528 = vmatprep.subr.mxu0 0.0
    %7529 = vmatpush1.msra.mxu0 0.0
    %7530 = vmatprep.subr.mxu0 0.0
    %7531 = vmatpush1.msra.mxu0 0.0
    %7532 = vmatprep.subr.mxu0 0.0
    %7533 = vmatpush1.msra.mxu0 0.0
    %7534 = vmatprep.subr.mxu0 0.0
    %7535 = vmatpush1.msra.mxu0 0.0
    %7536 = vmatprep.subr.mxu0 0.0
    %7537 = vmatpush1.msra.mxu0 0.0
    %7538 = vmatprep.subr.mxu0 0.0
    %7539 = vmatpush1.msra.mxu0 0.0
    %7540 = vmatprep.subr.mxu0 0.0
    %7541 = vmatpush1.msra.mxu0 0.0
    %7542 = vmatprep.subr.mxu0 0.0
    %7543 = vmatpush1.msra.mxu0 0.0
    %7544 = vmatprep.subr.mxu0 0.0
    %7545 = vmatpush1.msra.mxu0 0.0
    %7546 = vmatprep.subr.mxu0 0.0
    %7547 = vmatpush1.msra.mxu0 0.0
    %7548 = vmatprep.subr.mxu0 0.0
    %7549 = vmatpush1.msra.mxu0 0.0
    %7550 = vmatprep.subr.mxu0 0.0
    %7551 = vmatpush1.msra.mxu0 0.0
    %7552 = vmatprep.subr.mxu0 0.0
    %v7553 = vand.u32 %v6860, 4294901760
    %v7554 = vsub.f32 %v6860, %v7553
    %v7555 = vand.u32 %v7554, 4294901760
    %v7556 = vsub.f32 %v7554, %v7555
    %v7557 = vand.u32 %v7556, 4294901760
    %7558 = vmatpush1.msra.mxu0 %v7557
    %7559 = vmatprep.subr.mxu0 0.0
    %7560 = vmatpush2.msra.mxu0 0.0
    %7561 = vmatprep.subr.mxu0 0.0
    %7562 = vmatpush2.msra.mxu0 0.0
    %7563 = vmatprep.subr.mxu0 0.0
    %7564 = vmatpush2.msra.mxu0 0.0
    %7565 = vmatprep.subr.mxu0 0.0
    %7566 = vmatpush2.msra.mxu0 0.0
    %7567 = vmatprep.subr.mxu0 0.0
    %7568 = vmatpush2.msra.mxu0 0.0
    %7569 = vmatprep.subr.mxu0 0.0
    %7570 = vmatpush2.msra.mxu0 0.0
    %7571 = vmatprep.subr.mxu0 0.0
    %7572 = vmatpush2.msra.mxu0 0.0
    %7573 = vmatprep.subr.mxu0 0.0
    %7574 = vmatpush2.msra.mxu0 0.0
    %7575 = vmatprep.subr.mxu0 0.0
    %7576 = vmatpush2.msra.mxu0 0.0
    %7577 = vmatprep.subr.mxu0 0.0
    %7578 = vmatpush2.msra.mxu0 0.0
    %7579 = vmatprep.subr.mxu0 0.0
    %7580 = vmatpush2.msra.mxu0 0.0
    %7581 = vmatprep.subr.mxu0 0.0
    %7582 = vmatpush2.msra.mxu0 0.0
    %7583 = vmatprep.subr.mxu0 0.0
    %7584 = vmatpush2.msra.mxu0 0.0
    %7585 = vmatprep.subr.mxu0 0.0
    %7586 = vmatpush2.msra.mxu0 0.0
    %7587 = vmatprep.subr.mxu0 0.0
    %7588 = vmatpush2.msra.mxu0 0.0
    %7589 = vmatprep.subr.mxu0 0.0
    %7590 = vmatpush2.msra.mxu0 0.0
    %7591 = vmatprep.mubr.f32.mxu0 0.0
    %v7592 = vand.u32 %v1256, 4294901760
    %7593 = vmatmul.mubr.f32.gmra.mxu0 %v7592
    %v7594 = vpop.f32.mrf.mxu0
    %v7595 = vadd.f32 %v7509, %v7594
    %v7596 = vpop.f32.mrf.mxu0
    %7597 = vmatprep.mubr.f32.mxu0 0.0
    %v7598 = vand.u32 %v1259, 4294901760
    %7599 = vmatmul.mubr.f32.gmra.mxu0 %v7598
    %v7600 = vpop.f32.mrf.mxu0
    %v7601 = vadd.f32 %v7519, %v7600
    %v7602 = vpop.f32.mrf.mxu0
    %7603 = vdwg.mxu0
    %7604 = vmatprep.subr.mxu0 0.0
    %7605 = vmatpush1.msra.mxu0 0.0
    %7606 = vmatprep.subr.mxu0 0.0
    %7607 = vmatpush1.msra.mxu0 0.0
    %7608 = vmatprep.subr.mxu0 0.0
    %7609 = vmatpush1.msra.mxu0 0.0
    %7610 = vmatprep.subr.mxu0 0.0
    %7611 = vmatpush1.msra.mxu0 0.0
    %7612 = vmatprep.subr.mxu0 0.0
    %7613 = vmatpush1.msra.mxu0 0.0
    %7614 = vmatprep.subr.mxu0 0.0
    %7615 = vmatpush1.msra.mxu0 0.0
    %7616 = vmatprep.subr.mxu0 0.0
    %7617 = vmatpush1.msra.mxu0 0.0
    %7618 = vmatprep.subr.mxu0 0.0
    %7619 = vmatpush1.msra.mxu0 0.0
    %7620 = vmatprep.subr.mxu0 0.0
    %7621 = vmatpush1.msra.mxu0 0.0
    %7622 = vmatprep.subr.mxu0 0.0
    %7623 = vmatpush1.msra.mxu0 0.0
    %7624 = vmatprep.subr.mxu0 0.0
    %7625 = vmatpush1.msra.mxu0 0.0
    %7626 = vmatprep.subr.mxu0 0.0
    %7627 = vmatpush1.msra.mxu0 0.0
    %7628 = vmatprep.subr.mxu0 0.0
    %7629 = vmatpush1.msra.mxu0 0.0
    %7630 = vmatprep.subr.mxu0 0.0
    %7631 = vmatpush1.msra.mxu0 0.0
    %7632 = vmatprep.subr.mxu0 0.0
    %7633 = vmatpush1.msra.mxu0 0.0
    %7634 = vmatprep.subr.mxu0 0.0
    %v7635 = vand.u32 %v6860, 4294901760
    %v7636 = vsub.f32 %v6860, %v7635
    %7637 = vmatpush1.msra.mxu0 %v7636
    %7638 = vmatprep.subr.mxu0 0.0
    %7639 = vmatpush2.msra.mxu0 0.0
    %7640 = vmatprep.subr.mxu0 0.0
    %7641 = vmatpush2.msra.mxu0 0.0
    %7642 = vmatprep.subr.mxu0 0.0
    %7643 = vmatpush2.msra.mxu0 0.0
    %7644 = vmatprep.subr.mxu0 0.0
    %7645 = vmatpush2.msra.mxu0 0.0
    %7646 = vmatprep.subr.mxu0 0.0
    %7647 = vmatpush2.msra.mxu0 0.0
    %7648 = vmatprep.subr.mxu0 0.0
    %7649 = vmatpush2.msra.mxu0 0.0
    %7650 = vmatprep.subr.mxu0 0.0
    %7651 = vmatpush2.msra.mxu0 0.0
    %7652 = vmatprep.subr.mxu0 0.0
    %7653 = vmatpush2.msra.mxu0 0.0
    %7654 = vmatprep.subr.mxu0 0.0
    %7655 = vmatpush2.msra.mxu0 0.0
    %7656 = vmatprep.subr.mxu0 0.0
    %7657 = vmatpush2.msra.mxu0 0.0
    %7658 = vmatprep.subr.mxu0 0.0
    %7659 = vmatpush2.msra.mxu0 0.0
    %7660 = vmatprep.subr.mxu0 0.0
    %7661 = vmatpush2.msra.mxu0 0.0
    %7662 = vmatprep.subr.mxu0 0.0
    %7663 = vmatpush2.msra.mxu0 0.0
    %7664 = vmatprep.subr.mxu0 0.0
    %7665 = vmatpush2.msra.mxu0 0.0
    %7666 = vmatprep.subr.mxu0 0.0
    %7667 = vmatpush2.msra.mxu0 0.0
    %7668 = vmatprep.subr.mxu0 0.0
    %7669 = vmatpush2.msra.mxu0 0.0
    %7670 = vmatprep.mubr.f32.mxu0 0.0
    %v7671 = vand.u32 %v1256, 4294901760
    %v7672 = vsub.f32 %v1256, %v7671
    %7673 = vmatmul.mubr.f32.gmra.mxu0 %v7672
    %v7674 = vpop.f32.mrf.mxu0
    %v7675 = vadd.f32 %v7595, %v7674
    %v7676 = vpop.f32.mrf.mxu0
    %7677 = vmatprep.mubr.f32.mxu0 0.0
    %v7678 = vand.u32 %v1259, 4294901760
    %v7679 = vsub.f32 %v1259, %v7678
    %7680 = vmatmul.mubr.f32.gmra.mxu0 %v7679
    %v7681 = vpop.f32.mrf.mxu0
    %v7682 = vadd.f32 %v7601, %v7681
    %v7683 = vpop.f32.mrf.mxu0
    %7684 = vdwg.mxu0
    %7685 = vmatprep.subr.mxu0 0.0
    %7686 = vmatpush1.msra.mxu0 0.0
    %7687 = vmatprep.subr.mxu0 0.0
    %7688 = vmatpush1.msra.mxu0 0.0
    %7689 = vmatprep.subr.mxu0 0.0
    %7690 = vmatpush1.msra.mxu0 0.0
    %7691 = vmatprep.subr.mxu0 0.0
    %7692 = vmatpush1.msra.mxu0 0.0
    %7693 = vmatprep.subr.mxu0 0.0
    %7694 = vmatpush1.msra.mxu0 0.0
    %7695 = vmatprep.subr.mxu0 0.0
    %7696 = vmatpush1.msra.mxu0 0.0
    %7697 = vmatprep.subr.mxu0 0.0
    %7698 = vmatpush1.msra.mxu0 0.0
    %7699 = vmatprep.subr.mxu0 0.0
    %7700 = vmatpush1.msra.mxu0 0.0
    %7701 = vmatprep.subr.mxu0 0.0
    %7702 = vmatpush1.msra.mxu0 0.0
    %7703 = vmatprep.subr.mxu0 0.0
    %7704 = vmatpush1.msra.mxu0 0.0
    %7705 = vmatprep.subr.mxu0 0.0
    %7706 = vmatpush1.msra.mxu0 0.0
    %7707 = vmatprep.subr.mxu0 0.0
    %7708 = vmatpush1.msra.mxu0 0.0
    %7709 = vmatprep.subr.mxu0 0.0
    %7710 = vmatpush1.msra.mxu0 0.0
    %7711 = vmatprep.subr.mxu0 0.0
    %7712 = vmatpush1.msra.mxu0 0.0
    %7713 = vmatprep.subr.mxu0 0.0
    %7714 = vmatpush1.msra.mxu0 0.0
    %7715 = vmatprep.subr.mxu0 0.0
    %v7716 = vand.u32 %v6860, 4294901760
    %7717 = vmatpush1.msra.mxu0 %v7716
    %7718 = vmatprep.subr.mxu0 0.0
    %7719 = vmatpush2.msra.mxu0 0.0
    %7720 = vmatprep.subr.mxu0 0.0
    %7721 = vmatpush2.msra.mxu0 0.0
    %7722 = vmatprep.subr.mxu0 0.0
    %7723 = vmatpush2.msra.mxu0 0.0
    %7724 = vmatprep.subr.mxu0 0.0
    %7725 = vmatpush2.msra.mxu0 0.0
    %7726 = vmatprep.subr.mxu0 0.0
    %7727 = vmatpush2.msra.mxu0 0.0
    %7728 = vmatprep.subr.mxu0 0.0
    %7729 = vmatpush2.msra.mxu0 0.0
    %7730 = vmatprep.subr.mxu0 0.0
    %7731 = vmatpush2.msra.mxu0 0.0
    %7732 = vmatprep.subr.mxu0 0.0
    %7733 = vmatpush2.msra.mxu0 0.0
    %7734 = vmatprep.subr.mxu0 0.0
    %7735 = vmatpush2.msra.mxu0 0.0
    %7736 = vmatprep.subr.mxu0 0.0
    %7737 = vmatpush2.msra.mxu0 0.0
    %7738 = vmatprep.subr.mxu0 0.0
    %7739 = vmatpush2.msra.mxu0 0.0
    %7740 = vmatprep.subr.mxu0 0.0
    %7741 = vmatpush2.msra.mxu0 0.0
    %7742 = vmatprep.subr.mxu0 0.0
    %7743 = vmatpush2.msra.mxu0 0.0
    %7744 = vmatprep.subr.mxu0 0.0
    %7745 = vmatpush2.msra.mxu0 0.0
    %7746 = vmatprep.subr.mxu0 0.0
    %7747 = vmatpush2.msra.mxu0 0.0
    %7748 = vmatprep.subr.mxu0 0.0
    %7749 = vmatpush2.msra.mxu0 0.0
    %7750 = vmatprep.mubr.f32.mxu0 0.0
    %v7751 = vand.u32 %v1256, 4294901760
    %v7752 = vsub.f32 %v1256, %v7751
    %v7753 = vand.u32 %v7752, 4294901760
    %7754 = vmatmul.mubr.f32.gmra.mxu0 %v7753
    %v7755 = vpop.f32.mrf.mxu0
    %v7756 = vadd.f32 %v7675, %v7755
    %v7757 = vpop.f32.mrf.mxu0
    %7758 = vmatprep.mubr.f32.mxu0 0.0
    %v7759 = vand.u32 %v1259, 4294901760
    %v7760 = vsub.f32 %v1259, %v7759
    %v7761 = vand.u32 %v7760, 4294901760
    %7762 = vmatmul.mubr.f32.gmra.mxu0 %v7761
    %v7763 = vpop.f32.mrf.mxu0
    %v7764 = vadd.f32 %v7682, %v7763
    %v7765 = vpop.f32.mrf.mxu0
    %7766 = vdwg.mxu0
    %7767 = vmatprep.subr.mxu0 0.0
    %7768 = vmatpush1.msra.mxu0 0.0
    %7769 = vmatprep.subr.mxu0 0.0
    %7770 = vmatpush1.msra.mxu0 0.0
    %7771 = vmatprep.subr.mxu0 0.0
    %7772 = vmatpush1.msra.mxu0 0.0
    %7773 = vmatprep.subr.mxu0 0.0
    %7774 = vmatpush1.msra.mxu0 0.0
    %7775 = vmatprep.subr.mxu0 0.0
    %7776 = vmatpush1.msra.mxu0 0.0
    %7777 = vmatprep.subr.mxu0 0.0
    %7778 = vmatpush1.msra.mxu0 0.0
    %7779 = vmatprep.subr.mxu0 0.0
    %7780 = vmatpush1.msra.mxu0 0.0
    %7781 = vmatprep.subr.mxu0 0.0
    %7782 = vmatpush1.msra.mxu0 0.0
    %7783 = vmatprep.subr.mxu0 0.0
    %7784 = vmatpush1.msra.mxu0 0.0
    %7785 = vmatprep.subr.mxu0 0.0
    %7786 = vmatpush1.msra.mxu0 0.0
    %7787 = vmatprep.subr.mxu0 0.0
    %7788 = vmatpush1.msra.mxu0 0.0
    %7789 = vmatprep.subr.mxu0 0.0
    %7790 = vmatpush1.msra.mxu0 0.0
    %7791 = vmatprep.subr.mxu0 0.0
    %7792 = vmatpush1.msra.mxu0 0.0
    %7793 = vmatprep.subr.mxu0 0.0
    %7794 = vmatpush1.msra.mxu0 0.0
    %7795 = vmatprep.subr.mxu0 0.0
    %7796 = vmatpush1.msra.mxu0 0.0
    %7797 = vmatprep.subr.mxu0 0.0
    %v7798 = vand.u32 %v6860, 4294901760
    %v7799 = vsub.f32 %v6860, %v7798
    %v7800 = vand.u32 %v7799, 4294901760
    %7801 = vmatpush1.msra.mxu0 %v7800
    %7802 = vmatprep.subr.mxu0 0.0
    %7803 = vmatpush2.msra.mxu0 0.0
    %7804 = vmatprep.subr.mxu0 0.0
    %7805 = vmatpush2.msra.mxu0 0.0
    %7806 = vmatprep.subr.mxu0 0.0
    %7807 = vmatpush2.msra.mxu0 0.0
    %7808 = vmatprep.subr.mxu0 0.0
    %7809 = vmatpush2.msra.mxu0 0.0
    %7810 = vmatprep.subr.mxu0 0.0
    %7811 = vmatpush2.msra.mxu0 0.0
    %7812 = vmatprep.subr.mxu0 0.0
    %7813 = vmatpush2.msra.mxu0 0.0
    %7814 = vmatprep.subr.mxu0 0.0
    %7815 = vmatpush2.msra.mxu0 0.0
    %7816 = vmatprep.subr.mxu0 0.0
    %7817 = vmatpush2.msra.mxu0 0.0
    %7818 = vmatprep.subr.mxu0 0.0
    %7819 = vmatpush2.msra.mxu0 0.0
    %7820 = vmatprep.subr.mxu0 0.0
    %7821 = vmatpush2.msra.mxu0 0.0
    %7822 = vmatprep.subr.mxu0 0.0
    %7823 = vmatpush2.msra.mxu0 0.0
    %7824 = vmatprep.subr.mxu0 0.0
    %7825 = vmatpush2.msra.mxu0 0.0
    %7826 = vmatprep.subr.mxu0 0.0
    %7827 = vmatpush2.msra.mxu0 0.0
    %7828 = vmatprep.subr.mxu0 0.0
    %7829 = vmatpush2.msra.mxu0 0.0
    %7830 = vmatprep.subr.mxu0 0.0
    %7831 = vmatpush2.msra.mxu0 0.0
    %7832 = vmatprep.subr.mxu0 0.0
    %7833 = vmatpush2.msra.mxu0 0.0
    %7834 = vmatprep.mubr.f32.mxu0 0.0
    %v7835 = vand.u32 %v1256, 4294901760
    %7836 = vmatmul.mubr.f32.gmra.mxu0 %v7835
    %v7837 = vpop.f32.mrf.mxu0
    %v7838 = vadd.f32 %v7756, %v7837
    %v7839 = vpop.f32.mrf.mxu0
    %7840 = vmatprep.mubr.f32.mxu0 0.0
    %v7841 = vand.u32 %v1259, 4294901760
    %7842 = vmatmul.mubr.f32.gmra.mxu0 %v7841
    %v7843 = vpop.f32.mrf.mxu0
    %v7844 = vadd.f32 %v7764, %v7843
    %v7845 = vpop.f32.mrf.mxu0
    %7846 = vdwg.mxu0
    %7847 = vmatprep.subr.mxu0 0.0
    %7848 = vmatpush1.msra.mxu0 0.0
    %7849 = vmatprep.subr.mxu0 0.0
    %7850 = vmatpush1.msra.mxu0 0.0
    %7851 = vmatprep.subr.mxu0 0.0
    %7852 = vmatpush1.msra.mxu0 0.0
    %7853 = vmatprep.subr.mxu0 0.0
    %7854 = vmatpush1.msra.mxu0 0.0
    %7855 = vmatprep.subr.mxu0 0.0
    %7856 = vmatpush1.msra.mxu0 0.0
    %7857 = vmatprep.subr.mxu0 0.0
    %7858 = vmatpush1.msra.mxu0 0.0
    %7859 = vmatprep.subr.mxu0 0.0
    %7860 = vmatpush1.msra.mxu0 0.0
    %7861 = vmatprep.subr.mxu0 0.0
    %7862 = vmatpush1.msra.mxu0 0.0
    %7863 = vmatprep.subr.mxu0 0.0
    %7864 = vmatpush1.msra.mxu0 0.0
    %7865 = vmatprep.subr.mxu0 0.0
    %7866 = vmatpush1.msra.mxu0 0.0
    %7867 = vmatprep.subr.mxu0 0.0
    %7868 = vmatpush1.msra.mxu0 0.0
    %7869 = vmatprep.subr.mxu0 0.0
    %7870 = vmatpush1.msra.mxu0 0.0
    %7871 = vmatprep.subr.mxu0 0.0
    %7872 = vmatpush1.msra.mxu0 0.0
    %7873 = vmatprep.subr.mxu0 0.0
    %7874 = vmatpush1.msra.mxu0 0.0
    %7875 = vmatprep.subr.mxu0 0.0
    %7876 = vmatpush1.msra.mxu0 0.0
    %7877 = vmatprep.subr.mxu0 0.0
    %v7878 = vand.u32 %v6860, 4294901760
    %7879 = vmatpush1.msra.mxu0 %v7878
    %7880 = vmatprep.subr.mxu0 0.0
    %7881 = vmatpush2.msra.mxu0 0.0
    %7882 = vmatprep.subr.mxu0 0.0
    %7883 = vmatpush2.msra.mxu0 0.0
    %7884 = vmatprep.subr.mxu0 0.0
    %7885 = vmatpush2.msra.mxu0 0.0
    %7886 = vmatprep.subr.mxu0 0.0
    %7887 = vmatpush2.msra.mxu0 0.0
    %7888 = vmatprep.subr.mxu0 0.0
    %7889 = vmatpush2.msra.mxu0 0.0
    %7890 = vmatprep.subr.mxu0 0.0
    %7891 = vmatpush2.msra.mxu0 0.0
    %7892 = vmatprep.subr.mxu0 0.0
    %7893 = vmatpush2.msra.mxu0 0.0
    %7894 = vmatprep.subr.mxu0 0.0
    %7895 = vmatpush2.msra.mxu0 0.0
    %7896 = vmatprep.subr.mxu0 0.0
    %7897 = vmatpush2.msra.mxu0 0.0
    %7898 = vmatprep.subr.mxu0 0.0
    %7899 = vmatpush2.msra.mxu0 0.0
    %7900 = vmatprep.subr.mxu0 0.0
    %7901 = vmatpush2.msra.mxu0 0.0
    %7902 = vmatprep.subr.mxu0 0.0
    %7903 = vmatpush2.msra.mxu0 0.0
    %7904 = vmatprep.subr.mxu0 0.0
    %7905 = vmatpush2.msra.mxu0 0.0
    %7906 = vmatprep.subr.mxu0 0.0
    %7907 = vmatpush2.msra.mxu0 0.0
    %7908 = vmatprep.subr.mxu0 0.0
    %7909 = vmatpush2.msra.mxu0 0.0
    %7910 = vmatprep.subr.mxu0 0.0
    %7911 = vmatpush2.msra.mxu0 0.0
    %7912 = vmatprep.mubr.f32.mxu0 0.0
    %v7913 = vand.u32 %v1256, 4294901760
    %7914 = vmatmul.mubr.f32.gmra.mxu0 %v7913
    %v7915 = vpop.f32.mrf.mxu0
    %v7916 = vadd.f32 %v7838, %v7915
    %v7917 = vpop.f32.mrf.mxu0
    %7918 = vmatprep.mubr.f32.mxu0 0.0
    %v7919 = vand.u32 %v1259, 4294901760
    %7920 = vmatmul.mubr.f32.gmra.mxu0 %v7919
    %v7921 = vpop.f32.mrf.mxu0
    %v7922 = vadd.f32 %v7844, %v7921
    %v7923 = vpop.f32.mrf.mxu0
    %7924 = vdwg.mxu0
    %v7925 = vmul.f32 %v7916, %v7916
    %v7926 = vmul.f32 %v7922, %v7922
    %v7927 = vsel %vm1752, %v7925, 0.0
    %7928 = vadd.xlane.f32.xlu0 %v7927
    %v7929 = vpop.xlane.xlu0 %7928
    %v7930 = vsel %vm1752, %v7926, 0.0
    %7931 = vadd.xlane.f32.xlu0 %v7930
    %v7932 = vpop.xlane.xlu0 %7931
    %v7933 = vrsqrt.pop %v7929
    %v7934 = vmul.f32 %v7929, %v7933
    %vm7935 = vcmp.eq.f32.partialorder %v7929, inf
    %v7936 = vsel %vm7935, %v7929, %v7934
    %vm7937 = vcmp.eq.f32.partialorder %v7929, 0.0
    %v7938 = vand.u32 %v7929, 2147483648
    %v7939 = vsel %vm7937, %v7938, %v7936
    %v7940 = vrsqrt.pop %v7932
    %v7941 = vmul.f32 %v7932, %v7940
    %vm7942 = vcmp.eq.f32.partialorder %v7932, inf
    %v7943 = vsel %vm7942, %v7932, %v7941
    %vm7944 = vcmp.eq.f32.partialorder %v7932, 0.0
    %v7945 = vand.u32 %v7932, 2147483648
    %v7946 = vsel %vm7944, %v7945, %v7943
    %v7947 = vmul.f32 %v1777, %v7939
    %v7948 = vmul.f32 %v1777, %v7946
    %v7949 = vand.u32 2147483647, %v7947
    %vm7950 = vcmp.le.f32.partialorder %v7949, 0.7853982
    %vm7951 = vcmp.lt.s32.totalorder %v7947, 0
    %v7952 = vand.u32 %v7947, 2139095040
    %v7953 = vshrl.u32 %v7952, 23
    %v7954 = vsub.s32 %v7953, 127
    %v7955 = vand.u32 2147483647, %v7947
    %v7956 = vand.u32 %v7955, 8388607
    %v7957 = vor.u32 %v7956, 8388608
    %v7958 = vsub.s32 0, %v7957
    %v7959 = vadd.s32 %v7954, 1
    %vm7960 = vcmp.gt.s32.totalorder %v7959, 0
    %v7961 = vsel %vm7960, %v7959, 0
    %v7962 = vshrl.u32 %v7961, 5
    %v7963 = vand.u32 %v7961, 31
    %v7964 = vsub.s32 32, %v7963
    %v7965 = vshrl.u32 683565275, %v7964
    %v7966 = vshll.u32 683565275, %v7963
    %v7967 = vshrl.u32 2475754826, %v7964
    %v7968 = vor.u32 %v7966, %v7967
    %v7969 = vshll.u32 2475754826, %v7963
    %v7970 = vshrl.u32 2131351028, %v7964
    %v7971 = vor.u32 %v7969, %v7970
    %v7972 = vshll.u32 2131351028, %v7963
    %v7973 = vshrl.u32 2102212464, %v7964
    %v7974 = vor.u32 %v7972, %v7973
    %v7975 = vshll.u32 2102212464, %v7963
    %v7976 = vshrl.u32 920167782, %v7964
    %v7977 = vor.u32 %v7975, %v7976
    %v7978 = vshll.u32 920167782, %v7963
    %v7979 = vshrl.u32 1326507024, %v7964
    %v7980 = vor.u32 %v7978, %v7979
    %vm7981 = vcmp.lt.s32.totalorder %v7962, 1
    %vm7982 = vcmp.lt.s32.totalorder %v7962, 2
    %vm7983 = vcmp.lt.s32.totalorder %v7962, 3
    %vm7984 = vcmp.lt.s32.totalorder %v7962, 4
    %v7985 = vsel %vm7981, %v7965, %v7968
    %v7986 = vsel %vm7984, %v7974, 2102212464
    %v7987 = vsel %vm7983, %v7971, %v7986
    %v7988 = vsel %vm7982, %v7985, %v7987
    %v7989 = vsel %vm7981, %v7968, %v7971
    %v7990 = vsel %vm7984, %v7977, 920167782
    %v7991 = vsel %vm7983, %v7974, %v7990
    %v7992 = vsel %vm7982, %v7989, %v7991
    %v7993 = vsel %vm7981, %v7971, %v7974
    %v7994 = vsel %vm7984, %v7980, 1326507024
    %v7995 = vsel %vm7983, %v7977, %v7994
    %v7996 = vsel %vm7982, %v7993, %v7995
    %v7997 = vshll.u32 %v7957, 8
    %v7998 = vmul.u32.u64.compose %v7997, %v7996
    %v7999 = vextract.low.u32 %v7998
    %v8000 = vextract.high.u32 %v7998
    %v8001 = vmul.u32.u64.compose %v7997, %v7992
    %v8002 = vextract.low.u32 %v8001
    %v8003 = vextract.high.u32 %v8001
    %v8004 = vmul.u32 %v7997, %v7988
    %v8005 = vadd.s32 %v8000, %v8002
    %vm8006 = vc.u32 %v8000, %v8002
    %v8007 = vadd.s32 %v8003, 1
    %v8008 = vsel %vm8006, %v8007, %v8003
    %v8009 = vadd.s32 %v8004, %v8008
    %v8010 = vadd.s32 %v8009, 536870912
    %v8011 = vshrl.u32 %v8010, 30
    %v8012 = vshll.u32 %v8011, 30
    %v8013 = vsub.s32 %v8009, %v8012
    %vm8014 = vcmp.lt.s32.totalorder %v8013, 0
    %v8015 = vsub.s32 0, %v8013
    %v8016 = vsel %vm8014, %v8015, %v8013
    %v8017 = vclz %v8016
    %v8018 = vsub.s32 %v8017, 2
    %vm8019 = vcmp.gt.s32.totalorder 0, %v8018
    %v8020 = vsel %vm8019, 0, %v8018
    %v8021 = vsub.s32 32, %v8020
    %v8022 = vshll.u32 %v8013, %v8020
    %v8023 = vshrl.u32 %v8005, %v8021
    %v8024 = vor.u32 %v8022, %v8023
    %v8025 = vsub.s32 4294967266, %v8020
    %v8026 = vadd.s32 %v8025, 127
    %v8027 = vshll.u32 %v8026, 23
    %v8028 = vor.u32 4788187, %v8027
    %v8029 = vand.u32 2147483647, %v8028
    %v8031 = vcvt.s32.f32 %v8024
    %v8032 = vmul.f32 %v8031, %v8029
    %v8033 = vxor.u32 %v8032, 2147483648
    %v8034 = vsel %vm7951, %v8033, %v8032
    %v8035 = vsub.s32 4, %v8011
    %v8036 = vsel %vm7951, %v8035, %v8011
    %v8037 = vsel %vm7950, %v7947, %v8034
    %v8038 = vsel %vm7950, 0, %v8036
    %v8039 = vcosq.f32.pop %v8037
    %v8040 = vsinq.f32.pop %v8037
    %vm8041 = vweird.f32 %v7947
    %v8042 = vadd.s32 %v8038, 3
    %v8043 = vand.u32 %v8042, 3
    %vm8044 = vcmp.lt.s32.totalorder %v8043, 2
    %vm8045 = vcmp.eq.s32.totalorder %v8043, 0
    %v8046 = vxor.u32 %v8040, 2147483648
    %v8047 = vsel %vm8045, %v8039, %v8046
    %vm8048 = vcmp.eq.s32.totalorder %v8043, 2
    %v8049 = vxor.u32 %v8039, 2147483648
    %v8050 = vsel %vm8048, %v8049, %v8040
    %v8051 = vsel %vm8044, %v8047, %v8050
    %v8052 = vsel %vm8041, nan, %v8051
    %v8053 = vand.u32 2147483647, %v7948
    %vm8054 = vcmp.le.f32.partialorder %v8053, 0.7853982
    %vm8055 = vcmp.lt.s32.totalorder %v7948, 0
    %v8056 = vand.u32 %v7948, 2139095040
    %v8057 = vshrl.u32 %v8056, 23
    %v8058 = vsub.s32 %v8057, 127
    %v8059 = vand.u32 2147483647, %v7948
    %v8060 = vand.u32 %v8059, 8388607
    %v8061 = vor.u32 %v8060, 8388608
    %v8062 = vsub.s32 0, %v8061
    %v8063 = vadd.s32 %v8058, 1
    %vm8064 = vcmp.gt.s32.totalorder %v8063, 0
    %v8065 = vsel %vm8064, %v8063, 0
    %v8066 = vshrl.u32 %v8065, 5
    %v8067 = vand.u32 %v8065, 31
    %v8068 = vsub.s32 32, %v8067
    %v8069 = vshrl.u32 683565275, %v8068
    %v8070 = vshll.u32 683565275, %v8067
    %v8071 = vshrl.u32 2475754826, %v8068
    %v8072 = vor.u32 %v8070, %v8071
    %v8073 = vshll.u32 2475754826, %v8067
    %v8074 = vshrl.u32 2131351028, %v8068
    %v8075 = vor.u32 %v8073, %v8074
    %v8076 = vshll.u32 2131351028, %v8067
    %v8077 = vshrl.u32 2102212464, %v8068
    %v8078 = vor.u32 %v8076, %v8077
    %v8079 = vshll.u32 2102212464, %v8067
    %v8080 = vshrl.u32 920167782, %v8068
    %v8081 = vor.u32 %v8079, %v8080
    %v8082 = vshll.u32 920167782, %v8067
    %v8083 = vshrl.u32 1326507024, %v8068
    %v8084 = vor.u32 %v8082, %v8083
    %vm8085 = vcmp.lt.s32.totalorder %v8066, 1
    %vm8086 = vcmp.lt.s32.totalorder %v8066, 2
    %vm8087 = vcmp.lt.s32.totalorder %v8066, 3
    %vm8088 = vcmp.lt.s32.totalorder %v8066, 4
    %v8089 = vsel %vm8085, %v8069, %v8072
    %v8090 = vsel %vm8088, %v8078, 2102212464
    %v8091 = vsel %vm8087, %v8075, %v8090
    %v8092 = vsel %vm8086, %v8089, %v8091
    %v8093 = vsel %vm8085, %v8072, %v8075
    %v8094 = vsel %vm8088, %v8081, 920167782
    %v8095 = vsel %vm8087, %v8078, %v8094
    %v8096 = vsel %vm8086, %v8093, %v8095
    %v8097 = vsel %vm8085, %v8075, %v8078
    %v8098 = vsel %vm8088, %v8084, 1326507024
    %v8099 = vsel %vm8087, %v8081, %v8098
    %v8100 = vsel %vm8086, %v8097, %v8099
    %v8101 = vshll.u32 %v8061, 8
    %v8102 = vmul.u32.u64.compose %v8101, %v8100
    %v8103 = vextract.low.u32 %v8102
    %v8104 = vextract.high.u32 %v8102
    %v8105 = vmul.u32.u64.compose %v8101, %v8096
    %v8106 = vextract.low.u32 %v8105
    %v8107 = vextract.high.u32 %v8105
    %v8108 = vmul.u32 %v8101, %v8092
    %v8109 = vadd.s32 %v8104, %v8106
    %vm8110 = vc.u32 %v8104, %v8106
    %v8111 = vadd.s32 %v8107, 1
    %v8112 = vsel %vm8110, %v8111, %v8107
    %v8113 = vadd.s32 %v8108, %v8112
    %v8114 = vadd.s32 %v8113, 536870912
    %v8115 = vshrl.u32 %v8114, 30
    %v8116 = vshll.u32 %v8115, 30
    %v8117 = vsub.s32 %v8113, %v8116
    %vm8118 = vcmp.lt.s32.totalorder %v8117, 0
    %v8119 = vsub.s32 0, %v8117
    %v8120 = vsel %vm8118, %v8119, %v8117
    %v8121 = vclz %v8120
    %v8122 = vsub.s32 %v8121, 2
    %vm8123 = vcmp.gt.s32.totalorder 0, %v8122
    %v8124 = vsel %vm8123, 0, %v8122
    %v8125 = vsub.s32 32, %v8124
    %v8126 = vshll.u32 %v8117, %v8124
    %v8127 = vshrl.u32 %v8109, %v8125
    %v8128 = vor.u32 %v8126, %v8127
    %v8129 = vsub.s32 4294967266, %v8124
    %v8130 = vadd.s32 %v8129, 127
    %v8131 = vshll.u32 %v8130, 23
    %v8132 = vor.u32 4788187, %v8131
    %v8133 = vand.u32 2147483647, %v8132
    %v8135 = vcvt.s32.f32 %v8128
    %v8136 = vmul.f32 %v8135, %v8133
    %v8137 = vxor.u32 %v8136, 2147483648
    %v8138 = vsel %vm8055, %v8137, %v8136
    %v8139 = vsub.s32 4, %v8115
    %v8140 = vsel %vm8055, %v8139, %v8115
    %v8141 = vsel %vm8054, %v7948, %v8138
    %v8142 = vsel %vm8054, 0, %v8140
    %v8143 = vcosq.f32.pop %v8141
    %v8144 = vsinq.f32.pop %v8141
    %vm8145 = vweird.f32 %v7948
    %v8146 = vadd.s32 %v8142, 3
    %v8147 = vand.u32 %v8146, 3
    %vm8148 = vcmp.lt.s32.totalorder %v8147, 2
    %vm8149 = vcmp.eq.s32.totalorder %v8147, 0
    %v8150 = vxor.u32 %v8144, 2147483648
    %v8151 = vsel %vm8149, %v8143, %v8150
    %vm8152 = vcmp.eq.s32.totalorder %v8147, 2
    %v8153 = vxor.u32 %v8143, 2147483648
    %v8154 = vsel %vm8152, %v8153, %v8144
    %v8155 = vsel %vm8148, %v8151, %v8154
    %v8156 = vsel %vm8145, nan, %v8155
    %v8157 = vmul.f32 %v8052, 0.6324555
    %v8158 = vmul.f32 %v8156, 0.6324555
    %v8159 = vrcp.pop %v7939
    %v8160 = vmul.f32 %v8157, %v8159
    %v8161 = vrcp.pop %v7946
    %v8162 = vmul.f32 %v8158, %v8161
    %s8163 = scalar_lea.vmem %s31, 32
    %v8164 = vld [vmem:[%s8163] sm:$0xf]
    %v8165 = vld [vmem:[%s8163 + $0x4] sm:$0xf]
    %v8166 = vld [vmem:[%s8163 + $0x8] sm:$0xf]
    %v8167 = vld [vmem:[%s8163 + $0xc] sm:$0xf]
    %v8168 = vpack.c.bf16 %v7421, %v7415
    %s8169 = scalar_lea.vmem %s33, 32
    %v8170 = vld [vmem:[%s8169] sm:$0xf]
    %v8171 = vld [vmem:[%s8169 + $0x4] sm:$0xf]
    %v8172 = vld [vmem:[%s8169 + $0x8] sm:$0xf]
    %v8173 = vld [vmem:[%s8169 + $0xc] sm:$0xf]
    %v8174 = vpack.c.bf16 %v7433, %v7427
    %v8179 = vunpack.c.l.b16 %v8170
    %v8180 = vunpack.c.l.b16 %v8171
    %v8181 = vunpack.c.l.b16 %v8172
    %v8182 = vunpack.c.l.b16 %v8173
    %v8183 = vpack.c.b16 %v8180, %v8179
    %v8184 = vpack.c.b16 %v8182, %v8181
    %v8188 = vsel %vm473, %v8174, 0
    %8190 = vmatprep.subr.bf16.mxu0 0
    %8191 = vmatpush1.bf16.msra.mxu0 0
    %8192 = vmatprep.subr.bf16.mxu0 0
    %8193 = vmatpush1.bf16.msra.mxu0 0
    %8194 = vmatprep.subr.bf16.mxu0 0
    %8195 = vmatpush1.bf16.msra.mxu0 0
    %8196 = vmatprep.subr.bf16.mxu0 0
    %8197 = vmatpush1.bf16.msra.mxu0 0
    %8198 = vmatprep.subr.bf16.mxu0 0
    %8199 = vmatpush1.bf16.msra.mxu0 0
    %8200 = vmatprep.subr.bf16.mxu0 0
    %8201 = vmatpush1.bf16.msra.mxu0 0
    %8202 = vmatprep.subr.bf16.mxu0 0
    %8203 = vmatpush1.bf16.msra.mxu0 %v8184
    %8204 = vmatprep.subr.bf16.mxu0 0
    %8205 = vmatpush1.bf16.msra.mxu0 %v8183
    %8206 = vmatprep.subr.bf16.mxu0 0
    %8207 = vmatpush2.bf16.msra.mxu0 0
    %8208 = vmatprep.subr.bf16.mxu0 0
    %8209 = vmatpush2.bf16.msra.mxu0 0
    %8210 = vmatprep.subr.bf16.mxu0 0
    %8211 = vmatpush2.bf16.msra.mxu0 0
    %8212 = vmatprep.subr.bf16.mxu0 0
    %8213 = vmatpush2.bf16.msra.mxu0 0
    %8214 = vmatprep.subr.bf16.mxu0 0
    %8215 = vmatpush2.bf16.msra.mxu0 0
    %8216 = vmatprep.subr.bf16.mxu0 0
    %8217 = vmatpush2.bf16.msra.mxu0 0
    %8218 = vmatprep.subr.bf16.mxu0 0
    %8219 = vmatpush2.bf16.msra.mxu0 0
    %8220 = vmatprep.subr.bf16.mxu0 0
    %8221 = vmatpush2.bf16.msra.mxu0 0
    %8222 = vmatprep.mubr.bf16.mxu0 0
    %8223 = vmatmul.mubr.bf16.gmra.mxu0 %v8188
    %v8224 = vpop.f32.mrf.mxu0
    %v8225 = vadd.f32 0.0, %v8224
    %v8226 = vpop.f32.mrf.mxu0
    %v8227 = vpop.f32.mrf.mxu0
    %v8228 = vadd.f32 0.0, %v8227
    %v8229 = vpop.f32.mrf.mxu0
    %8230 = vdwg.mxu0
    %v8235 = vunpack.c.l.b16 %v8164
    %v8236 = vunpack.c.l.b16 %v8165
    %v8237 = vunpack.c.l.b16 %v8166
    %v8238 = vunpack.c.l.b16 %v8167
    %v8239 = vpack.c.b16 %v8236, %v8235
    %v8240 = vpack.c.b16 %v8238, %v8237
    %v8244 = vsel %vm473, %v8168, 0
    %8246 = vmatprep.subr.bf16.mxu0 0
    %8247 = vmatpush1.bf16.msra.mxu0 0
    %8248 = vmatprep.subr.bf16.mxu0 0
    %8249 = vmatpush1.bf16.msra.mxu0 0
    %8250 = vmatprep.subr.bf16.mxu0 0
    %8251 = vmatpush1.bf16.msra.mxu0 0
    %8252 = vmatprep.subr.bf16.mxu0 0
    %8253 = vmatpush1.bf16.msra.mxu0 0
    %8254 = vmatprep.subr.bf16.mxu0 0
    %8255 = vmatpush1.bf16.msra.mxu0 0
    %8256 = vmatprep.subr.bf16.mxu0 0
    %8257 = vmatpush1.bf16.msra.mxu0 0
    %8258 = vmatprep.subr.bf16.mxu0 0
    %8259 = vmatpush1.bf16.msra.mxu0 %v8240
    %8260 = vmatprep.subr.bf16.mxu0 0
    %8261 = vmatpush1.bf16.msra.mxu0 %v8239
    %8262 = vmatprep.subr.bf16.mxu0 0
    %8263 = vmatpush2.bf16.msra.mxu0 0
    %8264 = vmatprep.subr.bf16.mxu0 0
    %8265 = vmatpush2.bf16.msra.mxu0 0
    %8266 = vmatprep.subr.bf16.mxu0 0
    %8267 = vmatpush2.bf16.msra.mxu0 0
    %8268 = vmatprep.subr.bf16.mxu0 0
    %8269 = vmatpush2.bf16.msra.mxu0 0
    %8270 = vmatprep.subr.bf16.mxu0 0
    %8271 = vmatpush2.bf16.msra.mxu0 0
    %8272 = vmatprep.subr.bf16.mxu0 0
    %8273 = vmatpush2.bf16.msra.mxu0 0
    %8274 = vmatprep.subr.bf16.mxu0 0
    %8275 = vmatpush2.bf16.msra.mxu0 0
    %8276 = vmatprep.subr.bf16.mxu0 0
    %8277 = vmatpush2.bf16.msra.mxu0 0
    %8278 = vmatprep.mubr.bf16.mxu0 0
    %8279 = vmatmul.mubr.bf16.gmra.mxu0 %v8244
    %v8280 = vpop.f32.mrf.mxu0
    %v8281 = vadd.f32 %v8225, %v8280
    %v8282 = vpop.f32.mrf.mxu0
    %v8283 = vpop.f32.mrf.mxu0
    %v8284 = vadd.f32 %v8228, %v8283
    %v8285 = vpop.f32.mrf.mxu0
    %8286 = vdwg.mxu0
    %s8287 = scalar_lea.vmem [#allocation14], 2
    %v8288 = vld [vmem:[%s8287] sm:$0x1]
    %v8290 = vlaneseq
    %v8291 = vshrl.u32 %v8290, 7
    %v8292 = vsub.s32 0, %v8291
    %v8293 = vrot.slane %v8288, %v8292
    %v8295 = vmul.f32 %v7939, %v8293
    %v8296 = vmul.f32 %v7946, %v8293
    %v8297 = vadd.f32 %v8281, %v8295
    %v8298 = vadd.f32 %v8284, %v8296
    %s8299 = scalar_lea.vmem [#allocation16], 8
    %v8300 = vld [vmem:[%s8299] sm:$0xf]
    %v8301 = vpack.c.bf16 %v8162, %v8160
    %v8303 = vsel %vm394, %v8301, 0
    %v8306 = vsel %vm398, %v8300, 0
    %8308 = vmatprep.subr.bf16.mxu0 0
    %8309 = vmatpush1.bf16.msra.mxu0 0
    %8310 = vmatprep.subr.bf16.mxu0 0
    %8311 = vmatpush1.bf16.msra.mxu0 0
    %8312 = vmatprep.subr.bf16.mxu0 0
    %8313 = vmatpush1.bf16.msra.mxu0 0
    %8314 = vmatprep.subr.bf16.mxu0 0
    %8315 = vmatpush1.bf16.msra.mxu0 0
    %8316 = vmatprep.subr.bf16.mxu0 0
    %8317 = vmatpush1.bf16.msra.mxu0 0
    %8318 = vmatprep.subr.bf16.mxu0 0
    %8319 = vmatpush1.bf16.msra.mxu0 0
    %8320 = vmatprep.subr.bf16.mxu0 0
    %8321 = vmatpush1.bf16.msra.mxu0 0
    %8322 = vmatprep.subr.bf16.mxu0 0
    %8323 = vmatpush1.bf16.msra.mxu0 %v8306
    %8324 = vmatprep.subr.bf16.mxu0 0
    %8325 = vmatpush2.bf16.msra.mxu0 0
    %8326 = vmatprep.subr.bf16.mxu0 0
    %8327 = vmatpush2.bf16.msra.mxu0 0
    %8328 = vmatprep.subr.bf16.mxu0 0
    %8329 = vmatpush2.bf16.msra.mxu0 0
    %8330 = vmatprep.subr.bf16.mxu0 0
    %8331 = vmatpush2.bf16.msra.mxu0 0
    %8332 = vmatprep.subr.bf16.mxu0 0
    %8333 = vmatpush2.bf16.msra.mxu0 0
    %8334 = vmatprep.subr.bf16.mxu0 0
    %8335 = vmatpush2.bf16.msra.mxu0 0
    %8336 = vmatprep.subr.bf16.mxu0 0
    %8337 = vmatpush2.bf16.msra.mxu0 0
    %8338 = vmatprep.subr.bf16.mxu0 0
    %8339 = vmatpush2.bf16.msra.mxu0 0
    %8340 = vmatprep.mubr.bf16.mxu0 0
    %8341 = vmatmul.mubr.bf16.gmra.mxu0 %v8303
    %v8342 = vpop.f32.mrf.mxu0
    %v8343 = vadd.f32 0.0, %v8342
    %v8344 = vpop.f32.mrf.mxu0
    %v8345 = vpop.f32.mrf.mxu0
    %v8346 = vadd.f32 0.0, %v8345
    %v8347 = vpop.f32.mrf.mxu0
    %8348 = vdwg.mxu0
    %v8349 = vadd.f32 %v8297, %v8343
    %v8350 = vadd.f32 %v8298, %v8346
    %s8351 = scalar_lea.vmem %s39, 32
    %v8352 = vld [vmem:[%s8351] sm:$0xf]
    %v8353 = vld [vmem:[%s8351 + $0x4] sm:$0xf]
    %v8354 = vld [vmem:[%s8351 + $0x8] sm:$0xf]
    %v8355 = vld [vmem:[%s8351 + $0xc] sm:$0xf]
    %v8356 = vpack.c.bf16 %v5574, %v5571
    %v8361 = vunpack.c.l.b16 %v8352
    %v8362 = vunpack.c.l.b16 %v8353
    %v8363 = vunpack.c.l.b16 %v8354
    %v8364 = vunpack.c.l.b16 %v8355
    %v8365 = vpack.c.b16 %v8362, %v8361
    %v8366 = vpack.c.b16 %v8364, %v8363
    %v8370 = vsel %vm473, %v8356, 0
    %8372 = vmatprep.subr.bf16.mxu0 0
    %8373 = vmatpush1.bf16.msra.mxu0 0
    %8374 = vmatprep.subr.bf16.mxu0 0
    %8375 = vmatpush1.bf16.msra.mxu0 0
    %8376 = vmatprep.subr.bf16.mxu0 0
    %8377 = vmatpush1.bf16.msra.mxu0 0
    %8378 = vmatprep.subr.bf16.mxu0 0
    %8379 = vmatpush1.bf16.msra.mxu0 0
    %8380 = vmatprep.subr.bf16.mxu0 0
    %8381 = vmatpush1.bf16.msra.mxu0 0
    %8382 = vmatprep.subr.bf16.mxu0 0
    %8383 = vmatpush1.bf16.msra.mxu0 0
    %8384 = vmatprep.subr.bf16.mxu0 0
    %8385 = vmatpush1.bf16.msra.mxu0 %v8366
    %8386 = vmatprep.subr.bf16.mxu0 0
    %8387 = vmatpush1.bf16.msra.mxu0 %v8365
    %8388 = vmatprep.subr.bf16.mxu0 0
    %8389 = vmatpush2.bf16.msra.mxu0 0
    %8390 = vmatprep.subr.bf16.mxu0 0
    %8391 = vmatpush2.bf16.msra.mxu0 0
    %8392 = vmatprep.subr.bf16.mxu0 0
    %8393 = vmatpush2.bf16.msra.mxu0 0
    %8394 = vmatprep.subr.bf16.mxu0 0
    %8395 = vmatpush2.bf16.msra.mxu0 0
    %8396 = vmatprep.subr.bf16.mxu0 0
    %8397 = vmatpush2.bf16.msra.mxu0 0
    %8398 = vmatprep.subr.bf16.mxu0 0
    %8399 = vmatpush2.bf16.msra.mxu0 0
    %8400 = vmatprep.subr.bf16.mxu0 0
    %8401 = vmatpush2.bf16.msra.mxu0 0
    %8402 = vmatprep.subr.bf16.mxu0 0
    %8403 = vmatpush2.bf16.msra.mxu0 0
    %8404 = vmatprep.mubr.bf16.mxu0 0
    %8405 = vmatmul.mubr.bf16.gmra.mxu0 %v8370
    %v8406 = vpop.f32.mrf.mxu0
    %v8407 = vadd.f32 0.0, %v8406
    %v8408 = vpop.f32.mrf.mxu0
    %v8409 = vpop.f32.mrf.mxu0
    %v8410 = vadd.f32 0.0, %v8409
    %v8411 = vpop.f32.mrf.mxu0
    %8412 = vdwg.mxu0
    %v8413 = vadd.f32 %v8349, %v8407
    %v8414 = vadd.f32 %v8350, %v8410
    %s8415 = scalar_lea.vmem [#allocation17], 2
    %v8416 = vld [vmem:[%s8415] sm:$0x1]
    %v8418 = vlaneseq
    %v8419 = vshrl.u32 %v8418, 7
    %v8420 = vsub.s32 0, %v8419
    %v8421 = vrot.slane %v8416, %v8420
    %v8423 = vadd.f32 %v8413, %v8421
    %v8424 = vadd.f32 %v8414, %v8421
    %v8425 = vxor.u32 %v8423, 2147483648
    %v8426 = vxor.u32 %v8424, 2147483648
    %v8427 = vmul.f32 %v8425, 1.442695
    %v8428 = vpow.pop %v8427
    %v8429 = vmul.f32 %v8426, 1.442695
    %v8430 = vpow.pop %v8429
    %v8431 = vadd.f32 %v8428, 1.0
    %v8432 = vadd.f32 %v8430, 1.0
    %v8433 = vrcp.pop %v8431
    %v8434 = vmul.f32 1.0, %v8433
    %v8435 = vrcp.pop %v8432
    %v8436 = vmul.f32 1.0, %v8435
    %v8437 = vmul.f32 %v8423, %v8434
    %v8438 = vmul.f32 %v8424, %v8436
    %s8439 = scalar_lea.vmem %s47, 32
    %v8440 = vld [vmem:[%s8439] sm:$0xf]
    %v8441 = vld [vmem:[%s8439 + $0x4] sm:$0xf]
    %v8442 = vld [vmem:[%s8439 + $0x8] sm:$0xf]
    %v8443 = vld [vmem:[%s8439 + $0xc] sm:$0xf]
    %v8444 = vpack.c.bf16 %v8438, %v8437
    %s8445 = scalar_lea.vmem [#allocation20], 2
    %v8446 = vld [vmem:[%s8445] sm:$0x1]
    %v8448 = vlaneseq
    %v8449 = vshrl.u32 %v8448, 7
    %v8450 = vsub.s32 0, %v8449
    %v8451 = vrot.slane %v8446, %v8450
    %v8457 = vunpack.c.l.b16 %v8440
    %v8458 = vunpack.c.l.b16 %v8441
    %v8459 = vunpack.c.l.b16 %v8442
    %v8460 = vunpack.c.l.b16 %v8443
    %v8461 = vpack.c.b16 %v8458, %v8457
    %v8462 = vpack.c.b16 %v8460, %v8459
    %v8466 = vsel %vm473, %v8444, 0
    %8468 = vmatprep.subr.bf16.mxu0 0
    %8469 = vmatpush1.bf16.msra.mxu0 0
    %8470 = vmatprep.subr.bf16.mxu0 0
    %8471 = vmatpush1.bf16.msra.mxu0 0
    %8472 = vmatprep.subr.bf16.mxu0 0
    %8473 = vmatpush1.bf16.msra.mxu0 0
    %8474 = vmatprep.subr.bf16.mxu0 0
    %8475 = vmatpush1.bf16.msra.mxu0 0
    %8476 = vmatprep.subr.bf16.mxu0 0
    %8477 = vmatpush1.bf16.msra.mxu0 0
    %8478 = vmatprep.subr.bf16.mxu0 0
    %8479 = vmatpush1.bf16.msra.mxu0 0
    %8480 = vmatprep.subr.bf16.mxu0 0
    %8481 = vmatpush1.bf16.msra.mxu0 %v8462
    %8482 = vmatprep.subr.bf16.mxu0 0
    %8483 = vmatpush1.bf16.msra.mxu0 %v8461
    %8484 = vmatprep.subr.bf16.mxu0 0
    %8485 = vmatpush2.bf16.msra.mxu0 0
    %8486 = vmatprep.subr.bf16.mxu0 0
    %8487 = vmatpush2.bf16.msra.mxu0 0
    %8488 = vmatprep.subr.bf16.mxu0 0
    %8489 = vmatpush2.bf16.msra.mxu0 0
    %8490 = vmatprep.subr.bf16.mxu0 0
    %8491 = vmatpush2.bf16.msra.mxu0 0
    %8492 = vmatprep.subr.bf16.mxu0 0
    %8493 = vmatpush2.bf16.msra.mxu0 0
    %8494 = vmatprep.subr.bf16.mxu0 0
    %8495 = vmatpush2.bf16.msra.mxu0 0
    %8496 = vmatprep.subr.bf16.mxu0 0
    %8497 = vmatpush2.bf16.msra.mxu0 0
    %8498 = vmatprep.subr.bf16.mxu0 0
    %8499 = vmatpush2.bf16.msra.mxu0 0
    %8500 = vmatprep.mubr.bf16.mxu0 0
    %8501 = vmatmul.mubr.bf16.gmra.mxu0 %v8466
    %v8502 = vpop.f32.mrf.mxu0
    %v8503 = vadd.f32 %v8451, %v8502
    %v8504 = vpop.f32.mrf.mxu0
    %v8505 = vpop.f32.mrf.mxu0
    %v8506 = vadd.f32 %v8451, %v8505
    %v8507 = vpop.f32.mrf.mxu0
    %8508 = vdwg.mxu0
    %s8509 = scalar_lea.vmem %s43, 32
    %v8510 = vld [vmem:[%s8509] sm:$0xf]
    %v8511 = vld [vmem:[%s8509 + $0x4] sm:$0xf]
    %v8512 = vld [vmem:[%s8509 + $0x8] sm:$0xf]
    %v8513 = vld [vmem:[%s8509 + $0xc] sm:$0xf]
    %v8514 = vpack.c.bf16 %v8506, %v8503
    %v8519 = vunpack.c.l.b16 %v8510
    %v8520 = vunpack.c.l.b16 %v8511
    %v8521 = vunpack.c.l.b16 %v8512
    %v8522 = vunpack.c.l.b16 %v8513
    %v8523 = vpack.c.b16 %v8520, %v8519
    %v8524 = vpack.c.b16 %v8522, %v8521
    %v8528 = vsel %vm473, %v8514, 0
    %8530 = vmatprep.subr.bf16.mxu0 0
    %8531 = vmatpush1.bf16.msra.mxu0 0
    %8532 = vmatprep.subr.bf16.mxu0 0
    %8533 = vmatpush1.bf16.msra.mxu0 0
    %8534 = vmatprep.subr.bf16.mxu0 0
    %8535 = vmatpush1.bf16.msra.mxu0 0
    %8536 = vmatprep.subr.bf16.mxu0 0
    %8537 = vmatpush1.bf16.msra.mxu0 0
    %8538 = vmatprep.subr.bf16.mxu0 0
    %8539 = vmatpush1.bf16.msra.mxu0 0
    %8540 = vmatprep.subr.bf16.mxu0 0
    %8541 = vmatpush1.bf16.msra.mxu0 0
    %8542 = vmatprep.subr.bf16.mxu0 0
    %8543 = vmatpush1.bf16.msra.mxu0 %v8524
    %8544 = vmatprep.subr.bf16.mxu0 0
    %8545 = vmatpush1.bf16.msra.mxu0 %v8523
    %8546 = vmatprep.subr.bf16.mxu0 0
    %8547 = vmatpush2.bf16.msra.mxu0 0
    %8548 = vmatprep.subr.bf16.mxu0 0
    %8549 = vmatpush2.bf16.msra.mxu0 0
    %8550 = vmatprep.subr.bf16.mxu0 0
    %8551 = vmatpush2.bf16.msra.mxu0 0
    %8552 = vmatprep.subr.bf16.mxu0 0
    %8553 = vmatpush2.bf16.msra.mxu0 0
    %8554 = vmatprep.subr.bf16.mxu0 0
    %8555 = vmatpush2.bf16.msra.mxu0 0
    %8556 = vmatprep.subr.bf16.mxu0 0
    %8557 = vmatpush2.bf16.msra.mxu0 0
    %8558 = vmatprep.subr.bf16.mxu0 0
    %8559 = vmatpush2.bf16.msra.mxu0 0
    %8560 = vmatprep.subr.bf16.mxu0 0
    %8561 = vmatpush2.bf16.msra.mxu0 0
    %8562 = vmatprep.mubr.bf16.mxu0 0
    %8563 = vmatmul.mubr.bf16.gmra.mxu0 %v8528
    %v8564 = vpop.f32.mrf.mxu0
    %v8565 = vadd.f32 0.0, %v8564
    %v8566 = vpop.f32.mrf.mxu0
    %v8567 = vpop.f32.mrf.mxu0
    %v8568 = vadd.f32 0.0, %v8567
    %v8569 = vpop.f32.mrf.mxu0
    %8570 = vdwg.mxu0
    %8573 = vrot.lane.b32.xlu0 %v8565, 32
    %v8574 = vpop.permute.xlu0 %8573
    %8575 = vrot.lane.b32.xlu0 %v8568, 32
    %v8576 = vpop.permute.xlu0 %8575
    %v8579 = vadd.f32 %v8423, %v8574
    %v8580 = vadd.f32 %v8424, %v8576
    %v8581 = vxor.u32 %v8579, 2147483648
    %v8582 = vxor.u32 %v8580, 2147483648
    %v8583 = vmul.f32 %v8581, 1.442695
    %v8584 = vpow.pop %v8583
    %v8585 = vmul.f32 %v8582, 1.442695
    %v8586 = vpow.pop %v8585
    %v8587 = vadd.f32 %v8584, 1.0
    %v8588 = vadd.f32 %v8586, 1.0
    %v8589 = vrcp.pop %v8587
    %v8590 = vmul.f32 1.0, %v8589
    %v8591 = vrcp.pop %v8588
    %v8592 = vmul.f32 1.0, %v8591
    %v8593 = vmul.f32 %v8579, %v8590
    %v8594 = vmul.f32 %v8580, %v8592
    %s8595 = scalar_lea.vmem [#allocation22], 32
    %v8596 = vld [vmem:[%s8595] sm:$0xf]
    %v8597 = vld [vmem:[%s8595 + $0x4] sm:$0xf]
    %v8598 = vld [vmem:[%s8595 + $0x8] sm:$0xf]
    %v8599 = vld [vmem:[%s8595 + $0xc] sm:$0xf]
    %v8600 = vpack.c.bf16 %v8594, %v8593
    %s8601 = scalar_lea.vmem [#allocation23], 2
    %v8602 = vld [vmem:[%s8601] sm:$0x1]
    %v8604 = vlaneseq
    %v8605 = vshrl.u32 %v8604, 7
    %v8606 = vsub.s32 0, %v8605
    %v8607 = vrot.slane %v8602, %v8606
    %8610 = vrot.lane.b32.xlu0 %v8600, 96
    %v8611 = vpop.permute.xlu0 %8610
    %v8616 = vunpack.c.l.b16 %v8596
    %v8617 = vunpack.c.l.b16 %v8597
    %v8618 = vunpack.c.l.b16 %v8598
    %v8619 = vunpack.c.l.b16 %v8599
    %v8620 = vpack.c.b16 %v8617, %v8616
    %v8621 = vpack.c.b16 %v8619, %v8618
    %v8625 = vsel %vm473, %v8611, 0
    %8627 = vmatprep.subr.bf16.mxu0 0
    %8628 = vmatpush1.bf16.msra.mxu0 0
    %8629 = vmatprep.subr.bf16.mxu0 0
    %8630 = vmatpush1.bf16.msra.mxu0 0
    %8631 = vmatprep.subr.bf16.mxu0 0
    %8632 = vmatpush1.bf16.msra.mxu0 0
    %8633 = vmatprep.subr.bf16.mxu0 0
    %8634 = vmatpush1.bf16.msra.mxu0 0
    %8635 = vmatprep.subr.bf16.mxu0 0
    %8636 = vmatpush1.bf16.msra.mxu0 0
    %8637 = vmatprep.subr.bf16.mxu0 0
    %8638 = vmatpush1.bf16.msra.mxu0 0
    %8639 = vmatprep.subr.bf16.mxu0 0
    %8640 = vmatpush1.bf16.msra.mxu0 %v8621
    %8641 = vmatprep.subr.bf16.mxu0 0
    %8642 = vmatpush1.bf16.msra.mxu0 %v8620
    %8643 = vmatprep.subr.bf16.mxu0 0
    %8644 = vmatpush2.bf16.msra.mxu0 0
    %8645 = vmatprep.subr.bf16.mxu0 0
    %8646 = vmatpush2.bf16.msra.mxu0 0
    %8647 = vmatprep.subr.bf16.mxu0 0
    %8648 = vmatpush2.bf16.msra.mxu0 0
    %8649 = vmatprep.subr.bf16.mxu0 0
    %8650 = vmatpush2.bf16.msra.mxu0 0
    %8651 = vmatprep.subr.bf16.mxu0 0
    %8652 = vmatpush2.bf16.msra.mxu0 0
    %8653 = vmatprep.subr.bf16.mxu0 0
    %8654 = vmatpush2.bf16.msra.mxu0 0
    %8655 = vmatprep.subr.bf16.mxu0 0
    %8656 = vmatpush2.bf16.msra.mxu0 0
    %8657 = vmatprep.subr.bf16.mxu0 0
    %8658 = vmatpush2.bf16.msra.mxu0 0
    %8659 = vmatprep.mubr.bf16.mxu0 0
    %8660 = vmatmul.mubr.bf16.gmra.mxu0 %v8625
    %v8661 = vpop.f32.mrf.mxu0
    %v8662 = vadd.f32 %v8607, %v8661
    %v8663 = vpop.f32.mrf.mxu0
    %v8664 = vpop.f32.mrf.mxu0
    %v8665 = vadd.f32 %v8607, %v8664
    %v8666 = vpop.f32.mrf.mxu0
    %8667 = vdwg.mxu0
    %s8668 = scalar_lea.vmem [#allocation19], 2
    %v8669 = vld [vmem:[%s8668] sm:$0x1]
    %v8671 = vlaneseq
    %v8672 = vshrl.u32 %v8671, 7
    %v8673 = vsub.s32 0, %v8672
    %v8674 = vrot.slane %v8669, %v8673
    %8675 = vrot.lane.b32.xlu0 %v8674, 32
    %v8676 = vpop.permute.xlu0 %8675
    %v8678 = vadd.f32 %v8565, %v8676
    %v8679 = vadd.f32 %v8568, %v8676
    %v8680 = vxor.u32 %v8678, 2147483648
    %v8681 = vxor.u32 %v8679, 2147483648
    %v8682 = vmul.f32 %v8680, 1.442695
    %v8683 = vpow.pop %v8682
    %v8684 = vmul.f32 %v8681, 1.442695
    %v8685 = vpow.pop %v8684
    %v8686 = vadd.f32 %v8683, 1.0
    %v8687 = vadd.f32 %v8685, 1.0
    %v8688 = vrcp.pop %v8686
    %v8689 = vmul.f32 1.0, %v8688
    %v8690 = vrcp.pop %v8687
    %v8691 = vmul.f32 1.0, %v8690
    %v8692 = vmul.f32 %v8678, %v8689
    %v8693 = vmul.f32 %v8679, %v8691
    %s8694 = scalar_lea.vmem %s55, 64
    %v8695 = vld [vmem:[%s8694] sm:$0xf]
    %v8696 = vld [vmem:[%s8694 + $0x4] sm:$0xf]
    %v8697 = vld [vmem:[%s8694 + $0x8] sm:$0xf]
    %v8698 = vld [vmem:[%s8694 + $0xc] sm:$0xf]
    %v8699 = vld [vmem:[%s8694 + $0x10] sm:$0xf]
    %v8700 = vld [vmem:[%s8694 + $0x14] sm:$0xf]
    %v8701 = vld [vmem:[%s8694 + $0x18] sm:$0xf]
    %v8702 = vld [vmem:[%s8694 + $0x1c] sm:$0xf]
    %v8703 = vpack.c.bf16 %v8693, %v8692
    %s8704 = scalar_lea.vmem %s57, 2
    %v8705 = vld [vmem:[%s8704] sm:$0x1]
    %v8707 = vlaneseq
    %v8708 = vshrl.u32 %v8707, 7
    %v8709 = vsub.s32 0, %v8708
    %v8710 = vrot.slane %v8705, %v8709
    %8713 = vrot.lane.b32.xlu0 %v8703, 96
    %v8714 = vpop.permute.xlu0 %8713
    %v8723 = vunpack.c.l.b16 %v8695
    %v8724 = vunpack.c.l.b16 %v8696
    %v8725 = vunpack.c.l.b16 %v8697
    %v8726 = vunpack.c.l.b16 %v8698
    %v8727 = vunpack.c.l.b16 %v8699
    %v8728 = vunpack.c.l.b16 %v8700
    %v8729 = vunpack.c.l.b16 %v8701
    %v8730 = vunpack.c.l.b16 %v8702
    %v8731 = vpack.c.b16 %v8724, %v8723
    %v8732 = vpack.c.b16 %v8726, %v8725
    %v8733 = vpack.c.b16 %v8728, %v8727
    %v8734 = vpack.c.b16 %v8730, %v8729
    %v8740 = vsel %vm2557, %v8714, 0
    %8742 = vmatprep.subr.bf16.mxu0 0
    %8743 = vmatpush1.bf16.msra.mxu0 0
    %8744 = vmatprep.subr.bf16.mxu0 0
    %8745 = vmatpush1.bf16.msra.mxu0 0
    %8746 = vmatprep.subr.bf16.mxu0 0
    %8747 = vmatpush1.bf16.msra.mxu0 0
    %8748 = vmatprep.subr.bf16.mxu0 0
    %8749 = vmatpush1.bf16.msra.mxu0 0
    %8750 = vmatprep.subr.bf16.mxu0 0
    %8751 = vmatpush1.bf16.msra.mxu0 %v8734
    %8752 = vmatprep.subr.bf16.mxu0 0
    %8753 = vmatpush1.bf16.msra.mxu0 %v8733
    %8754 = vmatprep.subr.bf16.mxu0 0
    %8755 = vmatpush1.bf16.msra.mxu0 %v8732
    %8756 = vmatprep.subr.bf16.mxu0 0
    %8757 = vmatpush1.bf16.msra.mxu0 %v8731
    %8758 = vmatprep.subr.bf16.mxu0 0
    %8759 = vmatpush2.bf16.msra.mxu0 0
    %8760 = vmatprep.subr.bf16.mxu0 0
    %8761 = vmatpush2.bf16.msra.mxu0 0
    %8762 = vmatprep.subr.bf16.mxu0 0
    %8763 = vmatpush2.bf16.msra.mxu0 0
    %8764 = vmatprep.subr.bf16.mxu0 0
    %8765 = vmatpush2.bf16.msra.mxu0 0
    %8766 = vmatprep.subr.bf16.mxu0 0
    %8767 = vmatpush2.bf16.msra.mxu0 0
    %8768 = vmatprep.subr.bf16.mxu0 0
    %8769 = vmatpush2.bf16.msra.mxu0 0
    %8770 = vmatprep.subr.bf16.mxu0 0
    %8771 = vmatpush2.bf16.msra.mxu0 0
    %8772 = vmatprep.subr.bf16.mxu0 0
    %8773 = vmatpush2.bf16.msra.mxu0 0
    %8774 = vmatprep.mubr.bf16.mxu0 0
    %8775 = vmatmul.mubr.bf16.gmra.mxu0 %v8740
    %v8776 = vpop.f32.mrf.mxu0
    %v8777 = vadd.f32 %v8710, %v8776
    %v8778 = vpop.f32.mrf.mxu0
    %v8779 = vpop.f32.mrf.mxu0
    %v8780 = vadd.f32 %v8710, %v8779
    %v8781 = vpop.f32.mrf.mxu0
    %8782 = vdwg.mxu0
    %v8783 = vxor.u32 %v8777, 2147483648
    %v8784 = vxor.u32 %v8780, 2147483648
    %v8785 = vmul.f32 %v8783, 1.442695
    %v8786 = vpow.pop %v8785
    %v8787 = vmul.f32 %v8784, 1.442695
    %v8788 = vpow.pop %v8787
    %v8789 = vadd.f32 %v8786, 1.0
    %v8790 = vadd.f32 %v8788, 1.0
    %v8791 = vrcp.pop %v8789
    %v8792 = vmul.f32 1.0, %v8791
    %v8793 = vrcp.pop %v8790
    %v8794 = vmul.f32 1.0, %v8793
    %8796 = vset.pattern.permute.xlu0 0
    %8797 = vperm.xlu0 %8796, %v8792
    %v8798 = vpop.permute.xlu0 %8797
    %8801 = vset.pattern.permute.xlu0 0
    %8802 = vperm.xlu0 %8801, %v8794
    %v8803 = vpop.permute.xlu0 %8802
    %v8805 = vmul.f32 %v8503, %v8798
    %v8806 = vmul.f32 %v8506, %v8803
    %v8807 = vadd.f32 %v7939, 1.0
    %v8808 = vadd.f32 %v7946, 1.0
    %v8809 = vrcp.pop %v8807
    %v8810 = vmul.f32 %v7916, %v8809
    %v8811 = vrcp.pop %v8808
    %v8812 = vmul.f32 %v7922, %v8811
    %8814 = vset.pattern.permute.xlu0 1
    %8815 = vperm.xlu0 %8814, %v8777
    %v8816 = vpop.permute.xlu0 %8815
    %8819 = vset.pattern.permute.xlu0 1
    %8820 = vperm.xlu0 %8819, %v8780
    %v8821 = vpop.permute.xlu0 %8820
    %v8823 = vmul.f32 %v8810, %v8816
    %v8824 = vmul.f32 %v8812, %v8821
    %8825 = vmatprep.subr.mxu0 0.0
    %8826 = vmatpush1.msra.mxu0 0.0
    %8827 = vmatprep.subr.mxu0 0.0
    %8828 = vmatpush1.msra.mxu0 0.0
    %8829 = vmatprep.subr.mxu0 0.0
    %8830 = vmatpush1.msra.mxu0 0.0
    %8831 = vmatprep.subr.mxu0 0.0
    %8832 = vmatpush1.msra.mxu0 0.0
    %8833 = vmatprep.subr.mxu0 0.0
    %8834 = vmatpush1.msra.mxu0 0.0
    %8835 = vmatprep.subr.mxu0 0.0
    %8836 = vmatpush1.msra.mxu0 0.0
    %8837 = vmatprep.subr.mxu0 0.0
    %8838 = vmatpush1.msra.mxu0 0.0
    %8839 = vmatprep.subr.mxu0 0.0
    %8840 = vmatpush1.msra.mxu0 0.0
    %8841 = vmatprep.subr.mxu0 0.0
    %8842 = vmatpush1.msra.mxu0 0.0
    %8843 = vmatprep.subr.mxu0 0.0
    %8844 = vmatpush1.msra.mxu0 0.0
    %8845 = vmatprep.subr.mxu0 0.0
    %8846 = vmatpush1.msra.mxu0 0.0
    %8847 = vmatprep.subr.mxu0 0.0
    %8848 = vmatpush1.msra.mxu0 0.0
    %8849 = vmatprep.subr.mxu0 0.0
    %8850 = vmatpush1.msra.mxu0 0.0
    %8851 = vmatprep.subr.mxu0 0.0
    %8852 = vmatpush1.msra.mxu0 0.0
    %8853 = vmatprep.subr.mxu0 0.0
    %v8854 = vand.u32 %v8806, 4294901760
    %8855 = vmatpush1.msra.mxu0 %v8854
    %8856 = vmatprep.subr.mxu0 0.0
    %v8857 = vand.u32 %v8805, 4294901760
    %8858 = vmatpush1.msra.mxu0 %v8857
    %8859 = vmatprep.subr.mxu0 0.0
    %8860 = vmatpush2.msra.mxu0 0.0
    %8861 = vmatprep.subr.mxu0 0.0
    %8862 = vmatpush2.msra.mxu0 0.0
    %8863 = vmatprep.subr.mxu0 0.0
    %8864 = vmatpush2.msra.mxu0 0.0
    %8865 = vmatprep.subr.mxu0 0.0
    %8866 = vmatpush2.msra.mxu0 0.0
    %8867 = vmatprep.subr.mxu0 0.0
    %8868 = vmatpush2.msra.mxu0 0.0
    %8869 = vmatprep.subr.mxu0 0.0
    %8870 = vmatpush2.msra.mxu0 0.0
    %8871 = vmatprep.subr.mxu0 0.0
    %8872 = vmatpush2.msra.mxu0 0.0
    %8873 = vmatprep.subr.mxu0 0.0
    %8874 = vmatpush2.msra.mxu0 0.0
    %8875 = vmatprep.subr.mxu0 0.0
    %8876 = vmatpush2.msra.mxu0 0.0
    %8877 = vmatprep.subr.mxu0 0.0
    %8878 = vmatpush2.msra.mxu0 0.0
    %8879 = vmatprep.subr.mxu0 0.0
    %8880 = vmatpush2.msra.mxu0 0.0
    %8881 = vmatprep.subr.mxu0 0.0
    %8882 = vmatpush2.msra.mxu0 0.0
    %8883 = vmatprep.subr.mxu0 0.0
    %8884 = vmatpush2.msra.mxu0 0.0
    %8885 = vmatprep.subr.mxu0 0.0
    %8886 = vmatpush2.msra.mxu0 0.0
    %8887 = vmatprep.subr.mxu0 0.0
    %8888 = vmatpush2.msra.mxu0 0.0
    %8889 = vmatprep.subr.mxu0 0.0
    %8890 = vmatpush2.msra.mxu0 0.0
    %8891 = vmatprep.mubr.f32.mxu0 0.0
    %v8892 = vand.u32 %v2646, 4294901760
    %v8893 = vsub.f32 %v2646, %v8892
    %v8894 = vand.u32 %v8893, 4294901760
    %v8895 = vsub.f32 %v8893, %v8894
    %v8896 = vand.u32 %v8895, 4294901760
    %8897 = vmatmul.mubr.f32.gmra.mxu0 %v8896
    %v8898 = vpop.f32.mrf.mxu0
    %v8899 = vadd.f32 0.0, %v8898
    %v8900 = vpop.f32.mrf.mxu0
    %8901 = vdwg.mxu0
    %8902 = vmatprep.subr.mxu0 0.0
    %8903 = vmatpush1.msra.mxu0 0.0
    %8904 = vmatprep.subr.mxu0 0.0
    %8905 = vmatpush1.msra.mxu0 0.0
    %8906 = vmatprep.subr.mxu0 0.0
    %8907 = vmatpush1.msra.mxu0 0.0
    %8908 = vmatprep.subr.mxu0 0.0
    %8909 = vmatpush1.msra.mxu0 0.0
    %8910 = vmatprep.subr.mxu0 0.0
    %8911 = vmatpush1.msra.mxu0 0.0
    %8912 = vmatprep.subr.mxu0 0.0
    %8913 = vmatpush1.msra.mxu0 0.0
    %8914 = vmatprep.subr.mxu0 0.0
    %8915 = vmatpush1.msra.mxu0 0.0
    %8916 = vmatprep.subr.mxu0 0.0
    %8917 = vmatpush1.msra.mxu0 0.0
    %8918 = vmatprep.subr.mxu0 0.0
    %8919 = vmatpush1.msra.mxu0 0.0
    %8920 = vmatprep.subr.mxu0 0.0
    %8921 = vmatpush1.msra.mxu0 0.0
    %8922 = vmatprep.subr.mxu0 0.0
    %8923 = vmatpush1.msra.mxu0 0.0
    %8924 = vmatprep.subr.mxu0 0.0
    %8925 = vmatpush1.msra.mxu0 0.0
    %8926 = vmatprep.subr.mxu0 0.0
    %8927 = vmatpush1.msra.mxu0 0.0
    %8928 = vmatprep.subr.mxu0 0.0
    %8929 = vmatpush1.msra.mxu0 0.0
    %8930 = vmatprep.subr.mxu0 0.0
    %v8931 = vand.u32 %v8806, 4294901760
    %v8932 = vsub.f32 %v8806, %v8931
    %v8933 = vand.u32 %v8932, 4294901760
    %v8934 = vsub.f32 %v8932, %v8933
    %v8935 = vand.u32 %v8934, 4294901760
    %8936 = vmatpush1.msra.mxu0 %v8935
    %8937 = vmatprep.subr.mxu0 0.0
    %v8938 = vand.u32 %v8805, 4294901760
    %v8939 = vsub.f32 %v8805, %v8938
    %v8940 = vand.u32 %v8939, 4294901760
    %v8941 = vsub.f32 %v8939, %v8940
    %v8942 = vand.u32 %v8941, 4294901760
    %8943 = vmatpush1.msra.mxu0 %v8942
    %8944 = vmatprep.subr.mxu0 0.0
    %8945 = vmatpush2.msra.mxu0 0.0
    %8946 = vmatprep.subr.mxu0 0.0
    %8947 = vmatpush2.msra.mxu0 0.0
    %8948 = vmatprep.subr.mxu0 0.0
    %8949 = vmatpush2.msra.mxu0 0.0
    %8950 = vmatprep.subr.mxu0 0.0
    %8951 = vmatpush2.msra.mxu0 0.0
    %8952 = vmatprep.subr.mxu0 0.0
    %8953 = vmatpush2.msra.mxu0 0.0
    %8954 = vmatprep.subr.mxu0 0.0
    %8955 = vmatpush2.msra.mxu0 0.0
    %8956 = vmatprep.subr.mxu0 0.0
    %8957 = vmatpush2.msra.mxu0 0.0
    %8958 = vmatprep.subr.mxu0 0.0
    %8959 = vmatpush2.msra.mxu0 0.0
    %8960 = vmatprep.subr.mxu0 0.0
    %8961 = vmatpush2.msra.mxu0 0.0
    %8962 = vmatprep.subr.mxu0 0.0
    %8963 = vmatpush2.msra.mxu0 0.0
    %8964 = vmatprep.subr.mxu0 0.0
    %8965 = vmatpush2.msra.mxu0 0.0
    %8966 = vmatprep.subr.mxu0 0.0
    %8967 = vmatpush2.msra.mxu0 0.0
    %8968 = vmatprep.subr.mxu0 0.0
    %8969 = vmatpush2.msra.mxu0 0.0
    %8970 = vmatprep.subr.mxu0 0.0
    %8971 = vmatpush2.msra.mxu0 0.0
    %8972 = vmatprep.subr.mxu0 0.0
    %8973 = vmatpush2.msra.mxu0 0.0
    %8974 = vmatprep.subr.mxu0 0.0
    %8975 = vmatpush2.msra.mxu0 0.0
    %8976 = vmatprep.mubr.f32.mxu0 0.0
    %v8977 = vand.u32 %v2646, 4294901760
    %8978 = vmatmul.mubr.f32.gmra.mxu0 %v8977
    %v8979 = vpop.f32.mrf.mxu0
    %v8980 = vadd.f32 %v8899, %v8979
    %v8981 = vpop.f32.mrf.mxu0
    %8982 = vdwg.mxu0
    %8983 = vmatprep.subr.mxu0 0.0
    %8984 = vmatpush1.msra.mxu0 0.0
    %8985 = vmatprep.subr.mxu0 0.0
    %8986 = vmatpush1.msra.mxu0 0.0
    %8987 = vmatprep.subr.mxu0 0.0
    %8988 = vmatpush1.msra.mxu0 0.0
    %8989 = vmatprep.subr.mxu0 0.0
    %8990 = vmatpush1.msra.mxu0 0.0
    %8991 = vmatprep.subr.mxu0 0.0
    %8992 = vmatpush1.msra.mxu0 0.0
    %8993 = vmatprep.subr.mxu0 0.0
    %8994 = vmatpush1.msra.mxu0 0.0
    %8995 = vmatprep.subr.mxu0 0.0
    %8996 = vmatpush1.msra.mxu0 0.0
    %8997 = vmatprep.subr.mxu0 0.0
    %8998 = vmatpush1.msra.mxu0 0.0
    %8999 = vmatprep.subr.mxu0 0.0
    %9000 = vmatpush1.msra.mxu0 0.0
    %9001 = vmatprep.subr.mxu0 0.0
    %9002 = vmatpush1.msra.mxu0 0.0
    %9003 = vmatprep.subr.mxu0 0.0
    %9004 = vmatpush1.msra.mxu0 0.0
    %9005 = vmatprep.subr.mxu0 0.0
    %9006 = vmatpush1.msra.mxu0 0.0
    %9007 = vmatprep.subr.mxu0 0.0
    %9008 = vmatpush1.msra.mxu0 0.0
    %9009 = vmatprep.subr.mxu0 0.0
    %9010 = vmatpush1.msra.mxu0 0.0
    %9011 = vmatprep.subr.mxu0 0.0
    %v9012 = vand.u32 %v8806, 4294901760
    %v9013 = vsub.f32 %v8806, %v9012
    %9014 = vmatpush1.msra.mxu0 %v9013
    %9015 = vmatprep.subr.mxu0 0.0
    %v9016 = vand.u32 %v8805, 4294901760
    %v9017 = vsub.f32 %v8805, %v9016
    %9018 = vmatpush1.msra.mxu0 %v9017
    %9019 = vmatprep.subr.mxu0 0.0
    %9020 = vmatpush2.msra.mxu0 0.0
    %9021 = vmatprep.subr.mxu0 0.0
    %9022 = vmatpush2.msra.mxu0 0.0
    %9023 = vmatprep.subr.mxu0 0.0
    %9024 = vmatpush2.msra.mxu0 0.0
    %9025 = vmatprep.subr.mxu0 0.0
    %9026 = vmatpush2.msra.mxu0 0.0
    %9027 = vmatprep.subr.mxu0 0.0
    %9028 = vmatpush2.msra.mxu0 0.0
    %9029 = vmatprep.subr.mxu0 0.0
    %9030 = vmatpush2.msra.mxu0 0.0
    %9031 = vmatprep.subr.mxu0 0.0
    %9032 = vmatpush2.msra.mxu0 0.0
    %9033 = vmatprep.subr.mxu0 0.0
    %9034 = vmatpush2.msra.mxu0 0.0
    %9035 = vmatprep.subr.mxu0 0.0
    %9036 = vmatpush2.msra.mxu0 0.0
    %9037 = vmatprep.subr.mxu0 0.0
    %9038 = vmatpush2.msra.mxu0 0.0
    %9039 = vmatprep.subr.mxu0 0.0
    %9040 = vmatpush2.msra.mxu0 0.0
    %9041 = vmatprep.subr.mxu0 0.0
    %9042 = vmatpush2.msra.mxu0 0.0
    %9043 = vmatprep.subr.mxu0 0.0
    %9044 = vmatpush2.msra.mxu0 0.0
    %9045 = vmatprep.subr.mxu0 0.0
    %9046 = vmatpush2.msra.mxu0 0.0
    %9047 = vmatprep.subr.mxu0 0.0
    %9048 = vmatpush2.msra.mxu0 0.0
    %9049 = vmatprep.subr.mxu0 0.0
    %9050 = vmatpush2.msra.mxu0 0.0
    %9051 = vmatprep.mubr.f32.mxu0 0.0
    %v9052 = vand.u32 %v2646, 4294901760
    %v9053 = vsub.f32 %v2646, %v9052
    %9054 = vmatmul.mubr.f32.gmra.mxu0 %v9053
    %v9055 = vpop.f32.mrf.mxu0
    %v9056 = vadd.f32 %v8980, %v9055
    %v9057 = vpop.f32.mrf.mxu0
    %9058 = vdwg.mxu0
    %9059 = vmatprep.subr.mxu0 0.0
    %9060 = vmatpush1.msra.mxu0 0.0
    %9061 = vmatprep.subr.mxu0 0.0
    %9062 = vmatpush1.msra.mxu0 0.0
    %9063 = vmatprep.subr.mxu0 0.0
    %9064 = vmatpush1.msra.mxu0 0.0
    %9065 = vmatprep.subr.mxu0 0.0
    %9066 = vmatpush1.msra.mxu0 0.0
    %9067 = vmatprep.subr.mxu0 0.0
    %9068 = vmatpush1.msra.mxu0 0.0
    %9069 = vmatprep.subr.mxu0 0.0
    %9070 = vmatpush1.msra.mxu0 0.0
    %9071 = vmatprep.subr.mxu0 0.0
    %9072 = vmatpush1.msra.mxu0 0.0
    %9073 = vmatprep.subr.mxu0 0.0
    %9074 = vmatpush1.msra.mxu0 0.0
    %9075 = vmatprep.subr.mxu0 0.0
    %9076 = vmatpush1.msra.mxu0 0.0
    %9077 = vmatprep.subr.mxu0 0.0
    %9078 = vmatpush1.msra.mxu0 0.0
    %9079 = vmatprep.subr.mxu0 0.0
    %9080 = vmatpush1.msra.mxu0 0.0
    %9081 = vmatprep.subr.mxu0 0.0
    %9082 = vmatpush1.msra.mxu0 0.0
    %9083 = vmatprep.subr.mxu0 0.0
    %9084 = vmatpush1.msra.mxu0 0.0
    %9085 = vmatprep.subr.mxu0 0.0
    %9086 = vmatpush1.msra.mxu0 0.0
    %9087 = vmatprep.subr.mxu0 0.0
    %v9088 = vand.u32 %v8806, 4294901760
    %9089 = vmatpush1.msra.mxu0 %v9088
    %9090 = vmatprep.subr.mxu0 0.0
    %v9091 = vand.u32 %v8805, 4294901760
    %9092 = vmatpush1.msra.mxu0 %v9091
    %9093 = vmatprep.subr.mxu0 0.0
    %9094 = vmatpush2.msra.mxu0 0.0
    %9095 = vmatprep.subr.mxu0 0.0
    %9096 = vmatpush2.msra.mxu0 0.0
    %9097 = vmatprep.subr.mxu0 0.0
    %9098 = vmatpush2.msra.mxu0 0.0
    %9099 = vmatprep.subr.mxu0 0.0
    %9100 = vmatpush2.msra.mxu0 0.0
    %9101 = vmatprep.subr.mxu0 0.0
    %9102 = vmatpush2.msra.mxu0 0.0
    %9103 = vmatprep.subr.mxu0 0.0
    %9104 = vmatpush2.msra.mxu0 0.0
    %9105 = vmatprep.subr.mxu0 0.0
    %9106 = vmatpush2.msra.mxu0 0.0
    %9107 = vmatprep.subr.mxu0 0.0
    %9108 = vmatpush2.msra.mxu0 0.0
    %9109 = vmatprep.subr.mxu0 0.0
    %9110 = vmatpush2.msra.mxu0 0.0
    %9111 = vmatprep.subr.mxu0 0.0
    %9112 = vmatpush2.msra.mxu0 0.0
    %9113 = vmatprep.subr.mxu0 0.0
    %9114 = vmatpush2.msra.mxu0 0.0
    %9115 = vmatprep.subr.mxu0 0.0
    %9116 = vmatpush2.msra.mxu0 0.0
    %9117 = vmatprep.subr.mxu0 0.0
    %9118 = vmatpush2.msra.mxu0 0.0
    %9119 = vmatprep.subr.mxu0 0.0
    %9120 = vmatpush2.msra.mxu0 0.0
    %9121 = vmatprep.subr.mxu0 0.0
    %9122 = vmatpush2.msra.mxu0 0.0
    %9123 = vmatprep.subr.mxu0 0.0
    %9124 = vmatpush2.msra.mxu0 0.0
    %9125 = vmatprep.mubr.f32.mxu0 0.0
    %v9126 = vand.u32 %v2646, 4294901760
    %v9127 = vsub.f32 %v2646, %v9126
    %v9128 = vand.u32 %v9127, 4294901760
    %9129 = vmatmul.mubr.f32.gmra.mxu0 %v9128
    %v9130 = vpop.f32.mrf.mxu0
    %v9131 = vadd.f32 %v9056, %v9130
    %v9132 = vpop.f32.mrf.mxu0
    %9133 = vdwg.mxu0
    %9134 = vmatprep.subr.mxu0 0.0
    %9135 = vmatpush1.msra.mxu0 0.0
    %9136 = vmatprep.subr.mxu0 0.0
    %9137 = vmatpush1.msra.mxu0 0.0
    %9138 = vmatprep.subr.mxu0 0.0
    %9139 = vmatpush1.msra.mxu0 0.0
    %9140 = vmatprep.subr.mxu0 0.0
    %9141 = vmatpush1.msra.mxu0 0.0
    %9142 = vmatprep.subr.mxu0 0.0
    %9143 = vmatpush1.msra.mxu0 0.0
    %9144 = vmatprep.subr.mxu0 0.0
    %9145 = vmatpush1.msra.mxu0 0.0
    %9146 = vmatprep.subr.mxu0 0.0
    %9147 = vmatpush1.msra.mxu0 0.0
    %9148 = vmatprep.subr.mxu0 0.0
    %9149 = vmatpush1.msra.mxu0 0.0
    %9150 = vmatprep.subr.mxu0 0.0
    %9151 = vmatpush1.msra.mxu0 0.0
    %9152 = vmatprep.subr.mxu0 0.0
    %9153 = vmatpush1.msra.mxu0 0.0
    %9154 = vmatprep.subr.mxu0 0.0
    %9155 = vmatpush1.msra.mxu0 0.0
    %9156 = vmatprep.subr.mxu0 0.0
    %9157 = vmatpush1.msra.mxu0 0.0
    %9158 = vmatprep.subr.mxu0 0.0
    %9159 = vmatpush1.msra.mxu0 0.0
    %9160 = vmatprep.subr.mxu0 0.0
    %9161 = vmatpush1.msra.mxu0 0.0
    %9162 = vmatprep.subr.mxu0 0.0
    %v9163 = vand.u32 %v8806, 4294901760
    %v9164 = vsub.f32 %v8806, %v9163
    %v9165 = vand.u32 %v9164, 4294901760
    %9166 = vmatpush1.msra.mxu0 %v9165
    %9167 = vmatprep.subr.mxu0 0.0
    %v9168 = vand.u32 %v8805, 4294901760
    %v9169 = vsub.f32 %v8805, %v9168
    %v9170 = vand.u32 %v9169, 4294901760
    %9171 = vmatpush1.msra.mxu0 %v9170
    %9172 = vmatprep.subr.mxu0 0.0
    %9173 = vmatpush2.msra.mxu0 0.0
    %9174 = vmatprep.subr.mxu0 0.0
    %9175 = vmatpush2.msra.mxu0 0.0
    %9176 = vmatprep.subr.mxu0 0.0
    %9177 = vmatpush2.msra.mxu0 0.0
    %9178 = vmatprep.subr.mxu0 0.0
    %9179 = vmatpush2.msra.mxu0 0.0
    %9180 = vmatprep.subr.mxu0 0.0
    %9181 = vmatpush2.msra.mxu0 0.0
    %9182 = vmatprep.subr.mxu0 0.0
    %9183 = vmatpush2.msra.mxu0 0.0
    %9184 = vmatprep.subr.mxu0 0.0
    %9185 = vmatpush2.msra.mxu0 0.0
    %9186 = vmatprep.subr.mxu0 0.0
    %9187 = vmatpush2.msra.mxu0 0.0
    %9188 = vmatprep.subr.mxu0 0.0
    %9189 = vmatpush2.msra.mxu0 0.0
    %9190 = vmatprep.subr.mxu0 0.0
    %9191 = vmatpush2.msra.mxu0 0.0
    %9192 = vmatprep.subr.mxu0 0.0
    %9193 = vmatpush2.msra.mxu0 0.0
    %9194 = vmatprep.subr.mxu0 0.0
    %9195 = vmatpush2.msra.mxu0 0.0
    %9196 = vmatprep.subr.mxu0 0.0
    %9197 = vmatpush2.msra.mxu0 0.0
    %9198 = vmatprep.subr.mxu0 0.0
    %9199 = vmatpush2.msra.mxu0 0.0
    %9200 = vmatprep.subr.mxu0 0.0
    %9201 = vmatpush2.msra.mxu0 0.0
    %9202 = vmatprep.subr.mxu0 0.0
    %9203 = vmatpush2.msra.mxu0 0.0
    %9204 = vmatprep.mubr.f32.mxu0 0.0
    %v9205 = vand.u32 %v2646, 4294901760
    %9206 = vmatmul.mubr.f32.gmra.mxu0 %v9205
    %v9207 = vpop.f32.mrf.mxu0
    %v9208 = vadd.f32 %v9131, %v9207
    %v9209 = vpop.f32.mrf.mxu0
    %9210 = vdwg.mxu0
    %9211 = vmatprep.subr.mxu0 0.0
    %9212 = vmatpush1.msra.mxu0 0.0
    %9213 = vmatprep.subr.mxu0 0.0
    %9214 = vmatpush1.msra.mxu0 0.0
    %9215 = vmatprep.subr.mxu0 0.0
    %9216 = vmatpush1.msra.mxu0 0.0
    %9217 = vmatprep.subr.mxu0 0.0
    %9218 = vmatpush1.msra.mxu0 0.0
    %9219 = vmatprep.subr.mxu0 0.0
    %9220 = vmatpush1.msra.mxu0 0.0
    %9221 = vmatprep.subr.mxu0 0.0
    %9222 = vmatpush1.msra.mxu0 0.0
    %9223 = vmatprep.subr.mxu0 0.0
    %9224 = vmatpush1.msra.mxu0 0.0
    %9225 = vmatprep.subr.mxu0 0.0
    %9226 = vmatpush1.msra.mxu0 0.0
    %9227 = vmatprep.subr.mxu0 0.0
    %9228 = vmatpush1.msra.mxu0 0.0
    %9229 = vmatprep.subr.mxu0 0.0
    %9230 = vmatpush1.msra.mxu0 0.0
    %9231 = vmatprep.subr.mxu0 0.0
    %9232 = vmatpush1.msra.mxu0 0.0
    %9233 = vmatprep.subr.mxu0 0.0
    %9234 = vmatpush1.msra.mxu0 0.0
    %9235 = vmatprep.subr.mxu0 0.0
    %9236 = vmatpush1.msra.mxu0 0.0
    %9237 = vmatprep.subr.mxu0 0.0
    %9238 = vmatpush1.msra.mxu0 0.0
    %9239 = vmatprep.subr.mxu0 0.0
    %v9240 = vand.u32 %v8806, 4294901760
    %9241 = vmatpush1.msra.mxu0 %v9240
    %9242 = vmatprep.subr.mxu0 0.0
    %v9243 = vand.u32 %v8805, 4294901760
    %9244 = vmatpush1.msra.mxu0 %v9243
    %9245 = vmatprep.subr.mxu0 0.0
    %9246 = vmatpush2.msra.mxu0 0.0
    %9247 = vmatprep.subr.mxu0 0.0
    %9248 = vmatpush2.msra.mxu0 0.0
    %9249 = vmatprep.subr.mxu0 0.0
    %9250 = vmatpush2.msra.mxu0 0.0
    %9251 = vmatprep.subr.mxu0 0.0
    %9252 = vmatpush2.msra.mxu0 0.0
    %9253 = vmatprep.subr.mxu0 0.0
    %9254 = vmatpush2.msra.mxu0 0.0
    %9255 = vmatprep.subr.mxu0 0.0
    %9256 = vmatpush2.msra.mxu0 0.0
    %9257 = vmatprep.subr.mxu0 0.0
    %9258 = vmatpush2.msra.mxu0 0.0
    %9259 = vmatprep.subr.mxu0 0.0
    %9260 = vmatpush2.msra.mxu0 0.0
    %9261 = vmatprep.subr.mxu0 0.0
    %9262 = vmatpush2.msra.mxu0 0.0
    %9263 = vmatprep.subr.mxu0 0.0
    %9264 = vmatpush2.msra.mxu0 0.0
    %9265 = vmatprep.subr.mxu0 0.0
    %9266 = vmatpush2.msra.mxu0 0.0
    %9267 = vmatprep.subr.mxu0 0.0
    %9268 = vmatpush2.msra.mxu0 0.0
    %9269 = vmatprep.subr.mxu0 0.0
    %9270 = vmatpush2.msra.mxu0 0.0
    %9271 = vmatprep.subr.mxu0 0.0
    %9272 = vmatpush2.msra.mxu0 0.0
    %9273 = vmatprep.subr.mxu0 0.0
    %9274 = vmatpush2.msra.mxu0 0.0
    %9275 = vmatprep.subr.mxu0 0.0
    %9276 = vmatpush2.msra.mxu0 0.0
    %9277 = vmatprep.mubr.f32.mxu0 0.0
    %v9278 = vand.u32 %v2646, 4294901760
    %9279 = vmatmul.mubr.f32.gmra.mxu0 %v9278
    %v9280 = vpop.f32.mrf.mxu0
    %v9281 = vadd.f32 %v9208, %v9280
    %v9282 = vpop.f32.mrf.mxu0
    %9283 = vdwg.mxu0
    %9284 = vmatprep.subr.mxu0 0.0
    %9285 = vmatpush1.msra.mxu0 0.0
    %9286 = vmatprep.subr.mxu0 0.0
    %9287 = vmatpush1.msra.mxu0 0.0
    %9288 = vmatprep.subr.mxu0 0.0
    %9289 = vmatpush1.msra.mxu0 0.0
    %9290 = vmatprep.subr.mxu0 0.0
    %9291 = vmatpush1.msra.mxu0 0.0
    %9292 = vmatprep.subr.mxu0 0.0
    %9293 = vmatpush1.msra.mxu0 0.0
    %9294 = vmatprep.subr.mxu0 0.0
    %9295 = vmatpush1.msra.mxu0 0.0
    %9296 = vmatprep.subr.mxu0 0.0
    %9297 = vmatpush1.msra.mxu0 0.0
    %9298 = vmatprep.subr.mxu0 0.0
    %9299 = vmatpush1.msra.mxu0 0.0
    %9300 = vmatprep.subr.mxu0 0.0
    %9301 = vmatpush1.msra.mxu0 0.0
    %9302 = vmatprep.subr.mxu0 0.0
    %9303 = vmatpush1.msra.mxu0 0.0
    %9304 = vmatprep.subr.mxu0 0.0
    %9305 = vmatpush1.msra.mxu0 0.0
    %9306 = vmatprep.subr.mxu0 0.0
    %9307 = vmatpush1.msra.mxu0 0.0
    %9308 = vmatprep.subr.mxu0 0.0
    %9309 = vmatpush1.msra.mxu0 0.0
    %9310 = vmatprep.subr.mxu0 0.0
    %9311 = vmatpush1.msra.mxu0 0.0
    %9312 = vmatprep.subr.mxu0 0.0
    %v9313 = vand.u32 %v8824, 4294901760
    %9314 = vmatpush1.msra.mxu0 %v9313
    %9315 = vmatprep.subr.mxu0 0.0
    %v9316 = vand.u32 %v8823, 4294901760
    %9317 = vmatpush1.msra.mxu0 %v9316
    %9318 = vmatprep.subr.mxu0 0.0
    %9319 = vmatpush2.msra.mxu0 0.0
    %9320 = vmatprep.subr.mxu0 0.0
    %9321 = vmatpush2.msra.mxu0 0.0
    %9322 = vmatprep.subr.mxu0 0.0
    %9323 = vmatpush2.msra.mxu0 0.0
    %9324 = vmatprep.subr.mxu0 0.0
    %9325 = vmatpush2.msra.mxu0 0.0
    %9326 = vmatprep.subr.mxu0 0.0
    %9327 = vmatpush2.msra.mxu0 0.0
    %9328 = vmatprep.subr.mxu0 0.0
    %9329 = vmatpush2.msra.mxu0 0.0
    %9330 = vmatprep.subr.mxu0 0.0
    %9331 = vmatpush2.msra.mxu0 0.0
    %9332 = vmatprep.subr.mxu0 0.0
    %9333 = vmatpush2.msra.mxu0 0.0
    %9334 = vmatprep.subr.mxu0 0.0
    %9335 = vmatpush2.msra.mxu0 0.0
    %9336 = vmatprep.subr.mxu0 0.0
    %9337 = vmatpush2.msra.mxu0 0.0
    %9338 = vmatprep.subr.mxu0 0.0
    %9339 = vmatpush2.msra.mxu0 0.0
    %9340 = vmatprep.subr.mxu0 0.0
    %9341 = vmatpush2.msra.mxu0 0.0
    %9342 = vmatprep.subr.mxu0 0.0
    %9343 = vmatpush2.msra.mxu0 0.0
    %9344 = vmatprep.subr.mxu0 0.0
    %9345 = vmatpush2.msra.mxu0 0.0
    %9346 = vmatprep.subr.mxu0 0.0
    %9347 = vmatpush2.msra.mxu0 0.0
    %9348 = vmatprep.subr.mxu0 0.0
    %9349 = vmatpush2.msra.mxu0 0.0
    %9350 = vmatprep.mubr.f32.mxu0 0.0
    %v9351 = vand.u32 %v2646, 4294901760
    %v9352 = vsub.f32 %v2646, %v9351
    %v9353 = vand.u32 %v9352, 4294901760
    %v9354 = vsub.f32 %v9352, %v9353
    %v9355 = vand.u32 %v9354, 4294901760
    %9356 = vmatmul.mubr.f32.gmra.mxu0 %v9355
    %v9357 = vpop.f32.mrf.mxu0
    %v9358 = vadd.f32 0.0, %v9357
    %v9359 = vpop.f32.mrf.mxu0
    %9360 = vdwg.mxu0
    %9361 = vmatprep.subr.mxu0 0.0
    %9362 = vmatpush1.msra.mxu0 0.0
    %9363 = vmatprep.subr.mxu0 0.0
    %9364 = vmatpush1.msra.mxu0 0.0
    %9365 = vmatprep.subr.mxu0 0.0
    %9366 = vmatpush1.msra.mxu0 0.0
    %9367 = vmatprep.subr.mxu0 0.0
    %9368 = vmatpush1.msra.mxu0 0.0
    %9369 = vmatprep.subr.mxu0 0.0
    %9370 = vmatpush1.msra.mxu0 0.0
    %9371 = vmatprep.subr.mxu0 0.0
    %9372 = vmatpush1.msra.mxu0 0.0
    %9373 = vmatprep.subr.mxu0 0.0
    %9374 = vmatpush1.msra.mxu0 0.0
    %9375 = vmatprep.subr.mxu0 0.0
    %9376 = vmatpush1.msra.mxu0 0.0
    %9377 = vmatprep.subr.mxu0 0.0
    %9378 = vmatpush1.msra.mxu0 0.0
    %9379 = vmatprep.subr.mxu0 0.0
    %9380 = vmatpush1.msra.mxu0 0.0
    %9381 = vmatprep.subr.mxu0 0.0
    %9382 = vmatpush1.msra.mxu0 0.0
    %9383 = vmatprep.subr.mxu0 0.0
    %9384 = vmatpush1.msra.mxu0 0.0
    %9385 = vmatprep.subr.mxu0 0.0
    %9386 = vmatpush1.msra.mxu0 0.0
    %9387 = vmatprep.subr.mxu0 0.0
    %9388 = vmatpush1.msra.mxu0 0.0
    %9389 = vmatprep.subr.mxu0 0.0
    %v9390 = vand.u32 %v8824, 4294901760
    %v9391 = vsub.f32 %v8824, %v9390
    %v9392 = vand.u32 %v9391, 4294901760
    %v9393 = vsub.f32 %v9391, %v9392
    %v9394 = vand.u32 %v9393, 4294901760
    %9395 = vmatpush1.msra.mxu0 %v9394
    %9396 = vmatprep.subr.mxu0 0.0
    %v9397 = vand.u32 %v8823, 4294901760
    %v9398 = vsub.f32 %v8823, %v9397
    %v9399 = vand.u32 %v9398, 4294901760
    %v9400 = vsub.f32 %v9398, %v9399
    %v9401 = vand.u32 %v9400, 4294901760
    %9402 = vmatpush1.msra.mxu0 %v9401
    %9403 = vmatprep.subr.mxu0 0.0
    %9404 = vmatpush2.msra.mxu0 0.0
    %9405 = vmatprep.subr.mxu0 0.0
    %9406 = vmatpush2.msra.mxu0 0.0
    %9407 = vmatprep.subr.mxu0 0.0
    %9408 = vmatpush2.msra.mxu0 0.0
    %9409 = vmatprep.subr.mxu0 0.0
    %9410 = vmatpush2.msra.mxu0 0.0
    %9411 = vmatprep.subr.mxu0 0.0
    %9412 = vmatpush2.msra.mxu0 0.0
    %9413 = vmatprep.subr.mxu0 0.0
    %9414 = vmatpush2.msra.mxu0 0.0
    %9415 = vmatprep.subr.mxu0 0.0
    %9416 = vmatpush2.msra.mxu0 0.0
    %9417 = vmatprep.subr.mxu0 0.0
    %9418 = vmatpush2.msra.mxu0 0.0
    %9419 = vmatprep.subr.mxu0 0.0
    %9420 = vmatpush2.msra.mxu0 0.0
    %9421 = vmatprep.subr.mxu0 0.0
    %9422 = vmatpush2.msra.mxu0 0.0
    %9423 = vmatprep.subr.mxu0 0.0
    %9424 = vmatpush2.msra.mxu0 0.0
    %9425 = vmatprep.subr.mxu0 0.0
    %9426 = vmatpush2.msra.mxu0 0.0
    %9427 = vmatprep.subr.mxu0 0.0
    %9428 = vmatpush2.msra.mxu0 0.0
    %9429 = vmatprep.subr.mxu0 0.0
    %9430 = vmatpush2.msra.mxu0 0.0
    %9431 = vmatprep.subr.mxu0 0.0
    %9432 = vmatpush2.msra.mxu0 0.0
    %9433 = vmatprep.subr.mxu0 0.0
    %9434 = vmatpush2.msra.mxu0 0.0
    %9435 = vmatprep.mubr.f32.mxu0 0.0
    %v9436 = vand.u32 %v2646, 4294901760
    %9437 = vmatmul.mubr.f32.gmra.mxu0 %v9436
    %v9438 = vpop.f32.mrf.mxu0
    %v9439 = vadd.f32 %v9358, %v9438
    %v9440 = vpop.f32.mrf.mxu0
    %9441 = vdwg.mxu0
    %9442 = vmatprep.subr.mxu0 0.0
    %9443 = vmatpush1.msra.mxu0 0.0
    %9444 = vmatprep.subr.mxu0 0.0
    %9445 = vmatpush1.msra.mxu0 0.0
    %9446 = vmatprep.subr.mxu0 0.0
    %9447 = vmatpush1.msra.mxu0 0.0
    %9448 = vmatprep.subr.mxu0 0.0
    %9449 = vmatpush1.msra.mxu0 0.0
    %9450 = vmatprep.subr.mxu0 0.0
    %9451 = vmatpush1.msra.mxu0 0.0
    %9452 = vmatprep.subr.mxu0 0.0
    %9453 = vmatpush1.msra.mxu0 0.0
    %9454 = vmatprep.subr.mxu0 0.0
    %9455 = vmatpush1.msra.mxu0 0.0
    %9456 = vmatprep.subr.mxu0 0.0
    %9457 = vmatpush1.msra.mxu0 0.0
    %9458 = vmatprep.subr.mxu0 0.0
    %9459 = vmatpush1.msra.mxu0 0.0
    %9460 = vmatprep.subr.mxu0 0.0
    %9461 = vmatpush1.msra.mxu0 0.0
    %9462 = vmatprep.subr.mxu0 0.0
    %9463 = vmatpush1.msra.mxu0 0.0
    %9464 = vmatprep.subr.mxu0 0.0
    %9465 = vmatpush1.msra.mxu0 0.0
    %9466 = vmatprep.subr.mxu0 0.0
    %9467 = vmatpush1.msra.mxu0 0.0
    %9468 = vmatprep.subr.mxu0 0.0
    %9469 = vmatpush1.msra.mxu0 0.0
    %9470 = vmatprep.subr.mxu0 0.0
    %v9471 = vand.u32 %v8824, 4294901760
    %v9472 = vsub.f32 %v8824, %v9471
    %9473 = vmatpush1.msra.mxu0 %v9472
    %9474 = vmatprep.subr.mxu0 0.0
    %v9475 = vand.u32 %v8823, 4294901760
    %v9476 = vsub.f32 %v8823, %v9475
    %9477 = vmatpush1.msra.mxu0 %v9476
    %9478 = vmatprep.subr.mxu0 0.0
    %9479 = vmatpush2.msra.mxu0 0.0
    %9480 = vmatprep.subr.mxu0 0.0
    %9481 = vmatpush2.msra.mxu0 0.0
    %9482 = vmatprep.subr.mxu0 0.0
    %9483 = vmatpush2.msra.mxu0 0.0
    %9484 = vmatprep.subr.mxu0 0.0
    %9485 = vmatpush2.msra.mxu0 0.0
    %9486 = vmatprep.subr.mxu0 0.0
    %9487 = vmatpush2.msra.mxu0 0.0
    %9488 = vmatprep.subr.mxu0 0.0
    %9489 = vmatpush2.msra.mxu0 0.0
    %9490 = vmatprep.subr.mxu0 0.0
    %9491 = vmatpush2.msra.mxu0 0.0
    %9492 = vmatprep.subr.mxu0 0.0
    %9493 = vmatpush2.msra.mxu0 0.0
    %9494 = vmatprep.subr.mxu0 0.0
    %9495 = vmatpush2.msra.mxu0 0.0
    %9496 = vmatprep.subr.mxu0 0.0
    %9497 = vmatpush2.msra.mxu0 0.0
    %9498 = vmatprep.subr.mxu0 0.0
    %9499 = vmatpush2.msra.mxu0 0.0
    %9500 = vmatprep.subr.mxu0 0.0
    %9501 = vmatpush2.msra.mxu0 0.0
    %9502 = vmatprep.subr.mxu0 0.0
    %9503 = vmatpush2.msra.mxu0 0.0
    %9504 = vmatprep.subr.mxu0 0.0
    %9505 = vmatpush2.msra.mxu0 0.0
    %9506 = vmatprep.subr.mxu0 0.0
    %9507 = vmatpush2.msra.mxu0 0.0
    %9508 = vmatprep.subr.mxu0 0.0
    %9509 = vmatpush2.msra.mxu0 0.0
    %9510 = vmatprep.mubr.f32.mxu0 0.0
    %v9511 = vand.u32 %v2646, 4294901760
    %v9512 = vsub.f32 %v2646, %v9511
    %9513 = vmatmul.mubr.f32.gmra.mxu0 %v9512
    %v9514 = vpop.f32.mrf.mxu0
    %v9515 = vadd.f32 %v9439, %v9514
    %v9516 = vpop.f32.mrf.mxu0
    %9517 = vdwg.mxu0
    %9518 = vmatprep.subr.mxu0 0.0
    %9519 = vmatpush1.msra.mxu0 0.0
    %9520 = vmatprep.subr.mxu0 0.0
    %9521 = vmatpush1.msra.mxu0 0.0
    %9522 = vmatprep.subr.mxu0 0.0
    %9523 = vmatpush1.msra.mxu0 0.0
    %9524 = vmatprep.subr.mxu0 0.0
    %9525 = vmatpush1.msra.mxu0 0.0
    %9526 = vmatprep.subr.mxu0 0.0
    %9527 = vmatpush1.msra.mxu0 0.0
    %9528 = vmatprep.subr.mxu0 0.0
    %9529 = vmatpush1.msra.mxu0 0.0
    %9530 = vmatprep.subr.mxu0 0.0
    %9531 = vmatpush1.msra.mxu0 0.0
    %9532 = vmatprep.subr.mxu0 0.0
    %9533 = vmatpush1.msra.mxu0 0.0
    %9534 = vmatprep.subr.mxu0 0.0
    %9535 = vmatpush1.msra.mxu0 0.0
    %9536 = vmatprep.subr.mxu0 0.0
    %9537 = vmatpush1.msra.mxu0 0.0
    %9538 = vmatprep.subr.mxu0 0.0
    %9539 = vmatpush1.msra.mxu0 0.0
    %9540 = vmatprep.subr.mxu0 0.0
    %9541 = vmatpush1.msra.mxu0 0.0
    %9542 = vmatprep.subr.mxu0 0.0
    %9543 = vmatpush1.msra.mxu0 0.0
    %9544 = vmatprep.subr.mxu0 0.0
    %9545 = vmatpush1.msra.mxu0 0.0
    %9546 = vmatprep.subr.mxu0 0.0
    %v9547 = vand.u32 %v8824, 4294901760
    %9548 = vmatpush1.msra.mxu0 %v9547
    %9549 = vmatprep.subr.mxu0 0.0
    %v9550 = vand.u32 %v8823, 4294901760
    %9551 = vmatpush1.msra.mxu0 %v9550
    %9552 = vmatprep.subr.mxu0 0.0
    %9553 = vmatpush2.msra.mxu0 0.0
    %9554 = vmatprep.subr.mxu0 0.0
    %9555 = vmatpush2.msra.mxu0 0.0
    %9556 = vmatprep.subr.mxu0 0.0
    %9557 = vmatpush2.msra.mxu0 0.0
    %9558 = vmatprep.subr.mxu0 0.0
    %9559 = vmatpush2.msra.mxu0 0.0
    %9560 = vmatprep.subr.mxu0 0.0
    %9561 = vmatpush2.msra.mxu0 0.0
    %9562 = vmatprep.subr.mxu0 0.0
    %9563 = vmatpush2.msra.mxu0 0.0
    %9564 = vmatprep.subr.mxu0 0.0
    %9565 = vmatpush2.msra.mxu0 0.0
    %9566 = vmatprep.subr.mxu0 0.0
    %9567 = vmatpush2.msra.mxu0 0.0
    %9568 = vmatprep.subr.mxu0 0.0
    %9569 = vmatpush2.msra.mxu0 0.0
    %9570 = vmatprep.subr.mxu0 0.0
    %9571 = vmatpush2.msra.mxu0 0.0
    %9572 = vmatprep.subr.mxu0 0.0
    %9573 = vmatpush2.msra.mxu0 0.0
    %9574 = vmatprep.subr.mxu0 0.0
    %9575 = vmatpush2.msra.mxu0 0.0
    %9576 = vmatprep.subr.mxu0 0.0
    %9577 = vmatpush2.msra.mxu0 0.0
    %9578 = vmatprep.subr.mxu0 0.0
    %9579 = vmatpush2.msra.mxu0 0.0
    %9580 = vmatprep.subr.mxu0 0.0
    %9581 = vmatpush2.msra.mxu0 0.0
    %9582 = vmatprep.subr.mxu0 0.0
    %9583 = vmatpush2.msra.mxu0 0.0
    %9584 = vmatprep.mubr.f32.mxu0 0.0
    %v9585 = vand.u32 %v2646, 4294901760
    %v9586 = vsub.f32 %v2646, %v9585
    %v9587 = vand.u32 %v9586, 4294901760
    %9588 = vmatmul.mubr.f32.gmra.mxu0 %v9587
    %v9589 = vpop.f32.mrf.mxu0
    %v9590 = vadd.f32 %v9515, %v9589
    %v9591 = vpop.f32.mrf.mxu0
    %9592 = vdwg.mxu0
    %9593 = vmatprep.subr.mxu0 0.0
    %9594 = vmatpush1.msra.mxu0 0.0
    %9595 = vmatprep.subr.mxu0 0.0
    %9596 = vmatpush1.msra.mxu0 0.0
    %9597 = vmatprep.subr.mxu0 0.0
    %9598 = vmatpush1.msra.mxu0 0.0
    %9599 = vmatprep.subr.mxu0 0.0
    %9600 = vmatpush1.msra.mxu0 0.0
    %9601 = vmatprep.subr.mxu0 0.0
    %9602 = vmatpush1.msra.mxu0 0.0
    %9603 = vmatprep.subr.mxu0 0.0
    %9604 = vmatpush1.msra.mxu0 0.0
    %9605 = vmatprep.subr.mxu0 0.0
    %9606 = vmatpush1.msra.mxu0 0.0
    %9607 = vmatprep.subr.mxu0 0.0
    %9608 = vmatpush1.msra.mxu0 0.0
    %9609 = vmatprep.subr.mxu0 0.0
    %9610 = vmatpush1.msra.mxu0 0.0
    %9611 = vmatprep.subr.mxu0 0.0
    %9612 = vmatpush1.msra.mxu0 0.0
    %9613 = vmatprep.subr.mxu0 0.0
    %9614 = vmatpush1.msra.mxu0 0.0
    %9615 = vmatprep.subr.mxu0 0.0
    %9616 = vmatpush1.msra.mxu0 0.0
    %9617 = vmatprep.subr.mxu0 0.0
    %9618 = vmatpush1.msra.mxu0 0.0
    %9619 = vmatprep.subr.mxu0 0.0
    %9620 = vmatpush1.msra.mxu0 0.0
    %9621 = vmatprep.subr.mxu0 0.0
    %v9622 = vand.u32 %v8824, 4294901760
    %v9623 = vsub.f32 %v8824, %v9622
    %v9624 = vand.u32 %v9623, 4294901760
    %9625 = vmatpush1.msra.mxu0 %v9624
    %9626 = vmatprep.subr.mxu0 0.0
    %v9627 = vand.u32 %v8823, 4294901760
    %v9628 = vsub.f32 %v8823, %v9627
    %v9629 = vand.u32 %v9628, 4294901760
    %9630 = vmatpush1.msra.mxu0 %v9629
    %9631 = vmatprep.subr.mxu0 0.0
    %9632 = vmatpush2.msra.mxu0 0.0
    %9633 = vmatprep.subr.mxu0 0.0
    %9634 = vmatpush2.msra.mxu0 0.0
    %9635 = vmatprep.subr.mxu0 0.0
    %9636 = vmatpush2.msra.mxu0 0.0
    %9637 = vmatprep.subr.mxu0 0.0
    %9638 = vmatpush2.msra.mxu0 0.0
    %9639 = vmatprep.subr.mxu0 0.0
    %9640 = vmatpush2.msra.mxu0 0.0
    %9641 = vmatprep.subr.mxu0 0.0
    %9642 = vmatpush2.msra.mxu0 0.0
    %9643 = vmatprep.subr.mxu0 0.0
    %9644 = vmatpush2.msra.mxu0 0.0
    %9645 = vmatprep.subr.mxu0 0.0
    %9646 = vmatpush2.msra.mxu0 0.0
    %9647 = vmatprep.subr.mxu0 0.0
    %9648 = vmatpush2.msra.mxu0 0.0
    %9649 = vmatprep.subr.mxu0 0.0
    %9650 = vmatpush2.msra.mxu0 0.0
    %9651 = vmatprep.subr.mxu0 0.0
    %9652 = vmatpush2.msra.mxu0 0.0
    %9653 = vmatprep.subr.mxu0 0.0
    %9654 = vmatpush2.msra.mxu0 0.0
    %9655 = vmatprep.subr.mxu0 0.0
    %9656 = vmatpush2.msra.mxu0 0.0
    %9657 = vmatprep.subr.mxu0 0.0
    %9658 = vmatpush2.msra.mxu0 0.0
    %9659 = vmatprep.subr.mxu0 0.0
    %9660 = vmatpush2.msra.mxu0 0.0
    %9661 = vmatprep.subr.mxu0 0.0
    %9662 = vmatpush2.msra.mxu0 0.0
    %9663 = vmatprep.mubr.f32.mxu0 0.0
    %v9664 = vand.u32 %v2646, 4294901760
    %9665 = vmatmul.mubr.f32.gmra.mxu0 %v9664
    %v9666 = vpop.f32.mrf.mxu0
    %v9667 = vadd.f32 %v9590, %v9666
    %v9668 = vpop.f32.mrf.mxu0
    %9669 = vdwg.mxu0
    %9670 = vmatprep.subr.mxu0 0.0
    %9671 = vmatpush1.msra.mxu0 0.0
    %9672 = vmatprep.subr.mxu0 0.0
    %9673 = vmatpush1.msra.mxu0 0.0
    %9674 = vmatprep.subr.mxu0 0.0
    %9675 = vmatpush1.msra.mxu0 0.0
    %9676 = vmatprep.subr.mxu0 0.0
    %9677 = vmatpush1.msra.mxu0 0.0
    %9678 = vmatprep.subr.mxu0 0.0
    %9679 = vmatpush1.msra.mxu0 0.0
    %9680 = vmatprep.subr.mxu0 0.0
    %9681 = vmatpush1.msra.mxu0 0.0
    %9682 = vmatprep.subr.mxu0 0.0
    %9683 = vmatpush1.msra.mxu0 0.0
    %9684 = vmatprep.subr.mxu0 0.0
    %9685 = vmatpush1.msra.mxu0 0.0
    %9686 = vmatprep.subr.mxu0 0.0
    %9687 = vmatpush1.msra.mxu0 0.0
    %9688 = vmatprep.subr.mxu0 0.0
    %9689 = vmatpush1.msra.mxu0 0.0
    %9690 = vmatprep.subr.mxu0 0.0
    %9691 = vmatpush1.msra.mxu0 0.0
    %9692 = vmatprep.subr.mxu0 0.0
    %9693 = vmatpush1.msra.mxu0 0.0
    %9694 = vmatprep.subr.mxu0 0.0
    %9695 = vmatpush1.msra.mxu0 0.0
    %9696 = vmatprep.subr.mxu0 0.0
    %9697 = vmatpush1.msra.mxu0 0.0
    %9698 = vmatprep.subr.mxu0 0.0
    %v9699 = vand.u32 %v8824, 4294901760
    %9700 = vmatpush1.msra.mxu0 %v9699
    %9701 = vmatprep.subr.mxu0 0.0
    %v9702 = vand.u32 %v8823, 4294901760
    %9703 = vmatpush1.msra.mxu0 %v9702
    %9704 = vmatprep.subr.mxu0 0.0
    %9705 = vmatpush2.msra.mxu0 0.0
    %9706 = vmatprep.subr.mxu0 0.0
    %9707 = vmatpush2.msra.mxu0 0.0
    %9708 = vmatprep.subr.mxu0 0.0
    %9709 = vmatpush2.msra.mxu0 0.0
    %9710 = vmatprep.subr.mxu0 0.0
    %9711 = vmatpush2.msra.mxu0 0.0
    %9712 = vmatprep.subr.mxu0 0.0
    %9713 = vmatpush2.msra.mxu0 0.0
    %9714 = vmatprep.subr.mxu0 0.0
    %9715 = vmatpush2.msra.mxu0 0.0
    %9716 = vmatprep.subr.mxu0 0.0
    %9717 = vmatpush2.msra.mxu0 0.0
    %9718 = vmatprep.subr.mxu0 0.0
    %9719 = vmatpush2.msra.mxu0 0.0
    %9720 = vmatprep.subr.mxu0 0.0
    %9721 = vmatpush2.msra.mxu0 0.0
    %9722 = vmatprep.subr.mxu0 0.0
    %9723 = vmatpush2.msra.mxu0 0.0
    %9724 = vmatprep.subr.mxu0 0.0
    %9725 = vmatpush2.msra.mxu0 0.0
    %9726 = vmatprep.subr.mxu0 0.0
    %9727 = vmatpush2.msra.mxu0 0.0
    %9728 = vmatprep.subr.mxu0 0.0
    %9729 = vmatpush2.msra.mxu0 0.0
    %9730 = vmatprep.subr.mxu0 0.0
    %9731 = vmatpush2.msra.mxu0 0.0
    %9732 = vmatprep.subr.mxu0 0.0
    %9733 = vmatpush2.msra.mxu0 0.0
    %9734 = vmatprep.subr.mxu0 0.0
    %9735 = vmatpush2.msra.mxu0 0.0
    %9736 = vmatprep.mubr.f32.mxu0 0.0
    %v9737 = vand.u32 %v2646, 4294901760
    %9738 = vmatmul.mubr.f32.gmra.mxu0 %v9737
    %v9739 = vpop.f32.mrf.mxu0
    %v9740 = vadd.f32 %v9667, %v9739
    %v9741 = vpop.f32.mrf.mxu0
    %9742 = vdwg.mxu0
    %s9743 = scalar_lea.vmem %s59, 32
    %v9744 = vld [vmem:[%s9743] sm:$0xf]
    %v9745 = vld [vmem:[%s9743 + $0x4] sm:$0xf]
    %v9746 = vld [vmem:[%s9743 + $0x8] sm:$0xf]
    %v9747 = vld [vmem:[%s9743 + $0xc] sm:$0xf]
    %v9748 = vpack.c.bf16 %v6859, %v6859
    %s9749 = scalar_lea.vmem [#allocation25], 32
    %v9750 = vld [vmem:[%s9749] sm:$0xf]
    %v9751 = vld [vmem:[%s9749 + $0x4] sm:$0xf]
    %v9752 = vld [vmem:[%s9749 + $0x8] sm:$0xf]
    %v9753 = vld [vmem:[%s9749 + $0xc] sm:$0xf]
    %v9754 = vpack.c.bf16 %v9281, %v9281
    %v9759 = vunpack.c.l.b16 %v9750
    %v9760 = vunpack.c.l.b16 %v9751
    %v9761 = vunpack.c.l.b16 %v9752
    %v9762 = vunpack.c.l.b16 %v9753
    %v9763 = vpack.c.b16 %v9760, %v9759
    %v9764 = vpack.c.b16 %v9762, %v9761
    %v9768 = vsel %vm473, %v9754, 0
    %9770 = vmatprep.subr.bf16.mxu0 0
    %9771 = vmatpush1.bf16.msra.mxu0 0
    %9772 = vmatprep.subr.bf16.mxu0 0
    %9773 = vmatpush1.bf16.msra.mxu0 0
    %9774 = vmatprep.subr.bf16.mxu0 0
    %9775 = vmatpush1.bf16.msra.mxu0 0
    %9776 = vmatprep.subr.bf16.mxu0 0
    %9777 = vmatpush1.bf16.msra.mxu0 0
    %9778 = vmatprep.subr.bf16.mxu0 0
    %9779 = vmatpush1.bf16.msra.mxu0 0
    %9780 = vmatprep.subr.bf16.mxu0 0
    %9781 = vmatpush1.bf16.msra.mxu0 0
    %9782 = vmatprep.subr.bf16.mxu0 0
    %9783 = vmatpush1.bf16.msra.mxu0 %v9764
    %9784 = vmatprep.subr.bf16.mxu0 0
    %9785 = vmatpush1.bf16.msra.mxu0 %v9763
    %9786 = vmatprep.subr.bf16.mxu0 0
    %9787 = vmatpush2.bf16.msra.mxu0 0
    %9788 = vmatprep.subr.bf16.mxu0 0
    %9789 = vmatpush2.bf16.msra.mxu0 0
    %9790 = vmatprep.subr.bf16.mxu0 0
    %9791 = vmatpush2.bf16.msra.mxu0 0
    %9792 = vmatprep.subr.bf16.mxu0 0
    %9793 = vmatpush2.bf16.msra.mxu0 0
    %9794 = vmatprep.subr.bf16.mxu0 0
    %9795 = vmatpush2.bf16.msra.mxu0 0
    %9796 = vmatprep.subr.bf16.mxu0 0
    %9797 = vmatpush2.bf16.msra.mxu0 0
    %9798 = vmatprep.subr.bf16.mxu0 0
    %9799 = vmatpush2.bf16.msra.mxu0 0
    %9800 = vmatprep.subr.bf16.mxu0 0
    %9801 = vmatpush2.bf16.msra.mxu0 0
    %9802 = vmatprep.mubr.bf16.mxu0 0
    %9803 = vmatmul.mubr.bf16.gmra.mxu0 %v9768
    %v9804 = vpop.f32.mrf.mxu0
    %v9805 = vadd.f32 0.0, %v9804
    %v9806 = vpop.f32.mrf.mxu0
    %v9807 = vpop.f32.mrf.mxu0
    %v9808 = vpop.f32.mrf.mxu0
    %9809 = vdwg.mxu0
    %v9814 = vunpack.c.l.b16 %v9744
    %v9815 = vunpack.c.l.b16 %v9745
    %v9816 = vunpack.c.l.b16 %v9746
    %v9817 = vunpack.c.l.b16 %v9747
    %v9818 = vpack.c.b16 %v9815, %v9814
    %v9819 = vpack.c.b16 %v9817, %v9816
    %v9823 = vsel %vm473, %v9748, 0
    %9825 = vmatprep.subr.bf16.mxu0 0
    %9826 = vmatpush1.bf16.msra.mxu0 0
    %9827 = vmatprep.subr.bf16.mxu0 0
    %9828 = vmatpush1.bf16.msra.mxu0 0
    %9829 = vmatprep.subr.bf16.mxu0 0
    %9830 = vmatpush1.bf16.msra.mxu0 0
    %9831 = vmatprep.subr.bf16.mxu0 0
    %9832 = vmatpush1.bf16.msra.mxu0 0
    %9833 = vmatprep.subr.bf16.mxu0 0
    %9834 = vmatpush1.bf16.msra.mxu0 0
    %9835 = vmatprep.subr.bf16.mxu0 0
    %9836 = vmatpush1.bf16.msra.mxu0 0
    %9837 = vmatprep.subr.bf16.mxu0 0
    %9838 = vmatpush1.bf16.msra.mxu0 %v9819
    %9839 = vmatprep.subr.bf16.mxu0 0
    %9840 = vmatpush1.bf16.msra.mxu0 %v9818
    %9841 = vmatprep.subr.bf16.mxu0 0
    %9842 = vmatpush2.bf16.msra.mxu0 0
    %9843 = vmatprep.subr.bf16.mxu0 0
    %9844 = vmatpush2.bf16.msra.mxu0 0
    %9845 = vmatprep.subr.bf16.mxu0 0
    %9846 = vmatpush2.bf16.msra.mxu0 0
    %9847 = vmatprep.subr.bf16.mxu0 0
    %9848 = vmatpush2.bf16.msra.mxu0 0
    %9849 = vmatprep.subr.bf16.mxu0 0
    %9850 = vmatpush2.bf16.msra.mxu0 0
    %9851 = vmatprep.subr.bf16.mxu0 0
    %9852 = vmatpush2.bf16.msra.mxu0 0
    %9853 = vmatprep.subr.bf16.mxu0 0
    %9854 = vmatpush2.bf16.msra.mxu0 0
    %9855 = vmatprep.subr.bf16.mxu0 0
    %9856 = vmatpush2.bf16.msra.mxu0 0
    %9857 = vmatprep.mubr.bf16.mxu0 0
    %9858 = vmatmul.mubr.bf16.gmra.mxu0 %v9823
    %v9859 = vpop.f32.mrf.mxu0
    %v9860 = vadd.f32 %v9805, %v9859
    %v9861 = vpop.f32.mrf.mxu0
    %v9862 = vpop.f32.mrf.mxu0
    %v9863 = vpop.f32.mrf.mxu0
    %9864 = vdwg.mxu0
    %s9865 = scalar_lea.vmem [#allocation26], 2
    %v9866 = vld [vmem:[%s9865] sm:$0x1]
    %v9868 = vlaneseq
    %v9869 = vshrl.u32 %v9868, 7
    %v9870 = vsub.s32 0, %v9869
    %v9871 = vrot.slane %v9866, %v9870
    %v9873 = vadd.f32 %v9860, %v9871
    %v9874 = vxor.u32 %v9873, 2147483648
    %v9875 = vmul.f32 %v9874, 1.442695
    %v9876 = vpow.pop %v9875
    %v9877 = vadd.f32 %v9876, 1.0
    %v9878 = vrcp.pop %v9877
    %v9879 = vmul.f32 1.0, %v9878
    %v9880 = vmul.f32 %v9873, %v9879
    %s9881 = scalar_lea.vmem [#allocation28], 32
    %v9882 = vld [vmem:[%s9881] sm:$0xf]
    %v9883 = vld [vmem:[%s9881 + $0x4] sm:$0xf]
    %v9884 = vld [vmem:[%s9881 + $0x8] sm:$0xf]
    %v9885 = vld [vmem:[%s9881 + $0xc] sm:$0xf]
    %v9886 = vpack.c.bf16 %v9880, %v9880
    %s9887 = scalar_lea.vmem [#allocation29], 2
    %v9888 = vld [vmem:[%s9887] sm:$0x1]
    %v9890 = vlaneseq
    %v9891 = vshrl.u32 %v9890, 7
    %v9892 = vsub.s32 0, %v9891
    %v9893 = vrot.slane %v9888, %v9892
    %v9899 = vunpack.c.l.b16 %v9882
    %v9900 = vunpack.c.l.b16 %v9883
    %v9901 = vunpack.c.l.b16 %v9884
    %v9902 = vunpack.c.l.b16 %v9885
    %v9903 = vpack.c.b16 %v9900, %v9899
    %v9904 = vpack.c.b16 %v9902, %v9901
    %v9908 = vsel %vm473, %v9886, 0
    %9910 = vmatprep.subr.bf16.mxu0 0
    %9911 = vmatpush1.bf16.msra.mxu0 0
    %9912 = vmatprep.subr.bf16.mxu0 0
    %9913 = vmatpush1.bf16.msra.mxu0 0
    %9914 = vmatprep.subr.bf16.mxu0 0
    %9915 = vmatpush1.bf16.msra.mxu0 0
    %9916 = vmatprep.subr.bf16.mxu0 0
    %9917 = vmatpush1.bf16.msra.mxu0 0
    %9918 = vmatprep.subr.bf16.mxu0 0
    %9919 = vmatpush1.bf16.msra.mxu0 0
    %9920 = vmatprep.subr.bf16.mxu0 0
    %9921 = vmatpush1.bf16.msra.mxu0 0
    %9922 = vmatprep.subr.bf16.mxu0 0
    %9923 = vmatpush1.bf16.msra.mxu0 %v9904
    %9924 = vmatprep.subr.bf16.mxu0 0
    %9925 = vmatpush1.bf16.msra.mxu0 %v9903
    %9926 = vmatprep.subr.bf16.mxu0 0
    %9927 = vmatpush2.bf16.msra.mxu0 0
    %9928 = vmatprep.subr.bf16.mxu0 0
    %9929 = vmatpush2.bf16.msra.mxu0 0
    %9930 = vmatprep.subr.bf16.mxu0 0
    %9931 = vmatpush2.bf16.msra.mxu0 0
    %9932 = vmatprep.subr.bf16.mxu0 0
    %9933 = vmatpush2.bf16.msra.mxu0 0
    %9934 = vmatprep.subr.bf16.mxu0 0
    %9935 = vmatpush2.bf16.msra.mxu0 0
    %9936 = vmatprep.subr.bf16.mxu0 0
    %9937 = vmatpush2.bf16.msra.mxu0 0
    %9938 = vmatprep.subr.bf16.mxu0 0
    %9939 = vmatpush2.bf16.msra.mxu0 0
    %9940 = vmatprep.subr.bf16.mxu0 0
    %9941 = vmatpush2.bf16.msra.mxu0 0
    %9942 = vmatprep.mubr.bf16.mxu0 0
    %9943 = vmatmul.mubr.bf16.gmra.mxu0 %v9908
    %v9944 = vpop.f32.mrf.mxu0
    %v9945 = vadd.f32 %v9893, %v9944
    %v9946 = vpop.f32.mrf.mxu0
    %v9947 = vpop.f32.mrf.mxu0
    %v9948 = vpop.f32.mrf.mxu0
    %9949 = vdwg.mxu0
    %v9950 = vadd.f32 %v9945, %v6859
    %v9951 = vadd.f32 %v6860, %v9740
    %9952 = vst.msk [vmem:[#allocation31] sm:$0xff] %vm473, %v9950
    %9953 = vst.msk [vmem:[%s71] sm:$0xff] %vm1752, %v9951
    %9954 = vst.msk [vmem:[#allocation32] sm:$0xff] %vm473, %v8662
    %9955 = vst.msk [vmem:[#allocation32 + $0x8] sm:$0xff] %vm473, %v8665
    %vm9956 = vcmask 7168
    %9957 = vst.msk [vmem:[%s75] sm:$0xff] %vm9956, %v8792
    %9958 = vst.msk [vmem:[%s75 + $0x8] sm:$0xff] %vm9956, %v8794
    // Predicated region
    $region210: #{_egnn_forward_impl.1} parent=1 // pred_check
      _
    $region211: #{_egnn_forward_impl.1} parent=1 // pred_check_branch
      %9960 = sbr.rel (0) target = $region213
    $region212: #{_egnn_forward_impl.1} parent=1 // pred_region
      %s9962 = ssub.s32 128, 128
      %9963 = vsyncadd [#allocation4], %s9962
      %s9965 = sshll.u32 [#allocation31], 4
      %s9966 = int_to_ptr.vmem [resolvable:$true] %s9965
      %9968 = dma.vmem_to_hbm [thread:$0]  %s9966, 128, %s69, [#allocation4]
    $region213: #{_egnn_forward_impl.1} parent=1 // pred_fallthru
      _
    // Predicated region
    $region214: #{_egnn_forward_impl.1} parent=1 // pred_check
      _
    $region215: #{_egnn_forward_impl.1} parent=1 // pred_check_branch
      %9970 = sbr.rel (0) target = $region217
    $region216: #{_egnn_forward_impl.1} parent=1 // pred_region
      _
    $region217: #{_egnn_forward_impl.1} parent=1 // pred_fallthru
      _
    // Predicated region
    $region218: #{_egnn_forward_impl.1} parent=1 // pred_check
      _
    $region219: #{_egnn_forward_impl.1} parent=1 // pred_check_branch
      %9972 = sbr.rel (0) target = $region221
    $region220: #{_egnn_forward_impl.1} parent=1 // pred_region
      %s9974 = ssub.s32 256, 256
      %9975 = vsyncadd [#allocation33], %s9974
      %s9976 = sshll.u32 [#allocation32], 4
      %s9977 = int_to_ptr.vmem [resolvable:$true] %s9976
      %9982 = dma.vmem_to_hbm [thread:$0]  %s9977, 256, %s73, [#allocation33], 128, 128, 8
    $region221: #{_egnn_forward_impl.1} parent=1 // pred_fallthru
      _
    // Predicated region
    $region222: #{_egnn_forward_impl.1} parent=1 // pred_check
      _
    $region223: #{_egnn_forward_impl.1} parent=1 // pred_check_branch
      %9984 = sbr.rel (0) target = $region225
    $region224: #{_egnn_forward_impl.1} parent=1 // pred_region
      _
    $region225: #{_egnn_forward_impl.1} parent=1 // pred_fallthru
      _
    // Predicated region
    $region226: #{_egnn_forward_impl.1} parent=1 // pred_check
      _
    $region227: #{_egnn_forward_impl.1} parent=1 // pred_check_branch
      %9986 = sbr.rel (0) target = $region229
    $region228: #{_egnn_forward_impl.1} parent=1 // pred_region
      %9987 = dma.done [#allocation4], 128
    $region229: #{_egnn_forward_impl.1} parent=1 // pred_fallthru
      _
    // Predicated region
    $region230: #{_egnn_forward_impl.1} parent=1 // pred_check
      _
    $region231: #{_egnn_forward_impl.1} parent=1 // pred_check_branch
      %9989 = sbr.rel (0) target = $region233
    $region232: #{_egnn_forward_impl.1} parent=1 // pred_region
      _
    $region233: #{_egnn_forward_impl.1} parent=1 // pred_fallthru
      _
    // Predicated region
    $region234: #{_egnn_forward_impl.1} parent=1 // pred_check
      _
    $region235: #{_egnn_forward_impl.1} parent=1 // pred_check_branch
      %9991 = sbr.rel (0) target = $region237
    $region236: #{_egnn_forward_impl.1} parent=1 // pred_region
      %9992 = dma.done [#allocation33], 256
    $region237: #{_egnn_forward_impl.1} parent=1 // pred_fallthru
      _
    // Predicated region
    $region238: #{_egnn_forward_impl.1} parent=1 // pred_check
      _
    $region239: #{_egnn_forward_impl.1} parent=1 // pred_check_branch
      %9994 = sbr.rel (0) target = $region241
    $region240: #{_egnn_forward_impl.1} parent=1 // pred_region
      _
    $region241: #{_egnn_forward_impl.1} parent=1 // pred_fallthru
      _
    %9995 = vsyncpa [#allocation3], 1
    %9996 = vsyncpa [#allocation6], 1
    %9997 = vsyncpa [#allocation9], 1
    %9998 = vsyncpa [#allocation12], 1
    %9999 = vsyncpa [#allocation15], 1
    %10000 = vsyncpa [#allocation18], 1
    %10001 = vsyncpa [#allocation21], 1
    %10002 = vsyncpa [#allocation24], 1
    %10003 = vsyncpa [#allocation27], 1
    %10004 = vsyncpa [#allocation30], 1
    %10005 = vsyncpa [#allocation4], 1
    %10006 = vsyncpa [#allocation33], 1

</llo_original>
